<compile_context>
chip_gen: v6e
topology: v6e:2x2x1
jax: 0.10.0
libtpu: 0.0.40
codegen_flags: <defaults>
</compile_context>

<pallas_src>
import functools

import jax
import jax.numpy as jnp
from jax.experimental import pallas as pl
from jax.experimental.pallas import tpu as pltpu


_BF16 = jnp.bfloat16
_VMEM_LIMIT = 32 * 1024 * 1024       # explicit scoped-VMEM budget (fits v5e/v6e/v7x)
_ROW_TILE = 256                      # rows per grid step for row-tiled kernels
_LN_EPS = 1e-5                       # PyTorch nn.LayerNorm default


def _row_tile(m):
    return m if m <= _ROW_TILE else _ROW_TILE


# ------------------------------ kernel helpers ------------------------------

def _dot(a, b):
    """a @ b with bf16 MXU inputs, f32 accumulation."""
    return jnp.dot(a.astype(_BF16), b.astype(_BF16),
                   preferred_element_type=jnp.float32)


def _dot_t(a, b):
    """a @ b.T without materializing the transpose."""
    return jax.lax.dot_general(a.astype(_BF16), b.astype(_BF16),
                               (((1,), (1,)), ((), ())),
                               preferred_element_type=jnp.float32)


def _layernorm(y, g, b, eps):
    mu = jnp.mean(y, axis=-1, keepdims=True)
    yc = y - mu
    var = jnp.mean(yc * yc, axis=-1, keepdims=True)
    return yc * jax.lax.rsqrt(var + eps) * g + b


# ----------------------------- Pallas kernels ------------------------------

def _lin_act_ln_kernel(x_ref, w_ref, b_ref, g_ref, bt_ref, o_ref, *, act, eps):
    """y = LayerNorm(act(x @ w + b))."""
    y = _dot(x_ref[...], w_ref[...]) + b_ref[...]
    if act == "tanh":
        y = jnp.tanh(y)
    elif act == "relu":
        y = jnp.maximum(y, 0.0)
    o_ref[...] = _layernorm(y, g_ref[...], bt_ref[...], eps).astype(o_ref.dtype)


def _lin_kernel(x_ref, w_ref, b_ref, o_ref):
    """y = x @ w + b."""
    o_ref[...] = (_dot(x_ref[...], w_ref[...]) + b_ref[...]).astype(o_ref.dtype)


def _lin_relu_add_kernel(x_ref, res_ref, w_ref, b_ref, o_ref):
    """y = res + relu(x @ w + b)."""
    y = jnp.maximum(_dot(x_ref[...], w_ref[...]) + b_ref[...], 0.0)
    o_ref[...] = (res_ref[...] + y).astype(o_ref.dtype)


def _ffn_ln_kernel(x_ref, w1_ref, b1_ref, w2_ref, b2_ref, g_ref, bt_ref, o_ref, *, eps):
    """y = LayerNorm(x + lin2(relu(lin1(x))))."""
    x = x_ref[...]
    h = jnp.maximum(_dot(x, w1_ref[...]) + b1_ref[...], 0.0)
    f = _dot(h, w2_ref[...]) + b2_ref[...]
    o_ref[...] = _layernorm(x + f, g_ref[...], bt_ref[...], eps).astype(o_ref.dtype)


def _mha_ln_kernel(q_ref, kv_ref, wq_ref, bq_ref, wk_ref, bk_ref, wv_ref, bv_ref,
                   wo_ref, bo_ref, g_ref, bt_ref, o_ref, *, nhead, eps):
    """Fused MultiheadAttention + residual + post-LayerNorm for one batch element."""
    q_in = q_ref[0]                       # (Sq, D) f32
    kv_in = kv_ref[0]                     # (Sk, D) f32
    d = q_in.shape[-1]
    dh = d // nhead
    scale = 1.0 / (dh ** 0.5)

    # projections (scale folded into q: Sq*D muls instead of H*Sq*Sk)
    qp = (_dot(q_in, wq_ref[...]) + bq_ref[...]) * scale
    kp = _dot(kv_in, wk_ref[...]) + bk_ref[...]
    vp = _dot(kv_in, wv_ref[...]) + bv_ref[...]

    head_outs = []
    for h in range(nhead):                # static, unrolled (nhead = 2 or 4)
        lo, hi = h * dh, (h + 1) * dh
        qh = qp[:, lo:hi]
        kh = kp[:, lo:hi]
        vh = vp[:, lo:hi]
        s = _dot_t(qh, kh)                # (Sq, Sk) f32
        s = s - jnp.max(s, axis=-1, keepdims=True)
        p = jnp.exp(s)
        inv = pl.reciprocal(jnp.sum(p, axis=-1, keepdims=True), approx=True)
        p = p * inv
        head_outs.append(_dot(p, vh))     # (Sq, dh)
    attn = jnp.concatenate(head_outs, axis=-1)      # (Sq, D)

    out = _dot(attn, wo_ref[...]) + bo_ref[...]
    y = q_in + out                        # residual = query input (pre-projection)
    o_ref[0] = _layernorm(y, g_ref[...], bt_ref[...], eps).astype(o_ref.dtype)


# --------------------------- pallas_call builders ---------------------------

def _compiler_params():
    return pltpu.CompilerParams(dimension_semantics=("parallel",),
                                vmem_limit_bytes=_VMEM_LIMIT)


@functools.lru_cache(maxsize=None)
def _lin_act_ln_call(M, K, N, tm, act, eps):
    return pl.pallas_call(
        functools.partial(_lin_act_ln_kernel, act=act, eps=eps),
        out_shape=jax.ShapeDtypeStruct((M, N), jnp.float32),
        grid=(pl.cdiv(M, tm),),
        in_specs=[
            pl.BlockSpec((tm, K), lambda i: (i, 0)),
            pl.BlockSpec((K, N), lambda i: (0, 0)),
            pl.BlockSpec((1, N), lambda i: (0, 0)),
            pl.BlockSpec((1, N), lambda i: (0, 0)),
            pl.BlockSpec((1, N), lambda i: (0, 0)),
        ],
        out_specs=pl.BlockSpec((tm, N), lambda i: (i, 0)),
        compiler_params=_compiler_params(),
    )


@functools.lru_cache(maxsize=None)
def _lin_call(M, K, N, tm):
    return pl.pallas_call(
        _lin_kernel,
        out_shape=jax.ShapeDtypeStruct((M, N), jnp.float32),
        grid=(pl.cdiv(M, tm),),
        in_specs=[
            pl.BlockSpec((tm, K), lambda i: (i, 0)),
            pl.BlockSpec((K, N), lambda i: (0, 0)),
            pl.BlockSpec((1, N), lambda i: (0, 0)),
        ],
        out_specs=pl.BlockSpec((tm, N), lambda i: (i, 0)),
        compiler_params=_compiler_params(),
    )


@functools.lru_cache(maxsize=None)
def _lin_relu_add_call(M, K, N, tm):
    return pl.pallas_call(
        _lin_relu_add_kernel,
        out_shape=jax.ShapeDtypeStruct((M, N), jnp.float32),
        grid=(pl.cdiv(M, tm),),
        in_specs=[
            pl.BlockSpec((tm, K), lambda i: (i, 0)),
            pl.BlockSpec((tm, N), lambda i: (i, 0)),
            pl.BlockSpec((K, N), lambda i: (0, 0)),
            pl.BlockSpec((1, N), lambda i: (0, 0)),
        ],
        out_specs=pl.BlockSpec((tm, N), lambda i: (i, 0)),
        compiler_params=_compiler_params(),
    )


@functools.lru_cache(maxsize=None)
def _ffn_ln_call(M, D, F, tm, eps):
    return pl.pallas_call(
        functools.partial(_ffn_ln_kernel, eps=eps),
        out_shape=jax.ShapeDtypeStruct((M, D), jnp.float32),
        grid=(pl.cdiv(M, tm),),
        in_specs=[
            pl.BlockSpec((tm, D), lambda i: (i, 0)),
            pl.BlockSpec((D, F), lambda i: (0, 0)),
            pl.BlockSpec((1, F), lambda i: (0, 0)),
            pl.BlockSpec((F, D), lambda i: (0, 0)),
            pl.BlockSpec((1, D), lambda i: (0, 0)),
            pl.BlockSpec((1, D), lambda i: (0, 0)),
            pl.BlockSpec((1, D), lambda i: (0, 0)),
        ],
        out_specs=pl.BlockSpec((tm, D), lambda i: (i, 0)),
        compiler_params=_compiler_params(),
    )


@functools.lru_cache(maxsize=None)
def _mha_ln_call(B, Sq, Sk, D, nhead, eps):
    const2 = lambda i: (0, 0)
    return pl.pallas_call(
        functools.partial(_mha_ln_kernel, nhead=nhead, eps=eps),
        out_shape=jax.ShapeDtypeStruct((B, Sq, D), jnp.float32),
        grid=(B,),
        in_specs=[
            pl.BlockSpec((1, Sq, D), lambda i: (i, 0, 0)),   # q (also residual)
            pl.BlockSpec((1, Sk, D), lambda i: (i, 0, 0)),   # k/v source
            pl.BlockSpec((D, D), const2), pl.BlockSpec((1, D), const2),   # wq, bq
            pl.BlockSpec((D, D), const2), pl.BlockSpec((1, D), const2),   # wk, bk
            pl.BlockSpec((D, D), const2), pl.BlockSpec((1, D), const2),   # wv, bv
            pl.BlockSpec((D, D), const2), pl.BlockSpec((1, D), const2),   # wo, bo
            pl.BlockSpec((1, D), const2), pl.BlockSpec((1, D), const2),   # ln g, b
        ],
        out_specs=pl.BlockSpec((1, Sq, D), lambda i: (i, 0, 0)),
        compiler_params=_compiler_params(),
    )


# ------------------------------ host wrappers -------------------------------

def fused_linear_tanh_ln(x, w, b, g, beta, eps=_LN_EPS):
    M, K = x.shape
    N = w.shape[1]
    tm = _row_tile(M)
    return _lin_act_ln_call(M, K, N, tm, "tanh", eps)(
        x, w, b.reshape(1, N), g.reshape(1, N), beta.reshape(1, N))


def plain_linear(x, w, b):
    M, K = x.shape
    N = w.shape[1]
    tm = _row_tile(M)
    return _lin_call(M, K, N, tm)(x, w, b.reshape(1, N))


def fused_linear_relu_add(x, res, w, b):
    M, K = x.shape
    N = w.shape[1]
    tm = _row_tile(M)
    return _lin_relu_add_call(M, K, N, tm)(x, res, w, b.reshape(1, N))


def fused_ffn_ln(x, lin1, lin2, ln, eps=_LN_EPS):
    M, D = x.shape
    F = lin1["w"].shape[1]
    tm = _row_tile(M)
    return _ffn_ln_call(M, D, F, tm, eps)(
        x, lin1["w"], lin1["b"].reshape(1, F), lin2["w"], lin2["b"].reshape(1, D),
        ln["g"].reshape(1, D), ln["b"].reshape(1, D))


def fused_mha_ln(q, kv, attn_p, ln_p, nhead, eps=_LN_EPS):
    B, Sq, D = q.shape
    Sk = kv.shape[1]
    r = lambda v: v.reshape(1, D)
    return _mha_ln_call(B, Sq, Sk, D, nhead, eps)(
        q, kv,
        attn_p["q"]["w"], r(attn_p["q"]["b"]),
        attn_p["k"]["w"], r(attn_p["k"]["b"]),
        attn_p["v"]["w"], r(attn_p["v"]["b"]),
        attn_p["o"]["w"], r(attn_p["o"]["b"]),
        r(ln_p["g"]), r(ln_p["b"]))


# -------------------------- composite model blocks --------------------------

def backbone_forward(p, img, cfg):
    """TransformerBackbone.forward (couple=True)."""
    B, P, PD = img.shape
    dim = cfg["dim"]
    M = B * P
    img2d = img.reshape(M, PD)
    x = img
    for i in range(cfg["depth"]):
        # depth_i : 5 x (Linear -> Tanh -> LayerNorm) — fully fused per block
        h = x.reshape(M, x.shape[-1])
        for blk in p["mlp"][i]:
            h = fused_linear_tanh_ln(h, blk["lin"]["w"], blk["lin"]["b"],
                                     blk["ln"]["g"], blk["ln"]["b"])
        x = h.reshape(B, P, dim)
        # trans_i : post-norm TransformerEncoderLayer (self-attn over patches)
        enc = p["enc"][i]
        x = fused_mha_ln(x, x, enc["attn"], enc["norm1"], cfg["enc_nhead"])
        x2d = fused_ffn_ln(x.reshape(M, dim), enc["lin1"], enc["lin2"], enc["norm2"])
        # x = x + relu(res_i(img))
        x2d = fused_linear_relu_add(img2d, x2d, p["res"][i]["w"], p["res"][i]["b"])
        x = x2d.reshape(B, P, dim)
    # NOTE: the patch mlp_head logits are not used by DeepGEM's returned output,
    # so they are not computed (head params remain in the pytree for fidelity).
    return x


def decoder_layer_forward(p, tgt, src, nhead):
    """TransformerDecoderLayer: self-attn->norm2, cross-attn->norm1, FFN->norm3."""
    B, Nq, D = tgt.shape
    tgt = fused_mha_ln(tgt, tgt, p["self_attn"], p["norm2"], nhead)
    tgt = fused_mha_ln(tgt, src, p["cross_attn"], p["norm1"], nhead)
    t2d = fused_ffn_ln(tgt.reshape(B * Nq, D), p["lin1"], p["lin2"], p["norm3"])
    return t2d.reshape(B, Nq, D)


def deepgem_forward(params, img, cfg):
    B, P, _ = img.shape
    x_inst = backbone_forward(params["backbone"], img, cfg)

    # The reference forward also computes patch_classifier_output and a
    # prototype-softmax score, but neither contributes to the returned
    # wsi_classifier_output -> skipped (dead code w.r.t. the return value).

    # WSI aggregator: learned queries attend over instance embeddings.
    tgt = jnp.broadcast_to(params["query_embed"][None, :, :],
                           (B,) + params["query_embed"].shape)
    for lp in params["decoder_layers"]:
        tgt = decoder_layer_forward(lp, tgt, x_inst, cfg["dec_nhead"])

    hs = tgt.reshape(B, -1)
    return plain_linear(hs, params["cls"]["w"], params["cls"]["b"])


# ------------------------------ parameter init ------------------------------

def _init_linear(key, in_dim, out_dim):
    kw, kb = jax.random.split(key)
    bound = 1.0 / (in_dim ** 0.5)
    return {"w": jax.random.uniform(kw, (in_dim, out_dim), jnp.float32, -bound, bound),
            "b": jax.random.uniform(kb, (out_dim,), jnp.float32, -bound, bound)}


def _init_layernorm(dim):
    return {"g": jnp.ones((dim,), jnp.float32), "b": jnp.zeros((dim,), jnp.float32)}


def _init_mha(key, dim):
    kq, kk, kv, ko = jax.random.split(key, 4)
    return {"q": _init_linear(kq, dim, dim), "k": _init_linear(kk, dim, dim),
            "v": _init_linear(kv, dim, dim), "o": _init_linear(ko, dim, dim)}


def build_params(key, cfg):
    dim, patch_dim = cfg["dim"], cfg["patch_dim"]
    keys = iter(jax.random.split(key, 128))
    nk = lambda: next(keys)

    backbone = {"mlp": [], "enc": [], "res": []}
    for i in range(cfg["depth"]):
        in_dim = patch_dim if i == 0 else dim
        dims = [(in_dim, 2 * dim), (2 * dim, 4 * dim), (4 * dim, 2 * dim),
                (2 * dim, 2 * dim), (2 * dim, dim)]
        backbone["mlp"].append([{"lin": _init_linear(nk(), a, b),
                                 "ln": _init_layernorm(b)} for a, b in dims])
        backbone["enc"].append({"attn": _init_mha(nk(), dim),
                                "lin1": _init_linear(nk(), dim, cfg["enc_ffn"]),
                                "lin2": _init_linear(nk(), cfg["enc_ffn"], dim),
                                "norm1": _init_layernorm(dim),
                                "norm2": _init_layernorm(dim)})
        backbone["res"].append(_init_linear(nk(), patch_dim, dim))
    backbone["head_ln"] = _init_layernorm(dim)
    backbone["head_lin"] = _init_linear(nk(), dim, cfg["num_classes"])

    # TransformerDecoder deep-copies one layer -> all layers start identical.
    dec_layer = {"self_attn": _init_mha(nk(), dim),
                 "cross_attn": _init_mha(nk(), dim),
                 "norm1": _init_layernorm(dim), "norm2": _init_layernorm(dim),
                 "norm3": _init_layernorm(dim),
                 "lin1": _init_linear(nk(), dim, cfg["dec_ffn"]),
                 "lin2": _init_linear(nk(), cfg["dec_ffn"], dim)}
    decoder_layers = [dec_layer for _ in range(cfg["dec_layers"])]

    return {"backbone": backbone,
            "decoder_layers": decoder_layers,
            "query_embed": jax.random.normal(nk(), (cfg["num_queries"], dim), jnp.float32),
            "cls": _init_linear(nk(), dim * cfg["num_queries"], cfg["num_classes"]),
            "prototypes": jnp.zeros((cfg["num_classes"], dim), jnp.float32)}


# ----------------------------------- main -----------------------------------

if __name__ == "__main__":
    cfg = {
        "num_classes": 2,
        "patch_dim": 64,    # reduced from 768 for a small self-contained test
        "dim": 32,
        "depth": 2,         # reduced from 6 for a small self-contained test
        "num_queries": 5,
        "enc_nhead": 2,     # TransformerEncoderLayer(nhead=2)
        "enc_ffn": 64,      # PyTorch encoder-layer default is 2048; reduced for the small test
        "dec_nhead": 4,     # WSIAggregator(nhead=4)
        "dec_ffn": 64,      # dim * 2, as in WSIAggregator(dim_feedforward=dim*2)
        "dec_layers": 2,    # num_decoder_layers=2
    }
    key = jax.random.PRNGKey(0)
    pkey, xkey = jax.random.split(key)
    params = build_params(pkey, cfg)

    bs, patch_num = 2, 8
    img = jax.random.normal(xkey, (bs, patch_num, cfg["patch_dim"]), jnp.float32)

    fwd = jax.jit(functools.partial(deepgem_forward, cfg=cfg))
    out = fwd(params, img)
    out = jax.block_until_ready(out)
    assert out.shape == (bs, cfg["num_classes"]), out.shape
    assert jnp.all(jnp.isfinite(out))
    print("KERNEL_OK")
</pallas_src>

<mosaic_0001>
module attributes {stable_mosaic.version = 11 : i64} {
  func.func @_lin_act_ln_kernel(%arg0: i32, %arg1: memref<16x64xf32, #tpu.memory_space<vmem>>, %arg2: memref<64x128xf32, #tpu.memory_space<vmem>>, %arg3: memref<1x128xf32, #tpu.memory_space<vmem>>, %arg4: memref<1x128xf32, #tpu.memory_space<vmem>>, %arg5: memref<1x128xf32, #tpu.memory_space<vmem>>, %arg6: memref<16x128xf32, #tpu.memory_space<vmem>>) attributes {dimension_semantics = [#tpu.dimension_semantics<parallel>], iteration_bounds = array<i64: 1>, scalar_prefetch = 0 : i64, scratch_operands = 0 : i64, tpu.core_type = #tpu.core_type<tc>, window_params = [{transform_indices = @transform_0, window_bounds = array<i64: 16, 64>}, {pipeline_mode = #tpu.pipeline_mode<synchronous>, transform_indices = @transform_1, window_bounds = array<i64: 64, 128>}, {pipeline_mode = #tpu.pipeline_mode<synchronous>, transform_indices = @transform_2, window_bounds = array<i64: 1, 128>}, {pipeline_mode = #tpu.pipeline_mode<synchronous>, transform_indices = @transform_3, window_bounds = array<i64: 1, 128>}, {pipeline_mode = #tpu.pipeline_mode<synchronous>, transform_indices = @transform_4, window_bounds = array<i64: 1, 128>}, {transform_indices = @transform_5, window_bounds = array<i64: 16, 128>}]} {
    %c0 = arith.constant 0 : index
    %c0_0 = arith.constant 0 : index
    %0 = vector.load %arg1[%c0, %c0_0] : memref<16x64xf32, #tpu.memory_space<vmem>>, vector<16x64xf32>
    %c0_1 = arith.constant 0 : index
    %c0_2 = arith.constant 0 : index
    %1 = vector.load %arg2[%c0_1, %c0_2] : memref<64x128xf32, #tpu.memory_space<vmem>>, vector<64x128xf32>
    %2 = arith.truncf %0 : vector<16x64xf32> to vector<16x64xbf16>
    %3 = arith.truncf %1 : vector<64x128xf32> to vector<64x128xbf16>
    %cst = arith.constant dense<0.000000e+00> : vector<16x128xf32>
    %4 = tpu.matmul %2, %3, %cst {dimension_numbers = #tpu.dot_dimension_numbers<[1], [0], [0], [1], [0, 0, 1, 1], [], []>} : vector<16x64xbf16>, vector<64x128xbf16>, vector<16x128xf32> -> vector<16x128xf32>
    %c0_3 = arith.constant 0 : index
    %c0_4 = arith.constant 0 : index
    %5 = vector.load %arg3[%c0_3, %c0_4] : memref<1x128xf32, #tpu.memory_space<vmem>>, vector<1x128xf32>
    %6 = vector.broadcast %5 : vector<1x128xf32> to vector<16x128xf32>
    %7 = arith.addf %4, %6 : vector<16x128xf32>
    %8 = math.tanh %7 : vector<16x128xf32>
    %c0_5 = arith.constant 0 : index
    %c0_6 = arith.constant 0 : index
    %9 = vector.load %arg4[%c0_5, %c0_6] : memref<1x128xf32, #tpu.memory_space<vmem>>, vector<1x128xf32>
    %c0_7 = arith.constant 0 : index
    %c0_8 = arith.constant 0 : index
    %10 = vector.load %arg5[%c0_7, %c0_8] : memref<1x128xf32, #tpu.memory_space<vmem>>, vector<1x128xf32>
    %cst_9 = arith.constant dense<0.000000e+00> : vector<16xf32>
    %11 = vector.multi_reduction <add>, %8, %cst_9 [1] : vector<16x128xf32> to vector<16xf32>
    %12 = vector.shape_cast %11 : vector<16xf32> to vector<16x1xf32>
    %cst_10 = arith.constant 1.280000e+02 : f32
    %13 = vector.broadcast %cst_10 : f32 to vector<16x1xf32>
    %14 = arith.divf %12, %13 : vector<16x1xf32>
    %15 = vector.broadcast %14 : vector<16x1xf32> to vector<16x128xf32>
    %16 = arith.subf %8, %15 : vector<16x128xf32>
    %17 = arith.mulf %16, %16 : vector<16x128xf32>
    %cst_11 = arith.constant dense<0.000000e+00> : vector<16xf32>
    %18 = vector.multi_reduction <add>, %17, %cst_11 [1] : vector<16x128xf32> to vector<16xf32>
    %19 = vector.shape_cast %18 : vector<16xf32> to vector<16x1xf32>
    %cst_12 = arith.constant 1.280000e+02 : f32
    %20 = vector.broadcast %cst_12 : f32 to vector<16x1xf32>
    %21 = arith.divf %19, %20 : vector<16x1xf32>
    %cst_13 = arith.constant 9.99999974E-6 : f32
    %22 = vector.broadcast %cst_13 : f32 to vector<16x1xf32>
    %23 = arith.addf %21, %22 : vector<16x1xf32>
    %24 = math.rsqrt %23 : vector<16x1xf32>
    %25 = vector.broadcast %24 : vector<16x1xf32> to vector<16x128xf32>
    %26 = arith.mulf %16, %25 : vector<16x128xf32>
    %27 = vector.broadcast %9 : vector<1x128xf32> to vector<16x128xf32>
    %28 = arith.mulf %26, %27 : vector<16x128xf32>
    %29 = vector.broadcast %10 : vector<1x128xf32> to vector<16x128xf32>
    %30 = arith.addf %28, %29 : vector<16x128xf32>
    %c0_14 = arith.constant 0 : index
    %c0_15 = arith.constant 0 : index
    %31 = vector.load %arg6[%c0_14, %c0_15] : memref<16x128xf32, #tpu.memory_space<vmem>>, vector<16x128xf32>
    tpu.vector_store %arg6[%c0_14, %c0_15], %30 {strides = array<i32>} : memref<16x128xf32, #tpu.memory_space<vmem>>, vector<16x128xf32>,
    return
  }
  func.func @transform_0(%arg0: i32) -> (i32, i32) {
    %c0_i32 = arith.constant 0 : i32
    %c0_i32_0 = arith.constant 0 : i32
    return %arg0, %c0_i32 : i32, i32
  }
  func.func @transform_1(%arg0: i32) -> (i32, i32) {
    %c0_i32 = arith.constant 0 : i32
    %c0_i32_0 = arith.constant 0 : i32
    %c0_i32_1 = arith.constant 0 : i32
    return %c0_i32, %c0_i32_0 : i32, i32
  }
  func.func @transform_2(%arg0: i32) -> (i32, i32) {
    %c0_i32 = arith.constant 0 : i32
    %c0_i32_0 = arith.constant 0 : i32
    %c0_i32_1 = arith.constant 0 : i32
    return %c0_i32, %c0_i32_0 : i32, i32
  }
  func.func @transform_3(%arg0: i32) -> (i32, i32) {
    %c0_i32 = arith.constant 0 : i32
    %c0_i32_0 = arith.constant 0 : i32
    %c0_i32_1 = arith.constant 0 : i32
    return %c0_i32, %c0_i32_0 : i32, i32
  }
  func.func @transform_4(%arg0: i32) -> (i32, i32) {
    %c0_i32 = arith.constant 0 : i32
    %c0_i32_0 = arith.constant 0 : i32
    %c0_i32_1 = arith.constant 0 : i32
    return %c0_i32, %c0_i32_0 : i32, i32
  }
  func.func @transform_5(%arg0: i32) -> (i32, i32) {
    %c0_i32 = arith.constant 0 : i32
    %c0_i32_0 = arith.constant 0 : i32
    return %arg0, %c0_i32 : i32, i32
  }
}

module attributes {stable_mosaic.version = 11 : i64} {
  func.func @_lin_act_ln_kernel(%arg0: i32, %arg1: memref<16x64xf32, #tpu.memory_space<vmem>>, %arg2: memref<64x64xf32, #tpu.memory_space<vmem>>, %arg3: memref<1x64xf32, #tpu.memory_space<vmem>>, %arg4: memref<1x64xf32, #tpu.memory_space<vmem>>, %arg5: memref<1x64xf32, #tpu.memory_space<vmem>>, %arg6: memref<16x64xf32, #tpu.memory_space<vmem>>) attributes {dimension_semantics = [#tpu.dimension_semantics<parallel>], iteration_bounds = array<i64: 1>, scalar_prefetch = 0 : i64, scratch_operands = 0 : i64, tpu.core_type = #tpu.core_type<tc>, window_params = [{transform_indices = @transform_0, window_bounds = array<i64: 16, 64>}, {pipeline_mode = #tpu.pipeline_mode<synchronous>, transform_indices = @transform_1, window_bounds = array<i64: 64, 64>}, {pipeline_mode = #tpu.pipeline_mode<synchronous>, transform_indices = @transform_2, window_bounds = array<i64: 1, 64>}, {pipeline_mode = #tpu.pipeline_mode<synchronous>, transform_indices = @transform_3, window_bounds = array<i64: 1, 64>}, {pipeline_mode = #tpu.pipeline_mode<synchronous>, transform_indices = @transform_4, window_bounds = array<i64: 1, 64>}, {transform_indices = @transform_5, window_bounds = array<i64: 16, 64>}]} {
    %c0 = arith.constant 0 : index
    %c0_0 = arith.constant 0 : index
    %0 = vector.load %arg1[%c0, %c0_0] : memref<16x64xf32, #tpu.memory_space<vmem>>, vector<16x64xf32>
    %c0_1 = arith.constant 0 : index
    %c0_2 = arith.constant 0 : index
    %1 = vector.load %arg2[%c0_1, %c0_2] : memref<64x64xf32, #tpu.memory_space<vmem>>, vector<64x64xf32>
    %2 = arith.truncf %0 : vector<16x64xf32> to vector<16x64xbf16>
    %3 = arith.truncf %1 : vector<64x64xf32> to vector<64x64xbf16>
    %cst = arith.constant dense<0.000000e+00> : vector<16x64xf32>
    %4 = tpu.matmul %2, %3, %cst {dimension_numbers = #tpu.dot_dimension_numbers<[1], [0], [0], [1], [0, 0, 1, 1], [], []>} : vector<16x64xbf16>, vector<64x64xbf16>, vector<16x64xf32> -> vector<16x64xf32>
    %c0_3 = arith.constant 0 : index
    %c0_4 = arith.constant 0 : index
    %5 = vector.load %arg3[%c0_3, %c0_4] : memref<1x64xf32, #tpu.memory_space<vmem>>, vector<1x64xf32>
    %6 = vector.broadcast %5 : vector<1x64xf32> to vector<16x64xf32>
    %7 = arith.addf %4, %6 : vector<16x64xf32>
    %8 = math.tanh %7 : vector<16x64xf32>
    %c0_5 = arith.constant 0 : index
    %c0_6 = arith.constant 0 : index
    %9 = vector.load %arg4[%c0_5, %c0_6] : memref<1x64xf32, #tpu.memory_space<vmem>>, vector<1x64xf32>
    %c0_7 = arith.constant 0 : index
    %c0_8 = arith.constant 0 : index
    %10 = vector.load %arg5[%c0_7, %c0_8] : memref<1x64xf32, #tpu.memory_space<vmem>>, vector<1x64xf32>
    %cst_9 = arith.constant dense<0.000000e+00> : vector<16xf32>
    %11 = vector.multi_reduction <add>, %8, %cst_9 [1] : vector<16x64xf32> to vector<16xf32>
    %12 = vector.shape_cast %11 : vector<16xf32> to vector<16x1xf32>
    %cst_10 = arith.constant 6.400000e+01 : f32
    %13 = vector.broadcast %cst_10 : f32 to vector<16x1xf32>
    %14 = arith.divf %12, %13 : vector<16x1xf32>
    %15 = vector.broadcast %14 : vector<16x1xf32> to vector<16x64xf32>
    %16 = arith.subf %8, %15 : vector<16x64xf32>
    %17 = arith.mulf %16, %16 : vector<16x64xf32>
    %cst_11 = arith.constant dense<0.000000e+00> : vector<16xf32>
    %18 = vector.multi_reduction <add>, %17, %cst_11 [1] : vector<16x64xf32> to vector<16xf32>
    %19 = vector.shape_cast %18 : vector<16xf32> to vector<16x1xf32>
    %cst_12 = arith.constant 6.400000e+01 : f32
    %20 = vector.broadcast %cst_12 : f32 to vector<16x1xf32>
    %21 = arith.divf %19, %20 : vector<16x1xf32>
    %cst_13 = arith.constant 9.99999974E-6 : f32
    %22 = vector.broadcast %cst_13 : f32 to vector<16x1xf32>
    %23 = arith.addf %21, %22 : vector<16x1xf32>
    %24 = math.rsqrt %23 : vector<16x1xf32>
    %25 = vector.broadcast %24 : vector<16x1xf32> to vector<16x64xf32>
    %26 = arith.mulf %16, %25 : vector<16x64xf32>
    %27 = vector.broadcast %9 : vector<1x64xf32> to vector<16x64xf32>
    %28 = arith.mulf %26, %27 : vector<16x64xf32>
    %29 = vector.broadcast %10 : vector<1x64xf32> to vector<16x64xf32>
    %30 = arith.addf %28, %29 : vector<16x64xf32>
    %c0_14 = arith.constant 0 : index
    %c0_15 = arith.constant 0 : index
    %31 = vector.load %arg6[%c0_14, %c0_15] : memref<16x64xf32, #tpu.memory_space<vmem>>, vector<16x64xf32>
    tpu.vector_store %arg6[%c0_14, %c0_15], %30 {strides = array<i32>} : memref<16x64xf32, #tpu.memory_space<vmem>>, vector<16x64xf32>,
    return
  }
  func.func @transform_0(%arg0: i32) -> (i32, i32) {
    %c0_i32 = arith.constant 0 : i32
    %c0_i32_0 = arith.constant 0 : i32
    return %arg0, %c0_i32 : i32, i32
  }
  func.func @transform_1(%arg0: i32) -> (i32, i32) {
    %c0_i32 = arith.constant 0 : i32
    %c0_i32_0 = arith.constant 0 : i32
    %c0_i32_1 = arith.constant 0 : i32
    return %c0_i32, %c0_i32_0 : i32, i32
  }
  func.func @transform_2(%arg0: i32) -> (i32, i32) {
    %c0_i32 = arith.constant 0 : i32
    %c0_i32_0 = arith.constant 0 : i32
    %c0_i32_1 = arith.constant 0 : i32
    return %c0_i32, %c0_i32_0 : i32, i32
  }
  func.func @transform_3(%arg0: i32) -> (i32, i32) {
    %c0_i32 = arith.constant 0 : i32
    %c0_i32_0 = arith.constant 0 : i32
    %c0_i32_1 = arith.constant 0 : i32
    return %c0_i32, %c0_i32_0 : i32, i32
  }
  func.func @transform_4(%arg0: i32) -> (i32, i32) {
    %c0_i32 = arith.constant 0 : i32
    %c0_i32_0 = arith.constant 0 : i32
    %c0_i32_1 = arith.constant 0 : i32
    return %c0_i32, %c0_i32_0 : i32, i32
  }
  func.func @transform_5(%arg0: i32) -> (i32, i32) {
    %c0_i32 = arith.constant 0 : i32
    %c0_i32_0 = arith.constant 0 : i32
    return %arg0, %c0_i32 : i32, i32
  }
}

module attributes {stable_mosaic.version = 11 : i64} {
  func.func @_lin_act_ln_kernel(%arg0: i32, %arg1: memref<16x128xf32, #tpu.memory_space<vmem>>, %arg2: memref<128x64xf32, #tpu.memory_space<vmem>>, %arg3: memref<1x64xf32, #tpu.memory_space<vmem>>, %arg4: memref<1x64xf32, #tpu.memory_space<vmem>>, %arg5: memref<1x64xf32, #tpu.memory_space<vmem>>, %arg6: memref<16x64xf32, #tpu.memory_space<vmem>>) attributes {dimension_semantics = [#tpu.dimension_semantics<parallel>], iteration_bounds = array<i64: 1>, scalar_prefetch = 0 : i64, scratch_operands = 0 : i64, tpu.core_type = #tpu.core_type<tc>, window_params = [{transform_indices = @transform_0, window_bounds = array<i64: 16, 128>}, {pipeline_mode = #tpu.pipeline_mode<synchronous>, transform_indices = @transform_1, window_bounds = array<i64: 128, 64>}, {pipeline_mode = #tpu.pipeline_mode<synchronous>, transform_indices = @transform_2, window_bounds = array<i64: 1, 64>}, {pipeline_mode = #tpu.pipeline_mode<synchronous>, transform_indices = @transform_3, window_bounds = array<i64: 1, 64>}, {pipeline_mode = #tpu.pipeline_mode<synchronous>, transform_indices = @transform_4, window_bounds = array<i64: 1, 64>}, {transform_indices = @transform_5, window_bounds = array<i64: 16, 64>}]} {
    %c0 = arith.constant 0 : index
    %c0_0 = arith.constant 0 : index
    %0 = vector.load %arg1[%c0, %c0_0] : memref<16x128xf32, #tpu.memory_space<vmem>>, vector<16x128xf32>
    %c0_1 = arith.constant 0 : index
    %c0_2 = arith.constant 0 : index
    %1 = vector.load %arg2[%c0_1, %c0_2] : memref<128x64xf32, #tpu.memory_space<vmem>>, vector<128x64xf32>
    %2 = arith.truncf %0 : vector<16x128xf32> to vector<16x128xbf16>
    %3 = arith.truncf %1 : vector<128x64xf32> to vector<128x64xbf16>
    %cst = arith.constant dense<0.000000e+00> : vector<16x64xf32>
    %4 = tpu.matmul %2, %3, %cst {dimension_numbers = #tpu.dot_dimension_numbers<[1], [0], [0], [1], [0, 0, 1, 1], [], []>} : vector<16x128xbf16>, vector<128x64xbf16>, vector<16x64xf32> -> vector<16x64xf32>
    %c0_3 = arith.constant 0 : index
    %c0_4 = arith.constant 0 : index
    %5 = vector.load %arg3[%c0_3, %c0_4] : memref<1x64xf32, #tpu.memory_space<vmem>>, vector<1x64xf32>
    %6 = vector.broadcast %5 : vector<1x64xf32> to vector<16x64xf32>
    %7 = arith.addf %4, %6 : vector<16x64xf32>
    %8 = math.tanh %7 : vector<16x64xf32>
    %c0_5 = arith.constant 0 : index
    %c0_6 = arith.constant 0 : index
    %9 = vector.load %arg4[%c0_5, %c0_6] : memref<1x64xf32, #tpu.memory_space<vmem>>, vector<1x64xf32>
    %c0_7 = arith.constant 0 : index
    %c0_8 = arith.constant 0 : index
    %10 = vector.load %arg5[%c0_7, %c0_8] : memref<1x64xf32, #tpu.memory_space<vmem>>, vector<1x64xf32>
    %cst_9 = arith.constant dense<0.000000e+00> : vector<16xf32>
    %11 = vector.multi_reduction <add>, %8, %cst_9 [1] : vector<16x64xf32> to vector<16xf32>
    %12 = vector.shape_cast %11 : vector<16xf32> to vector<16x1xf32>
    %cst_10 = arith.constant 6.400000e+01 : f32
    %13 = vector.broadcast %cst_10 : f32 to vector<16x1xf32>
    %14 = arith.divf %12, %13 : vector<16x1xf32>
    %15 = vector.broadcast %14 : vector<16x1xf32> to vector<16x64xf32>
    %16 = arith.subf %8, %15 : vector<16x64xf32>
    %17 = arith.mulf %16, %16 : vector<16x64xf32>
    %cst_11 = arith.constant dense<0.000000e+00> : vector<16xf32>
    %18 = vector.multi_reduction <add>, %17, %cst_11 [1] : vector<16x64xf32> to vector<16xf32>
    %19 = vector.shape_cast %18 : vector<16xf32> to vector<16x1xf32>
    %cst_12 = arith.constant 6.400000e+01 : f32
    %20 = vector.broadcast %cst_12 : f32 to vector<16x1xf32>
    %21 = arith.divf %19, %20 : vector<16x1xf32>
    %cst_13 = arith.constant 9.99999974E-6 : f32
    %22 = vector.broadcast %cst_13 : f32 to vector<16x1xf32>
    %23 = arith.addf %21, %22 : vector<16x1xf32>
    %24 = math.rsqrt %23 : vector<16x1xf32>
    %25 = vector.broadcast %24 : vector<16x1xf32> to vector<16x64xf32>
    %26 = arith.mulf %16, %25 : vector<16x64xf32>
    %27 = vector.broadcast %9 : vector<1x64xf32> to vector<16x64xf32>
    %28 = arith.mulf %26, %27 : vector<16x64xf32>
    %29 = vector.broadcast %10 : vector<1x64xf32> to vector<16x64xf32>
    %30 = arith.addf %28, %29 : vector<16x64xf32>
    %c0_14 = arith.constant 0 : index
    %c0_15 = arith.constant 0 : index
    %31 = vector.load %arg6[%c0_14, %c0_15] : memref<16x64xf32, #tpu.memory_space<vmem>>, vector<16x64xf32>
    tpu.vector_store %arg6[%c0_14, %c0_15], %30 {strides = array<i32>} : memref<16x64xf32, #tpu.memory_space<vmem>>, vector<16x64xf32>,
    return
  }
  func.func @transform_0(%arg0: i32) -> (i32, i32) {
    %c0_i32 = arith.constant 0 : i32
    %c0_i32_0 = arith.constant 0 : i32
    return %arg0, %c0_i32 : i32, i32
  }
  func.func @transform_1(%arg0: i32) -> (i32, i32) {
    %c0_i32 = arith.constant 0 : i32
    %c0_i32_0 = arith.constant 0 : i32
    %c0_i32_1 = arith.constant 0 : i32
    return %c0_i32, %c0_i32_0 : i32, i32
  }
  func.func @transform_2(%arg0: i32) -> (i32, i32) {
    %c0_i32 = arith.constant 0 : i32
    %c0_i32_0 = arith.constant 0 : i32
    %c0_i32_1 = arith.constant 0 : i32
    return %c0_i32, %c0_i32_0 : i32, i32
  }
  func.func @transform_3(%arg0: i32) -> (i32, i32) {
    %c0_i32 = arith.constant 0 : i32
    %c0_i32_0 = arith.constant 0 : i32
    %c0_i32_1 = arith.constant 0 : i32
    return %c0_i32, %c0_i32_0 : i32, i32
  }
  func.func @transform_4(%arg0: i32) -> (i32, i32) {
    %c0_i32 = arith.constant 0 : i32
    %c0_i32_0 = arith.constant 0 : i32
    %c0_i32_1 = arith.constant 0 : i32
    return %c0_i32, %c0_i32_0 : i32, i32
  }
  func.func @transform_5(%arg0: i32) -> (i32, i32) {
    %c0_i32 = arith.constant 0 : i32
    %c0_i32_0 = arith.constant 0 : i32
    return %arg0, %c0_i32 : i32, i32
  }
}

module attributes {stable_mosaic.version = 11 : i64} {
  func.func @_lin_act_ln_kernel(%arg0: i32, %arg1: memref<16x64xf32, #tpu.memory_space<vmem>>, %arg2: memref<64x32xf32, #tpu.memory_space<vmem>>, %arg3: memref<1x32xf32, #tpu.memory_space<vmem>>, %arg4: memref<1x32xf32, #tpu.memory_space<vmem>>, %arg5: memref<1x32xf32, #tpu.memory_space<vmem>>, %arg6: memref<16x32xf32, #tpu.memory_space<vmem>>) attributes {dimension_semantics = [#tpu.dimension_semantics<parallel>], iteration_bounds = array<i64: 1>, scalar_prefetch = 0 : i64, scratch_operands = 0 : i64, tpu.core_type = #tpu.core_type<tc>, window_params = [{transform_indices = @transform_0, window_bounds = array<i64: 16, 64>}, {pipeline_mode = #tpu.pipeline_mode<synchronous>, transform_indices = @transform_1, window_bounds = array<i64: 64, 32>}, {pipeline_mode = #tpu.pipeline_mode<synchronous>, transform_indices = @transform_2, window_bounds = array<i64: 1, 32>}, {pipeline_mode = #tpu.pipeline_mode<synchronous>, transform_indices = @transform_3, window_bounds = array<i64: 1, 32>}, {pipeline_mode = #tpu.pipeline_mode<synchronous>, transform_indices = @transform_4, window_bounds = array<i64: 1, 32>}, {transform_indices = @transform_5, window_bounds = array<i64: 16, 32>}]} {
    %c0 = arith.constant 0 : index
    %c0_0 = arith.constant 0 : index
    %0 = vector.load %arg1[%c0, %c0_0] : memref<16x64xf32, #tpu.memory_space<vmem>>, vector<16x64xf32>
    %c0_1 = arith.constant 0 : index
    %c0_2 = arith.constant 0 : index
    %1 = vector.load %arg2[%c0_1, %c0_2] : memref<64x32xf32, #tpu.memory_space<vmem>>, vector<64x32xf32>
    %2 = arith.truncf %0 : vector<16x64xf32> to vector<16x64xbf16>
    %3 = arith.truncf %1 : vector<64x32xf32> to vector<64x32xbf16>
    %cst = arith.constant dense<0.000000e+00> : vector<16x32xf32>
    %4 = tpu.matmul %2, %3, %cst {dimension_numbers = #tpu.dot_dimension_numbers<[1], [0], [0], [1], [0, 0, 1, 1], [], []>} : vector<16x64xbf16>, vector<64x32xbf16>, vector<16x32xf32> -> vector<16x32xf32>
    %c0_3 = arith.constant 0 : index
    %c0_4 = arith.constant 0 : index
    %5 = vector.load %arg3[%c0_3, %c0_4] : memref<1x32xf32, #tpu.memory_space<vmem>>, vector<1x32xf32>
    %6 = vector.broadcast %5 : vector<1x32xf32> to vector<16x32xf32>
    %7 = arith.addf %4, %6 : vector<16x32xf32>
    %8 = math.tanh %7 : vector<16x32xf32>
    %c0_5 = arith.constant 0 : index
    %c0_6 = arith.constant 0 : index
    %9 = vector.load %arg4[%c0_5, %c0_6] : memref<1x32xf32, #tpu.memory_space<vmem>>, vector<1x32xf32>
    %c0_7 = arith.constant 0 : index
    %c0_8 = arith.constant 0 : index
    %10 = vector.load %arg5[%c0_7, %c0_8] : memref<1x32xf32, #tpu.memory_space<vmem>>, vector<1x32xf32>
    %cst_9 = arith.constant dense<0.000000e+00> : vector<16xf32>
    %11 = vector.multi_reduction <add>, %8, %cst_9 [1] : vector<16x32xf32> to vector<16xf32>
    %12 = vector.shape_cast %11 : vector<16xf32> to vector<16x1xf32>
    %cst_10 = arith.constant 3.200000e+01 : f32
    %13 = vector.broadcast %cst_10 : f32 to vector<16x1xf32>
    %14 = arith.divf %12, %13 : vector<16x1xf32>
    %15 = vector.broadcast %14 : vector<16x1xf32> to vector<16x32xf32>
    %16 = arith.subf %8, %15 : vector<16x32xf32>
    %17 = arith.mulf %16, %16 : vector<16x32xf32>
    %cst_11 = arith.constant dense<0.000000e+00> : vector<16xf32>
    %18 = vector.multi_reduction <add>, %17, %cst_11 [1] : vector<16x32xf32> to vector<16xf32>
    %19 = vector.shape_cast %18 : vector<16xf32> to vector<16x1xf32>
    %cst_12 = arith.constant 3.200000e+01 : f32
    %20 = vector.broadcast %cst_12 : f32 to vector<16x1xf32>
    %21 = arith.divf %19, %20 : vector<16x1xf32>
    %cst_13 = arith.constant 9.99999974E-6 : f32
    %22 = vector.broadcast %cst_13 : f32 to vector<16x1xf32>
    %23 = arith.addf %21, %22 : vector<16x1xf32>
    %24 = math.rsqrt %23 : vector<16x1xf32>
    %25 = vector.broadcast %24 : vector<16x1xf32> to vector<16x32xf32>
    %26 = arith.mulf %16, %25 : vector<16x32xf32>
    %27 = vector.broadcast %9 : vector<1x32xf32> to vector<16x32xf32>
    %28 = arith.mulf %26, %27 : vector<16x32xf32>
    %29 = vector.broadcast %10 : vector<1x32xf32> to vector<16x32xf32>
    %30 = arith.addf %28, %29 : vector<16x32xf32>
    %c0_14 = arith.constant 0 : index
    %c0_15 = arith.constant 0 : index
    %31 = vector.load %arg6[%c0_14, %c0_15] : memref<16x32xf32, #tpu.memory_space<vmem>>, vector<16x32xf32>
    tpu.vector_store %arg6[%c0_14, %c0_15], %30 {strides = array<i32>} : memref<16x32xf32, #tpu.memory_space<vmem>>, vector<16x32xf32>,
    return
  }
  func.func @transform_0(%arg0: i32) -> (i32, i32) {
    %c0_i32 = arith.constant 0 : i32
    %c0_i32_0 = arith.constant 0 : i32
    return %arg0, %c0_i32 : i32, i32
  }
  func.func @transform_1(%arg0: i32) -> (i32, i32) {
    %c0_i32 = arith.constant 0 : i32
    %c0_i32_0 = arith.constant 0 : i32
    %c0_i32_1 = arith.constant 0 : i32
    return %c0_i32, %c0_i32_0 : i32, i32
  }
  func.func @transform_2(%arg0: i32) -> (i32, i32) {
    %c0_i32 = arith.constant 0 : i32
    %c0_i32_0 = arith.constant 0 : i32
    %c0_i32_1 = arith.constant 0 : i32
    return %c0_i32, %c0_i32_0 : i32, i32
  }
  func.func @transform_3(%arg0: i32) -> (i32, i32) {
    %c0_i32 = arith.constant 0 : i32
    %c0_i32_0 = arith.constant 0 : i32
    %c0_i32_1 = arith.constant 0 : i32
    return %c0_i32, %c0_i32_0 : i32, i32
  }
  func.func @transform_4(%arg0: i32) -> (i32, i32) {
    %c0_i32 = arith.constant 0 : i32
    %c0_i32_0 = arith.constant 0 : i32
    %c0_i32_1 = arith.constant 0 : i32
    return %c0_i32, %c0_i32_0 : i32, i32
  }
  func.func @transform_5(%arg0: i32) -> (i32, i32) {
    %c0_i32 = arith.constant 0 : i32
    %c0_i32_0 = arith.constant 0 : i32
    return %arg0, %c0_i32 : i32, i32
  }
}

module attributes {stable_mosaic.version = 11 : i64} {
  func.func @_lin_relu_add_kernel(%arg0: i32, %arg1: memref<16x64xf32, #tpu.memory_space<vmem>>, %arg2: memref<16x32xf32, #tpu.memory_space<vmem>>, %arg3: memref<64x32xf32, #tpu.memory_space<vmem>>, %arg4: memref<1x32xf32, #tpu.memory_space<vmem>>, %arg5: memref<16x32xf32, #tpu.memory_space<vmem>>) attributes {dimension_semantics = [#tpu.dimension_semantics<parallel>], iteration_bounds = array<i64: 1>, scalar_prefetch = 0 : i64, scratch_operands = 0 : i64, tpu.core_type = #tpu.core_type<tc>, window_params = [{transform_indices = @transform_0, window_bounds = array<i64: 16, 64>}, {transform_indices = @transform_1, window_bounds = array<i64: 16, 32>}, {pipeline_mode = #tpu.pipeline_mode<synchronous>, transform_indices = @transform_2, window_bounds = array<i64: 64, 32>}, {pipeline_mode = #tpu.pipeline_mode<synchronous>, transform_indices = @transform_3, window_bounds = array<i64: 1, 32>}, {transform_indices = @transform_4, window_bounds = array<i64: 16, 32>}]} {
    %c0 = arith.constant 0 : index
    %c0_0 = arith.constant 0 : index
    %0 = vector.load %arg1[%c0, %c0_0] : memref<16x64xf32, #tpu.memory_space<vmem>>, vector<16x64xf32>
    %c0_1 = arith.constant 0 : index
    %c0_2 = arith.constant 0 : index
    %1 = vector.load %arg3[%c0_1, %c0_2] : memref<64x32xf32, #tpu.memory_space<vmem>>, vector<64x32xf32>
    %2 = arith.truncf %0 : vector<16x64xf32> to vector<16x64xbf16>
    %3 = arith.truncf %1 : vector<64x32xf32> to vector<64x32xbf16>
    %cst = arith.constant dense<0.000000e+00> : vector<16x32xf32>
    %4 = tpu.matmul %2, %3, %cst {dimension_numbers = #tpu.dot_dimension_numbers<[1], [0], [0], [1], [0, 0, 1, 1], [], []>} : vector<16x64xbf16>, vector<64x32xbf16>, vector<16x32xf32> -> vector<16x32xf32>
    %c0_3 = arith.constant 0 : index
    %c0_4 = arith.constant 0 : index
    %5 = vector.load %arg4[%c0_3, %c0_4] : memref<1x32xf32, #tpu.memory_space<vmem>>, vector<1x32xf32>
    %6 = vector.broadcast %5 : vector<1x32xf32> to vector<16x32xf32>
    %7 = arith.addf %4, %6 : vector<16x32xf32>
    %cst_5 = arith.constant 0.000000e+00 : f32
    %8 = vector.broadcast %cst_5 : f32 to vector<16x32xf32>
    %9 = arith.maximumf %7, %8 : vector<16x32xf32>
    %c0_6 = arith.constant 0 : index
    %c0_7 = arith.constant 0 : index
    %10 = vector.load %arg2[%c0_6, %c0_7] : memref<16x32xf32, #tpu.memory_space<vmem>>, vector<16x32xf32>
    %11 = arith.addf %10, %9 : vector<16x32xf32>
    %c0_8 = arith.constant 0 : index
    %c0_9 = arith.constant 0 : index
    %12 = vector.load %arg5[%c0_8, %c0_9] : memref<16x32xf32, #tpu.memory_space<vmem>>, vector<16x32xf32>
    tpu.vector_store %arg5[%c0_8, %c0_9], %11 {strides = array<i32>} : memref<16x32xf32, #tpu.memory_space<vmem>>, vector<16x32xf32>,
    return
  }
  func.func @transform_0(%arg0: i32) -> (i32, i32) {
    %c0_i32 = arith.constant 0 : i32
    %c0_i32_0 = arith.constant 0 : i32
    return %arg0, %c0_i32 : i32, i32
  }
  func.func @transform_1(%arg0: i32) -> (i32, i32) {
    %c0_i32 = arith.constant 0 : i32
    %c0_i32_0 = arith.constant 0 : i32
    return %arg0, %c0_i32 : i32, i32
  }
  func.func @transform_2(%arg0: i32) -> (i32, i32) {
    %c0_i32 = arith.constant 0 : i32
    %c0_i32_0 = arith.constant 0 : i32
    %c0_i32_1 = arith.constant 0 : i32
    return %c0_i32, %c0_i32_0 : i32, i32
  }
  func.func @transform_3(%arg0: i32) -> (i32, i32) {
    %c0_i32 = arith.constant 0 : i32
    %c0_i32_0 = arith.constant 0 : i32
    %c0_i32_1 = arith.constant 0 : i32
    return %c0_i32, %c0_i32_0 : i32, i32
  }
  func.func @transform_4(%arg0: i32) -> (i32, i32) {
    %c0_i32 = arith.constant 0 : i32
    %c0_i32_0 = arith.constant 0 : i32
    return %arg0, %c0_i32 : i32, i32
  }
}

module attributes {stable_mosaic.version = 11 : i64} {
  func.func @_ffn_ln_kernel(%arg0: i32, %arg1: memref<16x32xf32, #tpu.memory_space<vmem>>, %arg2: memref<32x64xf32, #tpu.memory_space<vmem>>, %arg3: memref<1x64xf32, #tpu.memory_space<vmem>>, %arg4: memref<64x32xf32, #tpu.memory_space<vmem>>, %arg5: memref<1x32xf32, #tpu.memory_space<vmem>>, %arg6: memref<1x32xf32, #tpu.memory_space<vmem>>, %arg7: memref<1x32xf32, #tpu.memory_space<vmem>>, %arg8: memref<16x32xf32, #tpu.memory_space<vmem>>) attributes {dimension_semantics = [#tpu.dimension_semantics<parallel>], iteration_bounds = array<i64: 1>, scalar_prefetch = 0 : i64, scratch_operands = 0 : i64, tpu.core_type = #tpu.core_type<tc>, window_params = [{transform_indices = @transform_0, window_bounds = array<i64: 16, 32>}, {pipeline_mode = #tpu.pipeline_mode<synchronous>, transform_indices = @transform_1, window_bounds = array<i64: 32, 64>}, {pipeline_mode = #tpu.pipeline_mode<synchronous>, transform_indices = @transform_2, window_bounds = array<i64: 1, 64>}, {pipeline_mode = #tpu.pipeline_mode<synchronous>, transform_indices = @transform_3, window_bounds = array<i64: 64, 32>}, {pipeline_mode = #tpu.pipeline_mode<synchronous>, transform_indices = @transform_4, window_bounds = array<i64: 1, 32>}, {pipeline_mode = #tpu.pipeline_mode<synchronous>, transform_indices = @transform_5, window_bounds = array<i64: 1, 32>}, {pipeline_mode = #tpu.pipeline_mode<synchronous>, transform_indices = @transform_6, window_bounds = array<i64: 1, 32>}, {transform_indices = @transform_7, window_bounds = array<i64: 16, 32>}]} {
    %c0 = arith.constant 0 : index
    %c0_0 = arith.constant 0 : index
    %0 = vector.load %arg1[%c0, %c0_0] : memref<16x32xf32, #tpu.memory_space<vmem>>, vector<16x32xf32>
    %c0_1 = arith.constant 0 : index
    %c0_2 = arith.constant 0 : index
    %1 = vector.load %arg2[%c0_1, %c0_2] : memref<32x64xf32, #tpu.memory_space<vmem>>, vector<32x64xf32>
    %2 = arith.truncf %0 : vector<16x32xf32> to vector<16x32xbf16>
    %3 = arith.truncf %1 : vector<32x64xf32> to vector<32x64xbf16>
    %cst = arith.constant dense<0.000000e+00> : vector<16x64xf32>
    %4 = tpu.matmul %2, %3, %cst {dimension_numbers = #tpu.dot_dimension_numbers<[1], [0], [0], [1], [0, 0, 1, 1], [], []>} : vector<16x32xbf16>, vector<32x64xbf16>, vector<16x64xf32> -> vector<16x64xf32>
    %c0_3 = arith.constant 0 : index
    %c0_4 = arith.constant 0 : index
    %5 = vector.load %arg3[%c0_3, %c0_4] : memref<1x64xf32, #tpu.memory_space<vmem>>, vector<1x64xf32>
    %6 = vector.broadcast %5 : vector<1x64xf32> to vector<16x64xf32>
    %7 = arith.addf %4, %6 : vector<16x64xf32>
    %cst_5 = arith.constant 0.000000e+00 : f32
    %8 = vector.broadcast %cst_5 : f32 to vector<16x64xf32>
    %9 = arith.maximumf %7, %8 : vector<16x64xf32>
    %c0_6 = arith.constant 0 : index
    %c0_7 = arith.constant 0 : index
    %10 = vector.load %arg4[%c0_6, %c0_7] : memref<64x32xf32, #tpu.memory_space<vmem>>, vector<64x32xf32>
    %11 = arith.truncf %9 : vector<16x64xf32> to vector<16x64xbf16>
    %12 = arith.truncf %10 : vector<64x32xf32> to vector<64x32xbf16>
    %cst_8 = arith.constant dense<0.000000e+00> : vector<16x32xf32>
    %13 = tpu.matmul %11, %12, %cst_8 {dimension_numbers = #tpu.dot_dimension_numbers<[1], [0], [0], [1], [0, 0, 1, 1], [], []>} : vector<16x64xbf16>, vector<64x32xbf16>, vector<16x32xf32> -> vector<16x32xf32>
    %c0_9 = arith.constant 0 : index
    %c0_10 = arith.constant 0 : index
    %14 = vector.load %arg5[%c0_9, %c0_10] : memref<1x32xf32, #tpu.memory_space<vmem>>, vector<1x32xf32>
    %15 = vector.broadcast %14 : vector<1x32xf32> to vector<16x32xf32>
    %16 = arith.addf %13, %15 : vector<16x32xf32>
    %17 = arith.addf %0, %16 : vector<16x32xf32>
    %c0_11 = arith.constant 0 : index
    %c0_12 = arith.constant 0 : index
    %18 = vector.load %arg6[%c0_11, %c0_12] : memref<1x32xf32, #tpu.memory_space<vmem>>, vector<1x32xf32>
    %c0_13 = arith.constant 0 : index
    %c0_14 = arith.constant 0 : index
    %19 = vector.load %arg7[%c0_13, %c0_14] : memref<1x32xf32, #tpu.memory_space<vmem>>, vector<1x32xf32>
    %cst_15 = arith.constant dense<0.000000e+00> : vector<16xf32>
    %20 = vector.multi_reduction <add>, %17, %cst_15 [1] : vector<16x32xf32> to vector<16xf32>
    %21 = vector.shape_cast %20 : vector<16xf32> to vector<16x1xf32>
    %cst_16 = arith.constant 3.200000e+01 : f32
    %22 = vector.broadcast %cst_16 : f32 to vector<16x1xf32>
    %23 = arith.divf %21, %22 : vector<16x1xf32>
    %24 = vector.broadcast %23 : vector<16x1xf32> to vector<16x32xf32>
    %25 = arith.subf %17, %24 : vector<16x32xf32>
    %26 = arith.mulf %25, %25 : vector<16x32xf32>
    %cst_17 = arith.constant dense<0.000000e+00> : vector<16xf32>
    %27 = vector.multi_reduction <add>, %26, %cst_17 [1] : vector<16x32xf32> to vector<16xf32>
    %28 = vector.shape_cast %27 : vector<16xf32> to vector<16x1xf32>
    %cst_18 = arith.constant 3.200000e+01 : f32
    %29 = vector.broadcast %cst_18 : f32 to vector<16x1xf32>
    %30 = arith.divf %28, %29 : vector<16x1xf32>
    %cst_19 = arith.constant 9.99999974E-6 : f32
    %31 = vector.broadcast %cst_19 : f32 to vector<16x1xf32>
    %32 = arith.addf %30, %31 : vector<16x1xf32>
    %33 = math.rsqrt %32 : vector<16x1xf32>
    %34 = vector.broadcast %33 : vector<16x1xf32> to vector<16x32xf32>
    %35 = arith.mulf %25, %34 : vector<16x32xf32>
    %36 = vector.broadcast %18 : vector<1x32xf32> to vector<16x32xf32>
    %37 = arith.mulf %35, %36 : vector<16x32xf32>
    %38 = vector.broadcast %19 : vector<1x32xf32> to vector<16x32xf32>
    %39 = arith.addf %37, %38 : vector<16x32xf32>
    %c0_20 = arith.constant 0 : index
    %c0_21 = arith.constant 0 : index
    %40 = vector.load %arg8[%c0_20, %c0_21] : memref<16x32xf32, #tpu.memory_space<vmem>>, vector<16x32xf32>
    tpu.vector_store %arg8[%c0_20, %c0_21], %39 {strides = array<i32>} : memref<16x32xf32, #tpu.memory_space<vmem>>, vector<16x32xf32>,
    return
  }
  func.func @transform_0(%arg0: i32) -> (i32, i32) {
    %c0_i32 = arith.constant 0 : i32
    %c0_i32_0 = arith.constant 0 : i32
    return %arg0, %c0_i32 : i32, i32
  }
  func.func @transform_1(%arg0: i32) -> (i32, i32) {
    %c0_i32 = arith.constant 0 : i32
    %c0_i32_0 = arith.constant 0 : i32
    %c0_i32_1 = arith.constant 0 : i32
    return %c0_i32, %c0_i32_0 : i32, i32
  }
  func.func @transform_2(%arg0: i32) -> (i32, i32) {
    %c0_i32 = arith.constant 0 : i32
    %c0_i32_0 = arith.constant 0 : i32
    %c0_i32_1 = arith.constant 0 : i32
    return %c0_i32, %c0_i32_0 : i32, i32
  }
  func.func @transform_3(%arg0: i32) -> (i32, i32) {
    %c0_i32 = arith.constant 0 : i32
    %c0_i32_0 = arith.constant 0 : i32
    %c0_i32_1 = arith.constant 0 : i32
    return %c0_i32, %c0_i32_0 : i32, i32
  }
  func.func @transform_4(%arg0: i32) -> (i32, i32) {
    %c0_i32 = arith.constant 0 : i32
    %c0_i32_0 = arith.constant 0 : i32
    %c0_i32_1 = arith.constant 0 : i32
    return %c0_i32, %c0_i32_0 : i32, i32
  }
  func.func @transform_5(%arg0: i32) -> (i32, i32) {
    %c0_i32 = arith.constant 0 : i32
    %c0_i32_0 = arith.constant 0 : i32
    %c0_i32_1 = arith.constant 0 : i32
    return %c0_i32, %c0_i32_0 : i32, i32
  }
  func.func @transform_6(%arg0: i32) -> (i32, i32) {
    %c0_i32 = arith.constant 0 : i32
    %c0_i32_0 = arith.constant 0 : i32
    %c0_i32_1 = arith.constant 0 : i32
    return %c0_i32, %c0_i32_0 : i32, i32
  }
  func.func @transform_7(%arg0: i32) -> (i32, i32) {
    %c0_i32 = arith.constant 0 : i32
    %c0_i32_0 = arith.constant 0 : i32
    return %arg0, %c0_i32 : i32, i32
  }
}

module attributes {stable_mosaic.version = 11 : i64} {
  func.func @_mha_ln_kernel(%arg0: i32, %arg1: memref<1x8x32xf32, #tpu.memory_space<vmem>>, %arg2: memref<1x8x32xf32, #tpu.memory_space<vmem>>, %arg3: memref<32x32xf32, #tpu.memory_space<vmem>>, %arg4: memref<1x32xf32, #tpu.memory_space<vmem>>, %arg5: memref<32x32xf32, #tpu.memory_space<vmem>>, %arg6: memref<1x32xf32, #tpu.memory_space<vmem>>, %arg7: memref<32x32xf32, #tpu.memory_space<vmem>>, %arg8: memref<1x32xf32, #tpu.memory_space<vmem>>, %arg9: memref<32x32xf32, #tpu.memory_space<vmem>>, %arg10: memref<1x32xf32, #tpu.memory_space<vmem>>, %arg11: memref<1x32xf32, #tpu.memory_space<vmem>>, %arg12: memref<1x32xf32, #tpu.memory_space<vmem>>, %arg13: memref<1x8x32xf32, #tpu.memory_space<vmem>>) attributes {dimension_semantics = [#tpu.dimension_semantics<parallel>], iteration_bounds = array<i64: 2>, scalar_prefetch = 0 : i64, scratch_operands = 0 : i64, tpu.core_type = #tpu.core_type<tc>, window_params = [{transform_indices = @transform_0, window_bounds = array<i64: 1, 8, 32>}, {transform_indices = @transform_1, window_bounds = array<i64: 1, 8, 32>}, {pipeline_mode = #tpu.pipeline_mode<synchronous>, transform_indices = @transform_2, window_bounds = array<i64: 32, 32>}, {pipeline_mode = #tpu.pipeline_mode<synchronous>, transform_indices = @transform_3, window_bounds = array<i64: 1, 32>}, {pipeline_mode = #tpu.pipeline_mode<synchronous>, transform_indices = @transform_4, window_bounds = array<i64: 32, 32>}, {pipeline_mode = #tpu.pipeline_mode<synchronous>, transform_indices = @transform_5, window_bounds = array<i64: 1, 32>}, {pipeline_mode = #tpu.pipeline_mode<synchronous>, transform_indices = @transform_6, window_bounds = array<i64: 32, 32>}, {pipeline_mode = #tpu.pipeline_mode<synchronous>, transform_indices = @transform_7, window_bounds = array<i64: 1, 32>}, {pipeline_mode = #tpu.pipeline_mode<synchronous>, transform_indices = @transform_8, window_bounds = array<i64: 32, 32>}, {pipeline_mode = #tpu.pipeline_mode<synchronous>, transform_indices = @transform_9, window_bounds = array<i64: 1, 32>}, {pipeline_mode = #tpu.pipeline_mode<synchronous>, transform_indices = @transform_10, window_bounds = array<i64: 1, 32>}, {pipeline_mode = #tpu.pipeline_mode<synchronous>, transform_indices = @transform_11, window_bounds = array<i64: 1, 32>}, {transform_indices = @transform_12, window_bounds = array<i64: 1, 8, 32>}]} {
    %c0 = arith.constant 0 : index
    %c0_0 = arith.constant 0 : index
    %c0_1 = arith.constant 0 : index
    %0 = vector.load %arg1[%c0, %c0_0, %c0_1] : memref<1x8x32xf32, #tpu.memory_space<vmem>>, vector<1x8x32xf32>
    %1 = vector.shape_cast %0 : vector<1x8x32xf32> to vector<8x32xf32>
    %c0_2 = arith.constant 0 : index
    %c0_3 = arith.constant 0 : index
    %c0_4 = arith.constant 0 : index
    %2 = vector.load %arg2[%c0_2, %c0_3, %c0_4] : memref<1x8x32xf32, #tpu.memory_space<vmem>>, vector<1x8x32xf32>
    %3 = vector.shape_cast %2 : vector<1x8x32xf32> to vector<8x32xf32>
    %c0_5 = arith.constant 0 : index
    %c0_6 = arith.constant 0 : index
    %4 = vector.load %arg3[%c0_5, %c0_6] : memref<32x32xf32, #tpu.memory_space<vmem>>, vector<32x32xf32>
    %5 = arith.truncf %1 : vector<8x32xf32> to vector<8x32xbf16>
    %6 = arith.truncf %4 : vector<32x32xf32> to vector<32x32xbf16>
    %cst = arith.constant dense<0.000000e+00> : vector<8x32xf32>
    %7 = tpu.matmul %5, %6, %cst {dimension_numbers = #tpu.dot_dimension_numbers<[1], [0], [0], [1], [0, 0, 1, 1], [], []>} : vector<8x32xbf16>, vector<32x32xbf16>, vector<8x32xf32> -> vector<8x32xf32>
    %c0_7 = arith.constant 0 : index
    %c0_8 = arith.constant 0 : index
    %8 = vector.load %arg4[%c0_7, %c0_8] : memref<1x32xf32, #tpu.memory_space<vmem>>, vector<1x32xf32>
    %9 = vector.broadcast %8 : vector<1x32xf32> to vector<8x32xf32>
    %10 = arith.addf %7, %9 : vector<8x32xf32>
    %cst_9 = arith.constant 2.500000e-01 : f32
    %11 = vector.broadcast %cst_9 : f32 to vector<8x32xf32>
    %12 = arith.mulf %10, %11 : vector<8x32xf32>
    %c0_10 = arith.constant 0 : index
    %c0_11 = arith.constant 0 : index
    %13 = vector.load %arg5[%c0_10, %c0_11] : memref<32x32xf32, #tpu.memory_space<vmem>>, vector<32x32xf32>
    %14 = arith.truncf %3 : vector<8x32xf32> to vector<8x32xbf16>
    %15 = arith.truncf %13 : vector<32x32xf32> to vector<32x32xbf16>
    %cst_12 = arith.constant dense<0.000000e+00> : vector<8x32xf32>
    %16 = tpu.matmul %14, %15, %cst_12 {dimension_numbers = #tpu.dot_dimension_numbers<[1], [0], [0], [1], [0, 0, 1, 1], [], []>} : vector<8x32xbf16>, vector<32x32xbf16>, vector<8x32xf32> -> vector<8x32xf32>
    %c0_13 = arith.constant 0 : index
    %c0_14 = arith.constant 0 : index
    %17 = vector.load %arg6[%c0_13, %c0_14] : memref<1x32xf32, #tpu.memory_space<vmem>>, vector<1x32xf32>
    %18 = vector.broadcast %17 : vector<1x32xf32> to vector<8x32xf32>
    %19 = arith.addf %16, %18 : vector<8x32xf32>
    %c0_15 = arith.constant 0 : index
    %c0_16 = arith.constant 0 : index
    %20 = vector.load %arg7[%c0_15, %c0_16] : memref<32x32xf32, #tpu.memory_space<vmem>>, vector<32x32xf32>
    %21 = arith.truncf %3 : vector<8x32xf32> to vector<8x32xbf16>
    %22 = arith.truncf %20 : vector<32x32xf32> to vector<32x32xbf16>
    %cst_17 = arith.constant dense<0.000000e+00> : vector<8x32xf32>
    %23 = tpu.matmul %21, %22, %cst_17 {dimension_numbers = #tpu.dot_dimension_numbers<[1], [0], [0], [1], [0, 0, 1, 1], [], []>} : vector<8x32xbf16>, vector<32x32xbf16>, vector<8x32xf32> -> vector<8x32xf32>
    %c0_18 = arith.constant 0 : index
    %c0_19 = arith.constant 0 : index
    %24 = vector.load %arg8[%c0_18, %c0_19] : memref<1x32xf32, #tpu.memory_space<vmem>>, vector<1x32xf32>
    %25 = vector.broadcast %24 : vector<1x32xf32> to vector<8x32xf32>
    %26 = arith.addf %23, %25 : vector<8x32xf32>
    %27 = vector.extract_strided_slice %12 {offsets = [0, 0], sizes = [8, 16], strides = [1, 1]} : vector<8x32xf32> to vector<8x16xf32>
    %28 = vector.extract_strided_slice %19 {offsets = [0, 0], sizes = [8, 16], strides = [1, 1]} : vector<8x32xf32> to vector<8x16xf32>
    %29 = vector.extract_strided_slice %26 {offsets = [0, 0], sizes = [8, 16], strides = [1, 1]} : vector<8x32xf32> to vector<8x16xf32>
    %30 = arith.truncf %27 : vector<8x16xf32> to vector<8x16xbf16>
    %31 = arith.truncf %28 : vector<8x16xf32> to vector<8x16xbf16>
    %cst_20 = arith.constant dense<0.000000e+00> : vector<8x8xf32>
    %32 = tpu.matmul %30, %31, %cst_20 {dimension_numbers = #tpu.dot_dimension_numbers<[1], [1], [0], [0], [0, 0, 1, 0], [], []>} : vector<8x16xbf16>, vector<8x16xbf16>, vector<8x8xf32> -> vector<8x8xf32>
    %cst_21 = arith.constant dense<0xFF800000> : vector<8xf32>
    %33 = vector.multi_reduction <maximumf>, %32, %cst_21 [1] : vector<8x8xf32> to vector<8xf32>
    %34 = vector.shape_cast %33 : vector<8xf32> to vector<8x1xf32>
    %35 = vector.broadcast %34 : vector<8x1xf32> to vector<8x8xf32>
    %36 = arith.subf %32, %35 : vector<8x8xf32>
    %37 = math.exp %36 : vector<8x8xf32>
    %cst_22 = arith.constant dense<0.000000e+00> : vector<8xf32>
    %38 = vector.multi_reduction <add>, %37, %cst_22 [1] : vector<8x8xf32> to vector<8xf32>
    %39 = vector.shape_cast %38 : vector<8xf32> to vector<8x1xf32>
    %40 = tpu.reciprocal %39 {approx = true} : vector<8x1xf32> -> vector<8x1xf32>
    %41 = vector.broadcast %40 : vector<8x1xf32> to vector<8x8xf32>
    %42 = arith.mulf %37, %41 : vector<8x8xf32>
    %43 = arith.truncf %42 : vector<8x8xf32> to vector<8x8xbf16>
    %44 = arith.truncf %29 : vector<8x16xf32> to vector<8x16xbf16>
    %cst_23 = arith.constant dense<0.000000e+00> : vector<8x16xf32>
    %45 = tpu.matmul %43, %44, %cst_23 {dimension_numbers = #tpu.dot_dimension_numbers<[1], [0], [0], [1], [0, 0, 1, 1], [], []>} : vector<8x8xbf16>, vector<8x16xbf16>, vector<8x16xf32> -> vector<8x16xf32>
    %46 = vector.extract_strided_slice %12 {offsets = [0, 16], sizes = [8, 16], strides = [1, 1]} : vector<8x32xf32> to vector<8x16xf32>
    %47 = vector.extract_strided_slice %19 {offsets = [0, 16], sizes = [8, 16], strides = [1, 1]} : vector<8x32xf32> to vector<8x16xf32>
    %48 = vector.extract_strided_slice %26 {offsets = [0, 16], sizes = [8, 16], strides = [1, 1]} : vector<8x32xf32> to vector<8x16xf32>
    %49 = arith.truncf %46 : vector<8x16xf32> to vector<8x16xbf16>
    %50 = arith.truncf %47 : vector<8x16xf32> to vector<8x16xbf16>
    %cst_24 = arith.constant dense<0.000000e+00> : vector<8x8xf32>
    %51 = tpu.matmul %49, %50, %cst_24 {dimension_numbers = #tpu.dot_dimension_numbers<[1], [1], [0], [0], [0, 0, 1, 0], [], []>} : vector<8x16xbf16>, vector<8x16xbf16>, vector<8x8xf32> -> vector<8x8xf32>
    %cst_25 = arith.constant dense<0xFF800000> : vector<8xf32>
    %52 = vector.multi_reduction <maximumf>, %51, %cst_25 [1] : vector<8x8xf32> to vector<8xf32>
    %53 = vector.shape_cast %52 : vector<8xf32> to vector<8x1xf32>
    %54 = vector.broadcast %53 : vector<8x1xf32> to vector<8x8xf32>
    %55 = arith.subf %51, %54 : vector<8x8xf32>
    %56 = math.exp %55 : vector<8x8xf32>
    %cst_26 = arith.constant dense<0.000000e+00> : vector<8xf32>
    %57 = vector.multi_reduction <add>, %56, %cst_26 [1] : vector<8x8xf32> to vector<8xf32>
    %58 = vector.shape_cast %57 : vector<8xf32> to vector<8x1xf32>
    %59 = tpu.reciprocal %58 {approx = true} : vector<8x1xf32> -> vector<8x1xf32>
    %60 = vector.broadcast %59 : vector<8x1xf32> to vector<8x8xf32>
    %61 = arith.mulf %56, %60 : vector<8x8xf32>
    %62 = arith.truncf %61 : vector<8x8xf32> to vector<8x8xbf16>
    %63 = arith.truncf %48 : vector<8x16xf32> to vector<8x16xbf16>
    %cst_27 = arith.constant dense<0.000000e+00> : vector<8x16xf32>
    %64 = tpu.matmul %62, %63, %cst_27 {dimension_numbers = #tpu.dot_dimension_numbers<[1], [0], [0], [1], [0, 0, 1, 1], [], []>} : vector<8x8xbf16>, vector<8x16xbf16>, vector<8x16xf32> -> vector<8x16xf32>
    %65 = tpu.concatenate %45, %64 in 1 : vector<8x16xf32>, vector<8x16xf32> -> vector<8x32xf32>
    %c0_28 = arith.constant 0 : index
    %c0_29 = arith.constant 0 : index
    %66 = vector.load %arg9[%c0_28, %c0_29] : memref<32x32xf32, #tpu.memory_space<vmem>>, vector<32x32xf32>
    %67 = arith.truncf %65 : vector<8x32xf32> to vector<8x32xbf16>
    %68 = arith.truncf %66 : vector<32x32xf32> to vector<32x32xbf16>
    %cst_30 = arith.constant dense<0.000000e+00> : vector<8x32xf32>
    %69 = tpu.matmul %67, %68, %cst_30 {dimension_numbers = #tpu.dot_dimension_numbers<[1], [0], [0], [1], [0, 0, 1, 1], [], []>} : vector<8x32xbf16>, vector<32x32xbf16>, vector<8x32xf32> -> vector<8x32xf32>
    %c0_31 = arith.constant 0 : index
    %c0_32 = arith.constant 0 : index
    %70 = vector.load %arg10[%c0_31, %c0_32] : memref<1x32xf32, #tpu.memory_space<vmem>>, vector<1x32xf32>
    %71 = vector.broadcast %70 : vector<1x32xf32> to vector<8x32xf32>
    %72 = arith.addf %69, %71 : vector<8x32xf32>
    %73 = arith.addf %1, %72 : vector<8x32xf32>
    %c0_33 = arith.constant 0 : index
    %c0_34 = arith.constant 0 : index
    %74 = vector.load %arg11[%c0_33, %c0_34] : memref<1x32xf32, #tpu.memory_space<vmem>>, vector<1x32xf32>
    %c0_35 = arith.constant 0 : index
    %c0_36 = arith.constant 0 : index
    %75 = vector.load %arg12[%c0_35, %c0_36] : memref<1x32xf32, #tpu.memory_space<vmem>>, vector<1x32xf32>
    %cst_37 = arith.constant dense<0.000000e+00> : vector<8xf32>
    %76 = vector.multi_reduction <add>, %73, %cst_37 [1] : vector<8x32xf32> to vector<8xf32>
    %77 = vector.shape_cast %76 : vector<8xf32> to vector<8x1xf32>
    %cst_38 = arith.constant 3.200000e+01 : f32
    %78 = vector.broadcast %cst_38 : f32 to vector<8x1xf32>
    %79 = arith.divf %77, %78 : vector<8x1xf32>
    %80 = vector.broadcast %79 : vector<8x1xf32> to vector<8x32xf32>
    %81 = arith.subf %73, %80 : vector<8x32xf32>
    %82 = arith.mulf %81, %81 : vector<8x32xf32>
    %cst_39 = arith.constant dense<0.000000e+00> : vector<8xf32>
    %83 = vector.multi_reduction <add>, %82, %cst_39 [1] : vector<8x32xf32> to vector<8xf32>
    %84 = vector.shape_cast %83 : vector<8xf32> to vector<8x1xf32>
    %cst_40 = arith.constant 3.200000e+01 : f32
    %85 = vector.broadcast %cst_40 : f32 to vector<8x1xf32>
    %86 = arith.divf %84, %85 : vector<8x1xf32>
    %cst_41 = arith.constant 9.99999974E-6 : f32
    %87 = vector.broadcast %cst_41 : f32 to vector<8x1xf32>
    %88 = arith.addf %86, %87 : vector<8x1xf32>
    %89 = math.rsqrt %88 : vector<8x1xf32>
    %90 = vector.broadcast %89 : vector<8x1xf32> to vector<8x32xf32>
    %91 = arith.mulf %81, %90 : vector<8x32xf32>
    %92 = vector.broadcast %74 : vector<1x32xf32> to vector<8x32xf32>
    %93 = arith.mulf %91, %92 : vector<8x32xf32>
    %94 = vector.broadcast %75 : vector<1x32xf32> to vector<8x32xf32>
    %95 = arith.addf %93, %94 : vector<8x32xf32>
    %c0_42 = arith.constant 0 : index
    %c0_43 = arith.constant 0 : index
    %c0_44 = arith.constant 0 : index
    %96 = vector.load %arg13[%c0_42, %c0_43, %c0_44] : memref<1x8x32xf32, #tpu.memory_space<vmem>>, vector<1x8x32xf32>
    %97 = vector.shape_cast %96 : vector<1x8x32xf32> to vector<8x32xf32>
    %98 = vector.shape_cast %95 : vector<8x32xf32> to vector<1x8x32xf32>
    tpu.vector_store %arg13[%c0_42, %c0_43, %c0_44], %98 {strides = array<i32>} : memref<1x8x32xf32, #tpu.memory_space<vmem>>, vector<1x8x32xf32>,
    return
  }
  func.func @transform_0(%arg0: i32) -> (i32, i32, i32) {
    %c0_i32 = arith.constant 0 : i32
    %c0_i32_0 = arith.constant 0 : i32
    %c0_i32_1 = arith.constant 0 : i32
    return %arg0, %c0_i32, %c0_i32_0 : i32, i32, i32
  }
  func.func @transform_1(%arg0: i32) -> (i32, i32, i32) {
    %c0_i32 = arith.constant 0 : i32
    %c0_i32_0 = arith.constant 0 : i32
    %c0_i32_1 = arith.constant 0 : i32
    return %arg0, %c0_i32, %c0_i32_0 : i32, i32, i32
  }
  func.func @transform_2(%arg0: i32) -> (i32, i32) {
    %c0_i32 = arith.constant 0 : i32
    %c0_i32_0 = arith.constant 0 : i32
    %c0_i32_1 = arith.constant 0 : i32
    return %c0_i32, %c0_i32_0 : i32, i32
  }
  func.func @transform_3(%arg0: i32) -> (i32, i32) {
    %c0_i32 = arith.constant 0 : i32
    %c0_i32_0 = arith.constant 0 : i32
    %c0_i32_1 = arith.constant 0 : i32
    return %c0_i32, %c0_i32_0 : i32, i32
  }
  func.func @transform_4(%arg0: i32) -> (i32, i32) {
    %c0_i32 = arith.constant 0 : i32
    %c0_i32_0 = arith.constant 0 : i32
    %c0_i32_1 = arith.constant 0 : i32
    return %c0_i32, %c0_i32_0 : i32, i32
  }
  func.func @transform_5(%arg0: i32) -> (i32, i32) {
    %c0_i32 = arith.constant 0 : i32
    %c0_i32_0 = arith.constant 0 : i32
    %c0_i32_1 = arith.constant 0 : i32
    return %c0_i32, %c0_i32_0 : i32, i32
  }
  func.func @transform_6(%arg0: i32) -> (i32, i32) {
    %c0_i32 = arith.constant 0 : i32
    %c0_i32_0 = arith.constant 0 : i32
    %c0_i32_1 = arith.constant 0 : i32
    return %c0_i32, %c0_i32_0 : i32, i32
  }
  func.func @transform_7(%arg0: i32) -> (i32, i32) {
    %c0_i32 = arith.constant 0 : i32
    %c0_i32_0 = arith.constant 0 : i32
    %c0_i32_1 = arith.constant 0 : i32
    return %c0_i32, %c0_i32_0 : i32, i32
  }
  func.func @transform_8(%arg0: i32) -> (i32, i32) {
    %c0_i32 = arith.constant 0 : i32
    %c0_i32_0 = arith.constant 0 : i32
    %c0_i32_1 = arith.constant 0 : i32
    return %c0_i32, %c0_i32_0 : i32, i32
  }
  func.func @transform_9(%arg0: i32) -> (i32, i32) {
    %c0_i32 = arith.constant 0 : i32
    %c0_i32_0 = arith.constant 0 : i32
    %c0_i32_1 = arith.constant 0 : i32
    return %c0_i32, %c0_i32_0 : i32, i32
  }
  func.func @transform_10(%arg0: i32) -> (i32, i32) {
    %c0_i32 = arith.constant 0 : i32
    %c0_i32_0 = arith.constant 0 : i32
    %c0_i32_1 = arith.constant 0 : i32
    return %c0_i32, %c0_i32_0 : i32, i32
  }
  func.func @transform_11(%arg0: i32) -> (i32, i32) {
    %c0_i32 = arith.constant 0 : i32
    %c0_i32_0 = arith.constant 0 : i32
    %c0_i32_1 = arith.constant 0 : i32
    return %c0_i32, %c0_i32_0 : i32, i32
  }
  func.func @transform_12(%arg0: i32) -> (i32, i32, i32) {
    %c0_i32 = arith.constant 0 : i32
    %c0_i32_0 = arith.constant 0 : i32
    %c0_i32_1 = arith.constant 0 : i32
    return %arg0, %c0_i32, %c0_i32_0 : i32, i32, i32
  }
}

module attributes {stable_mosaic.version = 11 : i64} {
  func.func @_mha_ln_kernel(%arg0: i32, %arg1: memref<1x5x32xf32, #tpu.memory_space<vmem>>, %arg2: memref<1x5x32xf32, #tpu.memory_space<vmem>>, %arg3: memref<32x32xf32, #tpu.memory_space<vmem>>, %arg4: memref<1x32xf32, #tpu.memory_space<vmem>>, %arg5: memref<32x32xf32, #tpu.memory_space<vmem>>, %arg6: memref<1x32xf32, #tpu.memory_space<vmem>>, %arg7: memref<32x32xf32, #tpu.memory_space<vmem>>, %arg8: memref<1x32xf32, #tpu.memory_space<vmem>>, %arg9: memref<32x32xf32, #tpu.memory_space<vmem>>, %arg10: memref<1x32xf32, #tpu.memory_space<vmem>>, %arg11: memref<1x32xf32, #tpu.memory_space<vmem>>, %arg12: memref<1x32xf32, #tpu.memory_space<vmem>>, %arg13: memref<1x5x32xf32, #tpu.memory_space<vmem>>) attributes {dimension_semantics = [#tpu.dimension_semantics<parallel>], iteration_bounds = array<i64: 2>, scalar_prefetch = 0 : i64, scratch_operands = 0 : i64, tpu.core_type = #tpu.core_type<tc>, window_params = [{transform_indices = @transform_0, window_bounds = array<i64: 1, 5, 32>}, {transform_indices = @transform_1, window_bounds = array<i64: 1, 5, 32>}, {pipeline_mode = #tpu.pipeline_mode<synchronous>, transform_indices = @transform_2, window_bounds = array<i64: 32, 32>}, {pipeline_mode = #tpu.pipeline_mode<synchronous>, transform_indices = @transform_3, window_bounds = array<i64: 1, 32>}, {pipeline_mode = #tpu.pipeline_mode<synchronous>, transform_indices = @transform_4, window_bounds = array<i64: 32, 32>}, {pipeline_mode = #tpu.pipeline_mode<synchronous>, transform_indices = @transform_5, window_bounds = array<i64: 1, 32>}, {pipeline_mode = #tpu.pipeline_mode<synchronous>, transform_indices = @transform_6, window_bounds = array<i64: 32, 32>}, {pipeline_mode = #tpu.pipeline_mode<synchronous>, transform_indices = @transform_7, window_bounds = array<i64: 1, 32>}, {pipeline_mode = #tpu.pipeline_mode<synchronous>, transform_indices = @transform_8, window_bounds = array<i64: 32, 32>}, {pipeline_mode = #tpu.pipeline_mode<synchronous>, transform_indices = @transform_9, window_bounds = array<i64: 1, 32>}, {pipeline_mode = #tpu.pipeline_mode<synchronous>, transform_indices = @transform_10, window_bounds = array<i64: 1, 32>}, {pipeline_mode = #tpu.pipeline_mode<synchronous>, transform_indices = @transform_11, window_bounds = array<i64: 1, 32>}, {transform_indices = @transform_12, window_bounds = array<i64: 1, 5, 32>}]} {
    %c0 = arith.constant 0 : index
    %c0_0 = arith.constant 0 : index
    %c0_1 = arith.constant 0 : index
    %0 = vector.load %arg1[%c0, %c0_0, %c0_1] : memref<1x5x32xf32, #tpu.memory_space<vmem>>, vector<1x5x32xf32>
    %1 = vector.shape_cast %0 : vector<1x5x32xf32> to vector<5x32xf32>
    %c0_2 = arith.constant 0 : index
    %c0_3 = arith.constant 0 : index
    %c0_4 = arith.constant 0 : index
    %2 = vector.load %arg2[%c0_2, %c0_3, %c0_4] : memref<1x5x32xf32, #tpu.memory_space<vmem>>, vector<1x5x32xf32>
    %3 = vector.shape_cast %2 : vector<1x5x32xf32> to vector<5x32xf32>
    %c0_5 = arith.constant 0 : index
    %c0_6 = arith.constant 0 : index
    %4 = vector.load %arg3[%c0_5, %c0_6] : memref<32x32xf32, #tpu.memory_space<vmem>>, vector<32x32xf32>
    %5 = arith.truncf %1 : vector<5x32xf32> to vector<5x32xbf16>
    %6 = arith.truncf %4 : vector<32x32xf32> to vector<32x32xbf16>
    %cst = arith.constant dense<0.000000e+00> : vector<5x32xf32>
    %7 = tpu.matmul %5, %6, %cst {dimension_numbers = #tpu.dot_dimension_numbers<[1], [0], [0], [1], [0, 0, 1, 1], [], []>} : vector<5x32xbf16>, vector<32x32xbf16>, vector<5x32xf32> -> vector<5x32xf32>
    %c0_7 = arith.constant 0 : index
    %c0_8 = arith.constant 0 : index
    %8 = vector.load %arg4[%c0_7, %c0_8] : memref<1x32xf32, #tpu.memory_space<vmem>>, vector<1x32xf32>
    %9 = vector.broadcast %8 : vector<1x32xf32> to vector<5x32xf32>
    %10 = arith.addf %7, %9 : vector<5x32xf32>
    %cst_9 = arith.constant 0.353553385 : f32
    %11 = vector.broadcast %cst_9 : f32 to vector<5x32xf32>
    %12 = arith.mulf %10, %11 : vector<5x32xf32>
    %c0_10 = arith.constant 0 : index
    %c0_11 = arith.constant 0 : index
    %13 = vector.load %arg5[%c0_10, %c0_11] : memref<32x32xf32, #tpu.memory_space<vmem>>, vector<32x32xf32>
    %14 = arith.truncf %3 : vector<5x32xf32> to vector<5x32xbf16>
    %15 = arith.truncf %13 : vector<32x32xf32> to vector<32x32xbf16>
    %cst_12 = arith.constant dense<0.000000e+00> : vector<5x32xf32>
    %16 = tpu.matmul %14, %15, %cst_12 {dimension_numbers = #tpu.dot_dimension_numbers<[1], [0], [0], [1], [0, 0, 1, 1], [], []>} : vector<5x32xbf16>, vector<32x32xbf16>, vector<5x32xf32> -> vector<5x32xf32>
    %c0_13 = arith.constant 0 : index
    %c0_14 = arith.constant 0 : index
    %17 = vector.load %arg6[%c0_13, %c0_14] : memref<1x32xf32, #tpu.memory_space<vmem>>, vector<1x32xf32>
    %18 = vector.broadcast %17 : vector<1x32xf32> to vector<5x32xf32>
    %19 = arith.addf %16, %18 : vector<5x32xf32>
    %c0_15 = arith.constant 0 : index
    %c0_16 = arith.constant 0 : index
    %20 = vector.load %arg7[%c0_15, %c0_16] : memref<32x32xf32, #tpu.memory_space<vmem>>, vector<32x32xf32>
    %21 = arith.truncf %3 : vector<5x32xf32> to vector<5x32xbf16>
    %22 = arith.truncf %20 : vector<32x32xf32> to vector<32x32xbf16>
    %cst_17 = arith.constant dense<0.000000e+00> : vector<5x32xf32>
    %23 = tpu.matmul %21, %22, %cst_17 {dimension_numbers = #tpu.dot_dimension_numbers<[1], [0], [0], [1], [0, 0, 1, 1], [], []>} : vector<5x32xbf16>, vector<32x32xbf16>, vector<5x32xf32> -> vector<5x32xf32>
    %c0_18 = arith.constant 0 : index
    %c0_19 = arith.constant 0 : index
    %24 = vector.load %arg8[%c0_18, %c0_19] : memref<1x32xf32, #tpu.memory_space<vmem>>, vector<1x32xf32>
    %25 = vector.broadcast %24 : vector<1x32xf32> to vector<5x32xf32>
    %26 = arith.addf %23, %25 : vector<5x32xf32>
    %27 = vector.extract_strided_slice %12 {offsets = [0, 0], sizes = [5, 8], strides = [1, 1]} : vector<5x32xf32> to vector<5x8xf32>
    %28 = vector.extract_strided_slice %19 {offsets = [0, 0], sizes = [5, 8], strides = [1, 1]} : vector<5x32xf32> to vector<5x8xf32>
    %29 = vector.extract_strided_slice %26 {offsets = [0, 0], sizes = [5, 8], strides = [1, 1]} : vector<5x32xf32> to vector<5x8xf32>
    %30 = arith.truncf %27 : vector<5x8xf32> to vector<5x8xbf16>
    %31 = arith.truncf %28 : vector<5x8xf32> to vector<5x8xbf16>
    %cst_20 = arith.constant dense<0.000000e+00> : vector<5x5xf32>
    %32 = tpu.matmul %30, %31, %cst_20 {dimension_numbers = #tpu.dot_dimension_numbers<[1], [1], [0], [0], [0, 0, 1, 0], [], []>} : vector<5x8xbf16>, vector<5x8xbf16>, vector<5x5xf32> -> vector<5x5xf32>
    %cst_21 = arith.constant dense<0xFF800000> : vector<5xf32>
    %33 = vector.multi_reduction <maximumf>, %32, %cst_21 [1] : vector<5x5xf32> to vector<5xf32>
    %34 = vector.shape_cast %33 : vector<5xf32> to vector<5x1xf32>
    %35 = vector.broadcast %34 : vector<5x1xf32> to vector<5x5xf32>
    %36 = arith.subf %32, %35 : vector<5x5xf32>
    %37 = math.exp %36 : vector<5x5xf32>
    %cst_22 = arith.constant dense<0.000000e+00> : vector<5xf32>
    %38 = vector.multi_reduction <add>, %37, %cst_22 [1] : vector<5x5xf32> to vector<5xf32>
    %39 = vector.shape_cast %38 : vector<5xf32> to vector<5x1xf32>
    %40 = tpu.reciprocal %39 {approx = true} : vector<5x1xf32> -> vector<5x1xf32>
    %41 = vector.broadcast %40 : vector<5x1xf32> to vector<5x5xf32>
    %42 = arith.mulf %37, %41 : vector<5x5xf32>
    %43 = arith.truncf %42 : vector<5x5xf32> to vector<5x5xbf16>
    %44 = arith.truncf %29 : vector<5x8xf32> to vector<5x8xbf16>
    %cst_23 = arith.constant dense<0.000000e+00> : vector<5x8xf32>
    %45 = tpu.matmul %43, %44, %cst_23 {dimension_numbers = #tpu.dot_dimension_numbers<[1], [0], [0], [1], [0, 0, 1, 1], [], []>} : vector<5x5xbf16>, vector<5x8xbf16>, vector<5x8xf32> -> vector<5x8xf32>
    %46 = vector.extract_strided_slice %12 {offsets = [0, 8], sizes = [5, 8], strides = [1, 1]} : vector<5x32xf32> to vector<5x8xf32>
    %47 = vector.extract_strided_slice %19 {offsets = [0, 8], sizes = [5, 8], strides = [1, 1]} : vector<5x32xf32> to vector<5x8xf32>
    %48 = vector.extract_strided_slice %26 {offsets = [0, 8], sizes = [5, 8], strides = [1, 1]} : vector<5x32xf32> to vector<5x8xf32>
    %49 = arith.truncf %46 : vector<5x8xf32> to vector<5x8xbf16>
    %50 = arith.truncf %47 : vector<5x8xf32> to vector<5x8xbf16>
    %cst_24 = arith.constant dense<0.000000e+00> : vector<5x5xf32>
    %51 = tpu.matmul %49, %50, %cst_24 {dimension_numbers = #tpu.dot_dimension_numbers<[1], [1], [0], [0], [0, 0, 1, 0], [], []>} : vector<5x8xbf16>, vector<5x8xbf16>, vector<5x5xf32> -> vector<5x5xf32>
    %cst_25 = arith.constant dense<0xFF800000> : vector<5xf32>
    %52 = vector.multi_reduction <maximumf>, %51, %cst_25 [1] : vector<5x5xf32> to vector<5xf32>
    %53 = vector.shape_cast %52 : vector<5xf32> to vector<5x1xf32>
    %54 = vector.broadcast %53 : vector<5x1xf32> to vector<5x5xf32>
    %55 = arith.subf %51, %54 : vector<5x5xf32>
    %56 = math.exp %55 : vector<5x5xf32>
    %cst_26 = arith.constant dense<0.000000e+00> : vector<5xf32>
    %57 = vector.multi_reduction <add>, %56, %cst_26 [1] : vector<5x5xf32> to vector<5xf32>
    %58 = vector.shape_cast %57 : vector<5xf32> to vector<5x1xf32>
    %59 = tpu.reciprocal %58 {approx = true} : vector<5x1xf32> -> vector<5x1xf32>
    %60 = vector.broadcast %59 : vector<5x1xf32> to vector<5x5xf32>
    %61 = arith.mulf %56, %60 : vector<5x5xf32>
    %62 = arith.truncf %61 : vector<5x5xf32> to vector<5x5xbf16>
    %63 = arith.truncf %48 : vector<5x8xf32> to vector<5x8xbf16>
    %cst_27 = arith.constant dense<0.000000e+00> : vector<5x8xf32>
    %64 = tpu.matmul %62, %63, %cst_27 {dimension_numbers = #tpu.dot_dimension_numbers<[1], [0], [0], [1], [0, 0, 1, 1], [], []>} : vector<5x5xbf16>, vector<5x8xbf16>, vector<5x8xf32> -> vector<5x8xf32>
    %65 = vector.extract_strided_slice %12 {offsets = [0, 16], sizes = [5, 8], strides = [1, 1]} : vector<5x32xf32> to vector<5x8xf32>
    %66 = vector.extract_strided_slice %19 {offsets = [0, 16], sizes = [5, 8], strides = [1, 1]} : vector<5x32xf32> to vector<5x8xf32>
    %67 = vector.extract_strided_slice %26 {offsets = [0, 16], sizes = [5, 8], strides = [1, 1]} : vector<5x32xf32> to vector<5x8xf32>
    %68 = arith.truncf %65 : vector<5x8xf32> to vector<5x8xbf16>
    %69 = arith.truncf %66 : vector<5x8xf32> to vector<5x8xbf16>
    %cst_28 = arith.constant dense<0.000000e+00> : vector<5x5xf32>
    %70 = tpu.matmul %68, %69, %cst_28 {dimension_numbers = #tpu.dot_dimension_numbers<[1], [1], [0], [0], [0, 0, 1, 0], [], []>} : vector<5x8xbf16>, vector<5x8xbf16>, vector<5x5xf32> -> vector<5x5xf32>
    %cst_29 = arith.constant dense<0xFF800000> : vector<5xf32>
    %71 = vector.multi_reduction <maximumf>, %70, %cst_29 [1] : vector<5x5xf32> to vector<5xf32>
    %72 = vector.shape_cast %71 : vector<5xf32> to vector<5x1xf32>
    %73 = vector.broadcast %72 : vector<5x1xf32> to vector<5x5xf32>
    %74 = arith.subf %70, %73 : vector<5x5xf32>
    %75 = math.exp %74 : vector<5x5xf32>
    %cst_30 = arith.constant dense<0.000000e+00> : vector<5xf32>
    %76 = vector.multi_reduction <add>, %75, %cst_30 [1] : vector<5x5xf32> to vector<5xf32>
    %77 = vector.shape_cast %76 : vector<5xf32> to vector<5x1xf32>
    %78 = tpu.reciprocal %77 {approx = true} : vector<5x1xf32> -> vector<5x1xf32>
    %79 = vector.broadcast %78 : vector<5x1xf32> to vector<5x5xf32>
    %80 = arith.mulf %75, %79 : vector<5x5xf32>
    %81 = arith.truncf %80 : vector<5x5xf32> to vector<5x5xbf16>
    %82 = arith.truncf %67 : vector<5x8xf32> to vector<5x8xbf16>
    %cst_31 = arith.constant dense<0.000000e+00> : vector<5x8xf32>
    %83 = tpu.matmul %81, %82, %cst_31 {dimension_numbers = #tpu.dot_dimension_numbers<[1], [0], [0], [1], [0, 0, 1, 1], [], []>} : vector<5x5xbf16>, vector<5x8xbf16>, vector<5x8xf32> -> vector<5x8xf32>
    %84 = vector.extract_strided_slice %12 {offsets = [0, 24], sizes = [5, 8], strides = [1, 1]} : vector<5x32xf32> to vector<5x8xf32>
    %85 = vector.extract_strided_slice %19 {offsets = [0, 24], sizes = [5, 8], strides = [1, 1]} : vector<5x32xf32> to vector<5x8xf32>
    %86 = vector.extract_strided_slice %26 {offsets = [0, 24], sizes = [5, 8], strides = [1, 1]} : vector<5x32xf32> to vector<5x8xf32>
    %87 = arith.truncf %84 : vector<5x8xf32> to vector<5x8xbf16>
    %88 = arith.truncf %85 : vector<5x8xf32> to vector<5x8xbf16>
    %cst_32 = arith.constant dense<0.000000e+00> : vector<5x5xf32>
    %89 = tpu.matmul %87, %88, %cst_32 {dimension_numbers = #tpu.dot_dimension_numbers<[1], [1], [0], [0], [0, 0, 1, 0], [], []>} : vector<5x8xbf16>, vector<5x8xbf16>, vector<5x5xf32> -> vector<5x5xf32>
    %cst_33 = arith.constant dense<0xFF800000> : vector<5xf32>
    %90 = vector.multi_reduction <maximumf>, %89, %cst_33 [1] : vector<5x5xf32> to vector<5xf32>
    %91 = vector.shape_cast %90 : vector<5xf32> to vector<5x1xf32>
    %92 = vector.broadcast %91 : vector<5x1xf32> to vector<5x5xf32>
    %93 = arith.subf %89, %92 : vector<5x5xf32>
    %94 = math.exp %93 : vector<5x5xf32>
    %cst_34 = arith.constant dense<0.000000e+00> : vector<5xf32>
    %95 = vector.multi_reduction <add>, %94, %cst_34 [1] : vector<5x5xf32> to vector<5xf32>
    %96 = vector.shape_cast %95 : vector<5xf32> to vector<5x1xf32>
    %97 = tpu.reciprocal %96 {approx = true} : vector<5x1xf32> -> vector<5x1xf32>
    %98 = vector.broadcast %97 : vector<5x1xf32> to vector<5x5xf32>
    %99 = arith.mulf %94, %98 : vector<5x5xf32>
    %100 = arith.truncf %99 : vector<5x5xf32> to vector<5x5xbf16>
    %101 = arith.truncf %86 : vector<5x8xf32> to vector<5x8xbf16>
    %cst_35 = arith.constant dense<0.000000e+00> : vector<5x8xf32>
    %102 = tpu.matmul %100, %101, %cst_35 {dimension_numbers = #tpu.dot_dimension_numbers<[1], [0], [0], [1], [0, 0, 1, 1], [], []>} : vector<5x5xbf16>, vector<5x8xbf16>, vector<5x8xf32> -> vector<5x8xf32>
    %103 = tpu.concatenate %45, %64, %83, %102 in 1 : vector<5x8xf32>, vector<5x8xf32>, vector<5x8xf32>, vector<5x8xf32> -> vector<5x32xf32>
    %c0_36 = arith.constant 0 : index
    %c0_37 = arith.constant 0 : index
    %104 = vector.load %arg9[%c0_36, %c0_37] : memref<32x32xf32, #tpu.memory_space<vmem>>, vector<32x32xf32>
    %105 = arith.truncf %103 : vector<5x32xf32> to vector<5x32xbf16>
    %106 = arith.truncf %104 : vector<32x32xf32> to vector<32x32xbf16>
    %cst_38 = arith.constant dense<0.000000e+00> : vector<5x32xf32>
    %107 = tpu.matmul %105, %106, %cst_38 {dimension_numbers = #tpu.dot_dimension_numbers<[1], [0], [0], [1], [0, 0, 1, 1], [], []>} : vector<5x32xbf16>, vector<32x32xbf16>, vector<5x32xf32> -> vector<5x32xf32>
    %c0_39 = arith.constant 0 : index
    %c0_40 = arith.constant 0 : index
    %108 = vector.load %arg10[%c0_39, %c0_40] : memref<1x32xf32, #tpu.memory_space<vmem>>, vector<1x32xf32>
    %109 = vector.broadcast %108 : vector<1x32xf32> to vector<5x32xf32>
    %110 = arith.addf %107, %109 : vector<5x32xf32>
    %111 = arith.addf %1, %110 : vector<5x32xf32>
    %c0_41 = arith.constant 0 : index
    %c0_42 = arith.constant 0 : index
    %112 = vector.load %arg11[%c0_41, %c0_42] : memref<1x32xf32, #tpu.memory_space<vmem>>, vector<1x32xf32>
    %c0_43 = arith.constant 0 : index
    %c0_44 = arith.constant 0 : index
    %113 = vector.load %arg12[%c0_43, %c0_44] : memref<1x32xf32, #tpu.memory_space<vmem>>, vector<1x32xf32>
    %cst_45 = arith.constant dense<0.000000e+00> : vector<5xf32>
    %114 = vector.multi_reduction <add>, %111, %cst_45 [1] : vector<5x32xf32> to vector<5xf32>
    %115 = vector.shape_cast %114 : vector<5xf32> to vector<5x1xf32>
    %cst_46 = arith.constant 3.200000e+01 : f32
    %116 = vector.broadcast %cst_46 : f32 to vector<5x1xf32>
    %117 = arith.divf %115, %116 : vector<5x1xf32>
    %118 = vector.broadcast %117 : vector<5x1xf32> to vector<5x32xf32>
    %119 = arith.subf %111, %118 : vector<5x32xf32>
    %120 = arith.mulf %119, %119 : vector<5x32xf32>
    %cst_47 = arith.constant dense<0.000000e+00> : vector<5xf32>
    %121 = vector.multi_reduction <add>, %120, %cst_47 [1] : vector<5x32xf32> to vector<5xf32>
    %122 = vector.shape_cast %121 : vector<5xf32> to vector<5x1xf32>
    %cst_48 = arith.constant 3.200000e+01 : f32
    %123 = vector.broadcast %cst_48 : f32 to vector<5x1xf32>
    %124 = arith.divf %122, %123 : vector<5x1xf32>
    %cst_49 = arith.constant 9.99999974E-6 : f32
    %125 = vector.broadcast %cst_49 : f32 to vector<5x1xf32>
    %126 = arith.addf %124, %125 : vector<5x1xf32>
    %127 = math.rsqrt %126 : vector<5x1xf32>
    %128 = vector.broadcast %127 : vector<5x1xf32> to vector<5x32xf32>
    %129 = arith.mulf %119, %128 : vector<5x32xf32>
    %130 = vector.broadcast %112 : vector<1x32xf32> to vector<5x32xf32>
    %131 = arith.mulf %129, %130 : vector<5x32xf32>
    %132 = vector.broadcast %113 : vector<1x32xf32> to vector<5x32xf32>
    %133 = arith.addf %131, %132 : vector<5x32xf32>
    %c0_50 = arith.constant 0 : index
    %c0_51 = arith.constant 0 : index
    %c0_52 = arith.constant 0 : index
    %134 = vector.load %arg13[%c0_50, %c0_51, %c0_52] : memref<1x5x32xf32, #tpu.memory_space<vmem>>, vector<1x5x32xf32>
    %135 = vector.shape_cast %134 : vector<1x5x32xf32> to vector<5x32xf32>
    %136 = vector.shape_cast %133 : vector<5x32xf32> to vector<1x5x32xf32>
    tpu.vector_store %arg13[%c0_50, %c0_51, %c0_52], %136 {strides = array<i32>} : memref<1x5x32xf32, #tpu.memory_space<vmem>>, vector<1x5x32xf32>,
    return
  }
  func.func @transform_0(%arg0: i32) -> (i32, i32, i32) {
    %c0_i32 = arith.constant 0 : i32
    %c0_i32_0 = arith.constant 0 : i32
    %c0_i32_1 = arith.constant 0 : i32
    return %arg0, %c0_i32, %c0_i32_0 : i32, i32, i32
  }
  func.func @transform_1(%arg0: i32) -> (i32, i32, i32) {
    %c0_i32 = arith.constant 0 : i32
    %c0_i32_0 = arith.constant 0 : i32
    %c0_i32_1 = arith.constant 0 : i32
    return %arg0, %c0_i32, %c0_i32_0 : i32, i32, i32
  }
  func.func @transform_2(%arg0: i32) -> (i32, i32) {
    %c0_i32 = arith.constant 0 : i32
    %c0_i32_0 = arith.constant 0 : i32
    %c0_i32_1 = arith.constant 0 : i32
    return %c0_i32, %c0_i32_0 : i32, i32
  }
  func.func @transform_3(%arg0: i32) -> (i32, i32) {
    %c0_i32 = arith.constant 0 : i32
    %c0_i32_0 = arith.constant 0 : i32
    %c0_i32_1 = arith.constant 0 : i32
    return %c0_i32, %c0_i32_0 : i32, i32
  }
  func.func @transform_4(%arg0: i32) -> (i32, i32) {
    %c0_i32 = arith.constant 0 : i32
    %c0_i32_0 = arith.constant 0 : i32
    %c0_i32_1 = arith.constant 0 : i32
    return %c0_i32, %c0_i32_0 : i32, i32
  }
  func.func @transform_5(%arg0: i32) -> (i32, i32) {
    %c0_i32 = arith.constant 0 : i32
    %c0_i32_0 = arith.constant 0 : i32
    %c0_i32_1 = arith.constant 0 : i32
    return %c0_i32, %c0_i32_0 : i32, i32
  }
  func.func @transform_6(%arg0: i32) -> (i32, i32) {
    %c0_i32 = arith.constant 0 : i32
    %c0_i32_0 = arith.constant 0 : i32
    %c0_i32_1 = arith.constant 0 : i32
    return %c0_i32, %c0_i32_0 : i32, i32
  }
  func.func @transform_7(%arg0: i32) -> (i32, i32) {
    %c0_i32 = arith.constant 0 : i32
    %c0_i32_0 = arith.constant 0 : i32
    %c0_i32_1 = arith.constant 0 : i32
    return %c0_i32, %c0_i32_0 : i32, i32
  }
  func.func @transform_8(%arg0: i32) -> (i32, i32) {
    %c0_i32 = arith.constant 0 : i32
    %c0_i32_0 = arith.constant 0 : i32
    %c0_i32_1 = arith.constant 0 : i32
    return %c0_i32, %c0_i32_0 : i32, i32
  }
  func.func @transform_9(%arg0: i32) -> (i32, i32) {
    %c0_i32 = arith.constant 0 : i32
    %c0_i32_0 = arith.constant 0 : i32
    %c0_i32_1 = arith.constant 0 : i32
    return %c0_i32, %c0_i32_0 : i32, i32
  }
  func.func @transform_10(%arg0: i32) -> (i32, i32) {
    %c0_i32 = arith.constant 0 : i32
    %c0_i32_0 = arith.constant 0 : i32
    %c0_i32_1 = arith.constant 0 : i32
    return %c0_i32, %c0_i32_0 : i32, i32
  }
  func.func @transform_11(%arg0: i32) -> (i32, i32) {
    %c0_i32 = arith.constant 0 : i32
    %c0_i32_0 = arith.constant 0 : i32
    %c0_i32_1 = arith.constant 0 : i32
    return %c0_i32, %c0_i32_0 : i32, i32
  }
  func.func @transform_12(%arg0: i32) -> (i32, i32, i32) {
    %c0_i32 = arith.constant 0 : i32
    %c0_i32_0 = arith.constant 0 : i32
    %c0_i32_1 = arith.constant 0 : i32
    return %arg0, %c0_i32, %c0_i32_0 : i32, i32, i32
  }
}

module attributes {stable_mosaic.version = 11 : i64} {
  func.func @_lin_act_ln_kernel(%arg0: i32, %arg1: memref<16x32xf32, #tpu.memory_space<vmem>>, %arg2: memref<32x64xf32, #tpu.memory_space<vmem>>, %arg3: memref<1x64xf32, #tpu.memory_space<vmem>>, %arg4: memref<1x64xf32, #tpu.memory_space<vmem>>, %arg5: memref<1x64xf32, #tpu.memory_space<vmem>>, %arg6: memref<16x64xf32, #tpu.memory_space<vmem>>) attributes {dimension_semantics = [#tpu.dimension_semantics<parallel>], iteration_bounds = array<i64: 1>, scalar_prefetch = 0 : i64, scratch_operands = 0 : i64, tpu.core_type = #tpu.core_type<tc>, window_params = [{transform_indices = @transform_0, window_bounds = array<i64: 16, 32>}, {pipeline_mode = #tpu.pipeline_mode<synchronous>, transform_indices = @transform_1, window_bounds = array<i64: 32, 64>}, {pipeline_mode = #tpu.pipeline_mode<synchronous>, transform_indices = @transform_2, window_bounds = array<i64: 1, 64>}, {pipeline_mode = #tpu.pipeline_mode<synchronous>, transform_indices = @transform_3, window_bounds = array<i64: 1, 64>}, {pipeline_mode = #tpu.pipeline_mode<synchronous>, transform_indices = @transform_4, window_bounds = array<i64: 1, 64>}, {transform_indices = @transform_5, window_bounds = array<i64: 16, 64>}]} {
    %c0 = arith.constant 0 : index
    %c0_0 = arith.constant 0 : index
    %0 = vector.load %arg1[%c0, %c0_0] : memref<16x32xf32, #tpu.memory_space<vmem>>, vector<16x32xf32>
    %c0_1 = arith.constant 0 : index
    %c0_2 = arith.constant 0 : index
    %1 = vector.load %arg2[%c0_1, %c0_2] : memref<32x64xf32, #tpu.memory_space<vmem>>, vector<32x64xf32>
    %2 = arith.truncf %0 : vector<16x32xf32> to vector<16x32xbf16>
    %3 = arith.truncf %1 : vector<32x64xf32> to vector<32x64xbf16>
    %cst = arith.constant dense<0.000000e+00> : vector<16x64xf32>
    %4 = tpu.matmul %2, %3, %cst {dimension_numbers = #tpu.dot_dimension_numbers<[1], [0], [0], [1], [0, 0, 1, 1], [], []>} : vector<16x32xbf16>, vector<32x64xbf16>, vector<16x64xf32> -> vector<16x64xf32>
    %c0_3 = arith.constant 0 : index
    %c0_4 = arith.constant 0 : index
    %5 = vector.load %arg3[%c0_3, %c0_4] : memref<1x64xf32, #tpu.memory_space<vmem>>, vector<1x64xf32>
    %6 = vector.broadcast %5 : vector<1x64xf32> to vector<16x64xf32>
    %7 = arith.addf %4, %6 : vector<16x64xf32>
    %8 = math.tanh %7 : vector<16x64xf32>
    %c0_5 = arith.constant 0 : index
    %c0_6 = arith.constant 0 : index
    %9 = vector.load %arg4[%c0_5, %c0_6] : memref<1x64xf32, #tpu.memory_space<vmem>>, vector<1x64xf32>
    %c0_7 = arith.constant 0 : index
    %c0_8 = arith.constant 0 : index
    %10 = vector.load %arg5[%c0_7, %c0_8] : memref<1x64xf32, #tpu.memory_space<vmem>>, vector<1x64xf32>
    %cst_9 = arith.constant dense<0.000000e+00> : vector<16xf32>
    %11 = vector.multi_reduction <add>, %8, %cst_9 [1] : vector<16x64xf32> to vector<16xf32>
    %12 = vector.shape_cast %11 : vector<16xf32> to vector<16x1xf32>
    %cst_10 = arith.constant 6.400000e+01 : f32
    %13 = vector.broadcast %cst_10 : f32 to vector<16x1xf32>
    %14 = arith.divf %12, %13 : vector<16x1xf32>
    %15 = vector.broadcast %14 : vector<16x1xf32> to vector<16x64xf32>
    %16 = arith.subf %8, %15 : vector<16x64xf32>
    %17 = arith.mulf %16, %16 : vector<16x64xf32>
    %cst_11 = arith.constant dense<0.000000e+00> : vector<16xf32>
    %18 = vector.multi_reduction <add>, %17, %cst_11 [1] : vector<16x64xf32> to vector<16xf32>
    %19 = vector.shape_cast %18 : vector<16xf32> to vector<16x1xf32>
    %cst_12 = arith.constant 6.400000e+01 : f32
    %20 = vector.broadcast %cst_12 : f32 to vector<16x1xf32>
    %21 = arith.divf %19, %20 : vector<16x1xf32>
    %cst_13 = arith.constant 9.99999974E-6 : f32
    %22 = vector.broadcast %cst_13 : f32 to vector<16x1xf32>
    %23 = arith.addf %21, %22 : vector<16x1xf32>
    %24 = math.rsqrt %23 : vector<16x1xf32>
    %25 = vector.broadcast %24 : vector<16x1xf32> to vector<16x64xf32>
    %26 = arith.mulf %16, %25 : vector<16x64xf32>
    %27 = vector.broadcast %9 : vector<1x64xf32> to vector<16x64xf32>
    %28 = arith.mulf %26, %27 : vector<16x64xf32>
    %29 = vector.broadcast %10 : vector<1x64xf32> to vector<16x64xf32>
    %30 = arith.addf %28, %29 : vector<16x64xf32>
    %c0_14 = arith.constant 0 : index
    %c0_15 = arith.constant 0 : index
    %31 = vector.load %arg6[%c0_14, %c0_15] : memref<16x64xf32, #tpu.memory_space<vmem>>, vector<16x64xf32>
    tpu.vector_store %arg6[%c0_14, %c0_15], %30 {strides = array<i32>} : memref<16x64xf32, #tpu.memory_space<vmem>>, vector<16x64xf32>,
    return
  }
  func.func @transform_0(%arg0: i32) -> (i32, i32) {
    %c0_i32 = arith.constant 0 : i32
    %c0_i32_0 = arith.constant 0 : i32
    return %arg0, %c0_i32 : i32, i32
  }
  func.func @transform_1(%arg0: i32) -> (i32, i32) {
    %c0_i32 = arith.constant 0 : i32
    %c0_i32_0 = arith.constant 0 : i32
    %c0_i32_1 = arith.constant 0 : i32
    return %c0_i32, %c0_i32_0 : i32, i32
  }
  func.func @transform_2(%arg0: i32) -> (i32, i32) {
    %c0_i32 = arith.constant 0 : i32
    %c0_i32_0 = arith.constant 0 : i32
    %c0_i32_1 = arith.constant 0 : i32
    return %c0_i32, %c0_i32_0 : i32, i32
  }
  func.func @transform_3(%arg0: i32) -> (i32, i32) {
    %c0_i32 = arith.constant 0 : i32
    %c0_i32_0 = arith.constant 0 : i32
    %c0_i32_1 = arith.constant 0 : i32
    return %c0_i32, %c0_i32_0 : i32, i32
  }
  func.func @transform_4(%arg0: i32) -> (i32, i32) {
    %c0_i32 = arith.constant 0 : i32
    %c0_i32_0 = arith.constant 0 : i32
    %c0_i32_1 = arith.constant 0 : i32
    return %c0_i32, %c0_i32_0 : i32, i32
  }
  func.func @transform_5(%arg0: i32) -> (i32, i32) {
    %c0_i32 = arith.constant 0 : i32
    %c0_i32_0 = arith.constant 0 : i32
    return %arg0, %c0_i32 : i32, i32
  }
}

module attributes {stable_mosaic.version = 11 : i64} {
  func.func @_mha_ln_kernel(%arg0: i32, %arg1: memref<1x5x32xf32, #tpu.memory_space<vmem>>, %arg2: memref<1x8x32xf32, #tpu.memory_space<vmem>>, %arg3: memref<32x32xf32, #tpu.memory_space<vmem>>, %arg4: memref<1x32xf32, #tpu.memory_space<vmem>>, %arg5: memref<32x32xf32, #tpu.memory_space<vmem>>, %arg6: memref<1x32xf32, #tpu.memory_space<vmem>>, %arg7: memref<32x32xf32, #tpu.memory_space<vmem>>, %arg8: memref<1x32xf32, #tpu.memory_space<vmem>>, %arg9: memref<32x32xf32, #tpu.memory_space<vmem>>, %arg10: memref<1x32xf32, #tpu.memory_space<vmem>>, %arg11: memref<1x32xf32, #tpu.memory_space<vmem>>, %arg12: memref<1x32xf32, #tpu.memory_space<vmem>>, %arg13: memref<1x5x32xf32, #tpu.memory_space<vmem>>) attributes {dimension_semantics = [#tpu.dimension_semantics<parallel>], iteration_bounds = array<i64: 2>, scalar_prefetch = 0 : i64, scratch_operands = 0 : i64, tpu.core_type = #tpu.core_type<tc>, window_params = [{transform_indices = @transform_0, window_bounds = array<i64: 1, 5, 32>}, {transform_indices = @transform_1, window_bounds = array<i64: 1, 8, 32>}, {pipeline_mode = #tpu.pipeline_mode<synchronous>, transform_indices = @transform_2, window_bounds = array<i64: 32, 32>}, {pipeline_mode = #tpu.pipeline_mode<synchronous>, transform_indices = @transform_3, window_bounds = array<i64: 1, 32>}, {pipeline_mode = #tpu.pipeline_mode<synchronous>, transform_indices = @transform_4, window_bounds = array<i64: 32, 32>}, {pipeline_mode = #tpu.pipeline_mode<synchronous>, transform_indices = @transform_5, window_bounds = array<i64: 1, 32>}, {pipeline_mode = #tpu.pipeline_mode<synchronous>, transform_indices = @transform_6, window_bounds = array<i64: 32, 32>}, {pipeline_mode = #tpu.pipeline_mode<synchronous>, transform_indices = @transform_7, window_bounds = array<i64: 1, 32>}, {pipeline_mode = #tpu.pipeline_mode<synchronous>, transform_indices = @transform_8, window_bounds = array<i64: 32, 32>}, {pipeline_mode = #tpu.pipeline_mode<synchronous>, transform_indices = @transform_9, window_bounds = array<i64: 1, 32>}, {pipeline_mode = #tpu.pipeline_mode<synchronous>, transform_indices = @transform_10, window_bounds = array<i64: 1, 32>}, {pipeline_mode = #tpu.pipeline_mode<synchronous>, transform_indices = @transform_11, window_bounds = array<i64: 1, 32>}, {transform_indices = @transform_12, window_bounds = array<i64: 1, 5, 32>}]} {
    %c0 = arith.constant 0 : index
    %c0_0 = arith.constant 0 : index
    %c0_1 = arith.constant 0 : index
    %0 = vector.load %arg1[%c0, %c0_0, %c0_1] : memref<1x5x32xf32, #tpu.memory_space<vmem>>, vector<1x5x32xf32>
    %1 = vector.shape_cast %0 : vector<1x5x32xf32> to vector<5x32xf32>
    %c0_2 = arith.constant 0 : index
    %c0_3 = arith.constant 0 : index
    %c0_4 = arith.constant 0 : index
    %2 = vector.load %arg2[%c0_2, %c0_3, %c0_4] : memref<1x8x32xf32, #tpu.memory_space<vmem>>, vector<1x8x32xf32>
    %3 = vector.shape_cast %2 : vector<1x8x32xf32> to vector<8x32xf32>
    %c0_5 = arith.constant 0 : index
    %c0_6 = arith.constant 0 : index
    %4 = vector.load %arg3[%c0_5, %c0_6] : memref<32x32xf32, #tpu.memory_space<vmem>>, vector<32x32xf32>
    %5 = arith.truncf %1 : vector<5x32xf32> to vector<5x32xbf16>
    %6 = arith.truncf %4 : vector<32x32xf32> to vector<32x32xbf16>
    %cst = arith.constant dense<0.000000e+00> : vector<5x32xf32>
    %7 = tpu.matmul %5, %6, %cst {dimension_numbers = #tpu.dot_dimension_numbers<[1], [0], [0], [1], [0, 0, 1, 1], [], []>} : vector<5x32xbf16>, vector<32x32xbf16>, vector<5x32xf32> -> vector<5x32xf32>
    %c0_7 = arith.constant 0 : index
    %c0_8 = arith.constant 0 : index
    %8 = vector.load %arg4[%c0_7, %c0_8] : memref<1x32xf32, #tpu.memory_space<vmem>>, vector<1x32xf32>
    %9 = vector.broadcast %8 : vector<1x32xf32> to vector<5x32xf32>
    %10 = arith.addf %7, %9 : vector<5x32xf32>
    %cst_9 = arith.constant 0.353553385 : f32
    %11 = vector.broadcast %cst_9 : f32 to vector<5x32xf32>
    %12 = arith.mulf %10, %11 : vector<5x32xf32>
    %c0_10 = arith.constant 0 : index
    %c0_11 = arith.constant 0 : index
    %13 = vector.load %arg5[%c0_10, %c0_11] : memref<32x32xf32, #tpu.memory_space<vmem>>, vector<32x32xf32>
    %14 = arith.truncf %3 : vector<8x32xf32> to vector<8x32xbf16>
    %15 = arith.truncf %13 : vector<32x32xf32> to vector<32x32xbf16>
    %cst_12 = arith.constant dense<0.000000e+00> : vector<8x32xf32>
    %16 = tpu.matmul %14, %15, %cst_12 {dimension_numbers = #tpu.dot_dimension_numbers<[1], [0], [0], [1], [0, 0, 1, 1], [], []>} : vector<8x32xbf16>, vector<32x32xbf16>, vector<8x32xf32> -> vector<8x32xf32>
    %c0_13 = arith.constant 0 : index
    %c0_14 = arith.constant 0 : index
    %17 = vector.load %arg6[%c0_13, %c0_14] : memref<1x32xf32, #tpu.memory_space<vmem>>, vector<1x32xf32>
    %18 = vector.broadcast %17 : vector<1x32xf32> to vector<8x32xf32>
    %19 = arith.addf %16, %18 : vector<8x32xf32>
    %c0_15 = arith.constant 0 : index
    %c0_16 = arith.constant 0 : index
    %20 = vector.load %arg7[%c0_15, %c0_16] : memref<32x32xf32, #tpu.memory_space<vmem>>, vector<32x32xf32>
    %21 = arith.truncf %3 : vector<8x32xf32> to vector<8x32xbf16>
    %22 = arith.truncf %20 : vector<32x32xf32> to vector<32x32xbf16>
    %cst_17 = arith.constant dense<0.000000e+00> : vector<8x32xf32>
    %23 = tpu.matmul %21, %22, %cst_17 {dimension_numbers = #tpu.dot_dimension_numbers<[1], [0], [0], [1], [0, 0, 1, 1], [], []>} : vector<8x32xbf16>, vector<32x32xbf16>, vector<8x32xf32> -> vector<8x32xf32>
    %c0_18 = arith.constant 0 : index
    %c0_19 = arith.constant 0 : index
    %24 = vector.load %arg8[%c0_18, %c0_19] : memref<1x32xf32, #tpu.memory_space<vmem>>, vector<1x32xf32>
    %25 = vector.broadcast %24 : vector<1x32xf32> to vector<8x32xf32>
    %26 = arith.addf %23, %25 : vector<8x32xf32>
    %27 = vector.extract_strided_slice %12 {offsets = [0, 0], sizes = [5, 8], strides = [1, 1]} : vector<5x32xf32> to vector<5x8xf32>
    %28 = vector.extract_strided_slice %19 {offsets = [0, 0], sizes = [8, 8], strides = [1, 1]} : vector<8x32xf32> to vector<8x8xf32>
    %29 = vector.extract_strided_slice %26 {offsets = [0, 0], sizes = [8, 8], strides = [1, 1]} : vector<8x32xf32> to vector<8x8xf32>
    %30 = arith.truncf %27 : vector<5x8xf32> to vector<5x8xbf16>
    %31 = arith.truncf %28 : vector<8x8xf32> to vector<8x8xbf16>
    %cst_20 = arith.constant dense<0.000000e+00> : vector<5x8xf32>
    %32 = tpu.matmul %30, %31, %cst_20 {dimension_numbers = #tpu.dot_dimension_numbers<[1], [1], [0], [0], [0, 0, 1, 0], [], []>} : vector<5x8xbf16>, vector<8x8xbf16>, vector<5x8xf32> -> vector<5x8xf32>
    %cst_21 = arith.constant dense<0xFF800000> : vector<5xf32>
    %33 = vector.multi_reduction <maximumf>, %32, %cst_21 [1] : vector<5x8xf32> to vector<5xf32>
    %34 = vector.shape_cast %33 : vector<5xf32> to vector<5x1xf32>
    %35 = vector.broadcast %34 : vector<5x1xf32> to vector<5x8xf32>
    %36 = arith.subf %32, %35 : vector<5x8xf32>
    %37 = math.exp %36 : vector<5x8xf32>
    %cst_22 = arith.constant dense<0.000000e+00> : vector<5xf32>
    %38 = vector.multi_reduction <add>, %37, %cst_22 [1] : vector<5x8xf32> to vector<5xf32>
    %39 = vector.shape_cast %38 : vector<5xf32> to vector<5x1xf32>
    %40 = tpu.reciprocal %39 {approx = true} : vector<5x1xf32> -> vector<5x1xf32>
    %41 = vector.broadcast %40 : vector<5x1xf32> to vector<5x8xf32>
    %42 = arith.mulf %37, %41 : vector<5x8xf32>
    %43 = arith.truncf %42 : vector<5x8xf32> to vector<5x8xbf16>
    %44 = arith.truncf %29 : vector<8x8xf32> to vector<8x8xbf16>
    %cst_23 = arith.constant dense<0.000000e+00> : vector<5x8xf32>
    %45 = tpu.matmul %43, %44, %cst_23 {dimension_numbers = #tpu.dot_dimension_numbers<[1], [0], [0], [1], [0, 0, 1, 1], [], []>} : vector<5x8xbf16>, vector<8x8xbf16>, vector<5x8xf32> -> vector<5x8xf32>
    %46 = vector.extract_strided_slice %12 {offsets = [0, 8], sizes = [5, 8], strides = [1, 1]} : vector<5x32xf32> to vector<5x8xf32>
    %47 = vector.extract_strided_slice %19 {offsets = [0, 8], sizes = [8, 8], strides = [1, 1]} : vector<8x32xf32> to vector<8x8xf32>
    %48 = vector.extract_strided_slice %26 {offsets = [0, 8], sizes = [8, 8], strides = [1, 1]} : vector<8x32xf32> to vector<8x8xf32>
    %49 = arith.truncf %46 : vector<5x8xf32> to vector<5x8xbf16>
    %50 = arith.truncf %47 : vector<8x8xf32> to vector<8x8xbf16>
    %cst_24 = arith.constant dense<0.000000e+00> : vector<5x8xf32>
    %51 = tpu.matmul %49, %50, %cst_24 {dimension_numbers = #tpu.dot_dimension_numbers<[1], [1], [0], [0], [0, 0, 1, 0], [], []>} : vector<5x8xbf16>, vector<8x8xbf16>, vector<5x8xf32> -> vector<5x8xf32>
    %cst_25 = arith.constant dense<0xFF800000> : vector<5xf32>
    %52 = vector.multi_reduction <maximumf>, %51, %cst_25 [1] : vector<5x8xf32> to vector<5xf32>
    %53 = vector.shape_cast %52 : vector<5xf32> to vector<5x1xf32>
    %54 = vector.broadcast %53 : vector<5x1xf32> to vector<5x8xf32>
    %55 = arith.subf %51, %54 : vector<5x8xf32>
    %56 = math.exp %55 : vector<5x8xf32>
    %cst_26 = arith.constant dense<0.000000e+00> : vector<5xf32>
    %57 = vector.multi_reduction <add>, %56, %cst_26 [1] : vector<5x8xf32> to vector<5xf32>
    %58 = vector.shape_cast %57 : vector<5xf32> to vector<5x1xf32>
    %59 = tpu.reciprocal %58 {approx = true} : vector<5x1xf32> -> vector<5x1xf32>
    %60 = vector.broadcast %59 : vector<5x1xf32> to vector<5x8xf32>
    %61 = arith.mulf %56, %60 : vector<5x8xf32>
    %62 = arith.truncf %61 : vector<5x8xf32> to vector<5x8xbf16>
    %63 = arith.truncf %48 : vector<8x8xf32> to vector<8x8xbf16>
    %cst_27 = arith.constant dense<0.000000e+00> : vector<5x8xf32>
    %64 = tpu.matmul %62, %63, %cst_27 {dimension_numbers = #tpu.dot_dimension_numbers<[1], [0], [0], [1], [0, 0, 1, 1], [], []>} : vector<5x8xbf16>, vector<8x8xbf16>, vector<5x8xf32> -> vector<5x8xf32>
    %65 = vector.extract_strided_slice %12 {offsets = [0, 16], sizes = [5, 8], strides = [1, 1]} : vector<5x32xf32> to vector<5x8xf32>
    %66 = vector.extract_strided_slice %19 {offsets = [0, 16], sizes = [8, 8], strides = [1, 1]} : vector<8x32xf32> to vector<8x8xf32>
    %67 = vector.extract_strided_slice %26 {offsets = [0, 16], sizes = [8, 8], strides = [1, 1]} : vector<8x32xf32> to vector<8x8xf32>
    %68 = arith.truncf %65 : vector<5x8xf32> to vector<5x8xbf16>
    %69 = arith.truncf %66 : vector<8x8xf32> to vector<8x8xbf16>
    %cst_28 = arith.constant dense<0.000000e+00> : vector<5x8xf32>
    %70 = tpu.matmul %68, %69, %cst_28 {dimension_numbers = #tpu.dot_dimension_numbers<[1], [1], [0], [0], [0, 0, 1, 0], [], []>} : vector<5x8xbf16>, vector<8x8xbf16>, vector<5x8xf32> -> vector<5x8xf32>
    %cst_29 = arith.constant dense<0xFF800000> : vector<5xf32>
    %71 = vector.multi_reduction <maximumf>, %70, %cst_29 [1] : vector<5x8xf32> to vector<5xf32>
    %72 = vector.shape_cast %71 : vector<5xf32> to vector<5x1xf32>
    %73 = vector.broadcast %72 : vector<5x1xf32> to vector<5x8xf32>
    %74 = arith.subf %70, %73 : vector<5x8xf32>
    %75 = math.exp %74 : vector<5x8xf32>
    %cst_30 = arith.constant dense<0.000000e+00> : vector<5xf32>
    %76 = vector.multi_reduction <add>, %75, %cst_30 [1] : vector<5x8xf32> to vector<5xf32>
    %77 = vector.shape_cast %76 : vector<5xf32> to vector<5x1xf32>
    %78 = tpu.reciprocal %77 {approx = true} : vector<5x1xf32> -> vector<5x1xf32>
    %79 = vector.broadcast %78 : vector<5x1xf32> to vector<5x8xf32>
    %80 = arith.mulf %75, %79 : vector<5x8xf32>
    %81 = arith.truncf %80 : vector<5x8xf32> to vector<5x8xbf16>
    %82 = arith.truncf %67 : vector<8x8xf32> to vector<8x8xbf16>
    %cst_31 = arith.constant dense<0.000000e+00> : vector<5x8xf32>
    %83 = tpu.matmul %81, %82, %cst_31 {dimension_numbers = #tpu.dot_dimension_numbers<[1], [0], [0], [1], [0, 0, 1, 1], [], []>} : vector<5x8xbf16>, vector<8x8xbf16>, vector<5x8xf32> -> vector<5x8xf32>
    %84 = vector.extract_strided_slice %12 {offsets = [0, 24], sizes = [5, 8], strides = [1, 1]} : vector<5x32xf32> to vector<5x8xf32>
    %85 = vector.extract_strided_slice %19 {offsets = [0, 24], sizes = [8, 8], strides = [1, 1]} : vector<8x32xf32> to vector<8x8xf32>
    %86 = vector.extract_strided_slice %26 {offsets = [0, 24], sizes = [8, 8], strides = [1, 1]} : vector<8x32xf32> to vector<8x8xf32>
    %87 = arith.truncf %84 : vector<5x8xf32> to vector<5x8xbf16>
    %88 = arith.truncf %85 : vector<8x8xf32> to vector<8x8xbf16>
    %cst_32 = arith.constant dense<0.000000e+00> : vector<5x8xf32>
    %89 = tpu.matmul %87, %88, %cst_32 {dimension_numbers = #tpu.dot_dimension_numbers<[1], [1], [0], [0], [0, 0, 1, 0], [], []>} : vector<5x8xbf16>, vector<8x8xbf16>, vector<5x8xf32> -> vector<5x8xf32>
    %cst_33 = arith.constant dense<0xFF800000> : vector<5xf32>
    %90 = vector.multi_reduction <maximumf>, %89, %cst_33 [1] : vector<5x8xf32> to vector<5xf32>
    %91 = vector.shape_cast %90 : vector<5xf32> to vector<5x1xf32>
    %92 = vector.broadcast %91 : vector<5x1xf32> to vector<5x8xf32>
    %93 = arith.subf %89, %92 : vector<5x8xf32>
    %94 = math.exp %93 : vector<5x8xf32>
    %cst_34 = arith.constant dense<0.000000e+00> : vector<5xf32>
    %95 = vector.multi_reduction <add>, %94, %cst_34 [1] : vector<5x8xf32> to vector<5xf32>
    %96 = vector.shape_cast %95 : vector<5xf32> to vector<5x1xf32>
    %97 = tpu.reciprocal %96 {approx = true} : vector<5x1xf32> -> vector<5x1xf32>
    %98 = vector.broadcast %97 : vector<5x1xf32> to vector<5x8xf32>
    %99 = arith.mulf %94, %98 : vector<5x8xf32>
    %100 = arith.truncf %99 : vector<5x8xf32> to vector<5x8xbf16>
    %101 = arith.truncf %86 : vector<8x8xf32> to vector<8x8xbf16>
    %cst_35 = arith.constant dense<0.000000e+00> : vector<5x8xf32>
    %102 = tpu.matmul %100, %101, %cst_35 {dimension_numbers = #tpu.dot_dimension_numbers<[1], [0], [0], [1], [0, 0, 1, 1], [], []>} : vector<5x8xbf16>, vector<8x8xbf16>, vector<5x8xf32> -> vector<5x8xf32>
    %103 = tpu.concatenate %45, %64, %83, %102 in 1 : vector<5x8xf32>, vector<5x8xf32>, vector<5x8xf32>, vector<5x8xf32> -> vector<5x32xf32>
    %c0_36 = arith.constant 0 : index
    %c0_37 = arith.constant 0 : index
    %104 = vector.load %arg9[%c0_36, %c0_37] : memref<32x32xf32, #tpu.memory_space<vmem>>, vector<32x32xf32>
    %105 = arith.truncf %103 : vector<5x32xf32> to vector<5x32xbf16>
    %106 = arith.truncf %104 : vector<32x32xf32> to vector<32x32xbf16>
    %cst_38 = arith.constant dense<0.000000e+00> : vector<5x32xf32>
    %107 = tpu.matmul %105, %106, %cst_38 {dimension_numbers = #tpu.dot_dimension_numbers<[1], [0], [0], [1], [0, 0, 1, 1], [], []>} : vector<5x32xbf16>, vector<32x32xbf16>, vector<5x32xf32> -> vector<5x32xf32>
    %c0_39 = arith.constant 0 : index
    %c0_40 = arith.constant 0 : index
    %108 = vector.load %arg10[%c0_39, %c0_40] : memref<1x32xf32, #tpu.memory_space<vmem>>, vector<1x32xf32>
    %109 = vector.broadcast %108 : vector<1x32xf32> to vector<5x32xf32>
    %110 = arith.addf %107, %109 : vector<5x32xf32>
    %111 = arith.addf %1, %110 : vector<5x32xf32>
    %c0_41 = arith.constant 0 : index
    %c0_42 = arith.constant 0 : index
    %112 = vector.load %arg11[%c0_41, %c0_42] : memref<1x32xf32, #tpu.memory_space<vmem>>, vector<1x32xf32>
    %c0_43 = arith.constant 0 : index
    %c0_44 = arith.constant 0 : index
    %113 = vector.load %arg12[%c0_43, %c0_44] : memref<1x32xf32, #tpu.memory_space<vmem>>, vector<1x32xf32>
    %cst_45 = arith.constant dense<0.000000e+00> : vector<5xf32>
    %114 = vector.multi_reduction <add>, %111, %cst_45 [1] : vector<5x32xf32> to vector<5xf32>
    %115 = vector.shape_cast %114 : vector<5xf32> to vector<5x1xf32>
    %cst_46 = arith.constant 3.200000e+01 : f32
    %116 = vector.broadcast %cst_46 : f32 to vector<5x1xf32>
    %117 = arith.divf %115, %116 : vector<5x1xf32>
    %118 = vector.broadcast %117 : vector<5x1xf32> to vector<5x32xf32>
    %119 = arith.subf %111, %118 : vector<5x32xf32>
    %120 = arith.mulf %119, %119 : vector<5x32xf32>
    %cst_47 = arith.constant dense<0.000000e+00> : vector<5xf32>
    %121 = vector.multi_reduction <add>, %120, %cst_47 [1] : vector<5x32xf32> to vector<5xf32>
    %122 = vector.shape_cast %121 : vector<5xf32> to vector<5x1xf32>
    %cst_48 = arith.constant 3.200000e+01 : f32
    %123 = vector.broadcast %cst_48 : f32 to vector<5x1xf32>
    %124 = arith.divf %122, %123 : vector<5x1xf32>
    %cst_49 = arith.constant 9.99999974E-6 : f32
    %125 = vector.broadcast %cst_49 : f32 to vector<5x1xf32>
    %126 = arith.addf %124, %125 : vector<5x1xf32>
    %127 = math.rsqrt %126 : vector<5x1xf32>
    %128 = vector.broadcast %127 : vector<5x1xf32> to vector<5x32xf32>
    %129 = arith.mulf %119, %128 : vector<5x32xf32>
    %130 = vector.broadcast %112 : vector<1x32xf32> to vector<5x32xf32>
    %131 = arith.mulf %129, %130 : vector<5x32xf32>
    %132 = vector.broadcast %113 : vector<1x32xf32> to vector<5x32xf32>
    %133 = arith.addf %131, %132 : vector<5x32xf32>
    %c0_50 = arith.constant 0 : index
    %c0_51 = arith.constant 0 : index
    %c0_52 = arith.constant 0 : index
    %134 = vector.load %arg13[%c0_50, %c0_51, %c0_52] : memref<1x5x32xf32, #tpu.memory_space<vmem>>, vector<1x5x32xf32>
    %135 = vector.shape_cast %134 : vector<1x5x32xf32> to vector<5x32xf32>
    %136 = vector.shape_cast %133 : vector<5x32xf32> to vector<1x5x32xf32>
    tpu.vector_store %arg13[%c0_50, %c0_51, %c0_52], %136 {strides = array<i32>} : memref<1x5x32xf32, #tpu.memory_space<vmem>>, vector<1x5x32xf32>,
    return
  }
  func.func @transform_0(%arg0: i32) -> (i32, i32, i32) {
    %c0_i32 = arith.constant 0 : i32
    %c0_i32_0 = arith.constant 0 : i32
    %c0_i32_1 = arith.constant 0 : i32
    return %arg0, %c0_i32, %c0_i32_0 : i32, i32, i32
  }
  func.func @transform_1(%arg0: i32) -> (i32, i32, i32) {
    %c0_i32 = arith.constant 0 : i32
    %c0_i32_0 = arith.constant 0 : i32
    %c0_i32_1 = arith.constant 0 : i32
    return %arg0, %c0_i32, %c0_i32_0 : i32, i32, i32
  }
  func.func @transform_2(%arg0: i32) -> (i32, i32) {
    %c0_i32 = arith.constant 0 : i32
    %c0_i32_0 = arith.constant 0 : i32
    %c0_i32_1 = arith.constant 0 : i32
    return %c0_i32, %c0_i32_0 : i32, i32
  }
  func.func @transform_3(%arg0: i32) -> (i32, i32) {
    %c0_i32 = arith.constant 0 : i32
    %c0_i32_0 = arith.constant 0 : i32
    %c0_i32_1 = arith.constant 0 : i32
    return %c0_i32, %c0_i32_0 : i32, i32
  }
  func.func @transform_4(%arg0: i32) -> (i32, i32) {
    %c0_i32 = arith.constant 0 : i32
    %c0_i32_0 = arith.constant 0 : i32
    %c0_i32_1 = arith.constant 0 : i32
    return %c0_i32, %c0_i32_0 : i32, i32
  }
  func.func @transform_5(%arg0: i32) -> (i32, i32) {
    %c0_i32 = arith.constant 0 : i32
    %c0_i32_0 = arith.constant 0 : i32
    %c0_i32_1 = arith.constant 0 : i32
    return %c0_i32, %c0_i32_0 : i32, i32
  }
  func.func @transform_6(%arg0: i32) -> (i32, i32) {
    %c0_i32 = arith.constant 0 : i32
    %c0_i32_0 = arith.constant 0 : i32
    %c0_i32_1 = arith.constant 0 : i32
    return %c0_i32, %c0_i32_0 : i32, i32
  }
  func.func @transform_7(%arg0: i32) -> (i32, i32) {
    %c0_i32 = arith.constant 0 : i32
    %c0_i32_0 = arith.constant 0 : i32
    %c0_i32_1 = arith.constant 0 : i32
    return %c0_i32, %c0_i32_0 : i32, i32
  }
  func.func @transform_8(%arg0: i32) -> (i32, i32) {
    %c0_i32 = arith.constant 0 : i32
    %c0_i32_0 = arith.constant 0 : i32
    %c0_i32_1 = arith.constant 0 : i32
    return %c0_i32, %c0_i32_0 : i32, i32
  }
  func.func @transform_9(%arg0: i32) -> (i32, i32) {
    %c0_i32 = arith.constant 0 : i32
    %c0_i32_0 = arith.constant 0 : i32
    %c0_i32_1 = arith.constant 0 : i32
    return %c0_i32, %c0_i32_0 : i32, i32
  }
  func.func @transform_10(%arg0: i32) -> (i32, i32) {
    %c0_i32 = arith.constant 0 : i32
    %c0_i32_0 = arith.constant 0 : i32
    %c0_i32_1 = arith.constant 0 : i32
    return %c0_i32, %c0_i32_0 : i32, i32
  }
  func.func @transform_11(%arg0: i32) -> (i32, i32) {
    %c0_i32 = arith.constant 0 : i32
    %c0_i32_0 = arith.constant 0 : i32
    %c0_i32_1 = arith.constant 0 : i32
    return %c0_i32, %c0_i32_0 : i32, i32
  }
  func.func @transform_12(%arg0: i32) -> (i32, i32, i32) {
    %c0_i32 = arith.constant 0 : i32
    %c0_i32_0 = arith.constant 0 : i32
    %c0_i32_1 = arith.constant 0 : i32
    return %arg0, %c0_i32, %c0_i32_0 : i32, i32, i32
  }
}

module attributes {stable_mosaic.version = 11 : i64} {
  func.func @_ffn_ln_kernel(%arg0: i32, %arg1: memref<10x32xf32, #tpu.memory_space<vmem>>, %arg2: memref<32x64xf32, #tpu.memory_space<vmem>>, %arg3: memref<1x64xf32, #tpu.memory_space<vmem>>, %arg4: memref<64x32xf32, #tpu.memory_space<vmem>>, %arg5: memref<1x32xf32, #tpu.memory_space<vmem>>, %arg6: memref<1x32xf32, #tpu.memory_space<vmem>>, %arg7: memref<1x32xf32, #tpu.memory_space<vmem>>, %arg8: memref<10x32xf32, #tpu.memory_space<vmem>>) attributes {dimension_semantics = [#tpu.dimension_semantics<parallel>], iteration_bounds = array<i64: 1>, scalar_prefetch = 0 : i64, scratch_operands = 0 : i64, tpu.core_type = #tpu.core_type<tc>, window_params = [{transform_indices = @transform_0, window_bounds = array<i64: 10, 32>}, {pipeline_mode = #tpu.pipeline_mode<synchronous>, transform_indices = @transform_1, window_bounds = array<i64: 32, 64>}, {pipeline_mode = #tpu.pipeline_mode<synchronous>, transform_indices = @transform_2, window_bounds = array<i64: 1, 64>}, {pipeline_mode = #tpu.pipeline_mode<synchronous>, transform_indices = @transform_3, window_bounds = array<i64: 64, 32>}, {pipeline_mode = #tpu.pipeline_mode<synchronous>, transform_indices = @transform_4, window_bounds = array<i64: 1, 32>}, {pipeline_mode = #tpu.pipeline_mode<synchronous>, transform_indices = @transform_5, window_bounds = array<i64: 1, 32>}, {pipeline_mode = #tpu.pipeline_mode<synchronous>, transform_indices = @transform_6, window_bounds = array<i64: 1, 32>}, {transform_indices = @transform_7, window_bounds = array<i64: 10, 32>}]} {
    %c0 = arith.constant 0 : index
    %c0_0 = arith.constant 0 : index
    %0 = vector.load %arg1[%c0, %c0_0] : memref<10x32xf32, #tpu.memory_space<vmem>>, vector<10x32xf32>
    %c0_1 = arith.constant 0 : index
    %c0_2 = arith.constant 0 : index
    %1 = vector.load %arg2[%c0_1, %c0_2] : memref<32x64xf32, #tpu.memory_space<vmem>>, vector<32x64xf32>
    %2 = arith.truncf %0 : vector<10x32xf32> to vector<10x32xbf16>
    %3 = arith.truncf %1 : vector<32x64xf32> to vector<32x64xbf16>
    %cst = arith.constant dense<0.000000e+00> : vector<10x64xf32>
    %4 = tpu.matmul %2, %3, %cst {dimension_numbers = #tpu.dot_dimension_numbers<[1], [0], [0], [1], [0, 0, 1, 1], [], []>} : vector<10x32xbf16>, vector<32x64xbf16>, vector<10x64xf32> -> vector<10x64xf32>
    %c0_3 = arith.constant 0 : index
    %c0_4 = arith.constant 0 : index
    %5 = vector.load %arg3[%c0_3, %c0_4] : memref<1x64xf32, #tpu.memory_space<vmem>>, vector<1x64xf32>
    %6 = vector.broadcast %5 : vector<1x64xf32> to vector<10x64xf32>
    %7 = arith.addf %4, %6 : vector<10x64xf32>
    %cst_5 = arith.constant 0.000000e+00 : f32
    %8 = vector.broadcast %cst_5 : f32 to vector<10x64xf32>
    %9 = arith.maximumf %7, %8 : vector<10x64xf32>
    %c0_6 = arith.constant 0 : index
    %c0_7 = arith.constant 0 : index
    %10 = vector.load %arg4[%c0_6, %c0_7] : memref<64x32xf32, #tpu.memory_space<vmem>>, vector<64x32xf32>
    %11 = arith.truncf %9 : vector<10x64xf32> to vector<10x64xbf16>
    %12 = arith.truncf %10 : vector<64x32xf32> to vector<64x32xbf16>
    %cst_8 = arith.constant dense<0.000000e+00> : vector<10x32xf32>
    %13 = tpu.matmul %11, %12, %cst_8 {dimension_numbers = #tpu.dot_dimension_numbers<[1], [0], [0], [1], [0, 0, 1, 1], [], []>} : vector<10x64xbf16>, vector<64x32xbf16>, vector<10x32xf32> -> vector<10x32xf32>
    %c0_9 = arith.constant 0 : index
    %c0_10 = arith.constant 0 : index
    %14 = vector.load %arg5[%c0_9, %c0_10] : memref<1x32xf32, #tpu.memory_space<vmem>>, vector<1x32xf32>
    %15 = vector.broadcast %14 : vector<1x32xf32> to vector<10x32xf32>
    %16 = arith.addf %13, %15 : vector<10x32xf32>
    %17 = arith.addf %0, %16 : vector<10x32xf32>
    %c0_11 = arith.constant 0 : index
    %c0_12 = arith.constant 0 : index
    %18 = vector.load %arg6[%c0_11, %c0_12] : memref<1x32xf32, #tpu.memory_space<vmem>>, vector<1x32xf32>
    %c0_13 = arith.constant 0 : index
    %c0_14 = arith.constant 0 : index
    %19 = vector.load %arg7[%c0_13, %c0_14] : memref<1x32xf32, #tpu.memory_space<vmem>>, vector<1x32xf32>
    %cst_15 = arith.constant dense<0.000000e+00> : vector<10xf32>
    %20 = vector.multi_reduction <add>, %17, %cst_15 [1] : vector<10x32xf32> to vector<10xf32>
    %21 = vector.shape_cast %20 : vector<10xf32> to vector<10x1xf32>
    %cst_16 = arith.constant 3.200000e+01 : f32
    %22 = vector.broadcast %cst_16 : f32 to vector<10x1xf32>
    %23 = arith.divf %21, %22 : vector<10x1xf32>
    %24 = vector.broadcast %23 : vector<10x1xf32> to vector<10x32xf32>
    %25 = arith.subf %17, %24 : vector<10x32xf32>
    %26 = arith.mulf %25, %25 : vector<10x32xf32>
    %cst_17 = arith.constant dense<0.000000e+00> : vector<10xf32>
    %27 = vector.multi_reduction <add>, %26, %cst_17 [1] : vector<10x32xf32> to vector<10xf32>
    %28 = vector.shape_cast %27 : vector<10xf32> to vector<10x1xf32>
    %cst_18 = arith.constant 3.200000e+01 : f32
    %29 = vector.broadcast %cst_18 : f32 to vector<10x1xf32>
    %30 = arith.divf %28, %29 : vector<10x1xf32>
    %cst_19 = arith.constant 9.99999974E-6 : f32
    %31 = vector.broadcast %cst_19 : f32 to vector<10x1xf32>
    %32 = arith.addf %30, %31 : vector<10x1xf32>
    %33 = math.rsqrt %32 : vector<10x1xf32>
    %34 = vector.broadcast %33 : vector<10x1xf32> to vector<10x32xf32>
    %35 = arith.mulf %25, %34 : vector<10x32xf32>
    %36 = vector.broadcast %18 : vector<1x32xf32> to vector<10x32xf32>
    %37 = arith.mulf %35, %36 : vector<10x32xf32>
    %38 = vector.broadcast %19 : vector<1x32xf32> to vector<10x32xf32>
    %39 = arith.addf %37, %38 : vector<10x32xf32>
    %c0_20 = arith.constant 0 : index
    %c0_21 = arith.constant 0 : index
    %40 = vector.load %arg8[%c0_20, %c0_21] : memref<10x32xf32, #tpu.memory_space<vmem>>, vector<10x32xf32>
    tpu.vector_store %arg8[%c0_20, %c0_21], %39 {strides = array<i32>} : memref<10x32xf32, #tpu.memory_space<vmem>>, vector<10x32xf32>,
    return
  }
  func.func @transform_0(%arg0: i32) -> (i32, i32) {
    %c0_i32 = arith.constant 0 : i32
    %c0_i32_0 = arith.constant 0 : i32
    return %arg0, %c0_i32 : i32, i32
  }
  func.func @transform_1(%arg0: i32) -> (i32, i32) {
    %c0_i32 = arith.constant 0 : i32
    %c0_i32_0 = arith.constant 0 : i32
    %c0_i32_1 = arith.constant 0 : i32
    return %c0_i32, %c0_i32_0 : i32, i32
  }
  func.func @transform_2(%arg0: i32) -> (i32, i32) {
    %c0_i32 = arith.constant 0 : i32
    %c0_i32_0 = arith.constant 0 : i32
    %c0_i32_1 = arith.constant 0 : i32
    return %c0_i32, %c0_i32_0 : i32, i32
  }
  func.func @transform_3(%arg0: i32) -> (i32, i32) {
    %c0_i32 = arith.constant 0 : i32
    %c0_i32_0 = arith.constant 0 : i32
    %c0_i32_1 = arith.constant 0 : i32
    return %c0_i32, %c0_i32_0 : i32, i32
  }
  func.func @transform_4(%arg0: i32) -> (i32, i32) {
    %c0_i32 = arith.constant 0 : i32
    %c0_i32_0 = arith.constant 0 : i32
    %c0_i32_1 = arith.constant 0 : i32
    return %c0_i32, %c0_i32_0 : i32, i32
  }
  func.func @transform_5(%arg0: i32) -> (i32, i32) {
    %c0_i32 = arith.constant 0 : i32
    %c0_i32_0 = arith.constant 0 : i32
    %c0_i32_1 = arith.constant 0 : i32
    return %c0_i32, %c0_i32_0 : i32, i32
  }
  func.func @transform_6(%arg0: i32) -> (i32, i32) {
    %c0_i32 = arith.constant 0 : i32
    %c0_i32_0 = arith.constant 0 : i32
    %c0_i32_1 = arith.constant 0 : i32
    return %c0_i32, %c0_i32_0 : i32, i32
  }
  func.func @transform_7(%arg0: i32) -> (i32, i32) {
    %c0_i32 = arith.constant 0 : i32
    %c0_i32_0 = arith.constant 0 : i32
    return %arg0, %c0_i32 : i32, i32
  }
}

module attributes {stable_mosaic.version = 11 : i64} {
  func.func @_lin_kernel(%arg0: i32, %arg1: memref<2x160xf32, #tpu.memory_space<vmem>>, %arg2: memref<160x2xf32, #tpu.memory_space<vmem>>, %arg3: memref<1x2xf32, #tpu.memory_space<vmem>>, %arg4: memref<2x2xf32, #tpu.memory_space<vmem>>) attributes {dimension_semantics = [#tpu.dimension_semantics<parallel>], iteration_bounds = array<i64: 1>, scalar_prefetch = 0 : i64, scratch_operands = 0 : i64, tpu.core_type = #tpu.core_type<tc>, window_params = [{transform_indices = @transform_0, window_bounds = array<i64: 2, 160>}, {pipeline_mode = #tpu.pipeline_mode<synchronous>, transform_indices = @transform_1, window_bounds = array<i64: 160, 2>}, {pipeline_mode = #tpu.pipeline_mode<synchronous>, transform_indices = @transform_2, window_bounds = array<i64: 1, 2>}, {transform_indices = @transform_3, window_bounds = array<i64: 2, 2>}]} {
    %c0 = arith.constant 0 : index
    %c0_0 = arith.constant 0 : index
    %0 = vector.load %arg1[%c0, %c0_0] : memref<2x160xf32, #tpu.memory_space<vmem>>, vector<2x160xf32>
    %c0_1 = arith.constant 0 : index
    %c0_2 = arith.constant 0 : index
    %1 = vector.load %arg2[%c0_1, %c0_2] : memref<160x2xf32, #tpu.memory_space<vmem>>, vector<160x2xf32>
    %2 = arith.truncf %0 : vector<2x160xf32> to vector<2x160xbf16>
    %3 = arith.truncf %1 : vector<160x2xf32> to vector<160x2xbf16>
    %cst = arith.constant dense<0.000000e+00> : vector<2x2xf32>
    %4 = tpu.matmul %2, %3, %cst {dimension_numbers = #tpu.dot_dimension_numbers<[1], [0], [0], [1], [0, 0, 1, 1], [], []>} : vector<2x160xbf16>, vector<160x2xbf16>, vector<2x2xf32> -> vector<2x2xf32>
    %c0_3 = arith.constant 0 : index
    %c0_4 = arith.constant 0 : index
    %5 = vector.load %arg3[%c0_3, %c0_4] : memref<1x2xf32, #tpu.memory_space<vmem>>, vector<1x2xf32>
    %6 = vector.broadcast %5 : vector<1x2xf32> to vector<2x2xf32>
    %7 = arith.addf %4, %6 : vector<2x2xf32>
    %c0_5 = arith.constant 0 : index
    %c0_6 = arith.constant 0 : index
    %8 = vector.load %arg4[%c0_5, %c0_6] : memref<2x2xf32, #tpu.memory_space<vmem>>, vector<2x2xf32>
    tpu.vector_store %arg4[%c0_5, %c0_6], %7 {strides = array<i32>} : memref<2x2xf32, #tpu.memory_space<vmem>>, vector<2x2xf32>,
    return
  }
  func.func @transform_0(%arg0: i32) -> (i32, i32) {
    %c0_i32 = arith.constant 0 : i32
    %c0_i32_0 = arith.constant 0 : i32
    return %arg0, %c0_i32 : i32, i32
  }
  func.func @transform_1(%arg0: i32) -> (i32, i32) {
    %c0_i32 = arith.constant 0 : i32
    %c0_i32_0 = arith.constant 0 : i32
    %c0_i32_1 = arith.constant 0 : i32
    return %c0_i32, %c0_i32_0 : i32, i32
  }
  func.func @transform_2(%arg0: i32) -> (i32, i32) {
    %c0_i32 = arith.constant 0 : i32
    %c0_i32_0 = arith.constant 0 : i32
    %c0_i32_1 = arith.constant 0 : i32
    return %c0_i32, %c0_i32_0 : i32, i32
  }
  func.func @transform_3(%arg0: i32) -> (i32, i32) {
    %c0_i32 = arith.constant 0 : i32
    %c0_i32_0 = arith.constant 0 : i32
    return %arg0, %c0_i32 : i32, i32
  }
}

</mosaic_0001>

<llo_original>
// kernel: deepgem_forward.24
$region0: #{deepgem_forward.24}
  #allocation0 [shape = 'u32[]', space=smem, size = 0x4, offset = 0x4, fixed_abs, tag = 'smem constant byte address 0x4 - core index']
  #allocation1 [shape = 'u32[144,128]{1,0:T(1,128)}', space=vmem, size = 0x12000, scoped, tag = 'internal scratch']
  %s0 = inlined_call_operand.vmem [shape: f32[16,64], index: 0, kind: input, shape index: {}]
  %s1 = inlined_call_operand.vmem [shape: f32[64,128], index: 1, kind: input, shape index: {}]
  %s2 = inlined_call_operand.vmem [shape: f32[1,128], index: 2, kind: input, shape index: {}]
  %s3 = inlined_call_operand.vmem [shape: f32[1,128], index: 3, kind: input, shape index: {}]
  %s4 = inlined_call_operand.vmem [shape: f32[1,128], index: 4, kind: input, shape index: {}]
  %s5 = inlined_call_operand.vmem [shape: f32[16,128], index: 5, kind: output, shape index: {}]
  %s6 = sld [smem:[#allocation0]]
  $region30: #{deepgem_forward.24} parent=0
    _
  %s8 = ssub.s32 1, %s6
  %s9 = scalar_select 0, %s8, %s6
  // Predicated region
  $region2: #{deepgem_forward.24} parent=0 // pred_check
    _
  $region3: #{deepgem_forward.24} parent=0 // pred_check_branch
    %11 = sbr.rel (0) target = $region5
  $region4: #{deepgem_forward.24} parent=0 // pred_region
    _
  $region5: #{deepgem_forward.24} parent=0 // pred_fallthru
    _
  // Predicated region
  $region6: #{deepgem_forward.24} parent=0 // pred_check
    _
  $region7: #{deepgem_forward.24} parent=0 // pred_check_branch
    %13 = sbr.rel (0) target = $region9
  $region8: #{deepgem_forward.24} parent=0 // pred_region
    _
  $region9: #{deepgem_forward.24} parent=0 // pred_fallthru
    _
  // Predicated region
  $region10: #{deepgem_forward.24} parent=0 // pred_check
    _
  $region11: #{deepgem_forward.24} parent=0 // pred_check_branch
    %15 = sbr.rel (0) target = $region13
  $region12: #{deepgem_forward.24} parent=0 // pred_region
    _
  $region13: #{deepgem_forward.24} parent=0 // pred_fallthru
    _
  // Predicated region
  $region14: #{deepgem_forward.24} parent=0 // pred_check
    _
  $region15: #{deepgem_forward.24} parent=0 // pred_check_branch
    %17 = sbr.rel (0) target = $region17
  $region16: #{deepgem_forward.24} parent=0 // pred_region
    _
  $region17: #{deepgem_forward.24} parent=0 // pred_fallthru
    _
  // Predicated region
  $region18: #{deepgem_forward.24} parent=0 // pred_check
    _
  $region19: #{deepgem_forward.24} parent=0 // pred_check_branch
    %19 = sbr.rel (0) target = $region21
  $region20: #{deepgem_forward.24} parent=0 // pred_region
    _
  $region21: #{deepgem_forward.24} parent=0 // pred_fallthru
    _
  %v21 = vld [vmem:[%s0] sm:$0xff]
  %v22 = vld [vmem:[%s0 + $0x8] sm:$0xff]
  %v23 = vld [vmem:[%s1] sm:$0xff]
  %v24 = vld [vmem:[%s1 + $0x8] sm:$0xff]
  %v25 = vld [vmem:[%s1 + $0x10] sm:$0xff]
  %v26 = vld [vmem:[%s1 + $0x18] sm:$0xff]
  %v27 = vld [vmem:[%s1 + $0x20] sm:$0xff]
  %v28 = vld [vmem:[%s1 + $0x28] sm:$0xff]
  %v29 = vld [vmem:[%s1 + $0x30] sm:$0xff]
  %v30 = vld [vmem:[%s1 + $0x38] sm:$0xff]
  %v31 = vpack.c.bf16 %v22, %v21
  %v32 = vpack.c.bf16 %v24, %v23
  %v33 = vpack.c.bf16 %v26, %v25
  %v34 = vpack.c.bf16 %v28, %v27
  %v35 = vpack.c.bf16 %v30, %v29
  %v36 = vld [vmem:[%s2] sm:$0x1]
  %v38 = vlaneseq
  %v39 = vshrl.u32 %v38, 7
  %v40 = vsub.s32 0, %v39
  %v41 = vrot.slane %v36, %v40
  %vm43 = vcmask 523264
  %v45 = vsel %vm43, %v31, 0
  %47 = vmatprep.subr.bf16.mxu0 0
  %48 = vmatpush1.bf16.msra.mxu0 0
  %49 = vmatprep.subr.bf16.mxu0 0
  %50 = vmatpush1.bf16.msra.mxu0 0
  %51 = vmatprep.subr.bf16.mxu0 0
  %52 = vmatpush1.bf16.msra.mxu0 0
  %53 = vmatprep.subr.bf16.mxu0 0
  %54 = vmatpush1.bf16.msra.mxu0 0
  %55 = vmatprep.subr.bf16.mxu0 0
  %56 = vmatpush1.bf16.msra.mxu0 %v35
  %57 = vmatprep.subr.bf16.mxu0 0
  %58 = vmatpush1.bf16.msra.mxu0 %v34
  %59 = vmatprep.subr.bf16.mxu0 0
  %60 = vmatpush1.bf16.msra.mxu0 %v33
  %61 = vmatprep.subr.bf16.mxu0 0
  %62 = vmatpush1.bf16.msra.mxu0 %v32
  %63 = vmatprep.subr.bf16.mxu0 0
  %64 = vmatpush2.bf16.msra.mxu0 0
  %65 = vmatprep.subr.bf16.mxu0 0
  %66 = vmatpush2.bf16.msra.mxu0 0
  %67 = vmatprep.subr.bf16.mxu0 0
  %68 = vmatpush2.bf16.msra.mxu0 0
  %69 = vmatprep.subr.bf16.mxu0 0
  %70 = vmatpush2.bf16.msra.mxu0 0
  %71 = vmatprep.subr.bf16.mxu0 0
  %72 = vmatpush2.bf16.msra.mxu0 0
  %73 = vmatprep.subr.bf16.mxu0 0
  %74 = vmatpush2.bf16.msra.mxu0 0
  %75 = vmatprep.subr.bf16.mxu0 0
  %76 = vmatpush2.bf16.msra.mxu0 0
  %77 = vmatprep.subr.bf16.mxu0 0
  %78 = vmatpush2.bf16.msra.mxu0 0
  %79 = vmatprep.mubr.bf16.mxu0 0
  %80 = vmatmul.mubr.bf16.gmra.mxu0 %v45
  %v81 = vpop.f32.mrf.mxu0
  %v82 = vadd.f32 %v41, %v81
  %v83 = vpop.f32.mrf.mxu0
  %v84 = vpop.f32.mrf.mxu0
  %v85 = vadd.f32 %v41, %v84
  %v86 = vpop.f32.mrf.mxu0
  %87 = vdwg.mxu0
  %v88 = vtanh.pop %v82
  %v89 = vtanh.pop %v85
  %v90 = vld [vmem:[%s3] sm:$0x1]
  %v91 = vld [vmem:[%s4] sm:$0x1]
  %92 = vadd.xlane.f32.xlu0 %v88
  %v93 = vpop.xlane.xlu0 %92
  %94 = vadd.xlane.f32.xlu0 %v89
  %v95 = vpop.xlane.xlu0 %94
  %v96 = vrcp.pop 128.0
  %v97 = vmul.f32 %v93, %v96
  %v98 = vmul.f32 %v95, %v96
  %v99 = vsub.f32 %v88, %v97
  %v100 = vsub.f32 %v89, %v98
  %v101 = vmul.f32 %v99, %v99
  %v102 = vmul.f32 %v100, %v100
  %103 = vadd.xlane.f32.xlu0 %v101
  %v104 = vpop.xlane.xlu0 %103
  %105 = vadd.xlane.f32.xlu0 %v102
  %v106 = vpop.xlane.xlu0 %105
  %v107 = vmul.f32 %v104, %v96
  %v108 = vmul.f32 %v106, %v96
  %v109 = vadd.f32 %v107, 1e-05
  %v110 = vadd.f32 %v108, 1e-05
  %v111 = vrsqrt.pop %v109
  %v112 = vrsqrt.pop %v110
  %v113 = vmul.f32 %v99, %v111
  %v114 = vmul.f32 %v100, %v112
  %v116 = vlaneseq
  %v117 = vshrl.u32 %v116, 7
  %v118 = vsub.s32 0, %v117
  %v119 = vrot.slane %v90, %v118
  %v121 = vmul.f32 %v113, %v119
  %v122 = vmul.f32 %v114, %v119
  %v124 = vlaneseq
  %v125 = vshrl.u32 %v124, 7
  %v126 = vsub.s32 0, %v125
  %v127 = vrot.slane %v91, %v126
  %v129 = vadd.f32 %v121, %v127
  %v130 = vadd.f32 %v122, %v127
  %131 = vst [vmem:[%s5] sm:$0xff] %v129
  %132 = vst [vmem:[%s5 + $0x8] sm:$0xff] %v130
  // Predicated region
  $region22: #{deepgem_forward.24} parent=0 // pred_check
    _
  $region23: #{deepgem_forward.24} parent=0 // pred_check_branch
    %134 = sbr.rel (0) target = $region25
  $region24: #{deepgem_forward.24} parent=0 // pred_region
    _
  $region25: #{deepgem_forward.24} parent=0 // pred_fallthru
    _
  // Predicated region
  $region26: #{deepgem_forward.24} parent=0 // pred_check
    _
  $region27: #{deepgem_forward.24} parent=0 // pred_check_branch
    %136 = sbr.rel (0) target = $region29
  $region28: #{deepgem_forward.24} parent=0 // pred_region
    _
  $region29: #{deepgem_forward.24} parent=0 // pred_fallthru
    _

// kernel: deepgem_forward.25
$region0: #{deepgem_forward.25}
  #allocation0 [shape = 'u32[]', space=smem, size = 0x4, offset = 0x4, fixed_abs, tag = 'smem constant byte address 0x4 - core index']
  #allocation1 [shape = 'u32[144,128]{1,0:T(1,128)}', space=vmem, size = 0x12000, scoped, tag = 'internal scratch']
  %s0 = inlined_call_operand.vmem [shape: f32[16,128], index: 0, kind: input, shape index: {}]
  %s1 = inlined_call_operand.vmem [shape: f32[128,64], index: 1, kind: input, shape index: {}]
  %s2 = inlined_call_operand.vmem [shape: f32[1,64], index: 2, kind: input, shape index: {}]
  %s3 = inlined_call_operand.vmem [shape: f32[1,64], index: 3, kind: input, shape index: {}]
  %s4 = inlined_call_operand.vmem [shape: f32[1,64], index: 4, kind: input, shape index: {}]
  %s5 = inlined_call_operand.vmem [shape: f32[16,64], index: 5, kind: output, shape index: {}]
  %s6 = sld [smem:[#allocation0]]
  $region30: #{deepgem_forward.25} parent=0
    _
  %s8 = ssub.s32 1, %s6
  %s9 = scalar_select 0, %s8, %s6
  // Predicated region
  $region2: #{deepgem_forward.25} parent=0 // pred_check
    _
  $region3: #{deepgem_forward.25} parent=0 // pred_check_branch
    %11 = sbr.rel (0) target = $region5
  $region4: #{deepgem_forward.25} parent=0 // pred_region
    _
  $region5: #{deepgem_forward.25} parent=0 // pred_fallthru
    _
  // Predicated region
  $region6: #{deepgem_forward.25} parent=0 // pred_check
    _
  $region7: #{deepgem_forward.25} parent=0 // pred_check_branch
    %13 = sbr.rel (0) target = $region9
  $region8: #{deepgem_forward.25} parent=0 // pred_region
    _
  $region9: #{deepgem_forward.25} parent=0 // pred_fallthru
    _
  // Predicated region
  $region10: #{deepgem_forward.25} parent=0 // pred_check
    _
  $region11: #{deepgem_forward.25} parent=0 // pred_check_branch
    %15 = sbr.rel (0) target = $region13
  $region12: #{deepgem_forward.25} parent=0 // pred_region
    _
  $region13: #{deepgem_forward.25} parent=0 // pred_fallthru
    _
  // Predicated region
  $region14: #{deepgem_forward.25} parent=0 // pred_check
    _
  $region15: #{deepgem_forward.25} parent=0 // pred_check_branch
    %17 = sbr.rel (0) target = $region17
  $region16: #{deepgem_forward.25} parent=0 // pred_region
    _
  $region17: #{deepgem_forward.25} parent=0 // pred_fallthru
    _
  // Predicated region
  $region18: #{deepgem_forward.25} parent=0 // pred_check
    _
  $region19: #{deepgem_forward.25} parent=0 // pred_check_branch
    %19 = sbr.rel (0) target = $region21
  $region20: #{deepgem_forward.25} parent=0 // pred_region
    _
  $region21: #{deepgem_forward.25} parent=0 // pred_fallthru
    _
  %v21 = vld [vmem:[%s0] sm:$0xff]
  %v22 = vld [vmem:[%s0 + $0x8] sm:$0xff]
  %v23 = vld [vmem:[%s1] sm:$0xff]
  %v24 = vld [vmem:[%s1 + $0x8] sm:$0xff]
  %v25 = vld [vmem:[%s1 + $0x10] sm:$0xff]
  %v26 = vld [vmem:[%s1 + $0x18] sm:$0xff]
  %v27 = vld [vmem:[%s1 + $0x20] sm:$0xff]
  %v28 = vld [vmem:[%s1 + $0x28] sm:$0xff]
  %v29 = vld [vmem:[%s1 + $0x30] sm:$0xff]
  %v30 = vld [vmem:[%s1 + $0x38] sm:$0xff]
  %v31 = vld [vmem:[%s1 + $0x40] sm:$0xff]
  %v32 = vld [vmem:[%s1 + $0x48] sm:$0xff]
  %v33 = vld [vmem:[%s1 + $0x50] sm:$0xff]
  %v34 = vld [vmem:[%s1 + $0x58] sm:$0xff]
  %v35 = vld [vmem:[%s1 + $0x60] sm:$0xff]
  %v36 = vld [vmem:[%s1 + $0x68] sm:$0xff]
  %v37 = vld [vmem:[%s1 + $0x70] sm:$0xff]
  %v38 = vld [vmem:[%s1 + $0x78] sm:$0xff]
  %v39 = vpack.c.bf16 %v22, %v21
  %v40 = vpack.c.bf16 %v24, %v23
  %v41 = vpack.c.bf16 %v26, %v25
  %v42 = vpack.c.bf16 %v28, %v27
  %v43 = vpack.c.bf16 %v30, %v29
  %v44 = vpack.c.bf16 %v32, %v31
  %v45 = vpack.c.bf16 %v34, %v33
  %v46 = vpack.c.bf16 %v36, %v35
  %v47 = vpack.c.bf16 %v38, %v37
  %v48 = vld [vmem:[%s2] sm:$0x1]
  %v50 = vlaneseq
  %v51 = vshrl.u32 %v50, 7
  %v52 = vsub.s32 0, %v51
  %v53 = vrot.slane %v48, %v52
  %55 = vmatprep.subr.bf16.mxu0 0
  %56 = vmatpush1.bf16.msra.mxu0 %v47
  %57 = vmatprep.subr.bf16.mxu0 0
  %58 = vmatpush1.bf16.msra.mxu0 %v46
  %59 = vmatprep.subr.bf16.mxu0 0
  %60 = vmatpush1.bf16.msra.mxu0 %v45
  %61 = vmatprep.subr.bf16.mxu0 0
  %62 = vmatpush1.bf16.msra.mxu0 %v44
  %63 = vmatprep.subr.bf16.mxu0 0
  %64 = vmatpush1.bf16.msra.mxu0 %v43
  %65 = vmatprep.subr.bf16.mxu0 0
  %66 = vmatpush1.bf16.msra.mxu0 %v42
  %67 = vmatprep.subr.bf16.mxu0 0
  %68 = vmatpush1.bf16.msra.mxu0 %v41
  %69 = vmatprep.subr.bf16.mxu0 0
  %70 = vmatpush1.bf16.msra.mxu0 %v40
  %71 = vmatprep.subr.bf16.mxu0 0
  %72 = vmatpush2.bf16.msra.mxu0 0
  %73 = vmatprep.subr.bf16.mxu0 0
  %74 = vmatpush2.bf16.msra.mxu0 0
  %75 = vmatprep.subr.bf16.mxu0 0
  %76 = vmatpush2.bf16.msra.mxu0 0
  %77 = vmatprep.subr.bf16.mxu0 0
  %78 = vmatpush2.bf16.msra.mxu0 0
  %79 = vmatprep.subr.bf16.mxu0 0
  %80 = vmatpush2.bf16.msra.mxu0 0
  %81 = vmatprep.subr.bf16.mxu0 0
  %82 = vmatpush2.bf16.msra.mxu0 0
  %83 = vmatprep.subr.bf16.mxu0 0
  %84 = vmatpush2.bf16.msra.mxu0 0
  %85 = vmatprep.subr.bf16.mxu0 0
  %86 = vmatpush2.bf16.msra.mxu0 0
  %87 = vmatprep.mubr.bf16.mxu0 0
  %88 = vmatmul.mubr.bf16.gmra.mxu0 %v39
  %v89 = vpop.f32.mrf.mxu0
  %v90 = vadd.f32 %v53, %v89
  %v91 = vpop.f32.mrf.mxu0
  %v92 = vpop.f32.mrf.mxu0
  %v93 = vadd.f32 %v53, %v92
  %v94 = vpop.f32.mrf.mxu0
  %95 = vdwg.mxu0
  %v96 = vtanh.pop %v90
  %v97 = vtanh.pop %v93
  %v98 = vld [vmem:[%s3] sm:$0x1]
  %v99 = vld [vmem:[%s4] sm:$0x1]
  %vm100 = vcmask 523264
  %v101 = vsel %vm100, %v96, 0.0
  %102 = vadd.xlane.f32.xlu0 %v101
  %v103 = vpop.xlane.xlu0 %102
  %v104 = vsel %vm100, %v97, 0.0
  %105 = vadd.xlane.f32.xlu0 %v104
  %v106 = vpop.xlane.xlu0 %105
  %v107 = vrcp.pop 64.0
  %v108 = vmul.f32 %v103, %v107
  %v109 = vmul.f32 %v106, %v107
  %v110 = vsub.f32 %v96, %v108
  %v111 = vsub.f32 %v97, %v109
  %v112 = vmul.f32 %v110, %v110
  %v113 = vmul.f32 %v111, %v111
  %v114 = vsel %vm100, %v112, 0.0
  %115 = vadd.xlane.f32.xlu0 %v114
  %v116 = vpop.xlane.xlu0 %115
  %v117 = vsel %vm100, %v113, 0.0
  %118 = vadd.xlane.f32.xlu0 %v117
  %v119 = vpop.xlane.xlu0 %118
  %v120 = vmul.f32 %v116, %v107
  %v121 = vmul.f32 %v119, %v107
  %v122 = vadd.f32 %v120, 1e-05
  %v123 = vadd.f32 %v121, 1e-05
  %v124 = vrsqrt.pop %v122
  %v125 = vrsqrt.pop %v123
  %v126 = vmul.f32 %v110, %v124
  %v127 = vmul.f32 %v111, %v125
  %v129 = vlaneseq
  %v130 = vshrl.u32 %v129, 7
  %v131 = vsub.s32 0, %v130
  %v132 = vrot.slane %v98, %v131
  %v134 = vmul.f32 %v126, %v132
  %v135 = vmul.f32 %v127, %v132
  %v137 = vlaneseq
  %v138 = vshrl.u32 %v137, 7
  %v139 = vsub.s32 0, %v138
  %v140 = vrot.slane %v99, %v139
  %v142 = vadd.f32 %v134, %v140
  %v143 = vadd.f32 %v135, %v140
  %144 = vst.msk [vmem:[%s5] sm:$0xff] %vm100, %v142
  %145 = vst.msk [vmem:[%s5 + $0x8] sm:$0xff] %vm100, %v143
  // Predicated region
  $region22: #{deepgem_forward.25} parent=0 // pred_check
    _
  $region23: #{deepgem_forward.25} parent=0 // pred_check_branch
    %147 = sbr.rel (0) target = $region25
  $region24: #{deepgem_forward.25} parent=0 // pred_region
    _
  $region25: #{deepgem_forward.25} parent=0 // pred_fallthru
    _
  // Predicated region
  $region26: #{deepgem_forward.25} parent=0 // pred_check
    _
  $region27: #{deepgem_forward.25} parent=0 // pred_check_branch
    %149 = sbr.rel (0) target = $region29
  $region28: #{deepgem_forward.25} parent=0 // pred_region
    _
  $region29: #{deepgem_forward.25} parent=0 // pred_fallthru
    _

// kernel: deepgem_forward.23
$region0: #{deepgem_forward.23}
  #allocation0 [shape = 'u32[]', space=smem, size = 0x4, offset = 0x4, fixed_abs, tag = 'smem constant byte address 0x4 - core index']
  #allocation1 [shape = 'u32[144,128]{1,0:T(1,128)}', space=vmem, size = 0x12000, scoped, tag = 'internal scratch']
  %s0 = inlined_call_operand.vmem [shape: f32[16,64], index: 0, kind: input, shape index: {}]
  %s1 = inlined_call_operand.vmem [shape: f32[64,64], index: 1, kind: input, shape index: {}]
  %s2 = inlined_call_operand.vmem [shape: f32[1,64], index: 2, kind: input, shape index: {}]
  %s3 = inlined_call_operand.vmem [shape: f32[1,64], index: 3, kind: input, shape index: {}]
  %s4 = inlined_call_operand.vmem [shape: f32[1,64], index: 4, kind: input, shape index: {}]
  %s5 = inlined_call_operand.vmem [shape: f32[16,64], index: 5, kind: output, shape index: {}]
  %s6 = sld [smem:[#allocation0]]
  $region30: #{deepgem_forward.23} parent=0
    _
  %s8 = ssub.s32 1, %s6
  %s9 = scalar_select 0, %s8, %s6
  // Predicated region
  $region2: #{deepgem_forward.23} parent=0 // pred_check
    _
  $region3: #{deepgem_forward.23} parent=0 // pred_check_branch
    %11 = sbr.rel (0) target = $region5
  $region4: #{deepgem_forward.23} parent=0 // pred_region
    _
  $region5: #{deepgem_forward.23} parent=0 // pred_fallthru
    _
  // Predicated region
  $region6: #{deepgem_forward.23} parent=0 // pred_check
    _
  $region7: #{deepgem_forward.23} parent=0 // pred_check_branch
    %13 = sbr.rel (0) target = $region9
  $region8: #{deepgem_forward.23} parent=0 // pred_region
    _
  $region9: #{deepgem_forward.23} parent=0 // pred_fallthru
    _
  // Predicated region
  $region10: #{deepgem_forward.23} parent=0 // pred_check
    _
  $region11: #{deepgem_forward.23} parent=0 // pred_check_branch
    %15 = sbr.rel (0) target = $region13
  $region12: #{deepgem_forward.23} parent=0 // pred_region
    _
  $region13: #{deepgem_forward.23} parent=0 // pred_fallthru
    _
  // Predicated region
  $region14: #{deepgem_forward.23} parent=0 // pred_check
    _
  $region15: #{deepgem_forward.23} parent=0 // pred_check_branch
    %17 = sbr.rel (0) target = $region17
  $region16: #{deepgem_forward.23} parent=0 // pred_region
    _
  $region17: #{deepgem_forward.23} parent=0 // pred_fallthru
    _
  // Predicated region
  $region18: #{deepgem_forward.23} parent=0 // pred_check
    _
  $region19: #{deepgem_forward.23} parent=0 // pred_check_branch
    %19 = sbr.rel (0) target = $region21
  $region20: #{deepgem_forward.23} parent=0 // pred_region
    _
  $region21: #{deepgem_forward.23} parent=0 // pred_fallthru
    _
  %v21 = vld [vmem:[%s0] sm:$0xff]
  %v22 = vld [vmem:[%s0 + $0x8] sm:$0xff]
  %v23 = vld [vmem:[%s1] sm:$0xff]
  %v24 = vld [vmem:[%s1 + $0x8] sm:$0xff]
  %v25 = vld [vmem:[%s1 + $0x10] sm:$0xff]
  %v26 = vld [vmem:[%s1 + $0x18] sm:$0xff]
  %v27 = vld [vmem:[%s1 + $0x20] sm:$0xff]
  %v28 = vld [vmem:[%s1 + $0x28] sm:$0xff]
  %v29 = vld [vmem:[%s1 + $0x30] sm:$0xff]
  %v30 = vld [vmem:[%s1 + $0x38] sm:$0xff]
  %v31 = vpack.c.bf16 %v22, %v21
  %v32 = vpack.c.bf16 %v24, %v23
  %v33 = vpack.c.bf16 %v26, %v25
  %v34 = vpack.c.bf16 %v28, %v27
  %v35 = vpack.c.bf16 %v30, %v29
  %v36 = vld [vmem:[%s2] sm:$0x1]
  %v38 = vlaneseq
  %v39 = vshrl.u32 %v38, 7
  %v40 = vsub.s32 0, %v39
  %v41 = vrot.slane %v36, %v40
  %vm43 = vcmask 523264
  %v45 = vsel %vm43, %v31, 0
  %47 = vmatprep.subr.bf16.mxu0 0
  %48 = vmatpush1.bf16.msra.mxu0 0
  %49 = vmatprep.subr.bf16.mxu0 0
  %50 = vmatpush1.bf16.msra.mxu0 0
  %51 = vmatprep.subr.bf16.mxu0 0
  %52 = vmatpush1.bf16.msra.mxu0 0
  %53 = vmatprep.subr.bf16.mxu0 0
  %54 = vmatpush1.bf16.msra.mxu0 0
  %55 = vmatprep.subr.bf16.mxu0 0
  %56 = vmatpush1.bf16.msra.mxu0 %v35
  %57 = vmatprep.subr.bf16.mxu0 0
  %58 = vmatpush1.bf16.msra.mxu0 %v34
  %59 = vmatprep.subr.bf16.mxu0 0
  %60 = vmatpush1.bf16.msra.mxu0 %v33
  %61 = vmatprep.subr.bf16.mxu0 0
  %62 = vmatpush1.bf16.msra.mxu0 %v32
  %63 = vmatprep.subr.bf16.mxu0 0
  %64 = vmatpush2.bf16.msra.mxu0 0
  %65 = vmatprep.subr.bf16.mxu0 0
  %66 = vmatpush2.bf16.msra.mxu0 0
  %67 = vmatprep.subr.bf16.mxu0 0
  %68 = vmatpush2.bf16.msra.mxu0 0
  %69 = vmatprep.subr.bf16.mxu0 0
  %70 = vmatpush2.bf16.msra.mxu0 0
  %71 = vmatprep.subr.bf16.mxu0 0
  %72 = vmatpush2.bf16.msra.mxu0 0
  %73 = vmatprep.subr.bf16.mxu0 0
  %74 = vmatpush2.bf16.msra.mxu0 0
  %75 = vmatprep.subr.bf16.mxu0 0
  %76 = vmatpush2.bf16.msra.mxu0 0
  %77 = vmatprep.subr.bf16.mxu0 0
  %78 = vmatpush2.bf16.msra.mxu0 0
  %79 = vmatprep.mubr.bf16.mxu0 0
  %80 = vmatmul.mubr.bf16.gmra.mxu0 %v45
  %v81 = vpop.f32.mrf.mxu0
  %v82 = vadd.f32 %v41, %v81
  %v83 = vpop.f32.mrf.mxu0
  %v84 = vpop.f32.mrf.mxu0
  %v85 = vadd.f32 %v41, %v84
  %v86 = vpop.f32.mrf.mxu0
  %87 = vdwg.mxu0
  %v88 = vtanh.pop %v82
  %v89 = vtanh.pop %v85
  %v90 = vld [vmem:[%s3] sm:$0x1]
  %v91 = vld [vmem:[%s4] sm:$0x1]
  %v92 = vsel %vm43, %v88, 0.0
  %93 = vadd.xlane.f32.xlu0 %v92
  %v94 = vpop.xlane.xlu0 %93
  %v95 = vsel %vm43, %v89, 0.0
  %96 = vadd.xlane.f32.xlu0 %v95
  %v97 = vpop.xlane.xlu0 %96
  %v98 = vrcp.pop 64.0
  %v99 = vmul.f32 %v94, %v98
  %v100 = vmul.f32 %v97, %v98
  %v101 = vsub.f32 %v88, %v99
  %v102 = vsub.f32 %v89, %v100
  %v103 = vmul.f32 %v101, %v101
  %v104 = vmul.f32 %v102, %v102
  %v105 = vsel %vm43, %v103, 0.0
  %106 = vadd.xlane.f32.xlu0 %v105
  %v107 = vpop.xlane.xlu0 %106
  %v108 = vsel %vm43, %v104, 0.0
  %109 = vadd.xlane.f32.xlu0 %v108
  %v110 = vpop.xlane.xlu0 %109
  %v111 = vmul.f32 %v107, %v98
  %v112 = vmul.f32 %v110, %v98
  %v113 = vadd.f32 %v111, 1e-05
  %v114 = vadd.f32 %v112, 1e-05
  %v115 = vrsqrt.pop %v113
  %v116 = vrsqrt.pop %v114
  %v117 = vmul.f32 %v101, %v115
  %v118 = vmul.f32 %v102, %v116
  %v120 = vlaneseq
  %v121 = vshrl.u32 %v120, 7
  %v122 = vsub.s32 0, %v121
  %v123 = vrot.slane %v90, %v122
  %v125 = vmul.f32 %v117, %v123
  %v126 = vmul.f32 %v118, %v123
  %v128 = vlaneseq
  %v129 = vshrl.u32 %v128, 7
  %v130 = vsub.s32 0, %v129
  %v131 = vrot.slane %v91, %v130
  %v133 = vadd.f32 %v125, %v131
  %v134 = vadd.f32 %v126, %v131
  %135 = vst.msk [vmem:[%s5] sm:$0xff] %vm43, %v133
  %136 = vst.msk [vmem:[%s5 + $0x8] sm:$0xff] %vm43, %v134
  // Predicated region
  $region22: #{deepgem_forward.23} parent=0 // pred_check
    _
  $region23: #{deepgem_forward.23} parent=0 // pred_check_branch
    %138 = sbr.rel (0) target = $region25
  $region24: #{deepgem_forward.23} parent=0 // pred_region
    _
  $region25: #{deepgem_forward.23} parent=0 // pred_fallthru
    _
  // Predicated region
  $region26: #{deepgem_forward.23} parent=0 // pred_check
    _
  $region27: #{deepgem_forward.23} parent=0 // pred_check_branch
    %140 = sbr.rel (0) target = $region29
  $region28: #{deepgem_forward.23} parent=0 // pred_region
    _
  $region29: #{deepgem_forward.23} parent=0 // pred_fallthru
    _

// kernel: deepgem_forward.27
$region0: #{deepgem_forward.27}
  #allocation0 [shape = 'u32[]', space=smem, size = 0x4, offset = 0x4, fixed_abs, tag = 'smem constant byte address 0x4 - core index']
  #allocation1 [shape = 'u32[144,128]{1,0:T(1,128)}', space=vmem, size = 0x12000, scoped, tag = 'internal scratch']
  %s0 = inlined_call_operand.vmem [shape: f32[16,64], index: 0, kind: input, shape index: {}]
  %s1 = inlined_call_operand.vmem [shape: f32[64,32], index: 1, kind: input, shape index: {}]
  %s2 = inlined_call_operand.vmem [shape: f32[1,32], index: 2, kind: input, shape index: {}]
  %s3 = inlined_call_operand.vmem [shape: f32[1,32], index: 3, kind: input, shape index: {}]
  %s4 = inlined_call_operand.vmem [shape: f32[1,32], index: 4, kind: input, shape index: {}]
  %s5 = inlined_call_operand.vmem [shape: f32[16,32], index: 5, kind: output, shape index: {}]
  %s6 = sld [smem:[#allocation0]]
  $region30: #{deepgem_forward.27} parent=0
    _
  %s8 = ssub.s32 1, %s6
  %s9 = scalar_select 0, %s8, %s6
  // Predicated region
  $region2: #{deepgem_forward.27} parent=0 // pred_check
    _
  $region3: #{deepgem_forward.27} parent=0 // pred_check_branch
    %11 = sbr.rel (0) target = $region5
  $region4: #{deepgem_forward.27} parent=0 // pred_region
    _
  $region5: #{deepgem_forward.27} parent=0 // pred_fallthru
    _
  // Predicated region
  $region6: #{deepgem_forward.27} parent=0 // pred_check
    _
  $region7: #{deepgem_forward.27} parent=0 // pred_check_branch
    %13 = sbr.rel (0) target = $region9
  $region8: #{deepgem_forward.27} parent=0 // pred_region
    _
  $region9: #{deepgem_forward.27} parent=0 // pred_fallthru
    _
  // Predicated region
  $region10: #{deepgem_forward.27} parent=0 // pred_check
    _
  $region11: #{deepgem_forward.27} parent=0 // pred_check_branch
    %15 = sbr.rel (0) target = $region13
  $region12: #{deepgem_forward.27} parent=0 // pred_region
    _
  $region13: #{deepgem_forward.27} parent=0 // pred_fallthru
    _
  // Predicated region
  $region14: #{deepgem_forward.27} parent=0 // pred_check
    _
  $region15: #{deepgem_forward.27} parent=0 // pred_check_branch
    %17 = sbr.rel (0) target = $region17
  $region16: #{deepgem_forward.27} parent=0 // pred_region
    _
  $region17: #{deepgem_forward.27} parent=0 // pred_fallthru
    _
  // Predicated region
  $region18: #{deepgem_forward.27} parent=0 // pred_check
    _
  $region19: #{deepgem_forward.27} parent=0 // pred_check_branch
    %19 = sbr.rel (0) target = $region21
  $region20: #{deepgem_forward.27} parent=0 // pred_region
    _
  $region21: #{deepgem_forward.27} parent=0 // pred_fallthru
    _
  %v21 = vld [vmem:[%s0] sm:$0xff]
  %v22 = vld [vmem:[%s0 + $0x8] sm:$0xff]
  %v23 = vld [vmem:[%s1] sm:$0xff]
  %v24 = vld [vmem:[%s1 + $0x8] sm:$0xff]
  %v25 = vld [vmem:[%s1 + $0x10] sm:$0xff]
  %v26 = vld [vmem:[%s1 + $0x18] sm:$0xff]
  %v27 = vld [vmem:[%s1 + $0x20] sm:$0xff]
  %v28 = vld [vmem:[%s1 + $0x28] sm:$0xff]
  %v29 = vld [vmem:[%s1 + $0x30] sm:$0xff]
  %v30 = vld [vmem:[%s1 + $0x38] sm:$0xff]
  %v31 = vpack.c.bf16 %v22, %v21
  %v32 = vpack.c.bf16 %v24, %v23
  %v33 = vpack.c.bf16 %v26, %v25
  %v34 = vpack.c.bf16 %v28, %v27
  %v35 = vpack.c.bf16 %v30, %v29
  %v36 = vld [vmem:[%s2] sm:$0x1]
  %v38 = vlaneseq
  %v39 = vshrl.u32 %v38, 7
  %v40 = vsub.s32 0, %v39
  %v41 = vrot.slane %v36, %v40
  %vm43 = vcmask 523264
  %v45 = vsel %vm43, %v31, 0
  %47 = vmatprep.subr.bf16.mxu0 0
  %48 = vmatpush1.bf16.msra.mxu0 0
  %49 = vmatprep.subr.bf16.mxu0 0
  %50 = vmatpush1.bf16.msra.mxu0 0
  %51 = vmatprep.subr.bf16.mxu0 0
  %52 = vmatpush1.bf16.msra.mxu0 0
  %53 = vmatprep.subr.bf16.mxu0 0
  %54 = vmatpush1.bf16.msra.mxu0 0
  %55 = vmatprep.subr.bf16.mxu0 0
  %56 = vmatpush1.bf16.msra.mxu0 %v35
  %57 = vmatprep.subr.bf16.mxu0 0
  %58 = vmatpush1.bf16.msra.mxu0 %v34
  %59 = vmatprep.subr.bf16.mxu0 0
  %60 = vmatpush1.bf16.msra.mxu0 %v33
  %61 = vmatprep.subr.bf16.mxu0 0
  %62 = vmatpush1.bf16.msra.mxu0 %v32
  %63 = vmatprep.subr.bf16.mxu0 0
  %64 = vmatpush2.bf16.msra.mxu0 0
  %65 = vmatprep.subr.bf16.mxu0 0
  %66 = vmatpush2.bf16.msra.mxu0 0
  %67 = vmatprep.subr.bf16.mxu0 0
  %68 = vmatpush2.bf16.msra.mxu0 0
  %69 = vmatprep.subr.bf16.mxu0 0
  %70 = vmatpush2.bf16.msra.mxu0 0
  %71 = vmatprep.subr.bf16.mxu0 0
  %72 = vmatpush2.bf16.msra.mxu0 0
  %73 = vmatprep.subr.bf16.mxu0 0
  %74 = vmatpush2.bf16.msra.mxu0 0
  %75 = vmatprep.subr.bf16.mxu0 0
  %76 = vmatpush2.bf16.msra.mxu0 0
  %77 = vmatprep.subr.bf16.mxu0 0
  %78 = vmatpush2.bf16.msra.mxu0 0
  %79 = vmatprep.mubr.bf16.mxu0 0
  %80 = vmatmul.mubr.bf16.gmra.mxu0 %v45
  %v81 = vpop.f32.mrf.mxu0
  %v82 = vadd.f32 %v41, %v81
  %v83 = vpop.f32.mrf.mxu0
  %v84 = vpop.f32.mrf.mxu0
  %v85 = vadd.f32 %v41, %v84
  %v86 = vpop.f32.mrf.mxu0
  %87 = vdwg.mxu0
  %v88 = vtanh.pop %v82
  %v89 = vtanh.pop %v85
  %v90 = vld [vmem:[%s3] sm:$0x1]
  %v91 = vld [vmem:[%s4] sm:$0x1]
  %vm92 = vcmask 261120
  %v93 = vsel %vm92, %v88, 0.0
  %94 = vadd.xlane.f32.xlu0 %v93
  %v95 = vpop.xlane.xlu0 %94
  %v96 = vsel %vm92, %v89, 0.0
  %97 = vadd.xlane.f32.xlu0 %v96
  %v98 = vpop.xlane.xlu0 %97
  %v99 = vrcp.pop 32.0
  %v100 = vmul.f32 %v95, %v99
  %v101 = vmul.f32 %v98, %v99
  %v102 = vsub.f32 %v88, %v100
  %v103 = vsub.f32 %v89, %v101
  %v104 = vmul.f32 %v102, %v102
  %v105 = vmul.f32 %v103, %v103
  %v106 = vsel %vm92, %v104, 0.0
  %107 = vadd.xlane.f32.xlu0 %v106
  %v108 = vpop.xlane.xlu0 %107
  %v109 = vsel %vm92, %v105, 0.0
  %110 = vadd.xlane.f32.xlu0 %v109
  %v111 = vpop.xlane.xlu0 %110
  %v112 = vmul.f32 %v108, %v99
  %v113 = vmul.f32 %v111, %v99
  %v114 = vadd.f32 %v112, 1e-05
  %v115 = vadd.f32 %v113, 1e-05
  %v116 = vrsqrt.pop %v114
  %v117 = vrsqrt.pop %v115
  %v118 = vmul.f32 %v102, %v116
  %v119 = vmul.f32 %v103, %v117
  %v121 = vlaneseq
  %v122 = vshrl.u32 %v121, 7
  %v123 = vsub.s32 0, %v122
  %v124 = vrot.slane %v90, %v123
  %v126 = vmul.f32 %v118, %v124
  %v127 = vmul.f32 %v119, %v124
  %v129 = vlaneseq
  %v130 = vshrl.u32 %v129, 7
  %v131 = vsub.s32 0, %v130
  %v132 = vrot.slane %v91, %v131
  %v134 = vadd.f32 %v126, %v132
  %v135 = vadd.f32 %v127, %v132
  %136 = vst.msk [vmem:[%s5] sm:$0xff] %vm92, %v134
  %137 = vst.msk [vmem:[%s5 + $0x8] sm:$0xff] %vm92, %v135
  // Predicated region
  $region22: #{deepgem_forward.27} parent=0 // pred_check
    _
  $region23: #{deepgem_forward.27} parent=0 // pred_check_branch
    %139 = sbr.rel (0) target = $region25
  $region24: #{deepgem_forward.27} parent=0 // pred_region
    _
  $region25: #{deepgem_forward.27} parent=0 // pred_fallthru
    _
  // Predicated region
  $region26: #{deepgem_forward.27} parent=0 // pred_check
    _
  $region27: #{deepgem_forward.27} parent=0 // pred_check_branch
    %141 = sbr.rel (0) target = $region29
  $region28: #{deepgem_forward.27} parent=0 // pred_region
    _
  $region29: #{deepgem_forward.27} parent=0 // pred_fallthru
    _

// kernel: deepgem_forward.30
$region0: #{deepgem_forward.30}
  #allocation0 [shape = 'u32[]', space=smem, size = 0x4, offset = 0x4, fixed_abs, tag = 'smem constant byte address 0x4 - core index']
  #allocation1 [shape = 'u32[144,128]{1,0:T(1,128)}', space=vmem, size = 0x12000, scoped, tag = 'internal scratch']
  %s0 = inlined_call_operand.vmem [shape: f32[16,64], index: 0, kind: input, shape index: {}]
  %s1 = inlined_call_operand.vmem [shape: f32[16,32], index: 1, kind: input, shape index: {}]
  %s2 = inlined_call_operand.vmem [shape: f32[64,32], index: 2, kind: input, shape index: {}]
  %s3 = inlined_call_operand.vmem [shape: f32[1,32], index: 3, kind: input, shape index: {}]
  %s4 = inlined_call_operand.vmem [shape: f32[16,32], index: 4, kind: output, shape index: {}]
  %s5 = sld [smem:[#allocation0]]
  $region26: #{deepgem_forward.30} parent=0
    _
  %s7 = ssub.s32 1, %s5
  %s8 = scalar_select 0, %s7, %s5
  // Predicated region
  $region2: #{deepgem_forward.30} parent=0 // pred_check
    _
  $region3: #{deepgem_forward.30} parent=0 // pred_check_branch
    %10 = sbr.rel (0) target = $region5
  $region4: #{deepgem_forward.30} parent=0 // pred_region
    _
  $region5: #{deepgem_forward.30} parent=0 // pred_fallthru
    _
  // Predicated region
  $region6: #{deepgem_forward.30} parent=0 // pred_check
    _
  $region7: #{deepgem_forward.30} parent=0 // pred_check_branch
    %12 = sbr.rel (0) target = $region9
  $region8: #{deepgem_forward.30} parent=0 // pred_region
    _
  $region9: #{deepgem_forward.30} parent=0 // pred_fallthru
    _
  // Predicated region
  $region10: #{deepgem_forward.30} parent=0 // pred_check
    _
  $region11: #{deepgem_forward.30} parent=0 // pred_check_branch
    %14 = sbr.rel (0) target = $region13
  $region12: #{deepgem_forward.30} parent=0 // pred_region
    _
  $region13: #{deepgem_forward.30} parent=0 // pred_fallthru
    _
  // Predicated region
  $region14: #{deepgem_forward.30} parent=0 // pred_check
    _
  $region15: #{deepgem_forward.30} parent=0 // pred_check_branch
    %16 = sbr.rel (0) target = $region17
  $region16: #{deepgem_forward.30} parent=0 // pred_region
    _
  $region17: #{deepgem_forward.30} parent=0 // pred_fallthru
    _
  %v18 = vld [vmem:[%s0] sm:$0xff]
  %v19 = vld [vmem:[%s0 + $0x8] sm:$0xff]
  %v20 = vld [vmem:[%s2] sm:$0xff]
  %v21 = vld [vmem:[%s2 + $0x8] sm:$0xff]
  %v22 = vld [vmem:[%s2 + $0x10] sm:$0xff]
  %v23 = vld [vmem:[%s2 + $0x18] sm:$0xff]
  %v24 = vld [vmem:[%s2 + $0x20] sm:$0xff]
  %v25 = vld [vmem:[%s2 + $0x28] sm:$0xff]
  %v26 = vld [vmem:[%s2 + $0x30] sm:$0xff]
  %v27 = vld [vmem:[%s2 + $0x38] sm:$0xff]
  %v28 = vpack.c.bf16 %v19, %v18
  %v29 = vpack.c.bf16 %v21, %v20
  %v30 = vpack.c.bf16 %v23, %v22
  %v31 = vpack.c.bf16 %v25, %v24
  %v32 = vpack.c.bf16 %v27, %v26
  %v33 = vld [vmem:[%s3] sm:$0x1]
  %v35 = vlaneseq
  %v36 = vshrl.u32 %v35, 7
  %v37 = vsub.s32 0, %v36
  %v38 = vrot.slane %v33, %v37
  %vm40 = vcmask 523264
  %v42 = vsel %vm40, %v28, 0
  %44 = vmatprep.subr.bf16.mxu0 0
  %45 = vmatpush1.bf16.msra.mxu0 0
  %46 = vmatprep.subr.bf16.mxu0 0
  %47 = vmatpush1.bf16.msra.mxu0 0
  %48 = vmatprep.subr.bf16.mxu0 0
  %49 = vmatpush1.bf16.msra.mxu0 0
  %50 = vmatprep.subr.bf16.mxu0 0
  %51 = vmatpush1.bf16.msra.mxu0 0
  %52 = vmatprep.subr.bf16.mxu0 0
  %53 = vmatpush1.bf16.msra.mxu0 %v32
  %54 = vmatprep.subr.bf16.mxu0 0
  %55 = vmatpush1.bf16.msra.mxu0 %v31
  %56 = vmatprep.subr.bf16.mxu0 0
  %57 = vmatpush1.bf16.msra.mxu0 %v30
  %58 = vmatprep.subr.bf16.mxu0 0
  %59 = vmatpush1.bf16.msra.mxu0 %v29
  %60 = vmatprep.subr.bf16.mxu0 0
  %61 = vmatpush2.bf16.msra.mxu0 0
  %62 = vmatprep.subr.bf16.mxu0 0
  %63 = vmatpush2.bf16.msra.mxu0 0
  %64 = vmatprep.subr.bf16.mxu0 0
  %65 = vmatpush2.bf16.msra.mxu0 0
  %66 = vmatprep.subr.bf16.mxu0 0
  %67 = vmatpush2.bf16.msra.mxu0 0
  %68 = vmatprep.subr.bf16.mxu0 0
  %69 = vmatpush2.bf16.msra.mxu0 0
  %70 = vmatprep.subr.bf16.mxu0 0
  %71 = vmatpush2.bf16.msra.mxu0 0
  %72 = vmatprep.subr.bf16.mxu0 0
  %73 = vmatpush2.bf16.msra.mxu0 0
  %74 = vmatprep.subr.bf16.mxu0 0
  %75 = vmatpush2.bf16.msra.mxu0 0
  %76 = vmatprep.mubr.bf16.mxu0 0
  %77 = vmatmul.mubr.bf16.gmra.mxu0 %v42
  %v78 = vpop.f32.mrf.mxu0
  %v79 = vadd.f32 %v38, %v78
  %v80 = vpop.f32.mrf.mxu0
  %v81 = vpop.f32.mrf.mxu0
  %v82 = vadd.f32 %v38, %v81
  %v83 = vpop.f32.mrf.mxu0
  %84 = vdwg.mxu0
  %v85 = vmax.f32 %v79, 0.0
  %v86 = vmax.f32 %v82, 0.0
  %v87 = vld [vmem:[%s1] sm:$0xff]
  %v88 = vld [vmem:[%s1 + $0x8] sm:$0xff]
  %v89 = vadd.f32 %v87, %v85
  %v90 = vadd.f32 %v88, %v86
  %vm91 = vcmask 261120
  %92 = vst.msk [vmem:[%s4] sm:$0xff] %vm91, %v89
  %93 = vst.msk [vmem:[%s4 + $0x8] sm:$0xff] %vm91, %v90
  // Predicated region
  $region18: #{deepgem_forward.30} parent=0 // pred_check
    _
  $region19: #{deepgem_forward.30} parent=0 // pred_check_branch
    %95 = sbr.rel (0) target = $region21
  $region20: #{deepgem_forward.30} parent=0 // pred_region
    _
  $region21: #{deepgem_forward.30} parent=0 // pred_fallthru
    _
  // Predicated region
  $region22: #{deepgem_forward.30} parent=0 // pred_check
    _
  $region23: #{deepgem_forward.30} parent=0 // pred_check_branch
    %97 = sbr.rel (0) target = $region25
  $region24: #{deepgem_forward.30} parent=0 // pred_region
    _
  $region25: #{deepgem_forward.30} parent=0 // pred_fallthru
    _

// kernel: deepgem_forward.29
$region0: #{deepgem_forward.29}
  #allocation0 [shape = 'u32[]', space=smem, size = 0x4, offset = 0x4, fixed_abs, tag = 'smem constant byte address 0x4 - core index']
  #allocation1 [shape = 'u32[144,128]{1,0:T(1,128)}', space=vmem, size = 0x12000, scoped, tag = 'internal scratch']
  %s0 = inlined_call_operand.vmem [shape: f32[16,32], index: 0, kind: input, shape index: {}]
  %s1 = inlined_call_operand.vmem [shape: f32[32,64], index: 1, kind: input, shape index: {}]
  %s2 = inlined_call_operand.vmem [shape: f32[1,64], index: 2, kind: input, shape index: {}]
  %s3 = inlined_call_operand.vmem [shape: f32[64,32], index: 3, kind: input, shape index: {}]
  %s4 = inlined_call_operand.vmem [shape: f32[1,32], index: 4, kind: input, shape index: {}]
  %s5 = inlined_call_operand.vmem [shape: f32[1,32], index: 5, kind: input, shape index: {}]
  %s6 = inlined_call_operand.vmem [shape: f32[1,32], index: 6, kind: input, shape index: {}]
  %s7 = inlined_call_operand.vmem [shape: f32[16,32], index: 7, kind: output, shape index: {}]
  %s8 = sld [smem:[#allocation0]]
  $region38: #{deepgem_forward.29} parent=0
    _
  %s10 = ssub.s32 1, %s8
  %s11 = scalar_select 0, %s10, %s8
  // Predicated region
  $region2: #{deepgem_forward.29} parent=0 // pred_check
    _
  $region3: #{deepgem_forward.29} parent=0 // pred_check_branch
    %13 = sbr.rel (0) target = $region5
  $region4: #{deepgem_forward.29} parent=0 // pred_region
    _
  $region5: #{deepgem_forward.29} parent=0 // pred_fallthru
    _
  // Predicated region
  $region6: #{deepgem_forward.29} parent=0 // pred_check
    _
  $region7: #{deepgem_forward.29} parent=0 // pred_check_branch
    %15 = sbr.rel (0) target = $region9
  $region8: #{deepgem_forward.29} parent=0 // pred_region
    _
  $region9: #{deepgem_forward.29} parent=0 // pred_fallthru
    _
  // Predicated region
  $region10: #{deepgem_forward.29} parent=0 // pred_check
    _
  $region11: #{deepgem_forward.29} parent=0 // pred_check_branch
    %17 = sbr.rel (0) target = $region13
  $region12: #{deepgem_forward.29} parent=0 // pred_region
    _
  $region13: #{deepgem_forward.29} parent=0 // pred_fallthru
    _
  // Predicated region
  $region14: #{deepgem_forward.29} parent=0 // pred_check
    _
  $region15: #{deepgem_forward.29} parent=0 // pred_check_branch
    %19 = sbr.rel (0) target = $region17
  $region16: #{deepgem_forward.29} parent=0 // pred_region
    _
  $region17: #{deepgem_forward.29} parent=0 // pred_fallthru
    _
  // Predicated region
  $region18: #{deepgem_forward.29} parent=0 // pred_check
    _
  $region19: #{deepgem_forward.29} parent=0 // pred_check_branch
    %21 = sbr.rel (0) target = $region21
  $region20: #{deepgem_forward.29} parent=0 // pred_region
    _
  $region21: #{deepgem_forward.29} parent=0 // pred_fallthru
    _
  // Predicated region
  $region22: #{deepgem_forward.29} parent=0 // pred_check
    _
  $region23: #{deepgem_forward.29} parent=0 // pred_check_branch
    %23 = sbr.rel (0) target = $region25
  $region24: #{deepgem_forward.29} parent=0 // pred_region
    _
  $region25: #{deepgem_forward.29} parent=0 // pred_fallthru
    _
  // Predicated region
  $region26: #{deepgem_forward.29} parent=0 // pred_check
    _
  $region27: #{deepgem_forward.29} parent=0 // pred_check_branch
    %25 = sbr.rel (0) target = $region29
  $region28: #{deepgem_forward.29} parent=0 // pred_region
    _
  $region29: #{deepgem_forward.29} parent=0 // pred_fallthru
    _
  %v27 = vld [vmem:[%s0] sm:$0xff]
  %v28 = vld [vmem:[%s0 + $0x8] sm:$0xff]
  %v29 = vld [vmem:[%s1] sm:$0xff]
  %v30 = vld [vmem:[%s1 + $0x8] sm:$0xff]
  %v31 = vld [vmem:[%s1 + $0x10] sm:$0xff]
  %v32 = vld [vmem:[%s1 + $0x18] sm:$0xff]
  %v33 = vpack.c.bf16 %v28, %v27
  %v34 = vpack.c.bf16 %v30, %v29
  %v35 = vpack.c.bf16 %v32, %v31
  %v36 = vld [vmem:[%s2] sm:$0x1]
  %v38 = vlaneseq
  %v39 = vshrl.u32 %v38, 7
  %v40 = vsub.s32 0, %v39
  %v41 = vrot.slane %v36, %v40
  %vm43 = vcmask 261120
  %v45 = vsel %vm43, %v33, 0
  %47 = vmatprep.subr.bf16.mxu0 0
  %48 = vmatpush1.bf16.msra.mxu0 0
  %49 = vmatprep.subr.bf16.mxu0 0
  %50 = vmatpush1.bf16.msra.mxu0 0
  %51 = vmatprep.subr.bf16.mxu0 0
  %52 = vmatpush1.bf16.msra.mxu0 0
  %53 = vmatprep.subr.bf16.mxu0 0
  %54 = vmatpush1.bf16.msra.mxu0 0
  %55 = vmatprep.subr.bf16.mxu0 0
  %56 = vmatpush1.bf16.msra.mxu0 0
  %57 = vmatprep.subr.bf16.mxu0 0
  %58 = vmatpush1.bf16.msra.mxu0 0
  %59 = vmatprep.subr.bf16.mxu0 0
  %60 = vmatpush1.bf16.msra.mxu0 %v35
  %61 = vmatprep.subr.bf16.mxu0 0
  %62 = vmatpush1.bf16.msra.mxu0 %v34
  %63 = vmatprep.subr.bf16.mxu0 0
  %64 = vmatpush2.bf16.msra.mxu0 0
  %65 = vmatprep.subr.bf16.mxu0 0
  %66 = vmatpush2.bf16.msra.mxu0 0
  %67 = vmatprep.subr.bf16.mxu0 0
  %68 = vmatpush2.bf16.msra.mxu0 0
  %69 = vmatprep.subr.bf16.mxu0 0
  %70 = vmatpush2.bf16.msra.mxu0 0
  %71 = vmatprep.subr.bf16.mxu0 0
  %72 = vmatpush2.bf16.msra.mxu0 0
  %73 = vmatprep.subr.bf16.mxu0 0
  %74 = vmatpush2.bf16.msra.mxu0 0
  %75 = vmatprep.subr.bf16.mxu0 0
  %76 = vmatpush2.bf16.msra.mxu0 0
  %77 = vmatprep.subr.bf16.mxu0 0
  %78 = vmatpush2.bf16.msra.mxu0 0
  %79 = vmatprep.mubr.bf16.mxu0 0
  %80 = vmatmul.mubr.bf16.gmra.mxu0 %v45
  %v81 = vpop.f32.mrf.mxu0
  %v82 = vadd.f32 %v41, %v81
  %v83 = vpop.f32.mrf.mxu0
  %v84 = vpop.f32.mrf.mxu0
  %v85 = vadd.f32 %v41, %v84
  %v86 = vpop.f32.mrf.mxu0
  %87 = vdwg.mxu0
  %v88 = vmax.f32 %v82, 0.0
  %v89 = vmax.f32 %v85, 0.0
  %v90 = vld [vmem:[%s3] sm:$0xff]
  %v91 = vld [vmem:[%s3 + $0x8] sm:$0xff]
  %v92 = vld [vmem:[%s3 + $0x10] sm:$0xff]
  %v93 = vld [vmem:[%s3 + $0x18] sm:$0xff]
  %v94 = vld [vmem:[%s3 + $0x20] sm:$0xff]
  %v95 = vld [vmem:[%s3 + $0x28] sm:$0xff]
  %v96 = vld [vmem:[%s3 + $0x30] sm:$0xff]
  %v97 = vld [vmem:[%s3 + $0x38] sm:$0xff]
  %v98 = vpack.c.bf16 %v89, %v88
  %v99 = vpack.c.bf16 %v91, %v90
  %v100 = vpack.c.bf16 %v93, %v92
  %v101 = vpack.c.bf16 %v95, %v94
  %v102 = vpack.c.bf16 %v97, %v96
  %v103 = vld [vmem:[%s4] sm:$0x1]
  %v105 = vlaneseq
  %v106 = vshrl.u32 %v105, 7
  %v107 = vsub.s32 0, %v106
  %v108 = vrot.slane %v103, %v107
  %vm110 = vcmask 523264
  %v112 = vsel %vm110, %v98, 0
  %114 = vmatprep.subr.bf16.mxu0 0
  %115 = vmatpush1.bf16.msra.mxu0 0
  %116 = vmatprep.subr.bf16.mxu0 0
  %117 = vmatpush1.bf16.msra.mxu0 0
  %118 = vmatprep.subr.bf16.mxu0 0
  %119 = vmatpush1.bf16.msra.mxu0 0
  %120 = vmatprep.subr.bf16.mxu0 0
  %121 = vmatpush1.bf16.msra.mxu0 0
  %122 = vmatprep.subr.bf16.mxu0 0
  %123 = vmatpush1.bf16.msra.mxu0 %v102
  %124 = vmatprep.subr.bf16.mxu0 0
  %125 = vmatpush1.bf16.msra.mxu0 %v101
  %126 = vmatprep.subr.bf16.mxu0 0
  %127 = vmatpush1.bf16.msra.mxu0 %v100
  %128 = vmatprep.subr.bf16.mxu0 0
  %129 = vmatpush1.bf16.msra.mxu0 %v99
  %130 = vmatprep.subr.bf16.mxu0 0
  %131 = vmatpush2.bf16.msra.mxu0 0
  %132 = vmatprep.subr.bf16.mxu0 0
  %133 = vmatpush2.bf16.msra.mxu0 0
  %134 = vmatprep.subr.bf16.mxu0 0
  %135 = vmatpush2.bf16.msra.mxu0 0
  %136 = vmatprep.subr.bf16.mxu0 0
  %137 = vmatpush2.bf16.msra.mxu0 0
  %138 = vmatprep.subr.bf16.mxu0 0
  %139 = vmatpush2.bf16.msra.mxu0 0
  %140 = vmatprep.subr.bf16.mxu0 0
  %141 = vmatpush2.bf16.msra.mxu0 0
  %142 = vmatprep.subr.bf16.mxu0 0
  %143 = vmatpush2.bf16.msra.mxu0 0
  %144 = vmatprep.subr.bf16.mxu0 0
  %145 = vmatpush2.bf16.msra.mxu0 0
  %146 = vmatprep.mubr.bf16.mxu0 0
  %147 = vmatmul.mubr.bf16.gmra.mxu0 %v112
  %v148 = vpop.f32.mrf.mxu0
  %v149 = vadd.f32 %v108, %v148
  %v150 = vpop.f32.mrf.mxu0
  %v151 = vpop.f32.mrf.mxu0
  %v152 = vadd.f32 %v108, %v151
  %v153 = vpop.f32.mrf.mxu0
  %154 = vdwg.mxu0
  %v155 = vadd.f32 %v27, %v149
  %v156 = vadd.f32 %v28, %v152
  %v157 = vld [vmem:[%s5] sm:$0x1]
  %v158 = vld [vmem:[%s6] sm:$0x1]
  %v159 = vsel %vm43, %v155, 0.0
  %160 = vadd.xlane.f32.xlu0 %v159
  %v161 = vpop.xlane.xlu0 %160
  %v162 = vsel %vm43, %v156, 0.0
  %163 = vadd.xlane.f32.xlu0 %v162
  %v164 = vpop.xlane.xlu0 %163
  %v165 = vrcp.pop 32.0
  %v166 = vmul.f32 %v161, %v165
  %v167 = vmul.f32 %v164, %v165
  %v168 = vsub.f32 %v155, %v166
  %v169 = vsub.f32 %v156, %v167
  %v170 = vmul.f32 %v168, %v168
  %v171 = vmul.f32 %v169, %v169
  %v172 = vsel %vm43, %v170, 0.0
  %173 = vadd.xlane.f32.xlu0 %v172
  %v174 = vpop.xlane.xlu0 %173
  %v175 = vsel %vm43, %v171, 0.0
  %176 = vadd.xlane.f32.xlu0 %v175
  %v177 = vpop.xlane.xlu0 %176
  %v178 = vmul.f32 %v174, %v165
  %v179 = vmul.f32 %v177, %v165
  %v180 = vadd.f32 %v178, 1e-05
  %v181 = vadd.f32 %v179, 1e-05
  %v182 = vrsqrt.pop %v180
  %v183 = vrsqrt.pop %v181
  %v184 = vmul.f32 %v168, %v182
  %v185 = vmul.f32 %v169, %v183
  %v187 = vlaneseq
  %v188 = vshrl.u32 %v187, 7
  %v189 = vsub.s32 0, %v188
  %v190 = vrot.slane %v157, %v189
  %v192 = vmul.f32 %v184, %v190
  %v193 = vmul.f32 %v185, %v190
  %v195 = vlaneseq
  %v196 = vshrl.u32 %v195, 7
  %v197 = vsub.s32 0, %v196
  %v198 = vrot.slane %v158, %v197
  %v200 = vadd.f32 %v192, %v198
  %v201 = vadd.f32 %v193, %v198
  %202 = vst.msk [vmem:[%s7] sm:$0xff] %vm43, %v200
  %203 = vst.msk [vmem:[%s7 + $0x8] sm:$0xff] %vm43, %v201
  // Predicated region
  $region30: #{deepgem_forward.29} parent=0 // pred_check
    _
  $region31: #{deepgem_forward.29} parent=0 // pred_check_branch
    %205 = sbr.rel (0) target = $region33
  $region32: #{deepgem_forward.29} parent=0 // pred_region
    _
  $region33: #{deepgem_forward.29} parent=0 // pred_fallthru
    _
  // Predicated region
  $region34: #{deepgem_forward.29} parent=0 // pred_check
    _
  $region35: #{deepgem_forward.29} parent=0 // pred_check_branch
    %207 = sbr.rel (0) target = $region37
  $region36: #{deepgem_forward.29} parent=0 // pred_region
    _
  $region37: #{deepgem_forward.29} parent=0 // pred_fallthru
    _

// kernel: deepgem_forward.28
$region0: #{deepgem_forward.28}
  #allocation0 [shape = 'u32[]', space=smem, size = 0x4, offset = 0x4, fixed_abs, tag = 'smem constant byte address 0x4 - core index']
  #allocation1 [shape = 'u32[144,128]{1,0:T(1,128)}', space=vmem, size = 0x12000, scoped, tag = 'internal scratch']
  %s0 = inlined_call_operand.vmem [shape: f32[2,8,32], index: 0, kind: input, shape index: {}, may-alias: {0,1}]
  %s1 = inlined_call_operand.vmem [shape: f32[2,8,32], index: 1, kind: input, shape index: {}, may-alias: {0,1}]
  %s2 = inlined_call_operand.vmem [shape: f32[32,32], index: 2, kind: input, shape index: {}]
  %s3 = inlined_call_operand.vmem [shape: f32[1,32], index: 3, kind: input, shape index: {}]
  %s4 = inlined_call_operand.vmem [shape: f32[32,32], index: 4, kind: input, shape index: {}]
  %s5 = inlined_call_operand.vmem [shape: f32[1,32], index: 5, kind: input, shape index: {}]
  %s6 = inlined_call_operand.vmem [shape: f32[32,32], index: 6, kind: input, shape index: {}]
  %s7 = inlined_call_operand.vmem [shape: f32[1,32], index: 7, kind: input, shape index: {}]
  %s8 = inlined_call_operand.vmem [shape: f32[32,32], index: 8, kind: input, shape index: {}]
  %s9 = inlined_call_operand.vmem [shape: f32[1,32], index: 9, kind: input, shape index: {}]
  %s10 = inlined_call_operand.vmem [shape: f32[1,32], index: 10, kind: input, shape index: {}]
  %s11 = inlined_call_operand.vmem [shape: f32[1,32], index: 11, kind: input, shape index: {}]
  %s12 = inlined_call_operand.vmem [shape: f32[2,8,32], index: 12, kind: output, shape index: {}]
  %s13 = sld [smem:[#allocation0]]
  $region81: #{deepgem_forward.28} parent=0
    _
  %s15 = ssub.s32 1, %s13
  %s16 = scalar_select 0, %s15, %s13
  loop: start=0, step=1, limit=4
  $region2: #{deepgem_forward.28} parent=0 // loop_pre_header
    _
  $region3: #{deepgem_forward.28} parent=0 // loop_header
    %s18 = sphi 0, %s22
    %p19 = scmp.ge.s32.totalorder %s18, 4
    %s28 = sphi 0, %s30
    %s31 = sphi 0, %s28
    %s32 = sphi 0, %s31
    %s48 = sphi 0, %s32
    %s54 = sphi 0, %s56
    %s57 = sphi 0, %s54
    %s58 = sphi 0, %s57
    %s74 = sphi 0, %s58
    %s78 = sphi 0, %s78
    %s80 = sphi 0, %s78
    %s81 = sphi 0, %s80
    %s95 = sphi 0, %s81
    %s99 = sphi 0, %s99
    %s101 = sphi 0, %s99
    %s102 = sphi 0, %s101
    %s116 = sphi 0, %s102
    %s120 = sphi 0, %s120
    %s122 = sphi 0, %s120
    %s123 = sphi 0, %s122
    %s137 = sphi 0, %s123
    %s141 = sphi 0, %s141
    %s143 = sphi 0, %s141
    %s144 = sphi 0, %s143
    %s158 = sphi 0, %s144
    %s162 = sphi 0, %s162
    %s164 = sphi 0, %s162
    %s165 = sphi 0, %s164
    %s179 = sphi 0, %s165
    %s183 = sphi 0, %s183
    %s185 = sphi 0, %s183
    %s186 = sphi 0, %s185
    %s200 = sphi 0, %s186
    %s204 = sphi 0, %s204
    %s206 = sphi 0, %s204
    %s207 = sphi 0, %s206
    %s221 = sphi 0, %s207
    %s225 = sphi 0, %s225
    %s227 = sphi 0, %s225
    %s228 = sphi 0, %s227
    %s242 = sphi 0, %s228
    %s246 = sphi 0, %s246
    %s248 = sphi 0, %s246
    %s249 = sphi 0, %s248
    %s263 = sphi 0, %s249
    %s267 = sphi 0, %s267
    %s269 = sphi 0, %s267
    %s270 = sphi 0, %s269
    %s284 = sphi 0, %s270
    %s290 = sphi 0, %s292
    %s293 = sphi 0, %s290
    %s294 = sphi 0, %s293
    %s310 = sphi 0, %s294
  $region4: #{deepgem_forward.28} parent=0 // loop_header_branch
    %21 = sbr.rel (%p19) target = $region8
  $region5: #{deepgem_forward.28} parent=0 // loop_body
    %s23 = ssub.s32 %s18, 1
    %s24 = ssub.s32 %s18, 2
    %s25 = sadd.s32 %s18, 1
    %s26 = ssub.s32 %s18, %s25
    %p27 = scmp.eq.s32.totalorder %s26, 0
    %s29 = sadd.s32 %s28, 1
    %s30 = scalar_select %p27, %s28, %s29
    %p33 = pneg %p27
    %p34 = scmp.eq.s32.totalorder %s18, 1
    %p35 = por %p33, %p34
    %p36 = scmp.ne.s32.totalorder %s28, %s31
    %p37 = scmp.eq.s32.totalorder %s18, 0
    %p38 = por %p36, %p37
    %p39 = scmp.ne.s32.totalorder %s28, %s31
    %p40 = scmp.eq.s32.totalorder %s23, 1
    %p41 = por %p39, %p40
    %p42 = scmp.ne.s32.totalorder %s31, %s32
    %p43 = scmp.eq.s32.totalorder %s23, 0
    %p44 = por %p42, %p43
    %p45 = scmp.ne.s32.totalorder %s31, %s32
    %p46 = scmp.eq.s32.totalorder %s24, 1
    %p47 = por %p45, %p46
    %p49 = scmp.ne.s32.totalorder %s32, %s48
    %p50 = scmp.eq.s32.totalorder %s24, 0
    %p51 = por %p49, %p50
    %s52 = ssub.s32 %s18, %s25
    %p53 = scmp.eq.s32.totalorder %s52, 0
    %s55 = sadd.s32 %s54, 1
    %s56 = scalar_select %p53, %s54, %s55
    %p59 = pneg %p53
    %p60 = scmp.eq.s32.totalorder %s18, 1
    %p61 = por %p59, %p60
    %p62 = scmp.ne.s32.totalorder %s54, %s57
    %p63 = scmp.eq.s32.totalorder %s18, 0
    %p64 = por %p62, %p63
    %p65 = scmp.ne.s32.totalorder %s54, %s57
    %p66 = scmp.eq.s32.totalorder %s23, 1
    %p67 = por %p65, %p66
    %p68 = scmp.ne.s32.totalorder %s57, %s58
    %p69 = scmp.eq.s32.totalorder %s23, 0
    %p70 = por %p68, %p69
    %p71 = scmp.ne.s32.totalorder %s57, %s58
    %p72 = scmp.eq.s32.totalorder %s24, 1
    %p73 = por %p71, %p72
    %p75 = scmp.ne.s32.totalorder %s58, %s74
    %p76 = scmp.eq.s32.totalorder %s24, 0
    %p77 = por %p75, %p76
    %s79 = sadd.s32 %s78, 1
    %p82 = scmp.eq.s32.totalorder %s18, 1
    %p83 = scmp.ne.s32.totalorder %s78, %s80
    %p84 = scmp.eq.s32.totalorder %s18, 0
    %p85 = por %p83, %p84
    %p86 = scmp.ne.s32.totalorder %s78, %s80
    %p87 = scmp.eq.s32.totalorder %s23, 1
    %p88 = por %p86, %p87
    %p89 = scmp.ne.s32.totalorder %s80, %s81
    %p90 = scmp.eq.s32.totalorder %s23, 0
    %p91 = por %p89, %p90
    %p92 = scmp.ne.s32.totalorder %s80, %s81
    %p93 = scmp.eq.s32.totalorder %s24, 1
    %p94 = por %p92, %p93
    %p96 = scmp.ne.s32.totalorder %s81, %s95
    %p97 = scmp.eq.s32.totalorder %s24, 0
    %p98 = por %p96, %p97
    %s100 = sadd.s32 %s99, 1
    %p103 = scmp.eq.s32.totalorder %s18, 1
    %p104 = scmp.ne.s32.totalorder %s99, %s101
    %p105 = scmp.eq.s32.totalorder %s18, 0
    %p106 = por %p104, %p105
    %p107 = scmp.ne.s32.totalorder %s99, %s101
    %p108 = scmp.eq.s32.totalorder %s23, 1
    %p109 = por %p107, %p108
    %p110 = scmp.ne.s32.totalorder %s101, %s102
    %p111 = scmp.eq.s32.totalorder %s23, 0
    %p112 = por %p110, %p111
    %p113 = scmp.ne.s32.totalorder %s101, %s102
    %p114 = scmp.eq.s32.totalorder %s24, 1
    %p115 = por %p113, %p114
    %p117 = scmp.ne.s32.totalorder %s102, %s116
    %p118 = scmp.eq.s32.totalorder %s24, 0
    %p119 = por %p117, %p118
    %s121 = sadd.s32 %s120, 1
    %p124 = scmp.eq.s32.totalorder %s18, 1
    %p125 = scmp.ne.s32.totalorder %s120, %s122
    %p126 = scmp.eq.s32.totalorder %s18, 0
    %p127 = por %p125, %p126
    %p128 = scmp.ne.s32.totalorder %s120, %s122
    %p129 = scmp.eq.s32.totalorder %s23, 1
    %p130 = por %p128, %p129
    %p131 = scmp.ne.s32.totalorder %s122, %s123
    %p132 = scmp.eq.s32.totalorder %s23, 0
    %p133 = por %p131, %p132
    %p134 = scmp.ne.s32.totalorder %s122, %s123
    %p135 = scmp.eq.s32.totalorder %s24, 1
    %p136 = por %p134, %p135
    %p138 = scmp.ne.s32.totalorder %s123, %s137
    %p139 = scmp.eq.s32.totalorder %s24, 0
    %p140 = por %p138, %p139
    %s142 = sadd.s32 %s141, 1
    %p145 = scmp.eq.s32.totalorder %s18, 1
    %p146 = scmp.ne.s32.totalorder %s141, %s143
    %p147 = scmp.eq.s32.totalorder %s18, 0
    %p148 = por %p146, %p147
    %p149 = scmp.ne.s32.totalorder %s141, %s143
    %p150 = scmp.eq.s32.totalorder %s23, 1
    %p151 = por %p149, %p150
    %p152 = scmp.ne.s32.totalorder %s143, %s144
    %p153 = scmp.eq.s32.totalorder %s23, 0
    %p154 = por %p152, %p153
    %p155 = scmp.ne.s32.totalorder %s143, %s144
    %p156 = scmp.eq.s32.totalorder %s24, 1
    %p157 = por %p155, %p156
    %p159 = scmp.ne.s32.totalorder %s144, %s158
    %p160 = scmp.eq.s32.totalorder %s24, 0
    %p161 = por %p159, %p160
    %s163 = sadd.s32 %s162, 1
    %p166 = scmp.eq.s32.totalorder %s18, 1
    %p167 = scmp.ne.s32.totalorder %s162, %s164
    %p168 = scmp.eq.s32.totalorder %s18, 0
    %p169 = por %p167, %p168
    %p170 = scmp.ne.s32.totalorder %s162, %s164
    %p171 = scmp.eq.s32.totalorder %s23, 1
    %p172 = por %p170, %p171
    %p173 = scmp.ne.s32.totalorder %s164, %s165
    %p174 = scmp.eq.s32.totalorder %s23, 0
    %p175 = por %p173, %p174
    %p176 = scmp.ne.s32.totalorder %s164, %s165
    %p177 = scmp.eq.s32.totalorder %s24, 1
    %p178 = por %p176, %p177
    %p180 = scmp.ne.s32.totalorder %s165, %s179
    %p181 = scmp.eq.s32.totalorder %s24, 0
    %p182 = por %p180, %p181
    %s184 = sadd.s32 %s183, 1
    %p187 = scmp.eq.s32.totalorder %s18, 1
    %p188 = scmp.ne.s32.totalorder %s183, %s185
    %p189 = scmp.eq.s32.totalorder %s18, 0
    %p190 = por %p188, %p189
    %p191 = scmp.ne.s32.totalorder %s183, %s185
    %p192 = scmp.eq.s32.totalorder %s23, 1
    %p193 = por %p191, %p192
    %p194 = scmp.ne.s32.totalorder %s185, %s186
    %p195 = scmp.eq.s32.totalorder %s23, 0
    %p196 = por %p194, %p195
    %p197 = scmp.ne.s32.totalorder %s185, %s186
    %p198 = scmp.eq.s32.totalorder %s24, 1
    %p199 = por %p197, %p198
    %p201 = scmp.ne.s32.totalorder %s186, %s200
    %p202 = scmp.eq.s32.totalorder %s24, 0
    %p203 = por %p201, %p202
    %s205 = sadd.s32 %s204, 1
    %p208 = scmp.eq.s32.totalorder %s18, 1
    %p209 = scmp.ne.s32.totalorder %s204, %s206
    %p210 = scmp.eq.s32.totalorder %s18, 0
    %p211 = por %p209, %p210
    %p212 = scmp.ne.s32.totalorder %s204, %s206
    %p213 = scmp.eq.s32.totalorder %s23, 1
    %p214 = por %p212, %p213
    %p215 = scmp.ne.s32.totalorder %s206, %s207
    %p216 = scmp.eq.s32.totalorder %s23, 0
    %p217 = por %p215, %p216
    %p218 = scmp.ne.s32.totalorder %s206, %s207
    %p219 = scmp.eq.s32.totalorder %s24, 1
    %p220 = por %p218, %p219
    %p222 = scmp.ne.s32.totalorder %s207, %s221
    %p223 = scmp.eq.s32.totalorder %s24, 0
    %p224 = por %p222, %p223
    %s226 = sadd.s32 %s225, 1
    %p229 = scmp.eq.s32.totalorder %s18, 1
    %p230 = scmp.ne.s32.totalorder %s225, %s227
    %p231 = scmp.eq.s32.totalorder %s18, 0
    %p232 = por %p230, %p231
    %p233 = scmp.ne.s32.totalorder %s225, %s227
    %p234 = scmp.eq.s32.totalorder %s23, 1
    %p235 = por %p233, %p234
    %p236 = scmp.ne.s32.totalorder %s227, %s228
    %p237 = scmp.eq.s32.totalorder %s23, 0
    %p238 = por %p236, %p237
    %p239 = scmp.ne.s32.totalorder %s227, %s228
    %p240 = scmp.eq.s32.totalorder %s24, 1
    %p241 = por %p239, %p240
    %p243 = scmp.ne.s32.totalorder %s228, %s242
    %p244 = scmp.eq.s32.totalorder %s24, 0
    %p245 = por %p243, %p244
    %s247 = sadd.s32 %s246, 1
    %p250 = scmp.eq.s32.totalorder %s18, 1
    %p251 = scmp.ne.s32.totalorder %s246, %s248
    %p252 = scmp.eq.s32.totalorder %s18, 0
    %p253 = por %p251, %p252
    %p254 = scmp.ne.s32.totalorder %s246, %s248
    %p255 = scmp.eq.s32.totalorder %s23, 1
    %p256 = por %p254, %p255
    %p257 = scmp.ne.s32.totalorder %s248, %s249
    %p258 = scmp.eq.s32.totalorder %s23, 0
    %p259 = por %p257, %p258
    %p260 = scmp.ne.s32.totalorder %s248, %s249
    %p261 = scmp.eq.s32.totalorder %s24, 1
    %p262 = por %p260, %p261
    %p264 = scmp.ne.s32.totalorder %s249, %s263
    %p265 = scmp.eq.s32.totalorder %s24, 0
    %p266 = por %p264, %p265
    %s268 = sadd.s32 %s267, 1
    %p271 = scmp.eq.s32.totalorder %s18, 1
    %p272 = scmp.ne.s32.totalorder %s267, %s269
    %p273 = scmp.eq.s32.totalorder %s18, 0
    %p274 = por %p272, %p273
    %p275 = scmp.ne.s32.totalorder %s267, %s269
    %p276 = scmp.eq.s32.totalorder %s23, 1
    %p277 = por %p275, %p276
    %p278 = scmp.ne.s32.totalorder %s269, %s270
    %p279 = scmp.eq.s32.totalorder %s23, 0
    %p280 = por %p278, %p279
    %p281 = scmp.ne.s32.totalorder %s269, %s270
    %p282 = scmp.eq.s32.totalorder %s24, 1
    %p283 = por %p281, %p282
    %p285 = scmp.ne.s32.totalorder %s270, %s284
    %p286 = scmp.eq.s32.totalorder %s24, 0
    %p287 = por %p285, %p286
    %s288 = ssub.s32 %s18, %s25
    %p289 = scmp.eq.s32.totalorder %s288, 0
    %s291 = sadd.s32 %s290, 1
    %s292 = scalar_select %p289, %s290, %s291
    %p295 = pneg %p289
    %p296 = scmp.eq.s32.totalorder %s18, 1
    %p297 = por %p295, %p296
    %p298 = scmp.ne.s32.totalorder %s290, %s293
    %p299 = scmp.eq.s32.totalorder %s18, 0
    %p300 = por %p298, %p299
    %p301 = scmp.ne.s32.totalorder %s290, %s293
    %p302 = scmp.eq.s32.totalorder %s23, 1
    %p303 = por %p301, %p302
    %p304 = scmp.ne.s32.totalorder %s293, %s294
    %p305 = scmp.eq.s32.totalorder %s23, 0
    %p306 = por %p304, %p305
    %p307 = scmp.ne.s32.totalorder %s293, %s294
    %p308 = scmp.eq.s32.totalorder %s24, 1
    %p309 = por %p307, %p308
    %p311 = scmp.ne.s32.totalorder %s294, %s310
    %p312 = scmp.eq.s32.totalorder %s24, 0
    %p313 = por %p311, %p312
    %p314 = scmp.le.s32.totalorder 1, %s18
    %p315 = scmp.lt.s32.totalorder %s18, 3
    %p316 = pnand %p314, %p315
    %p317 = pneg %p316
    // Predicated region
    $region9: #{deepgem_forward.28} parent=5 // pred_check
      _
    $region10: #{deepgem_forward.28} parent=5 // pred_check_branch
      %319 = sbr.rel (%p316) target = $region12
    $region11: #{deepgem_forward.28} parent=5 // pred_region
      %s320 = ssub.s32 %s18, 1
      // Predicated region
      $region13: #{deepgem_forward.28} parent=11 // pred_check
        %p321 = pneg %p91
      $region14: #{deepgem_forward.28} parent=11 // pred_check_branch
        %323 = sbr.rel (%p321) target = $region16
      $region15: #{deepgem_forward.28} parent=11 // pred_region
        _
      $region16: #{deepgem_forward.28} parent=11 // pred_fallthru
        _
      // Predicated region
      $region17: #{deepgem_forward.28} parent=11 // pred_check
        %p324 = pneg %p112
      $region18: #{deepgem_forward.28} parent=11 // pred_check_branch
        %326 = sbr.rel (%p324) target = $region20
      $region19: #{deepgem_forward.28} parent=11 // pred_region
        _
      $region20: #{deepgem_forward.28} parent=11 // pred_fallthru
        _
      // Predicated region
      $region21: #{deepgem_forward.28} parent=11 // pred_check
        %p327 = pneg %p133
      $region22: #{deepgem_forward.28} parent=11 // pred_check_branch
        %329 = sbr.rel (%p327) target = $region24
      $region23: #{deepgem_forward.28} parent=11 // pred_region
        _
      $region24: #{deepgem_forward.28} parent=11 // pred_fallthru
        _
      // Predicated region
      $region25: #{deepgem_forward.28} parent=11 // pred_check
        %p330 = pneg %p154
      $region26: #{deepgem_forward.28} parent=11 // pred_check_branch
        %332 = sbr.rel (%p330) target = $region28
      $region27: #{deepgem_forward.28} parent=11 // pred_region
        _
      $region28: #{deepgem_forward.28} parent=11 // pred_fallthru
        _
      // Predicated region
      $region29: #{deepgem_forward.28} parent=11 // pred_check
        %p333 = pneg %p175
      $region30: #{deepgem_forward.28} parent=11 // pred_check_branch
        %335 = sbr.rel (%p333) target = $region32
      $region31: #{deepgem_forward.28} parent=11 // pred_region
        _
      $region32: #{deepgem_forward.28} parent=11 // pred_fallthru
        _
      // Predicated region
      $region33: #{deepgem_forward.28} parent=11 // pred_check
        %p336 = pneg %p196
      $region34: #{deepgem_forward.28} parent=11 // pred_check_branch
        %338 = sbr.rel (%p336) target = $region36
      $region35: #{deepgem_forward.28} parent=11 // pred_region
        _
      $region36: #{deepgem_forward.28} parent=11 // pred_fallthru
        _
      // Predicated region
      $region37: #{deepgem_forward.28} parent=11 // pred_check
        %p339 = pneg %p217
      $region38: #{deepgem_forward.28} parent=11 // pred_check_branch
        %341 = sbr.rel (%p339) target = $region40
      $region39: #{deepgem_forward.28} parent=11 // pred_region
        _
      $region40: #{deepgem_forward.28} parent=11 // pred_fallthru
        _
      // Predicated region
      $region41: #{deepgem_forward.28} parent=11 // pred_check
        %p342 = pneg %p238
      $region42: #{deepgem_forward.28} parent=11 // pred_check_branch
        %344 = sbr.rel (%p342) target = $region44
      $region43: #{deepgem_forward.28} parent=11 // pred_region
        _
      $region44: #{deepgem_forward.28} parent=11 // pred_fallthru
        _
      // Predicated region
      $region45: #{deepgem_forward.28} parent=11 // pred_check
        %p345 = pneg %p259
      $region46: #{deepgem_forward.28} parent=11 // pred_check_branch
        %347 = sbr.rel (%p345) target = $region48
      $region47: #{deepgem_forward.28} parent=11 // pred_region
        _
      $region48: #{deepgem_forward.28} parent=11 // pred_fallthru
        _
      // Predicated region
      $region49: #{deepgem_forward.28} parent=11 // pred_check
        %p348 = pneg %p280
      $region50: #{deepgem_forward.28} parent=11 // pred_check_branch
        %350 = sbr.rel (%p348) target = $region52
      $region51: #{deepgem_forward.28} parent=11 // pred_region
        _
      $region52: #{deepgem_forward.28} parent=11 // pred_fallthru
        _
    $region12: #{deepgem_forward.28} parent=5 // pred_fallthru
      _
    %p351 = scmp.lt.s32.totalorder %s18, 2
    // Predicated region
    $region53: #{deepgem_forward.28} parent=5 // pred_check
      %p352 = pneg %p351
    $region54: #{deepgem_forward.28} parent=5 // pred_check_branch
      %354 = sbr.rel (%p352) target = $region56
    $region55: #{deepgem_forward.28} parent=5 // pred_region
      // Predicated region
      $region57: #{deepgem_forward.28} parent=55 // pred_check
        %p355 = pneg %p38
      $region58: #{deepgem_forward.28} parent=55 // pred_check_branch
        %357 = sbr.rel (%p355) target = $region60
      $region59: #{deepgem_forward.28} parent=55 // pred_region
        %p358 = scmp.lt.s32.totalorder %s18, 1
        %s359 = scalar_select %p358, %s18, 1
        %s360 = smul.addr %s359, 8
        %s361 = scalar_lea.vmem %s0, %s360
      $region60: #{deepgem_forward.28} parent=55 // pred_fallthru
        _
      // Predicated region
      $region61: #{deepgem_forward.28} parent=55 // pred_check
        %p362 = pneg %p64
      $region62: #{deepgem_forward.28} parent=55 // pred_check_branch
        %364 = sbr.rel (%p362) target = $region64
      $region63: #{deepgem_forward.28} parent=55 // pred_region
        %p365 = scmp.lt.s32.totalorder %s18, 1
        %s366 = scalar_select %p365, %s18, 1
        %s367 = smul.addr %s366, 8
        %s368 = scalar_lea.vmem %s1, %s367
      $region64: #{deepgem_forward.28} parent=55 // pred_fallthru
        _
    $region56: #{deepgem_forward.28} parent=5 // pred_fallthru
      _
    %p369 = scmp.le.s32.totalorder 1, %s18
    %p370 = scmp.lt.s32.totalorder %s18, 3
    %p371 = pnand %p369, %p370
    %p372 = pneg %p371
    // Predicated region
    $region65: #{deepgem_forward.28} parent=5 // pred_check
      _
    $region66: #{deepgem_forward.28} parent=5 // pred_check_branch
      %374 = sbr.rel (%p371) target = $region68
    $region67: #{deepgem_forward.28} parent=5 // pred_region
      %s375 = ssub.s32 %s18, 1
      %p376 = scmp.lt.s32.totalorder %s23, 1
      %s377 = scalar_select %p376, %s23, 1
      %s378 = smul.addr %s377, 8
      %s379 = scalar_lea.vmem %s0, %s378
      %p380 = pneg %p44
      %p381 = pneg %p41
      %p382 = scmp.lt.s32.totalorder %s23, 1
      %s383 = scalar_select %p382, %s23, 1
      %s384 = smul.addr %s383, 8
      %s385 = scalar_lea.vmem %s1, %s384
      %p386 = pneg %p70
      %p387 = pneg %p67
      %p388 = pneg %p91
      %p389 = pneg %p88
      %p390 = pneg %p112
      %p391 = pneg %p109
      %p392 = pneg %p133
      %p393 = pneg %p130
      %p394 = pneg %p154
      %p395 = pneg %p151
      %p396 = pneg %p175
      %p397 = pneg %p172
      %p398 = pneg %p196
      %p399 = pneg %p193
      %p400 = pneg %p217
      %p401 = pneg %p214
      %p402 = pneg %p238
      %p403 = pneg %p235
      %p404 = pneg %p259
      %p405 = pneg %p256
      %p406 = pneg %p280
      %p407 = pneg %p277
      %p408 = pneg %p306
      %p409 = pneg %p303
      %p410 = scmp.lt.s32.totalorder %s23, 1
      %s411 = scalar_select %p410, %s23, 1
      %s412 = smul.addr %s411, 8
      %s413 = scalar_lea.vmem %s12, %s412
      %p414 = scmp.lt.s32.totalorder %s23, 1
      %s415 = scalar_select %p414, %s23, 1
      %s416 = smul.addr %s415, 8
      %s417 = scalar_lea.vmem %s0, %s416
      %p418 = scmp.lt.s32.totalorder %s23, 1
      %s419 = scalar_select %p418, %s23, 1
      %s420 = smul.addr %s419, 8
      %s421 = scalar_lea.vmem %s1, %s420
      %p422 = scmp.lt.s32.totalorder %s23, 1
      %s423 = scalar_select %p422, %s23, 1
      %s424 = smul.addr %s423, 8
      %s425 = scalar_lea.vmem %s12, %s424
      %v427 = vld [vmem:[%s417] sm:$0xff]
      %v428 = vld [vmem:[%s421] sm:$0xff]
      %v429 = vld [vmem:[%s2] sm:$0xff]
      %v430 = vld [vmem:[%s2 + $0x8] sm:$0xff]
      %v431 = vld [vmem:[%s2 + $0x10] sm:$0xff]
      %v432 = vld [vmem:[%s2 + $0x18] sm:$0xff]
      %v433 = vpack.c.bf16 %v427, %v427
      %v434 = vpack.c.bf16 %v430, %v429
      %v435 = vpack.c.bf16 %v432, %v431
      %v436 = vld [vmem:[%s3] sm:$0x1]
      %v438 = vlaneseq
      %v439 = vshrl.u32 %v438, 7
      %v440 = vsub.s32 0, %v439
      %v441 = vrot.slane %v436, %v440
      %vm443 = vcmask 261120
      %v445 = vsel %vm443, %v433, 0
      %447 = vmatprep.subr.bf16.mxu0 0
      %448 = vmatpush1.bf16.msra.mxu0 0
      %449 = vmatprep.subr.bf16.mxu0 0
      %450 = vmatpush1.bf16.msra.mxu0 0
      %451 = vmatprep.subr.bf16.mxu0 0
      %452 = vmatpush1.bf16.msra.mxu0 0
      %453 = vmatprep.subr.bf16.mxu0 0
      %454 = vmatpush1.bf16.msra.mxu0 0
      %455 = vmatprep.subr.bf16.mxu0 0
      %456 = vmatpush1.bf16.msra.mxu0 0
      %457 = vmatprep.subr.bf16.mxu0 0
      %458 = vmatpush1.bf16.msra.mxu0 0
      %459 = vmatprep.subr.bf16.mxu0 0
      %460 = vmatpush1.bf16.msra.mxu0 %v435
      %461 = vmatprep.subr.bf16.mxu0 0
      %462 = vmatpush1.bf16.msra.mxu0 %v434
      %463 = vmatprep.subr.bf16.mxu0 0
      %464 = vmatpush2.bf16.msra.mxu0 0
      %465 = vmatprep.subr.bf16.mxu0 0
      %466 = vmatpush2.bf16.msra.mxu0 0
      %467 = vmatprep.subr.bf16.mxu0 0
      %468 = vmatpush2.bf16.msra.mxu0 0
      %469 = vmatprep.subr.bf16.mxu0 0
      %470 = vmatpush2.bf16.msra.mxu0 0
      %471 = vmatprep.subr.bf16.mxu0 0
      %472 = vmatpush2.bf16.msra.mxu0 0
      %473 = vmatprep.subr.bf16.mxu0 0
      %474 = vmatpush2.bf16.msra.mxu0 0
      %475 = vmatprep.subr.bf16.mxu0 0
      %476 = vmatpush2.bf16.msra.mxu0 0
      %477 = vmatprep.subr.bf16.mxu0 0
      %478 = vmatpush2.bf16.msra.mxu0 0
      %479 = vmatprep.mubr.bf16.mxu0 0
      %480 = vmatmul.mubr.bf16.gmra.mxu0 %v445
      %v481 = vpop.f32.mrf.mxu0
      %v482 = vadd.f32 %v441, %v481
      %v483 = vpop.f32.mrf.mxu0
      %v484 = vpop.f32.mrf.mxu0
      %v485 = vpop.f32.mrf.mxu0
      %486 = vdwg.mxu0
      %v487 = vmul.f32 %v482, 0.25
      %v488 = vld [vmem:[%s4] sm:$0xff]
      %v489 = vld [vmem:[%s4 + $0x8] sm:$0xff]
      %v490 = vld [vmem:[%s4 + $0x10] sm:$0xff]
      %v491 = vld [vmem:[%s4 + $0x18] sm:$0xff]
      %v492 = vpack.c.bf16 %v428, %v428
      %v493 = vpack.c.bf16 %v489, %v488
      %v494 = vpack.c.bf16 %v491, %v490
      %v495 = vld [vmem:[%s5] sm:$0x1]
      %v497 = vlaneseq
      %v498 = vshrl.u32 %v497, 7
      %v499 = vsub.s32 0, %v498
      %v500 = vrot.slane %v495, %v499
      %v503 = vsel %vm443, %v492, 0
      %505 = vmatprep.subr.bf16.mxu0 0
      %506 = vmatpush1.bf16.msra.mxu0 0
      %507 = vmatprep.subr.bf16.mxu0 0
      %508 = vmatpush1.bf16.msra.mxu0 0
      %509 = vmatprep.subr.bf16.mxu0 0
      %510 = vmatpush1.bf16.msra.mxu0 0
      %511 = vmatprep.subr.bf16.mxu0 0
      %512 = vmatpush1.bf16.msra.mxu0 0
      %513 = vmatprep.subr.bf16.mxu0 0
      %514 = vmatpush1.bf16.msra.mxu0 0
      %515 = vmatprep.subr.bf16.mxu0 0
      %516 = vmatpush1.bf16.msra.mxu0 0
      %517 = vmatprep.subr.bf16.mxu0 0
      %518 = vmatpush1.bf16.msra.mxu0 %v494
      %519 = vmatprep.subr.bf16.mxu0 0
      %520 = vmatpush1.bf16.msra.mxu0 %v493
      %521 = vmatprep.subr.bf16.mxu0 0
      %522 = vmatpush2.bf16.msra.mxu0 0
      %523 = vmatprep.subr.bf16.mxu0 0
      %524 = vmatpush2.bf16.msra.mxu0 0
      %525 = vmatprep.subr.bf16.mxu0 0
      %526 = vmatpush2.bf16.msra.mxu0 0
      %527 = vmatprep.subr.bf16.mxu0 0
      %528 = vmatpush2.bf16.msra.mxu0 0
      %529 = vmatprep.subr.bf16.mxu0 0
      %530 = vmatpush2.bf16.msra.mxu0 0
      %531 = vmatprep.subr.bf16.mxu0 0
      %532 = vmatpush2.bf16.msra.mxu0 0
      %533 = vmatprep.subr.bf16.mxu0 0
      %534 = vmatpush2.bf16.msra.mxu0 0
      %535 = vmatprep.subr.bf16.mxu0 0
      %536 = vmatpush2.bf16.msra.mxu0 0
      %537 = vmatprep.mubr.bf16.mxu0 0
      %538 = vmatmul.mubr.bf16.gmra.mxu0 %v503
      %v539 = vpop.f32.mrf.mxu0
      %v540 = vadd.f32 %v500, %v539
      %v541 = vpop.f32.mrf.mxu0
      %v542 = vpop.f32.mrf.mxu0
      %v543 = vpop.f32.mrf.mxu0
      %544 = vdwg.mxu0
      %v545 = vld [vmem:[%s6] sm:$0xff]
      %v546 = vld [vmem:[%s6 + $0x8] sm:$0xff]
      %v547 = vld [vmem:[%s6 + $0x10] sm:$0xff]
      %v548 = vld [vmem:[%s6 + $0x18] sm:$0xff]
      %v549 = vpack.c.bf16 %v546, %v545
      %v550 = vpack.c.bf16 %v548, %v547
      %v551 = vld [vmem:[%s7] sm:$0x1]
      %v553 = vlaneseq
      %v554 = vshrl.u32 %v553, 7
      %v555 = vsub.s32 0, %v554
      %v556 = vrot.slane %v551, %v555
      %558 = vmatprep.subr.bf16.mxu0 0
      %559 = vmatpush1.bf16.msra.mxu0 0
      %560 = vmatprep.subr.bf16.mxu0 0
      %561 = vmatpush1.bf16.msra.mxu0 0
      %562 = vmatprep.subr.bf16.mxu0 0
      %563 = vmatpush1.bf16.msra.mxu0 0
      %564 = vmatprep.subr.bf16.mxu0 0
      %565 = vmatpush1.bf16.msra.mxu0 0
      %566 = vmatprep.subr.bf16.mxu0 0
      %567 = vmatpush1.bf16.msra.mxu0 0
      %568 = vmatprep.subr.bf16.mxu0 0
      %569 = vmatpush1.bf16.msra.mxu0 0
      %570 = vmatprep.subr.bf16.mxu0 0
      %571 = vmatpush1.bf16.msra.mxu0 %v550
      %572 = vmatprep.subr.bf16.mxu0 0
      %573 = vmatpush1.bf16.msra.mxu0 %v549
      %574 = vmatprep.subr.bf16.mxu0 0
      %575 = vmatpush2.bf16.msra.mxu0 0
      %576 = vmatprep.subr.bf16.mxu0 0
      %577 = vmatpush2.bf16.msra.mxu0 0
      %578 = vmatprep.subr.bf16.mxu0 0
      %579 = vmatpush2.bf16.msra.mxu0 0
      %580 = vmatprep.subr.bf16.mxu0 0
      %581 = vmatpush2.bf16.msra.mxu0 0
      %582 = vmatprep.subr.bf16.mxu0 0
      %583 = vmatpush2.bf16.msra.mxu0 0
      %584 = vmatprep.subr.bf16.mxu0 0
      %585 = vmatpush2.bf16.msra.mxu0 0
      %586 = vmatprep.subr.bf16.mxu0 0
      %587 = vmatpush2.bf16.msra.mxu0 0
      %588 = vmatprep.subr.bf16.mxu0 0
      %589 = vmatpush2.bf16.msra.mxu0 0
      %590 = vmatprep.mubr.bf16.mxu0 0
      %591 = vmatmul.mubr.bf16.gmra.mxu0 %v503
      %v592 = vpop.f32.mrf.mxu0
      %v593 = vadd.f32 %v556, %v592
      %v594 = vpop.f32.mrf.mxu0
      %v595 = vpop.f32.mrf.mxu0
      %v596 = vpop.f32.mrf.mxu0
      %597 = vdwg.mxu0
      %v598 = vpack.c.bf16 %v487, %v487
      %v599 = vpack.c.bf16 %v540, %v540
      %vm600 = vcmask 130048
      %v602 = vsel %vm600, %v598, 0
      %v605 = vsel %vm600, %v599, 0
      %607 = vmatprep.subr.bf16.mxu0 0
      %608 = vmatpush1.bf16.xpose.msra.mxu0 0
      %609 = vmatprep.subr.bf16.mxu0 0
      %610 = vmatpush1.bf16.xpose.msra.mxu0 0
      %611 = vmatprep.subr.bf16.mxu0 0
      %612 = vmatpush1.bf16.xpose.msra.mxu0 0
      %613 = vmatprep.subr.bf16.mxu0 0
      %614 = vmatpush1.bf16.xpose.msra.mxu0 0
      %615 = vmatprep.subr.bf16.mxu0 0
      %616 = vmatpush1.bf16.xpose.msra.mxu0 0
      %617 = vmatprep.subr.bf16.mxu0 0
      %618 = vmatpush1.bf16.xpose.msra.mxu0 0
      %619 = vmatprep.subr.bf16.mxu0 0
      %620 = vmatpush1.bf16.xpose.msra.mxu0 0
      %621 = vmatprep.subr.bf16.mxu0 0
      %622 = vmatpush1.bf16.xpose.msra.mxu0 %v605
      %623 = vmatprep.subr.bf16.mxu0 0
      %624 = vmatpush2.bf16.xpose.msra.mxu0 0
      %625 = vmatprep.subr.bf16.mxu0 0
      %626 = vmatpush2.bf16.xpose.msra.mxu0 0
      %627 = vmatprep.subr.bf16.mxu0 0
      %628 = vmatpush2.bf16.xpose.msra.mxu0 0
      %629 = vmatprep.subr.bf16.mxu0 0
      %630 = vmatpush2.bf16.xpose.msra.mxu0 0
      %631 = vmatprep.subr.bf16.mxu0 0
      %632 = vmatpush2.bf16.xpose.msra.mxu0 0
      %633 = vmatprep.subr.bf16.mxu0 0
      %634 = vmatpush2.bf16.xpose.msra.mxu0 0
      %635 = vmatprep.subr.bf16.mxu0 0
      %636 = vmatpush2.bf16.xpose.msra.mxu0 0
      %637 = vmatprep.subr.bf16.mxu0 0
      %638 = vmatpush2.bf16.xpose.msra.mxu0 0
      %639 = vmatprep.mubr.bf16.mxu0 0
      %640 = vmatmul.mubr.bf16.gmra.mxu0 %v602
      %v641 = vpop.f32.mrf.mxu0
      %v642 = vadd.f32 0.0, %v641
      %v643 = vpop.f32.mrf.mxu0
      %v644 = vpop.f32.mrf.mxu0
      %v645 = vpop.f32.mrf.mxu0
      %646 = vdwg.mxu0
      %vm647 = vcmask 64512
      %v648 = vsel %vm647, %v642, -inf
      %649 = vmax.xlane.f32.xlu0 %v648
      %v650 = vpop.xlane.xlu0 %649
      %v651 = vsub.f32 %v642, %v650
      %v652 = vmul.f32 %v651, 1.442695
      %v653 = vpow.pop %v652
      %v654 = vsel %vm647, %v653, 0.0
      %655 = vadd.xlane.f32.xlu0 %v654
      %v656 = vpop.xlane.xlu0 %655
      %v657 = vrcp.pop %v656
      %v658 = vmul.f32 %v653, %v657
      %v659 = vpack.c.bf16 %v658, %v658
      %v660 = vpack.c.bf16 %v593, %v593
      %v662 = vsel %vm647, %v659, 0
      %vm664 = vcmask 1043456
      %v666 = vsel %vm664, %v660, 0
      %668 = vmatprep.subr.bf16.mxu0 0
      %669 = vmatpush1.bf16.msra.mxu0 0
      %670 = vmatprep.subr.bf16.mxu0 0
      %671 = vmatpush1.bf16.msra.mxu0 0
      %672 = vmatprep.subr.bf16.mxu0 0
      %673 = vmatpush1.bf16.msra.mxu0 0
      %674 = vmatprep.subr.bf16.mxu0 0
      %675 = vmatpush1.bf16.msra.mxu0 0
      %676 = vmatprep.subr.bf16.mxu0 0
      %677 = vmatpush1.bf16.msra.mxu0 0
      %678 = vmatprep.subr.bf16.mxu0 0
      %679 = vmatpush1.bf16.msra.mxu0 0
      %680 = vmatprep.subr.bf16.mxu0 0
      %681 = vmatpush1.bf16.msra.mxu0 0
      %682 = vmatprep.subr.bf16.mxu0 0
      %683 = vmatpush1.bf16.msra.mxu0 %v666
      %684 = vmatprep.subr.bf16.mxu0 0
      %685 = vmatpush2.bf16.msra.mxu0 0
      %686 = vmatprep.subr.bf16.mxu0 0
      %687 = vmatpush2.bf16.msra.mxu0 0
      %688 = vmatprep.subr.bf16.mxu0 0
      %689 = vmatpush2.bf16.msra.mxu0 0
      %690 = vmatprep.subr.bf16.mxu0 0
      %691 = vmatpush2.bf16.msra.mxu0 0
      %692 = vmatprep.subr.bf16.mxu0 0
      %693 = vmatpush2.bf16.msra.mxu0 0
      %694 = vmatprep.subr.bf16.mxu0 0
      %695 = vmatpush2.bf16.msra.mxu0 0
      %696 = vmatprep.subr.bf16.mxu0 0
      %697 = vmatpush2.bf16.msra.mxu0 0
      %698 = vmatprep.subr.bf16.mxu0 0
      %699 = vmatpush2.bf16.msra.mxu0 0
      %700 = vmatprep.mubr.bf16.mxu0 0
      %701 = vmatmul.mubr.bf16.gmra.mxu0 %v662
      %v702 = vpop.f32.mrf.mxu0
      %v703 = vadd.f32 0.0, %v702
      %v704 = vpop.f32.mrf.mxu0
      %v705 = vpop.f32.mrf.mxu0
      %v706 = vpop.f32.mrf.mxu0
      %707 = vdwg.mxu0
      %709 = vrot.lane.b32.xlu0 %v598, 112
      %v710 = vpop.permute.xlu0 %709
      %712 = vrot.lane.b32.xlu0 %v599, 112
      %v713 = vpop.permute.xlu0 %712
      %v715 = vsel %vm600, %v710, 0
      %v718 = vsel %vm600, %v713, 0
      %720 = vmatprep.subr.bf16.mxu0 0
      %721 = vmatpush1.bf16.xpose.msra.mxu0 0
      %722 = vmatprep.subr.bf16.mxu0 0
      %723 = vmatpush1.bf16.xpose.msra.mxu0 0
      %724 = vmatprep.subr.bf16.mxu0 0
      %725 = vmatpush1.bf16.xpose.msra.mxu0 0
      %726 = vmatprep.subr.bf16.mxu0 0
      %727 = vmatpush1.bf16.xpose.msra.mxu0 0
      %728 = vmatprep.subr.bf16.mxu0 0
      %729 = vmatpush1.bf16.xpose.msra.mxu0 0
      %730 = vmatprep.subr.bf16.mxu0 0
      %731 = vmatpush1.bf16.xpose.msra.mxu0 0
      %732 = vmatprep.subr.bf16.mxu0 0
      %733 = vmatpush1.bf16.xpose.msra.mxu0 0
      %734 = vmatprep.subr.bf16.mxu0 0
      %735 = vmatpush1.bf16.xpose.msra.mxu0 %v718
      %736 = vmatprep.subr.bf16.mxu0 0
      %737 = vmatpush2.bf16.xpose.msra.mxu0 0
      %738 = vmatprep.subr.bf16.mxu0 0
      %739 = vmatpush2.bf16.xpose.msra.mxu0 0
      %740 = vmatprep.subr.bf16.mxu0 0
      %741 = vmatpush2.bf16.xpose.msra.mxu0 0
      %742 = vmatprep.subr.bf16.mxu0 0
      %743 = vmatpush2.bf16.xpose.msra.mxu0 0
      %744 = vmatprep.subr.bf16.mxu0 0
      %745 = vmatpush2.bf16.xpose.msra.mxu0 0
      %746 = vmatprep.subr.bf16.mxu0 0
      %747 = vmatpush2.bf16.xpose.msra.mxu0 0
      %748 = vmatprep.subr.bf16.mxu0 0
      %749 = vmatpush2.bf16.xpose.msra.mxu0 0
      %750 = vmatprep.subr.bf16.mxu0 0
      %751 = vmatpush2.bf16.xpose.msra.mxu0 0
      %752 = vmatprep.mubr.bf16.mxu0 0
      %753 = vmatmul.mubr.bf16.gmra.mxu0 %v715
      %v754 = vpop.f32.mrf.mxu0
      %v755 = vadd.f32 0.0, %v754
      %v756 = vpop.f32.mrf.mxu0
      %v757 = vpop.f32.mrf.mxu0
      %v758 = vpop.f32.mrf.mxu0
      %759 = vdwg.mxu0
      %v760 = vsel %vm647, %v755, -inf
      %761 = vmax.xlane.f32.xlu0 %v760
      %v762 = vpop.xlane.xlu0 %761
      %v763 = vsub.f32 %v755, %v762
      %v764 = vmul.f32 %v763, 1.442695
      %v765 = vpow.pop %v764
      %v766 = vsel %vm647, %v765, 0.0
      %767 = vadd.xlane.f32.xlu0 %v766
      %v768 = vpop.xlane.xlu0 %767
      %v769 = vrcp.pop %v768
      %v770 = vmul.f32 %v765, %v769
      %v771 = vpack.c.bf16 %v770, %v770
      %773 = vrot.lane.b32.xlu0 %v660, 112
      %v774 = vpop.permute.xlu0 %773
      %v776 = vsel %vm647, %v771, 0
      %v779 = vsel %vm664, %v774, 0
      %781 = vmatprep.subr.bf16.mxu0 0
      %782 = vmatpush1.bf16.msra.mxu0 0
      %783 = vmatprep.subr.bf16.mxu0 0
      %784 = vmatpush1.bf16.msra.mxu0 0
      %785 = vmatprep.subr.bf16.mxu0 0
      %786 = vmatpush1.bf16.msra.mxu0 0
      %787 = vmatprep.subr.bf16.mxu0 0
      %788 = vmatpush1.bf16.msra.mxu0 0
      %789 = vmatprep.subr.bf16.mxu0 0
      %790 = vmatpush1.bf16.msra.mxu0 0
      %791 = vmatprep.subr.bf16.mxu0 0
      %792 = vmatpush1.bf16.msra.mxu0 0
      %793 = vmatprep.subr.bf16.mxu0 0
      %794 = vmatpush1.bf16.msra.mxu0 0
      %795 = vmatprep.subr.bf16.mxu0 0
      %796 = vmatpush1.bf16.msra.mxu0 %v779
      %797 = vmatprep.subr.bf16.mxu0 0
      %798 = vmatpush2.bf16.msra.mxu0 0
      %799 = vmatprep.subr.bf16.mxu0 0
      %800 = vmatpush2.bf16.msra.mxu0 0
      %801 = vmatprep.subr.bf16.mxu0 0
      %802 = vmatpush2.bf16.msra.mxu0 0
      %803 = vmatprep.subr.bf16.mxu0 0
      %804 = vmatpush2.bf16.msra.mxu0 0
      %805 = vmatprep.subr.bf16.mxu0 0
      %806 = vmatpush2.bf16.msra.mxu0 0
      %807 = vmatprep.subr.bf16.mxu0 0
      %808 = vmatpush2.bf16.msra.mxu0 0
      %809 = vmatprep.subr.bf16.mxu0 0
      %810 = vmatpush2.bf16.msra.mxu0 0
      %811 = vmatprep.subr.bf16.mxu0 0
      %812 = vmatpush2.bf16.msra.mxu0 0
      %813 = vmatprep.mubr.bf16.mxu0 0
      %814 = vmatmul.mubr.bf16.gmra.mxu0 %v776
      %v815 = vpop.f32.mrf.mxu0
      %v816 = vadd.f32 0.0, %v815
      %v817 = vpop.f32.mrf.mxu0
      %v818 = vpop.f32.mrf.mxu0
      %v819 = vpop.f32.mrf.mxu0
      %820 = vdwg.mxu0
      %822 = vrot.lane.b32.xlu0 %v816, 16
      %v823 = vpop.permute.xlu0 %822
      %v825 = vsel %vm600, %v703, %v823
      %v826 = vld [vmem:[%s8] sm:$0xff]
      %v827 = vld [vmem:[%s8 + $0x8] sm:$0xff]
      %v828 = vld [vmem:[%s8 + $0x10] sm:$0xff]
      %v829 = vld [vmem:[%s8 + $0x18] sm:$0xff]
      %v830 = vpack.c.bf16 %v825, %v825
      %v831 = vpack.c.bf16 %v827, %v826
      %v832 = vpack.c.bf16 %v829, %v828
      %v833 = vld [vmem:[%s9] sm:$0x1]
      %v835 = vlaneseq
      %v836 = vshrl.u32 %v835, 7
      %v837 = vsub.s32 0, %v836
      %v838 = vrot.slane %v833, %v837
      %v841 = vsel %vm443, %v830, 0
      %843 = vmatprep.subr.bf16.mxu0 0
      %844 = vmatpush1.bf16.msra.mxu0 0
      %845 = vmatprep.subr.bf16.mxu0 0
      %846 = vmatpush1.bf16.msra.mxu0 0
      %847 = vmatprep.subr.bf16.mxu0 0
      %848 = vmatpush1.bf16.msra.mxu0 0
      %849 = vmatprep.subr.bf16.mxu0 0
      %850 = vmatpush1.bf16.msra.mxu0 0
      %851 = vmatprep.subr.bf16.mxu0 0
      %852 = vmatpush1.bf16.msra.mxu0 0
      %853 = vmatprep.subr.bf16.mxu0 0
      %854 = vmatpush1.bf16.msra.mxu0 0
      %855 = vmatprep.subr.bf16.mxu0 0
      %856 = vmatpush1.bf16.msra.mxu0 %v832
      %857 = vmatprep.subr.bf16.mxu0 0
      %858 = vmatpush1.bf16.msra.mxu0 %v831
      %859 = vmatprep.subr.bf16.mxu0 0
      %860 = vmatpush2.bf16.msra.mxu0 0
      %861 = vmatprep.subr.bf16.mxu0 0
      %862 = vmatpush2.bf16.msra.mxu0 0
      %863 = vmatprep.subr.bf16.mxu0 0
      %864 = vmatpush2.bf16.msra.mxu0 0
      %865 = vmatprep.subr.bf16.mxu0 0
      %866 = vmatpush2.bf16.msra.mxu0 0
      %867 = vmatprep.subr.bf16.mxu0 0
      %868 = vmatpush2.bf16.msra.mxu0 0
      %869 = vmatprep.subr.bf16.mxu0 0
      %870 = vmatpush2.bf16.msra.mxu0 0
      %871 = vmatprep.subr.bf16.mxu0 0
      %872 = vmatpush2.bf16.msra.mxu0 0
      %873 = vmatprep.subr.bf16.mxu0 0
      %874 = vmatpush2.bf16.msra.mxu0 0
      %875 = vmatprep.mubr.bf16.mxu0 0
      %876 = vmatmul.mubr.bf16.gmra.mxu0 %v841
      %v877 = vpop.f32.mrf.mxu0
      %v878 = vadd.f32 %v838, %v877
      %v879 = vpop.f32.mrf.mxu0
      %v880 = vpop.f32.mrf.mxu0
      %v881 = vpop.f32.mrf.mxu0
      %882 = vdwg.mxu0
      %v883 = vadd.f32 %v427, %v878
      %v884 = vld [vmem:[%s10] sm:$0x1]
      %v885 = vld [vmem:[%s11] sm:$0x1]
      %v886 = vsel %vm443, %v883, 0.0
      %887 = vadd.xlane.f32.xlu0 %v886
      %v888 = vpop.xlane.xlu0 %887
      %v889 = vrcp.pop 32.0
      %v890 = vmul.f32 %v888, %v889
      %v891 = vsub.f32 %v883, %v890
      %v892 = vmul.f32 %v891, %v891
      %v893 = vsel %vm443, %v892, 0.0
      %894 = vadd.xlane.f32.xlu0 %v893
      %v895 = vpop.xlane.xlu0 %894
      %v896 = vmul.f32 %v895, %v889
      %v897 = vadd.f32 %v896, 1e-05
      %v898 = vrsqrt.pop %v897
      %v899 = vmul.f32 %v891, %v898
      %v901 = vlaneseq
      %v902 = vshrl.u32 %v901, 7
      %v903 = vsub.s32 0, %v902
      %v904 = vrot.slane %v884, %v903
      %v906 = vmul.f32 %v899, %v904
      %v908 = vlaneseq
      %v909 = vshrl.u32 %v908, 7
      %v910 = vsub.s32 0, %v909
      %v911 = vrot.slane %v885, %v910
      %v913 = vadd.f32 %v906, %v911
      %914 = vst.msk [vmem:[%s425] sm:$0xff] %vm443, %v913
      %p915 = scmp.lt.s32.totalorder %s23, 1
      %s916 = scalar_select %p915, %s23, 1
      %s917 = smul.addr %s916, 8
      %s918 = scalar_lea.vmem %s12, %s917
      // Predicated region
      $region69: #{deepgem_forward.28} parent=67 // pred_check
        %p919 = pneg %p303
      $region70: #{deepgem_forward.28} parent=67 // pred_check_branch
        %921 = sbr.rel (%p919) target = $region72
      $region71: #{deepgem_forward.28} parent=67 // pred_region
        _
      $region72: #{deepgem_forward.28} parent=67 // pred_fallthru
        _
    $region68: #{deepgem_forward.28} parent=5 // pred_fallthru
      _
    %p922 = scmp.le.s32.totalorder 2, %s18
    // Predicated region
    $region73: #{deepgem_forward.28} parent=5 // pred_check
      %p923 = pneg %p922
    $region74: #{deepgem_forward.28} parent=5 // pred_check_branch
      %925 = sbr.rel (%p923) target = $region76
    $region75: #{deepgem_forward.28} parent=5 // pred_region
      %s926 = ssub.s32 %s18, 2
      // Predicated region
      $region77: #{deepgem_forward.28} parent=75 // pred_check
        %p927 = pneg %p309
      $region78: #{deepgem_forward.28} parent=75 // pred_check_branch
        %929 = sbr.rel (%p927) target = $region80
      $region79: #{deepgem_forward.28} parent=75 // pred_region
        %p930 = scmp.lt.s32.totalorder %s24, 1
        %s931 = scalar_select %p930, %s24, 1
        %s932 = smul.addr %s931, 8
        %s933 = scalar_lea.vmem %s12, %s932
      $region80: #{deepgem_forward.28} parent=75 // pred_fallthru
        _
    $region76: #{deepgem_forward.28} parent=5 // pred_fallthru
      _
  $region6: #{deepgem_forward.28} parent=0 // loop_footer
    %s22 = sadd.s32 1, %s18
  $region7: #{deepgem_forward.28} parent=0 // loop_footer_branch
    %17 = sbr.rel target = $region3
  $region8: #{deepgem_forward.28} parent=0 // loop_exit
    _

// kernel: deepgem_forward.31
$region0: #{deepgem_forward.31}
  #allocation0 [shape = 'u32[]', space=smem, size = 0x4, offset = 0x4, fixed_abs, tag = 'smem constant byte address 0x4 - core index']
  #allocation1 [shape = 'u32[144,128]{1,0:T(1,128)}', space=vmem, size = 0x12000, scoped, tag = 'internal scratch']
  %s0 = inlined_call_operand.vmem [shape: f32[16,32], index: 0, kind: input, shape index: {}]
  %s1 = inlined_call_operand.vmem [shape: f32[32,64], index: 1, kind: input, shape index: {}]
  %s2 = inlined_call_operand.vmem [shape: f32[1,64], index: 2, kind: input, shape index: {}]
  %s3 = inlined_call_operand.vmem [shape: f32[1,64], index: 3, kind: input, shape index: {}]
  %s4 = inlined_call_operand.vmem [shape: f32[1,64], index: 4, kind: input, shape index: {}]
  %s5 = inlined_call_operand.vmem [shape: f32[16,64], index: 5, kind: output, shape index: {}]
  %s6 = sld [smem:[#allocation0]]
  $region30: #{deepgem_forward.31} parent=0
    _
  %s8 = ssub.s32 1, %s6
  %s9 = scalar_select 0, %s8, %s6
  // Predicated region
  $region2: #{deepgem_forward.31} parent=0 // pred_check
    _
  $region3: #{deepgem_forward.31} parent=0 // pred_check_branch
    %11 = sbr.rel (0) target = $region5
  $region4: #{deepgem_forward.31} parent=0 // pred_region
    _
  $region5: #{deepgem_forward.31} parent=0 // pred_fallthru
    _
  // Predicated region
  $region6: #{deepgem_forward.31} parent=0 // pred_check
    _
  $region7: #{deepgem_forward.31} parent=0 // pred_check_branch
    %13 = sbr.rel (0) target = $region9
  $region8: #{deepgem_forward.31} parent=0 // pred_region
    _
  $region9: #{deepgem_forward.31} parent=0 // pred_fallthru
    _
  // Predicated region
  $region10: #{deepgem_forward.31} parent=0 // pred_check
    _
  $region11: #{deepgem_forward.31} parent=0 // pred_check_branch
    %15 = sbr.rel (0) target = $region13
  $region12: #{deepgem_forward.31} parent=0 // pred_region
    _
  $region13: #{deepgem_forward.31} parent=0 // pred_fallthru
    _
  // Predicated region
  $region14: #{deepgem_forward.31} parent=0 // pred_check
    _
  $region15: #{deepgem_forward.31} parent=0 // pred_check_branch
    %17 = sbr.rel (0) target = $region17
  $region16: #{deepgem_forward.31} parent=0 // pred_region
    _
  $region17: #{deepgem_forward.31} parent=0 // pred_fallthru
    _
  // Predicated region
  $region18: #{deepgem_forward.31} parent=0 // pred_check
    _
  $region19: #{deepgem_forward.31} parent=0 // pred_check_branch
    %19 = sbr.rel (0) target = $region21
  $region20: #{deepgem_forward.31} parent=0 // pred_region
    _
  $region21: #{deepgem_forward.31} parent=0 // pred_fallthru
    _
  %v21 = vld [vmem:[%s0] sm:$0xff]
  %v22 = vld [vmem:[%s0 + $0x8] sm:$0xff]
  %v23 = vld [vmem:[%s1] sm:$0xff]
  %v24 = vld [vmem:[%s1 + $0x8] sm:$0xff]
  %v25 = vld [vmem:[%s1 + $0x10] sm:$0xff]
  %v26 = vld [vmem:[%s1 + $0x18] sm:$0xff]
  %v27 = vpack.c.bf16 %v22, %v21
  %v28 = vpack.c.bf16 %v24, %v23
  %v29 = vpack.c.bf16 %v26, %v25
  %v30 = vld [vmem:[%s2] sm:$0x1]
  %v32 = vlaneseq
  %v33 = vshrl.u32 %v32, 7
  %v34 = vsub.s32 0, %v33
  %v35 = vrot.slane %v30, %v34
  %vm37 = vcmask 261120
  %v39 = vsel %vm37, %v27, 0
  %41 = vmatprep.subr.bf16.mxu0 0
  %42 = vmatpush1.bf16.msra.mxu0 0
  %43 = vmatprep.subr.bf16.mxu0 0
  %44 = vmatpush1.bf16.msra.mxu0 0
  %45 = vmatprep.subr.bf16.mxu0 0
  %46 = vmatpush1.bf16.msra.mxu0 0
  %47 = vmatprep.subr.bf16.mxu0 0
  %48 = vmatpush1.bf16.msra.mxu0 0
  %49 = vmatprep.subr.bf16.mxu0 0
  %50 = vmatpush1.bf16.msra.mxu0 0
  %51 = vmatprep.subr.bf16.mxu0 0
  %52 = vmatpush1.bf16.msra.mxu0 0
  %53 = vmatprep.subr.bf16.mxu0 0
  %54 = vmatpush1.bf16.msra.mxu0 %v29
  %55 = vmatprep.subr.bf16.mxu0 0
  %56 = vmatpush1.bf16.msra.mxu0 %v28
  %57 = vmatprep.subr.bf16.mxu0 0
  %58 = vmatpush2.bf16.msra.mxu0 0
  %59 = vmatprep.subr.bf16.mxu0 0
  %60 = vmatpush2.bf16.msra.mxu0 0
  %61 = vmatprep.subr.bf16.mxu0 0
  %62 = vmatpush2.bf16.msra.mxu0 0
  %63 = vmatprep.subr.bf16.mxu0 0
  %64 = vmatpush2.bf16.msra.mxu0 0
  %65 = vmatprep.subr.bf16.mxu0 0
  %66 = vmatpush2.bf16.msra.mxu0 0
  %67 = vmatprep.subr.bf16.mxu0 0
  %68 = vmatpush2.bf16.msra.mxu0 0
  %69 = vmatprep.subr.bf16.mxu0 0
  %70 = vmatpush2.bf16.msra.mxu0 0
  %71 = vmatprep.subr.bf16.mxu0 0
  %72 = vmatpush2.bf16.msra.mxu0 0
  %73 = vmatprep.mubr.bf16.mxu0 0
  %74 = vmatmul.mubr.bf16.gmra.mxu0 %v39
  %v75 = vpop.f32.mrf.mxu0
  %v76 = vadd.f32 %v35, %v75
  %v77 = vpop.f32.mrf.mxu0
  %v78 = vpop.f32.mrf.mxu0
  %v79 = vadd.f32 %v35, %v78
  %v80 = vpop.f32.mrf.mxu0
  %81 = vdwg.mxu0
  %v82 = vtanh.pop %v76
  %v83 = vtanh.pop %v79
  %v84 = vld [vmem:[%s3] sm:$0x1]
  %v85 = vld [vmem:[%s4] sm:$0x1]
  %vm86 = vcmask 523264
  %v87 = vsel %vm86, %v82, 0.0
  %88 = vadd.xlane.f32.xlu0 %v87
  %v89 = vpop.xlane.xlu0 %88
  %v90 = vsel %vm86, %v83, 0.0
  %91 = vadd.xlane.f32.xlu0 %v90
  %v92 = vpop.xlane.xlu0 %91
  %v93 = vrcp.pop 64.0
  %v94 = vmul.f32 %v89, %v93
  %v95 = vmul.f32 %v92, %v93
  %v96 = vsub.f32 %v82, %v94
  %v97 = vsub.f32 %v83, %v95
  %v98 = vmul.f32 %v96, %v96
  %v99 = vmul.f32 %v97, %v97
  %v100 = vsel %vm86, %v98, 0.0
  %101 = vadd.xlane.f32.xlu0 %v100
  %v102 = vpop.xlane.xlu0 %101
  %v103 = vsel %vm86, %v99, 0.0
  %104 = vadd.xlane.f32.xlu0 %v103
  %v105 = vpop.xlane.xlu0 %104
  %v106 = vmul.f32 %v102, %v93
  %v107 = vmul.f32 %v105, %v93
  %v108 = vadd.f32 %v106, 1e-05
  %v109 = vadd.f32 %v107, 1e-05
  %v110 = vrsqrt.pop %v108
  %v111 = vrsqrt.pop %v109
  %v112 = vmul.f32 %v96, %v110
  %v113 = vmul.f32 %v97, %v111
  %v115 = vlaneseq
  %v116 = vshrl.u32 %v115, 7
  %v117 = vsub.s32 0, %v116
  %v118 = vrot.slane %v84, %v117
  %v120 = vmul.f32 %v112, %v118
  %v121 = vmul.f32 %v113, %v118
  %v123 = vlaneseq
  %v124 = vshrl.u32 %v123, 7
  %v125 = vsub.s32 0, %v124
  %v126 = vrot.slane %v85, %v125
  %v128 = vadd.f32 %v120, %v126
  %v129 = vadd.f32 %v121, %v126
  %130 = vst.msk [vmem:[%s5] sm:$0xff] %vm86, %v128
  %131 = vst.msk [vmem:[%s5 + $0x8] sm:$0xff] %vm86, %v129
  // Predicated region
  $region22: #{deepgem_forward.31} parent=0 // pred_check
    _
  $region23: #{deepgem_forward.31} parent=0 // pred_check_branch
    %133 = sbr.rel (0) target = $region25
  $region24: #{deepgem_forward.31} parent=0 // pred_region
    _
  $region25: #{deepgem_forward.31} parent=0 // pred_fallthru
    _
  // Predicated region
  $region26: #{deepgem_forward.31} parent=0 // pred_check
    _
  $region27: #{deepgem_forward.31} parent=0 // pred_check_branch
    %135 = sbr.rel (0) target = $region29
  $region28: #{deepgem_forward.31} parent=0 // pred_region
    _
  $region29: #{deepgem_forward.31} parent=0 // pred_fallthru
    _

// kernel: deepgem_forward.39
$region0: #{deepgem_forward.39}
  #allocation0 [shape = 'u32[]', space=smem, size = 0x4, offset = 0x4, fixed_abs, tag = 'smem constant byte address 0x4 - core index']
  #allocation1 [shape = 'u32[144,128]{1,0:T(1,128)}', space=vmem, size = 0x12000, scoped, tag = 'internal scratch']
  %s0 = inlined_call_operand.vmem [shape: f32[2,5,32], index: 0, kind: input, shape index: {}, may-alias: {0,1}]
  %s1 = inlined_call_operand.vmem [shape: f32[2,5,32], index: 1, kind: input, shape index: {}, may-alias: {0,1}]
  %s2 = inlined_call_operand.vmem [shape: f32[32,32], index: 2, kind: input, shape index: {}]
  %s3 = inlined_call_operand.vmem [shape: f32[1,32], index: 3, kind: input, shape index: {}]
  %s4 = inlined_call_operand.vmem [shape: f32[32,32], index: 4, kind: input, shape index: {}]
  %s5 = inlined_call_operand.vmem [shape: f32[1,32], index: 5, kind: input, shape index: {}]
  %s6 = inlined_call_operand.vmem [shape: f32[32,32], index: 6, kind: input, shape index: {}]
  %s7 = inlined_call_operand.vmem [shape: f32[1,32], index: 7, kind: input, shape index: {}]
  %s8 = inlined_call_operand.vmem [shape: f32[32,32], index: 8, kind: input, shape index: {}]
  %s9 = inlined_call_operand.vmem [shape: f32[1,32], index: 9, kind: input, shape index: {}]
  %s10 = inlined_call_operand.vmem [shape: f32[1,32], index: 10, kind: input, shape index: {}]
  %s11 = inlined_call_operand.vmem [shape: f32[1,32], index: 11, kind: input, shape index: {}]
  %s12 = inlined_call_operand.vmem [shape: f32[2,5,32], index: 12, kind: output, shape index: {}]
  %s13 = sld [smem:[#allocation0]]
  $region81: #{deepgem_forward.39} parent=0
    _
  %s15 = ssub.s32 1, %s13
  %s16 = scalar_select 0, %s15, %s13
  loop: start=0, step=1, limit=4
  $region2: #{deepgem_forward.39} parent=0 // loop_pre_header
    _
  $region3: #{deepgem_forward.39} parent=0 // loop_header
    %s18 = sphi 0, %s22
    %p19 = scmp.ge.s32.totalorder %s18, 4
    %s28 = sphi 0, %s30
    %s31 = sphi 0, %s28
    %s32 = sphi 0, %s31
    %s48 = sphi 0, %s32
    %s54 = sphi 0, %s56
    %s57 = sphi 0, %s54
    %s58 = sphi 0, %s57
    %s74 = sphi 0, %s58
    %s78 = sphi 0, %s78
    %s80 = sphi 0, %s78
    %s81 = sphi 0, %s80
    %s95 = sphi 0, %s81
    %s99 = sphi 0, %s99
    %s101 = sphi 0, %s99
    %s102 = sphi 0, %s101
    %s116 = sphi 0, %s102
    %s120 = sphi 0, %s120
    %s122 = sphi 0, %s120
    %s123 = sphi 0, %s122
    %s137 = sphi 0, %s123
    %s141 = sphi 0, %s141
    %s143 = sphi 0, %s141
    %s144 = sphi 0, %s143
    %s158 = sphi 0, %s144
    %s162 = sphi 0, %s162
    %s164 = sphi 0, %s162
    %s165 = sphi 0, %s164
    %s179 = sphi 0, %s165
    %s183 = sphi 0, %s183
    %s185 = sphi 0, %s183
    %s186 = sphi 0, %s185
    %s200 = sphi 0, %s186
    %s204 = sphi 0, %s204
    %s206 = sphi 0, %s204
    %s207 = sphi 0, %s206
    %s221 = sphi 0, %s207
    %s225 = sphi 0, %s225
    %s227 = sphi 0, %s225
    %s228 = sphi 0, %s227
    %s242 = sphi 0, %s228
    %s246 = sphi 0, %s246
    %s248 = sphi 0, %s246
    %s249 = sphi 0, %s248
    %s263 = sphi 0, %s249
    %s267 = sphi 0, %s267
    %s269 = sphi 0, %s267
    %s270 = sphi 0, %s269
    %s284 = sphi 0, %s270
    %s290 = sphi 0, %s292
    %s293 = sphi 0, %s290
    %s294 = sphi 0, %s293
    %s310 = sphi 0, %s294
  $region4: #{deepgem_forward.39} parent=0 // loop_header_branch
    %21 = sbr.rel (%p19) target = $region8
  $region5: #{deepgem_forward.39} parent=0 // loop_body
    %s23 = ssub.s32 %s18, 1
    %s24 = ssub.s32 %s18, 2
    %s25 = sadd.s32 %s18, 1
    %s26 = ssub.s32 %s18, %s25
    %p27 = scmp.eq.s32.totalorder %s26, 0
    %s29 = sadd.s32 %s28, 1
    %s30 = scalar_select %p27, %s28, %s29
    %p33 = pneg %p27
    %p34 = scmp.eq.s32.totalorder %s18, 1
    %p35 = por %p33, %p34
    %p36 = scmp.ne.s32.totalorder %s28, %s31
    %p37 = scmp.eq.s32.totalorder %s18, 0
    %p38 = por %p36, %p37
    %p39 = scmp.ne.s32.totalorder %s28, %s31
    %p40 = scmp.eq.s32.totalorder %s23, 1
    %p41 = por %p39, %p40
    %p42 = scmp.ne.s32.totalorder %s31, %s32
    %p43 = scmp.eq.s32.totalorder %s23, 0
    %p44 = por %p42, %p43
    %p45 = scmp.ne.s32.totalorder %s31, %s32
    %p46 = scmp.eq.s32.totalorder %s24, 1
    %p47 = por %p45, %p46
    %p49 = scmp.ne.s32.totalorder %s32, %s48
    %p50 = scmp.eq.s32.totalorder %s24, 0
    %p51 = por %p49, %p50
    %s52 = ssub.s32 %s18, %s25
    %p53 = scmp.eq.s32.totalorder %s52, 0
    %s55 = sadd.s32 %s54, 1
    %s56 = scalar_select %p53, %s54, %s55
    %p59 = pneg %p53
    %p60 = scmp.eq.s32.totalorder %s18, 1
    %p61 = por %p59, %p60
    %p62 = scmp.ne.s32.totalorder %s54, %s57
    %p63 = scmp.eq.s32.totalorder %s18, 0
    %p64 = por %p62, %p63
    %p65 = scmp.ne.s32.totalorder %s54, %s57
    %p66 = scmp.eq.s32.totalorder %s23, 1
    %p67 = por %p65, %p66
    %p68 = scmp.ne.s32.totalorder %s57, %s58
    %p69 = scmp.eq.s32.totalorder %s23, 0
    %p70 = por %p68, %p69
    %p71 = scmp.ne.s32.totalorder %s57, %s58
    %p72 = scmp.eq.s32.totalorder %s24, 1
    %p73 = por %p71, %p72
    %p75 = scmp.ne.s32.totalorder %s58, %s74
    %p76 = scmp.eq.s32.totalorder %s24, 0
    %p77 = por %p75, %p76
    %s79 = sadd.s32 %s78, 1
    %p82 = scmp.eq.s32.totalorder %s18, 1
    %p83 = scmp.ne.s32.totalorder %s78, %s80
    %p84 = scmp.eq.s32.totalorder %s18, 0
    %p85 = por %p83, %p84
    %p86 = scmp.ne.s32.totalorder %s78, %s80
    %p87 = scmp.eq.s32.totalorder %s23, 1
    %p88 = por %p86, %p87
    %p89 = scmp.ne.s32.totalorder %s80, %s81
    %p90 = scmp.eq.s32.totalorder %s23, 0
    %p91 = por %p89, %p90
    %p92 = scmp.ne.s32.totalorder %s80, %s81
    %p93 = scmp.eq.s32.totalorder %s24, 1
    %p94 = por %p92, %p93
    %p96 = scmp.ne.s32.totalorder %s81, %s95
    %p97 = scmp.eq.s32.totalorder %s24, 0
    %p98 = por %p96, %p97
    %s100 = sadd.s32 %s99, 1
    %p103 = scmp.eq.s32.totalorder %s18, 1
    %p104 = scmp.ne.s32.totalorder %s99, %s101
    %p105 = scmp.eq.s32.totalorder %s18, 0
    %p106 = por %p104, %p105
    %p107 = scmp.ne.s32.totalorder %s99, %s101
    %p108 = scmp.eq.s32.totalorder %s23, 1
    %p109 = por %p107, %p108
    %p110 = scmp.ne.s32.totalorder %s101, %s102
    %p111 = scmp.eq.s32.totalorder %s23, 0
    %p112 = por %p110, %p111
    %p113 = scmp.ne.s32.totalorder %s101, %s102
    %p114 = scmp.eq.s32.totalorder %s24, 1
    %p115 = por %p113, %p114
    %p117 = scmp.ne.s32.totalorder %s102, %s116
    %p118 = scmp.eq.s32.totalorder %s24, 0
    %p119 = por %p117, %p118
    %s121 = sadd.s32 %s120, 1
    %p124 = scmp.eq.s32.totalorder %s18, 1
    %p125 = scmp.ne.s32.totalorder %s120, %s122
    %p126 = scmp.eq.s32.totalorder %s18, 0
    %p127 = por %p125, %p126
    %p128 = scmp.ne.s32.totalorder %s120, %s122
    %p129 = scmp.eq.s32.totalorder %s23, 1
    %p130 = por %p128, %p129
    %p131 = scmp.ne.s32.totalorder %s122, %s123
    %p132 = scmp.eq.s32.totalorder %s23, 0
    %p133 = por %p131, %p132
    %p134 = scmp.ne.s32.totalorder %s122, %s123
    %p135 = scmp.eq.s32.totalorder %s24, 1
    %p136 = por %p134, %p135
    %p138 = scmp.ne.s32.totalorder %s123, %s137
    %p139 = scmp.eq.s32.totalorder %s24, 0
    %p140 = por %p138, %p139
    %s142 = sadd.s32 %s141, 1
    %p145 = scmp.eq.s32.totalorder %s18, 1
    %p146 = scmp.ne.s32.totalorder %s141, %s143
    %p147 = scmp.eq.s32.totalorder %s18, 0
    %p148 = por %p146, %p147
    %p149 = scmp.ne.s32.totalorder %s141, %s143
    %p150 = scmp.eq.s32.totalorder %s23, 1
    %p151 = por %p149, %p150
    %p152 = scmp.ne.s32.totalorder %s143, %s144
    %p153 = scmp.eq.s32.totalorder %s23, 0
    %p154 = por %p152, %p153
    %p155 = scmp.ne.s32.totalorder %s143, %s144
    %p156 = scmp.eq.s32.totalorder %s24, 1
    %p157 = por %p155, %p156
    %p159 = scmp.ne.s32.totalorder %s144, %s158
    %p160 = scmp.eq.s32.totalorder %s24, 0
    %p161 = por %p159, %p160
    %s163 = sadd.s32 %s162, 1
    %p166 = scmp.eq.s32.totalorder %s18, 1
    %p167 = scmp.ne.s32.totalorder %s162, %s164
    %p168 = scmp.eq.s32.totalorder %s18, 0
    %p169 = por %p167, %p168
    %p170 = scmp.ne.s32.totalorder %s162, %s164
    %p171 = scmp.eq.s32.totalorder %s23, 1
    %p172 = por %p170, %p171
    %p173 = scmp.ne.s32.totalorder %s164, %s165
    %p174 = scmp.eq.s32.totalorder %s23, 0
    %p175 = por %p173, %p174
    %p176 = scmp.ne.s32.totalorder %s164, %s165
    %p177 = scmp.eq.s32.totalorder %s24, 1
    %p178 = por %p176, %p177
    %p180 = scmp.ne.s32.totalorder %s165, %s179
    %p181 = scmp.eq.s32.totalorder %s24, 0
    %p182 = por %p180, %p181
    %s184 = sadd.s32 %s183, 1
    %p187 = scmp.eq.s32.totalorder %s18, 1
    %p188 = scmp.ne.s32.totalorder %s183, %s185
    %p189 = scmp.eq.s32.totalorder %s18, 0
    %p190 = por %p188, %p189
    %p191 = scmp.ne.s32.totalorder %s183, %s185
    %p192 = scmp.eq.s32.totalorder %s23, 1
    %p193 = por %p191, %p192
    %p194 = scmp.ne.s32.totalorder %s185, %s186
    %p195 = scmp.eq.s32.totalorder %s23, 0
    %p196 = por %p194, %p195
    %p197 = scmp.ne.s32.totalorder %s185, %s186
    %p198 = scmp.eq.s32.totalorder %s24, 1
    %p199 = por %p197, %p198
    %p201 = scmp.ne.s32.totalorder %s186, %s200
    %p202 = scmp.eq.s32.totalorder %s24, 0
    %p203 = por %p201, %p202
    %s205 = sadd.s32 %s204, 1
    %p208 = scmp.eq.s32.totalorder %s18, 1
    %p209 = scmp.ne.s32.totalorder %s204, %s206
    %p210 = scmp.eq.s32.totalorder %s18, 0
    %p211 = por %p209, %p210
    %p212 = scmp.ne.s32.totalorder %s204, %s206
    %p213 = scmp.eq.s32.totalorder %s23, 1
    %p214 = por %p212, %p213
    %p215 = scmp.ne.s32.totalorder %s206, %s207
    %p216 = scmp.eq.s32.totalorder %s23, 0
    %p217 = por %p215, %p216
    %p218 = scmp.ne.s32.totalorder %s206, %s207
    %p219 = scmp.eq.s32.totalorder %s24, 1
    %p220 = por %p218, %p219
    %p222 = scmp.ne.s32.totalorder %s207, %s221
    %p223 = scmp.eq.s32.totalorder %s24, 0
    %p224 = por %p222, %p223
    %s226 = sadd.s32 %s225, 1
    %p229 = scmp.eq.s32.totalorder %s18, 1
    %p230 = scmp.ne.s32.totalorder %s225, %s227
    %p231 = scmp.eq.s32.totalorder %s18, 0
    %p232 = por %p230, %p231
    %p233 = scmp.ne.s32.totalorder %s225, %s227
    %p234 = scmp.eq.s32.totalorder %s23, 1
    %p235 = por %p233, %p234
    %p236 = scmp.ne.s32.totalorder %s227, %s228
    %p237 = scmp.eq.s32.totalorder %s23, 0
    %p238 = por %p236, %p237
    %p239 = scmp.ne.s32.totalorder %s227, %s228
    %p240 = scmp.eq.s32.totalorder %s24, 1
    %p241 = por %p239, %p240
    %p243 = scmp.ne.s32.totalorder %s228, %s242
    %p244 = scmp.eq.s32.totalorder %s24, 0
    %p245 = por %p243, %p244
    %s247 = sadd.s32 %s246, 1
    %p250 = scmp.eq.s32.totalorder %s18, 1
    %p251 = scmp.ne.s32.totalorder %s246, %s248
    %p252 = scmp.eq.s32.totalorder %s18, 0
    %p253 = por %p251, %p252
    %p254 = scmp.ne.s32.totalorder %s246, %s248
    %p255 = scmp.eq.s32.totalorder %s23, 1
    %p256 = por %p254, %p255
    %p257 = scmp.ne.s32.totalorder %s248, %s249
    %p258 = scmp.eq.s32.totalorder %s23, 0
    %p259 = por %p257, %p258
    %p260 = scmp.ne.s32.totalorder %s248, %s249
    %p261 = scmp.eq.s32.totalorder %s24, 1
    %p262 = por %p260, %p261
    %p264 = scmp.ne.s32.totalorder %s249, %s263
    %p265 = scmp.eq.s32.totalorder %s24, 0
    %p266 = por %p264, %p265
    %s268 = sadd.s32 %s267, 1
    %p271 = scmp.eq.s32.totalorder %s18, 1
    %p272 = scmp.ne.s32.totalorder %s267, %s269
    %p273 = scmp.eq.s32.totalorder %s18, 0
    %p274 = por %p272, %p273
    %p275 = scmp.ne.s32.totalorder %s267, %s269
    %p276 = scmp.eq.s32.totalorder %s23, 1
    %p277 = por %p275, %p276
    %p278 = scmp.ne.s32.totalorder %s269, %s270
    %p279 = scmp.eq.s32.totalorder %s23, 0
    %p280 = por %p278, %p279
    %p281 = scmp.ne.s32.totalorder %s269, %s270
    %p282 = scmp.eq.s32.totalorder %s24, 1
    %p283 = por %p281, %p282
    %p285 = scmp.ne.s32.totalorder %s270, %s284
    %p286 = scmp.eq.s32.totalorder %s24, 0
    %p287 = por %p285, %p286
    %s288 = ssub.s32 %s18, %s25
    %p289 = scmp.eq.s32.totalorder %s288, 0
    %s291 = sadd.s32 %s290, 1
    %s292 = scalar_select %p289, %s290, %s291
    %p295 = pneg %p289
    %p296 = scmp.eq.s32.totalorder %s18, 1
    %p297 = por %p295, %p296
    %p298 = scmp.ne.s32.totalorder %s290, %s293
    %p299 = scmp.eq.s32.totalorder %s18, 0
    %p300 = por %p298, %p299
    %p301 = scmp.ne.s32.totalorder %s290, %s293
    %p302 = scmp.eq.s32.totalorder %s23, 1
    %p303 = por %p301, %p302
    %p304 = scmp.ne.s32.totalorder %s293, %s294
    %p305 = scmp.eq.s32.totalorder %s23, 0
    %p306 = por %p304, %p305
    %p307 = scmp.ne.s32.totalorder %s293, %s294
    %p308 = scmp.eq.s32.totalorder %s24, 1
    %p309 = por %p307, %p308
    %p311 = scmp.ne.s32.totalorder %s294, %s310
    %p312 = scmp.eq.s32.totalorder %s24, 0
    %p313 = por %p311, %p312
    %p314 = scmp.le.s32.totalorder 1, %s18
    %p315 = scmp.lt.s32.totalorder %s18, 3
    %p316 = pnand %p314, %p315
    %p317 = pneg %p316
    // Predicated region
    $region9: #{deepgem_forward.39} parent=5 // pred_check
      _
    $region10: #{deepgem_forward.39} parent=5 // pred_check_branch
      %319 = sbr.rel (%p316) target = $region12
    $region11: #{deepgem_forward.39} parent=5 // pred_region
      %s320 = ssub.s32 %s18, 1
      // Predicated region
      $region13: #{deepgem_forward.39} parent=11 // pred_check
        %p321 = pneg %p91
      $region14: #{deepgem_forward.39} parent=11 // pred_check_branch
        %323 = sbr.rel (%p321) target = $region16
      $region15: #{deepgem_forward.39} parent=11 // pred_region
        _
      $region16: #{deepgem_forward.39} parent=11 // pred_fallthru
        _
      // Predicated region
      $region17: #{deepgem_forward.39} parent=11 // pred_check
        %p324 = pneg %p112
      $region18: #{deepgem_forward.39} parent=11 // pred_check_branch
        %326 = sbr.rel (%p324) target = $region20
      $region19: #{deepgem_forward.39} parent=11 // pred_region
        _
      $region20: #{deepgem_forward.39} parent=11 // pred_fallthru
        _
      // Predicated region
      $region21: #{deepgem_forward.39} parent=11 // pred_check
        %p327 = pneg %p133
      $region22: #{deepgem_forward.39} parent=11 // pred_check_branch
        %329 = sbr.rel (%p327) target = $region24
      $region23: #{deepgem_forward.39} parent=11 // pred_region
        _
      $region24: #{deepgem_forward.39} parent=11 // pred_fallthru
        _
      // Predicated region
      $region25: #{deepgem_forward.39} parent=11 // pred_check
        %p330 = pneg %p154
      $region26: #{deepgem_forward.39} parent=11 // pred_check_branch
        %332 = sbr.rel (%p330) target = $region28
      $region27: #{deepgem_forward.39} parent=11 // pred_region
        _
      $region28: #{deepgem_forward.39} parent=11 // pred_fallthru
        _
      // Predicated region
      $region29: #{deepgem_forward.39} parent=11 // pred_check
        %p333 = pneg %p175
      $region30: #{deepgem_forward.39} parent=11 // pred_check_branch
        %335 = sbr.rel (%p333) target = $region32
      $region31: #{deepgem_forward.39} parent=11 // pred_region
        _
      $region32: #{deepgem_forward.39} parent=11 // pred_fallthru
        _
      // Predicated region
      $region33: #{deepgem_forward.39} parent=11 // pred_check
        %p336 = pneg %p196
      $region34: #{deepgem_forward.39} parent=11 // pred_check_branch
        %338 = sbr.rel (%p336) target = $region36
      $region35: #{deepgem_forward.39} parent=11 // pred_region
        _
      $region36: #{deepgem_forward.39} parent=11 // pred_fallthru
        _
      // Predicated region
      $region37: #{deepgem_forward.39} parent=11 // pred_check
        %p339 = pneg %p217
      $region38: #{deepgem_forward.39} parent=11 // pred_check_branch
        %341 = sbr.rel (%p339) target = $region40
      $region39: #{deepgem_forward.39} parent=11 // pred_region
        _
      $region40: #{deepgem_forward.39} parent=11 // pred_fallthru
        _
      // Predicated region
      $region41: #{deepgem_forward.39} parent=11 // pred_check
        %p342 = pneg %p238
      $region42: #{deepgem_forward.39} parent=11 // pred_check_branch
        %344 = sbr.rel (%p342) target = $region44
      $region43: #{deepgem_forward.39} parent=11 // pred_region
        _
      $region44: #{deepgem_forward.39} parent=11 // pred_fallthru
        _
      // Predicated region
      $region45: #{deepgem_forward.39} parent=11 // pred_check
        %p345 = pneg %p259
      $region46: #{deepgem_forward.39} parent=11 // pred_check_branch
        %347 = sbr.rel (%p345) target = $region48
      $region47: #{deepgem_forward.39} parent=11 // pred_region
        _
      $region48: #{deepgem_forward.39} parent=11 // pred_fallthru
        _
      // Predicated region
      $region49: #{deepgem_forward.39} parent=11 // pred_check
        %p348 = pneg %p280
      $region50: #{deepgem_forward.39} parent=11 // pred_check_branch
        %350 = sbr.rel (%p348) target = $region52
      $region51: #{deepgem_forward.39} parent=11 // pred_region
        _
      $region52: #{deepgem_forward.39} parent=11 // pred_fallthru
        _
    $region12: #{deepgem_forward.39} parent=5 // pred_fallthru
      _
    %p351 = scmp.lt.s32.totalorder %s18, 2
    // Predicated region
    $region53: #{deepgem_forward.39} parent=5 // pred_check
      %p352 = pneg %p351
    $region54: #{deepgem_forward.39} parent=5 // pred_check_branch
      %354 = sbr.rel (%p352) target = $region56
    $region55: #{deepgem_forward.39} parent=5 // pred_region
      // Predicated region
      $region57: #{deepgem_forward.39} parent=55 // pred_check
        %p355 = pneg %p38
      $region58: #{deepgem_forward.39} parent=55 // pred_check_branch
        %357 = sbr.rel (%p355) target = $region60
      $region59: #{deepgem_forward.39} parent=55 // pred_region
        %p358 = scmp.lt.s32.totalorder %s18, 1
        %s359 = scalar_select %p358, %s18, 1
        %s360 = smul.addr %s359, 8
        %s361 = scalar_lea.vmem %s0, %s360
      $region60: #{deepgem_forward.39} parent=55 // pred_fallthru
        _
      // Predicated region
      $region61: #{deepgem_forward.39} parent=55 // pred_check
        %p362 = pneg %p64
      $region62: #{deepgem_forward.39} parent=55 // pred_check_branch
        %364 = sbr.rel (%p362) target = $region64
      $region63: #{deepgem_forward.39} parent=55 // pred_region
        %p365 = scmp.lt.s32.totalorder %s18, 1
        %s366 = scalar_select %p365, %s18, 1
        %s367 = smul.addr %s366, 8
        %s368 = scalar_lea.vmem %s1, %s367
      $region64: #{deepgem_forward.39} parent=55 // pred_fallthru
        _
    $region56: #{deepgem_forward.39} parent=5 // pred_fallthru
      _
    %p369 = scmp.le.s32.totalorder 1, %s18
    %p370 = scmp.lt.s32.totalorder %s18, 3
    %p371 = pnand %p369, %p370
    %p372 = pneg %p371
    // Predicated region
    $region65: #{deepgem_forward.39} parent=5 // pred_check
      _
    $region66: #{deepgem_forward.39} parent=5 // pred_check_branch
      %374 = sbr.rel (%p371) target = $region68
    $region67: #{deepgem_forward.39} parent=5 // pred_region
      %s375 = ssub.s32 %s18, 1
      %p376 = scmp.lt.s32.totalorder %s23, 1
      %s377 = scalar_select %p376, %s23, 1
      %s378 = smul.addr %s377, 8
      %s379 = scalar_lea.vmem %s0, %s378
      %p380 = pneg %p44
      %p381 = pneg %p41
      %p382 = scmp.lt.s32.totalorder %s23, 1
      %s383 = scalar_select %p382, %s23, 1
      %s384 = smul.addr %s383, 8
      %s385 = scalar_lea.vmem %s1, %s384
      %p386 = pneg %p70
      %p387 = pneg %p67
      %p388 = pneg %p91
      %p389 = pneg %p88
      %p390 = pneg %p112
      %p391 = pneg %p109
      %p392 = pneg %p133
      %p393 = pneg %p130
      %p394 = pneg %p154
      %p395 = pneg %p151
      %p396 = pneg %p175
      %p397 = pneg %p172
      %p398 = pneg %p196
      %p399 = pneg %p193
      %p400 = pneg %p217
      %p401 = pneg %p214
      %p402 = pneg %p238
      %p403 = pneg %p235
      %p404 = pneg %p259
      %p405 = pneg %p256
      %p406 = pneg %p280
      %p407 = pneg %p277
      %p408 = pneg %p306
      %p409 = pneg %p303
      %p410 = scmp.lt.s32.totalorder %s23, 1
      %s411 = scalar_select %p410, %s23, 1
      %s412 = smul.addr %s411, 8
      %s413 = scalar_lea.vmem %s12, %s412
      %p414 = scmp.lt.s32.totalorder %s23, 1
      %s415 = scalar_select %p414, %s23, 1
      %s416 = smul.addr %s415, 8
      %s417 = scalar_lea.vmem %s0, %s416
      %p418 = scmp.lt.s32.totalorder %s23, 1
      %s419 = scalar_select %p418, %s23, 1
      %s420 = smul.addr %s419, 8
      %s421 = scalar_lea.vmem %s1, %s420
      %p422 = scmp.lt.s32.totalorder %s23, 1
      %s423 = scalar_select %p422, %s23, 1
      %s424 = smul.addr %s423, 8
      %s425 = scalar_lea.vmem %s12, %s424
      %v427 = vld [vmem:[%s417] sm:$0x1f]
      %v428 = vld [vmem:[%s421] sm:$0x1f]
      %v429 = vld [vmem:[%s2] sm:$0xff]
      %v430 = vld [vmem:[%s2 + $0x8] sm:$0xff]
      %v431 = vld [vmem:[%s2 + $0x10] sm:$0xff]
      %v432 = vld [vmem:[%s2 + $0x18] sm:$0xff]
      %v433 = vpack.c.bf16 %v427, %v427
      %v434 = vpack.c.bf16 %v430, %v429
      %v435 = vpack.c.bf16 %v432, %v431
      %v436 = vld [vmem:[%s3] sm:$0x1]
      %v438 = vlaneseq
      %v439 = vshrl.u32 %v438, 7
      %v440 = vsub.s32 0, %v439
      %v441 = vrot.slane %v436, %v440
      %vm443 = vcmask 261120
      %v445 = vsel %vm443, %v433, 0
      %447 = vmatprep.subr.bf16.mxu0 0
      %448 = vmatpush1.bf16.msra.mxu0 0
      %449 = vmatprep.subr.bf16.mxu0 0
      %450 = vmatpush1.bf16.msra.mxu0 0
      %451 = vmatprep.subr.bf16.mxu0 0
      %452 = vmatpush1.bf16.msra.mxu0 0
      %453 = vmatprep.subr.bf16.mxu0 0
      %454 = vmatpush1.bf16.msra.mxu0 0
      %455 = vmatprep.subr.bf16.mxu0 0
      %456 = vmatpush1.bf16.msra.mxu0 0
      %457 = vmatprep.subr.bf16.mxu0 0
      %458 = vmatpush1.bf16.msra.mxu0 0
      %459 = vmatprep.subr.bf16.mxu0 0
      %460 = vmatpush1.bf16.msra.mxu0 %v435
      %461 = vmatprep.subr.bf16.mxu0 0
      %462 = vmatpush1.bf16.msra.mxu0 %v434
      %463 = vmatprep.subr.bf16.mxu0 0
      %464 = vmatpush2.bf16.msra.mxu0 0
      %465 = vmatprep.subr.bf16.mxu0 0
      %466 = vmatpush2.bf16.msra.mxu0 0
      %467 = vmatprep.subr.bf16.mxu0 0
      %468 = vmatpush2.bf16.msra.mxu0 0
      %469 = vmatprep.subr.bf16.mxu0 0
      %470 = vmatpush2.bf16.msra.mxu0 0
      %471 = vmatprep.subr.bf16.mxu0 0
      %472 = vmatpush2.bf16.msra.mxu0 0
      %473 = vmatprep.subr.bf16.mxu0 0
      %474 = vmatpush2.bf16.msra.mxu0 0
      %475 = vmatprep.subr.bf16.mxu0 0
      %476 = vmatpush2.bf16.msra.mxu0 0
      %477 = vmatprep.subr.bf16.mxu0 0
      %478 = vmatpush2.bf16.msra.mxu0 0
      %479 = vmatprep.mubr.bf16.mxu0 0
      %480 = vmatmul.mubr.bf16.gmra.mxu0 %v445
      %v481 = vpop.f32.mrf.mxu0
      %v482 = vadd.f32 %v441, %v481
      %v483 = vpop.f32.mrf.mxu0
      %v484 = vpop.f32.mrf.mxu0
      %v485 = vpop.f32.mrf.mxu0
      %486 = vdwg.mxu0
      %v487 = vmul.f32 %v482, 0.35355338
      %v488 = vld [vmem:[%s4] sm:$0xff]
      %v489 = vld [vmem:[%s4 + $0x8] sm:$0xff]
      %v490 = vld [vmem:[%s4 + $0x10] sm:$0xff]
      %v491 = vld [vmem:[%s4 + $0x18] sm:$0xff]
      %v492 = vpack.c.bf16 %v428, %v428
      %v493 = vpack.c.bf16 %v489, %v488
      %v494 = vpack.c.bf16 %v491, %v490
      %v495 = vld [vmem:[%s5] sm:$0x1]
      %v497 = vlaneseq
      %v498 = vshrl.u32 %v497, 7
      %v499 = vsub.s32 0, %v498
      %v500 = vrot.slane %v495, %v499
      %v503 = vsel %vm443, %v492, 0
      %505 = vmatprep.subr.bf16.mxu0 0
      %506 = vmatpush1.bf16.msra.mxu0 0
      %507 = vmatprep.subr.bf16.mxu0 0
      %508 = vmatpush1.bf16.msra.mxu0 0
      %509 = vmatprep.subr.bf16.mxu0 0
      %510 = vmatpush1.bf16.msra.mxu0 0
      %511 = vmatprep.subr.bf16.mxu0 0
      %512 = vmatpush1.bf16.msra.mxu0 0
      %513 = vmatprep.subr.bf16.mxu0 0
      %514 = vmatpush1.bf16.msra.mxu0 0
      %515 = vmatprep.subr.bf16.mxu0 0
      %516 = vmatpush1.bf16.msra.mxu0 0
      %517 = vmatprep.subr.bf16.mxu0 0
      %518 = vmatpush1.bf16.msra.mxu0 %v494
      %519 = vmatprep.subr.bf16.mxu0 0
      %520 = vmatpush1.bf16.msra.mxu0 %v493
      %521 = vmatprep.subr.bf16.mxu0 0
      %522 = vmatpush2.bf16.msra.mxu0 0
      %523 = vmatprep.subr.bf16.mxu0 0
      %524 = vmatpush2.bf16.msra.mxu0 0
      %525 = vmatprep.subr.bf16.mxu0 0
      %526 = vmatpush2.bf16.msra.mxu0 0
      %527 = vmatprep.subr.bf16.mxu0 0
      %528 = vmatpush2.bf16.msra.mxu0 0
      %529 = vmatprep.subr.bf16.mxu0 0
      %530 = vmatpush2.bf16.msra.mxu0 0
      %531 = vmatprep.subr.bf16.mxu0 0
      %532 = vmatpush2.bf16.msra.mxu0 0
      %533 = vmatprep.subr.bf16.mxu0 0
      %534 = vmatpush2.bf16.msra.mxu0 0
      %535 = vmatprep.subr.bf16.mxu0 0
      %536 = vmatpush2.bf16.msra.mxu0 0
      %537 = vmatprep.mubr.bf16.mxu0 0
      %538 = vmatmul.mubr.bf16.gmra.mxu0 %v503
      %v539 = vpop.f32.mrf.mxu0
      %v540 = vadd.f32 %v500, %v539
      %v541 = vpop.f32.mrf.mxu0
      %v542 = vpop.f32.mrf.mxu0
      %v543 = vpop.f32.mrf.mxu0
      %544 = vdwg.mxu0
      %v545 = vld [vmem:[%s6] sm:$0xff]
      %v546 = vld [vmem:[%s6 + $0x8] sm:$0xff]
      %v547 = vld [vmem:[%s6 + $0x10] sm:$0xff]
      %v548 = vld [vmem:[%s6 + $0x18] sm:$0xff]
      %v549 = vpack.c.bf16 %v546, %v545
      %v550 = vpack.c.bf16 %v548, %v547
      %v551 = vld [vmem:[%s7] sm:$0x1]
      %v553 = vlaneseq
      %v554 = vshrl.u32 %v553, 7
      %v555 = vsub.s32 0, %v554
      %v556 = vrot.slane %v551, %v555
      %558 = vmatprep.subr.bf16.mxu0 0
      %559 = vmatpush1.bf16.msra.mxu0 0
      %560 = vmatprep.subr.bf16.mxu0 0
      %561 = vmatpush1.bf16.msra.mxu0 0
      %562 = vmatprep.subr.bf16.mxu0 0
      %563 = vmatpush1.bf16.msra.mxu0 0
      %564 = vmatprep.subr.bf16.mxu0 0
      %565 = vmatpush1.bf16.msra.mxu0 0
      %566 = vmatprep.subr.bf16.mxu0 0
      %567 = vmatpush1.bf16.msra.mxu0 0
      %568 = vmatprep.subr.bf16.mxu0 0
      %569 = vmatpush1.bf16.msra.mxu0 0
      %570 = vmatprep.subr.bf16.mxu0 0
      %571 = vmatpush1.bf16.msra.mxu0 %v550
      %572 = vmatprep.subr.bf16.mxu0 0
      %573 = vmatpush1.bf16.msra.mxu0 %v549
      %574 = vmatprep.subr.bf16.mxu0 0
      %575 = vmatpush2.bf16.msra.mxu0 0
      %576 = vmatprep.subr.bf16.mxu0 0
      %577 = vmatpush2.bf16.msra.mxu0 0
      %578 = vmatprep.subr.bf16.mxu0 0
      %579 = vmatpush2.bf16.msra.mxu0 0
      %580 = vmatprep.subr.bf16.mxu0 0
      %581 = vmatpush2.bf16.msra.mxu0 0
      %582 = vmatprep.subr.bf16.mxu0 0
      %583 = vmatpush2.bf16.msra.mxu0 0
      %584 = vmatprep.subr.bf16.mxu0 0
      %585 = vmatpush2.bf16.msra.mxu0 0
      %586 = vmatprep.subr.bf16.mxu0 0
      %587 = vmatpush2.bf16.msra.mxu0 0
      %588 = vmatprep.subr.bf16.mxu0 0
      %589 = vmatpush2.bf16.msra.mxu0 0
      %590 = vmatprep.mubr.bf16.mxu0 0
      %591 = vmatmul.mubr.bf16.gmra.mxu0 %v503
      %v592 = vpop.f32.mrf.mxu0
      %v593 = vadd.f32 %v556, %v592
      %v594 = vpop.f32.mrf.mxu0
      %v595 = vpop.f32.mrf.mxu0
      %v596 = vpop.f32.mrf.mxu0
      %597 = vdwg.mxu0
      %v598 = vpack.c.bf16 %v487, %v487
      %v599 = vpack.c.bf16 %v540, %v540
      %vm600 = vcmask 64512
      %v602 = vsel %vm600, %v598, 0
      %v605 = vsel %vm600, %v599, 0
      %607 = vmatprep.subr.bf16.mxu0 0
      %608 = vmatpush1.bf16.xpose.msra.mxu0 0
      %609 = vmatprep.subr.bf16.mxu0 0
      %610 = vmatpush1.bf16.xpose.msra.mxu0 0
      %611 = vmatprep.subr.bf16.mxu0 0
      %612 = vmatpush1.bf16.xpose.msra.mxu0 0
      %613 = vmatprep.subr.bf16.mxu0 0
      %614 = vmatpush1.bf16.xpose.msra.mxu0 0
      %615 = vmatprep.subr.bf16.mxu0 0
      %616 = vmatpush1.bf16.xpose.msra.mxu0 0
      %617 = vmatprep.subr.bf16.mxu0 0
      %618 = vmatpush1.bf16.xpose.msra.mxu0 0
      %619 = vmatprep.subr.bf16.mxu0 0
      %620 = vmatpush1.bf16.xpose.msra.mxu0 0
      %621 = vmatprep.subr.bf16.mxu0 0
      %622 = vmatpush1.bf16.xpose.msra.mxu0 %v605
      %623 = vmatprep.subr.bf16.mxu0 0
      %624 = vmatpush2.bf16.xpose.msra.mxu0 0
      %625 = vmatprep.subr.bf16.mxu0 0
      %626 = vmatpush2.bf16.xpose.msra.mxu0 0
      %627 = vmatprep.subr.bf16.mxu0 0
      %628 = vmatpush2.bf16.xpose.msra.mxu0 0
      %629 = vmatprep.subr.bf16.mxu0 0
      %630 = vmatpush2.bf16.xpose.msra.mxu0 0
      %631 = vmatprep.subr.bf16.mxu0 0
      %632 = vmatpush2.bf16.xpose.msra.mxu0 0
      %633 = vmatprep.subr.bf16.mxu0 0
      %634 = vmatpush2.bf16.xpose.msra.mxu0 0
      %635 = vmatprep.subr.bf16.mxu0 0
      %636 = vmatpush2.bf16.xpose.msra.mxu0 0
      %637 = vmatprep.subr.bf16.mxu0 0
      %638 = vmatpush2.bf16.xpose.msra.mxu0 0
      %639 = vmatprep.mubr.bf16.mxu0 0
      %640 = vmatmul.mubr.bf16.gmra.mxu0 %v602
      %v641 = vpop.f32.mrf.mxu0
      %v642 = vadd.f32 0.0, %v641
      %v643 = vpop.f32.mrf.mxu0
      %v644 = vpop.f32.mrf.mxu0
      %v645 = vpop.f32.mrf.mxu0
      %646 = vdwg.mxu0
      %vm647 = vcmask 36864
      %v648 = vsel %vm647, %v642, -inf
      %649 = vmax.xlane.f32.xlu0 %v648
      %v650 = vpop.xlane.xlu0 %649
      %v651 = vsub.f32 %v642, %v650
      %v652 = vmul.f32 %v651, 1.442695
      %v653 = vpow.pop %v652
      %v654 = vsel %vm647, %v653, 0.0
      %655 = vadd.xlane.f32.xlu0 %v654
      %v656 = vpop.xlane.xlu0 %655
      %v657 = vrcp.pop %v656
      %v658 = vmul.f32 %v653, %v657
      %v659 = vpack.c.bf16 %v658, %v658
      %v660 = vpack.c.bf16 %v593, %v593
      %vm661 = vcmask 39936
      %v663 = vsel %vm661, %v659, 0
      %vm665 = vcmask 1041408
      %vm666 = vcmask 1042432
      %v667 = vsel %vm665, 4294967295, 65535
      %v668 = vsel %vm666, %v667, 0
      %v670 = vand.u32 %v660, %v668
      %672 = vmatprep.subr.bf16.mxu0 0
      %673 = vmatpush1.bf16.msra.mxu0 0
      %674 = vmatprep.subr.bf16.mxu0 0
      %675 = vmatpush1.bf16.msra.mxu0 0
      %676 = vmatprep.subr.bf16.mxu0 0
      %677 = vmatpush1.bf16.msra.mxu0 0
      %678 = vmatprep.subr.bf16.mxu0 0
      %679 = vmatpush1.bf16.msra.mxu0 0
      %680 = vmatprep.subr.bf16.mxu0 0
      %681 = vmatpush1.bf16.msra.mxu0 0
      %682 = vmatprep.subr.bf16.mxu0 0
      %683 = vmatpush1.bf16.msra.mxu0 0
      %684 = vmatprep.subr.bf16.mxu0 0
      %685 = vmatpush1.bf16.msra.mxu0 0
      %686 = vmatprep.subr.bf16.mxu0 0
      %687 = vmatpush1.bf16.msra.mxu0 %v670
      %688 = vmatprep.subr.bf16.mxu0 0
      %689 = vmatpush2.bf16.msra.mxu0 0
      %690 = vmatprep.subr.bf16.mxu0 0
      %691 = vmatpush2.bf16.msra.mxu0 0
      %692 = vmatprep.subr.bf16.mxu0 0
      %693 = vmatpush2.bf16.msra.mxu0 0
      %694 = vmatprep.subr.bf16.mxu0 0
      %695 = vmatpush2.bf16.msra.mxu0 0
      %696 = vmatprep.subr.bf16.mxu0 0
      %697 = vmatpush2.bf16.msra.mxu0 0
      %698 = vmatprep.subr.bf16.mxu0 0
      %699 = vmatpush2.bf16.msra.mxu0 0
      %700 = vmatprep.subr.bf16.mxu0 0
      %701 = vmatpush2.bf16.msra.mxu0 0
      %702 = vmatprep.subr.bf16.mxu0 0
      %703 = vmatpush2.bf16.msra.mxu0 0
      %704 = vmatprep.mubr.bf16.mxu0 0
      %705 = vmatmul.mubr.bf16.gmra.mxu0 %v663
      %v706 = vpop.f32.mrf.mxu0
      %v707 = vadd.f32 0.0, %v706
      %v708 = vpop.f32.mrf.mxu0
      %v709 = vpop.f32.mrf.mxu0
      %v710 = vpop.f32.mrf.mxu0
      %711 = vdwg.mxu0
      %713 = vrot.lane.b32.xlu0 %v598, 120
      %v714 = vpop.permute.xlu0 %713
      %716 = vrot.lane.b32.xlu0 %v599, 120
      %v717 = vpop.permute.xlu0 %716
      %v719 = vsel %vm600, %v714, 0
      %v722 = vsel %vm600, %v717, 0
      %724 = vmatprep.subr.bf16.mxu0 0
      %725 = vmatpush1.bf16.xpose.msra.mxu0 0
      %726 = vmatprep.subr.bf16.mxu0 0
      %727 = vmatpush1.bf16.xpose.msra.mxu0 0
      %728 = vmatprep.subr.bf16.mxu0 0
      %729 = vmatpush1.bf16.xpose.msra.mxu0 0
      %730 = vmatprep.subr.bf16.mxu0 0
      %731 = vmatpush1.bf16.xpose.msra.mxu0 0
      %732 = vmatprep.subr.bf16.mxu0 0
      %733 = vmatpush1.bf16.xpose.msra.mxu0 0
      %734 = vmatprep.subr.bf16.mxu0 0
      %735 = vmatpush1.bf16.xpose.msra.mxu0 0
      %736 = vmatprep.subr.bf16.mxu0 0
      %737 = vmatpush1.bf16.xpose.msra.mxu0 0
      %738 = vmatprep.subr.bf16.mxu0 0
      %739 = vmatpush1.bf16.xpose.msra.mxu0 %v722
      %740 = vmatprep.subr.bf16.mxu0 0
      %741 = vmatpush2.bf16.xpose.msra.mxu0 0
      %742 = vmatprep.subr.bf16.mxu0 0
      %743 = vmatpush2.bf16.xpose.msra.mxu0 0
      %744 = vmatprep.subr.bf16.mxu0 0
      %745 = vmatpush2.bf16.xpose.msra.mxu0 0
      %746 = vmatprep.subr.bf16.mxu0 0
      %747 = vmatpush2.bf16.xpose.msra.mxu0 0
      %748 = vmatprep.subr.bf16.mxu0 0
      %749 = vmatpush2.bf16.xpose.msra.mxu0 0
      %750 = vmatprep.subr.bf16.mxu0 0
      %751 = vmatpush2.bf16.xpose.msra.mxu0 0
      %752 = vmatprep.subr.bf16.mxu0 0
      %753 = vmatpush2.bf16.xpose.msra.mxu0 0
      %754 = vmatprep.subr.bf16.mxu0 0
      %755 = vmatpush2.bf16.xpose.msra.mxu0 0
      %756 = vmatprep.mubr.bf16.mxu0 0
      %757 = vmatmul.mubr.bf16.gmra.mxu0 %v719
      %v758 = vpop.f32.mrf.mxu0
      %v759 = vadd.f32 0.0, %v758
      %v760 = vpop.f32.mrf.mxu0
      %v761 = vpop.f32.mrf.mxu0
      %v762 = vpop.f32.mrf.mxu0
      %763 = vdwg.mxu0
      %v764 = vsel %vm647, %v759, -inf
      %765 = vmax.xlane.f32.xlu0 %v764
      %v766 = vpop.xlane.xlu0 %765
      %v767 = vsub.f32 %v759, %v766
      %v768 = vmul.f32 %v767, 1.442695
      %v769 = vpow.pop %v768
      %v770 = vsel %vm647, %v769, 0.0
      %771 = vadd.xlane.f32.xlu0 %v770
      %v772 = vpop.xlane.xlu0 %771
      %v773 = vrcp.pop %v772
      %v774 = vmul.f32 %v769, %v773
      %v775 = vpack.c.bf16 %v774, %v774
      %777 = vrot.lane.b32.xlu0 %v660, 120
      %v778 = vpop.permute.xlu0 %777
      %v780 = vsel %vm661, %v775, 0
      %v783 = vand.u32 %v778, %v668
      %785 = vmatprep.subr.bf16.mxu0 0
      %786 = vmatpush1.bf16.msra.mxu0 0
      %787 = vmatprep.subr.bf16.mxu0 0
      %788 = vmatpush1.bf16.msra.mxu0 0
      %789 = vmatprep.subr.bf16.mxu0 0
      %790 = vmatpush1.bf16.msra.mxu0 0
      %791 = vmatprep.subr.bf16.mxu0 0
      %792 = vmatpush1.bf16.msra.mxu0 0
      %793 = vmatprep.subr.bf16.mxu0 0
      %794 = vmatpush1.bf16.msra.mxu0 0
      %795 = vmatprep.subr.bf16.mxu0 0
      %796 = vmatpush1.bf16.msra.mxu0 0
      %797 = vmatprep.subr.bf16.mxu0 0
      %798 = vmatpush1.bf16.msra.mxu0 0
      %799 = vmatprep.subr.bf16.mxu0 0
      %800 = vmatpush1.bf16.msra.mxu0 %v783
      %801 = vmatprep.subr.bf16.mxu0 0
      %802 = vmatpush2.bf16.msra.mxu0 0
      %803 = vmatprep.subr.bf16.mxu0 0
      %804 = vmatpush2.bf16.msra.mxu0 0
      %805 = vmatprep.subr.bf16.mxu0 0
      %806 = vmatpush2.bf16.msra.mxu0 0
      %807 = vmatprep.subr.bf16.mxu0 0
      %808 = vmatpush2.bf16.msra.mxu0 0
      %809 = vmatprep.subr.bf16.mxu0 0
      %810 = vmatpush2.bf16.msra.mxu0 0
      %811 = vmatprep.subr.bf16.mxu0 0
      %812 = vmatpush2.bf16.msra.mxu0 0
      %813 = vmatprep.subr.bf16.mxu0 0
      %814 = vmatpush2.bf16.msra.mxu0 0
      %815 = vmatprep.subr.bf16.mxu0 0
      %816 = vmatpush2.bf16.msra.mxu0 0
      %817 = vmatprep.mubr.bf16.mxu0 0
      %818 = vmatmul.mubr.bf16.gmra.mxu0 %v780
      %v819 = vpop.f32.mrf.mxu0
      %v820 = vadd.f32 0.0, %v819
      %v821 = vpop.f32.mrf.mxu0
      %v822 = vpop.f32.mrf.mxu0
      %v823 = vpop.f32.mrf.mxu0
      %824 = vdwg.mxu0
      %825 = vrot.lane.b32.xlu0 %v598, 112
      %v826 = vpop.permute.xlu0 %825
      %827 = vrot.lane.b32.xlu0 %v599, 112
      %v828 = vpop.permute.xlu0 %827
      %v830 = vsel %vm600, %v826, 0
      %v833 = vsel %vm600, %v828, 0
      %835 = vmatprep.subr.bf16.mxu0 0
      %836 = vmatpush1.bf16.xpose.msra.mxu0 0
      %837 = vmatprep.subr.bf16.mxu0 0
      %838 = vmatpush1.bf16.xpose.msra.mxu0 0
      %839 = vmatprep.subr.bf16.mxu0 0
      %840 = vmatpush1.bf16.xpose.msra.mxu0 0
      %841 = vmatprep.subr.bf16.mxu0 0
      %842 = vmatpush1.bf16.xpose.msra.mxu0 0
      %843 = vmatprep.subr.bf16.mxu0 0
      %844 = vmatpush1.bf16.xpose.msra.mxu0 0
      %845 = vmatprep.subr.bf16.mxu0 0
      %846 = vmatpush1.bf16.xpose.msra.mxu0 0
      %847 = vmatprep.subr.bf16.mxu0 0
      %848 = vmatpush1.bf16.xpose.msra.mxu0 0
      %849 = vmatprep.subr.bf16.mxu0 0
      %850 = vmatpush1.bf16.xpose.msra.mxu0 %v833
      %851 = vmatprep.subr.bf16.mxu0 0
      %852 = vmatpush2.bf16.xpose.msra.mxu0 0
      %853 = vmatprep.subr.bf16.mxu0 0
      %854 = vmatpush2.bf16.xpose.msra.mxu0 0
      %855 = vmatprep.subr.bf16.mxu0 0
      %856 = vmatpush2.bf16.xpose.msra.mxu0 0
      %857 = vmatprep.subr.bf16.mxu0 0
      %858 = vmatpush2.bf16.xpose.msra.mxu0 0
      %859 = vmatprep.subr.bf16.mxu0 0
      %860 = vmatpush2.bf16.xpose.msra.mxu0 0
      %861 = vmatprep.subr.bf16.mxu0 0
      %862 = vmatpush2.bf16.xpose.msra.mxu0 0
      %863 = vmatprep.subr.bf16.mxu0 0
      %864 = vmatpush2.bf16.xpose.msra.mxu0 0
      %865 = vmatprep.subr.bf16.mxu0 0
      %866 = vmatpush2.bf16.xpose.msra.mxu0 0
      %867 = vmatprep.mubr.bf16.mxu0 0
      %868 = vmatmul.mubr.bf16.gmra.mxu0 %v830
      %v869 = vpop.f32.mrf.mxu0
      %v870 = vadd.f32 0.0, %v869
      %v871 = vpop.f32.mrf.mxu0
      %v872 = vpop.f32.mrf.mxu0
      %v873 = vpop.f32.mrf.mxu0
      %874 = vdwg.mxu0
      %v875 = vsel %vm647, %v870, -inf
      %876 = vmax.xlane.f32.xlu0 %v875
      %v877 = vpop.xlane.xlu0 %876
      %v878 = vsub.f32 %v870, %v877
      %v879 = vmul.f32 %v878, 1.442695
      %v880 = vpow.pop %v879
      %v881 = vsel %vm647, %v880, 0.0
      %882 = vadd.xlane.f32.xlu0 %v881
      %v883 = vpop.xlane.xlu0 %882
      %v884 = vrcp.pop %v883
      %v885 = vmul.f32 %v880, %v884
      %v886 = vpack.c.bf16 %v885, %v885
      %887 = vrot.lane.b32.xlu0 %v660, 112
      %v888 = vpop.permute.xlu0 %887
      %v890 = vsel %vm661, %v886, 0
      %v893 = vand.u32 %v888, %v668
      %895 = vmatprep.subr.bf16.mxu0 0
      %896 = vmatpush1.bf16.msra.mxu0 0
      %897 = vmatprep.subr.bf16.mxu0 0
      %898 = vmatpush1.bf16.msra.mxu0 0
      %899 = vmatprep.subr.bf16.mxu0 0
      %900 = vmatpush1.bf16.msra.mxu0 0
      %901 = vmatprep.subr.bf16.mxu0 0
      %902 = vmatpush1.bf16.msra.mxu0 0
      %903 = vmatprep.subr.bf16.mxu0 0
      %904 = vmatpush1.bf16.msra.mxu0 0
      %905 = vmatprep.subr.bf16.mxu0 0
      %906 = vmatpush1.bf16.msra.mxu0 0
      %907 = vmatprep.subr.bf16.mxu0 0
      %908 = vmatpush1.bf16.msra.mxu0 0
      %909 = vmatprep.subr.bf16.mxu0 0
      %910 = vmatpush1.bf16.msra.mxu0 %v893
      %911 = vmatprep.subr.bf16.mxu0 0
      %912 = vmatpush2.bf16.msra.mxu0 0
      %913 = vmatprep.subr.bf16.mxu0 0
      %914 = vmatpush2.bf16.msra.mxu0 0
      %915 = vmatprep.subr.bf16.mxu0 0
      %916 = vmatpush2.bf16.msra.mxu0 0
      %917 = vmatprep.subr.bf16.mxu0 0
      %918 = vmatpush2.bf16.msra.mxu0 0
      %919 = vmatprep.subr.bf16.mxu0 0
      %920 = vmatpush2.bf16.msra.mxu0 0
      %921 = vmatprep.subr.bf16.mxu0 0
      %922 = vmatpush2.bf16.msra.mxu0 0
      %923 = vmatprep.subr.bf16.mxu0 0
      %924 = vmatpush2.bf16.msra.mxu0 0
      %925 = vmatprep.subr.bf16.mxu0 0
      %926 = vmatpush2.bf16.msra.mxu0 0
      %927 = vmatprep.mubr.bf16.mxu0 0
      %928 = vmatmul.mubr.bf16.gmra.mxu0 %v890
      %v929 = vpop.f32.mrf.mxu0
      %v930 = vadd.f32 0.0, %v929
      %v931 = vpop.f32.mrf.mxu0
      %v932 = vpop.f32.mrf.mxu0
      %v933 = vpop.f32.mrf.mxu0
      %934 = vdwg.mxu0
      %935 = vrot.lane.b32.xlu0 %v598, 104
      %v936 = vpop.permute.xlu0 %935
      %937 = vrot.lane.b32.xlu0 %v599, 104
      %v938 = vpop.permute.xlu0 %937
      %v940 = vsel %vm600, %v936, 0
      %v943 = vsel %vm600, %v938, 0
      %945 = vmatprep.subr.bf16.mxu0 0
      %946 = vmatpush1.bf16.xpose.msra.mxu0 0
      %947 = vmatprep.subr.bf16.mxu0 0
      %948 = vmatpush1.bf16.xpose.msra.mxu0 0
      %949 = vmatprep.subr.bf16.mxu0 0
      %950 = vmatpush1.bf16.xpose.msra.mxu0 0
      %951 = vmatprep.subr.bf16.mxu0 0
      %952 = vmatpush1.bf16.xpose.msra.mxu0 0
      %953 = vmatprep.subr.bf16.mxu0 0
      %954 = vmatpush1.bf16.xpose.msra.mxu0 0
      %955 = vmatprep.subr.bf16.mxu0 0
      %956 = vmatpush1.bf16.xpose.msra.mxu0 0
      %957 = vmatprep.subr.bf16.mxu0 0
      %958 = vmatpush1.bf16.xpose.msra.mxu0 0
      %959 = vmatprep.subr.bf16.mxu0 0
      %960 = vmatpush1.bf16.xpose.msra.mxu0 %v943
      %961 = vmatprep.subr.bf16.mxu0 0
      %962 = vmatpush2.bf16.xpose.msra.mxu0 0
      %963 = vmatprep.subr.bf16.mxu0 0
      %964 = vmatpush2.bf16.xpose.msra.mxu0 0
      %965 = vmatprep.subr.bf16.mxu0 0
      %966 = vmatpush2.bf16.xpose.msra.mxu0 0
      %967 = vmatprep.subr.bf16.mxu0 0
      %968 = vmatpush2.bf16.xpose.msra.mxu0 0
      %969 = vmatprep.subr.bf16.mxu0 0
      %970 = vmatpush2.bf16.xpose.msra.mxu0 0
      %971 = vmatprep.subr.bf16.mxu0 0
      %972 = vmatpush2.bf16.xpose.msra.mxu0 0
      %973 = vmatprep.subr.bf16.mxu0 0
      %974 = vmatpush2.bf16.xpose.msra.mxu0 0
      %975 = vmatprep.subr.bf16.mxu0 0
      %976 = vmatpush2.bf16.xpose.msra.mxu0 0
      %977 = vmatprep.mubr.bf16.mxu0 0
      %978 = vmatmul.mubr.bf16.gmra.mxu0 %v940
      %v979 = vpop.f32.mrf.mxu0
      %v980 = vadd.f32 0.0, %v979
      %v981 = vpop.f32.mrf.mxu0
      %v982 = vpop.f32.mrf.mxu0
      %v983 = vpop.f32.mrf.mxu0
      %984 = vdwg.mxu0
      %v985 = vsel %vm647, %v980, -inf
      %986 = vmax.xlane.f32.xlu0 %v985
      %v987 = vpop.xlane.xlu0 %986
      %v988 = vsub.f32 %v980, %v987
      %v989 = vmul.f32 %v988, 1.442695
      %v990 = vpow.pop %v989
      %v991 = vsel %vm647, %v990, 0.0
      %992 = vadd.xlane.f32.xlu0 %v991
      %v993 = vpop.xlane.xlu0 %992
      %v994 = vrcp.pop %v993
      %v995 = vmul.f32 %v990, %v994
      %v996 = vpack.c.bf16 %v995, %v995
      %997 = vrot.lane.b32.xlu0 %v660, 104
      %v998 = vpop.permute.xlu0 %997
      %v1000 = vsel %vm661, %v996, 0
      %v1003 = vand.u32 %v998, %v668
      %1005 = vmatprep.subr.bf16.mxu0 0
      %1006 = vmatpush1.bf16.msra.mxu0 0
      %1007 = vmatprep.subr.bf16.mxu0 0
      %1008 = vmatpush1.bf16.msra.mxu0 0
      %1009 = vmatprep.subr.bf16.mxu0 0
      %1010 = vmatpush1.bf16.msra.mxu0 0
      %1011 = vmatprep.subr.bf16.mxu0 0
      %1012 = vmatpush1.bf16.msra.mxu0 0
      %1013 = vmatprep.subr.bf16.mxu0 0
      %1014 = vmatpush1.bf16.msra.mxu0 0
      %1015 = vmatprep.subr.bf16.mxu0 0
      %1016 = vmatpush1.bf16.msra.mxu0 0
      %1017 = vmatprep.subr.bf16.mxu0 0
      %1018 = vmatpush1.bf16.msra.mxu0 0
      %1019 = vmatprep.subr.bf16.mxu0 0
      %1020 = vmatpush1.bf16.msra.mxu0 %v1003
      %1021 = vmatprep.subr.bf16.mxu0 0
      %1022 = vmatpush2.bf16.msra.mxu0 0
      %1023 = vmatprep.subr.bf16.mxu0 0
      %1024 = vmatpush2.bf16.msra.mxu0 0
      %1025 = vmatprep.subr.bf16.mxu0 0
      %1026 = vmatpush2.bf16.msra.mxu0 0
      %1027 = vmatprep.subr.bf16.mxu0 0
      %1028 = vmatpush2.bf16.msra.mxu0 0
      %1029 = vmatprep.subr.bf16.mxu0 0
      %1030 = vmatpush2.bf16.msra.mxu0 0
      %1031 = vmatprep.subr.bf16.mxu0 0
      %1032 = vmatpush2.bf16.msra.mxu0 0
      %1033 = vmatprep.subr.bf16.mxu0 0
      %1034 = vmatpush2.bf16.msra.mxu0 0
      %1035 = vmatprep.subr.bf16.mxu0 0
      %1036 = vmatpush2.bf16.msra.mxu0 0
      %1037 = vmatprep.mubr.bf16.mxu0 0
      %1038 = vmatmul.mubr.bf16.gmra.mxu0 %v1000
      %v1039 = vpop.f32.mrf.mxu0
      %v1040 = vadd.f32 0.0, %v1039
      %v1041 = vpop.f32.mrf.mxu0
      %v1042 = vpop.f32.mrf.mxu0
      %v1043 = vpop.f32.mrf.mxu0
      %1044 = vdwg.mxu0
      %1046 = vrot.lane.b32.xlu0 %v820, 8
      %v1047 = vpop.permute.xlu0 %1046
      %1050 = vrot.lane.b32.xlu0 %v930, 16
      %v1051 = vpop.permute.xlu0 %1050
      %1054 = vrot.lane.b32.xlu0 %v1040, 24
      %v1055 = vpop.permute.xlu0 %1054
      %v1057 = vsel %vm600, %v707, %v1047
      %vm1058 = vcmask 130048
      %v1059 = vsel %vm1058, %v1057, %v1051
      %vm1060 = vcmask 195584
      %v1061 = vsel %vm1060, %v1059, %v1055
      %v1062 = vld [vmem:[%s8] sm:$0xff]
      %v1063 = vld [vmem:[%s8 + $0x8] sm:$0xff]
      %v1064 = vld [vmem:[%s8 + $0x10] sm:$0xff]
      %v1065 = vld [vmem:[%s8 + $0x18] sm:$0xff]
      %v1066 = vpack.c.bf16 %v1061, %v1061
      %v1067 = vpack.c.bf16 %v1063, %v1062
      %v1068 = vpack.c.bf16 %v1065, %v1064
      %v1069 = vld [vmem:[%s9] sm:$0x1]
      %v1071 = vlaneseq
      %v1072 = vshrl.u32 %v1071, 7
      %v1073 = vsub.s32 0, %v1072
      %v1074 = vrot.slane %v1069, %v1073
      %v1077 = vsel %vm443, %v1066, 0
      %1079 = vmatprep.subr.bf16.mxu0 0
      %1080 = vmatpush1.bf16.msra.mxu0 0
      %1081 = vmatprep.subr.bf16.mxu0 0
      %1082 = vmatpush1.bf16.msra.mxu0 0
      %1083 = vmatprep.subr.bf16.mxu0 0
      %1084 = vmatpush1.bf16.msra.mxu0 0
      %1085 = vmatprep.subr.bf16.mxu0 0
      %1086 = vmatpush1.bf16.msra.mxu0 0
      %1087 = vmatprep.subr.bf16.mxu0 0
      %1088 = vmatpush1.bf16.msra.mxu0 0
      %1089 = vmatprep.subr.bf16.mxu0 0
      %1090 = vmatpush1.bf16.msra.mxu0 0
      %1091 = vmatprep.subr.bf16.mxu0 0
      %1092 = vmatpush1.bf16.msra.mxu0 %v1068
      %1093 = vmatprep.subr.bf16.mxu0 0
      %1094 = vmatpush1.bf16.msra.mxu0 %v1067
      %1095 = vmatprep.subr.bf16.mxu0 0
      %1096 = vmatpush2.bf16.msra.mxu0 0
      %1097 = vmatprep.subr.bf16.mxu0 0
      %1098 = vmatpush2.bf16.msra.mxu0 0
      %1099 = vmatprep.subr.bf16.mxu0 0
      %1100 = vmatpush2.bf16.msra.mxu0 0
      %1101 = vmatprep.subr.bf16.mxu0 0
      %1102 = vmatpush2.bf16.msra.mxu0 0
      %1103 = vmatprep.subr.bf16.mxu0 0
      %1104 = vmatpush2.bf16.msra.mxu0 0
      %1105 = vmatprep.subr.bf16.mxu0 0
      %1106 = vmatpush2.bf16.msra.mxu0 0
      %1107 = vmatprep.subr.bf16.mxu0 0
      %1108 = vmatpush2.bf16.msra.mxu0 0
      %1109 = vmatprep.subr.bf16.mxu0 0
      %1110 = vmatpush2.bf16.msra.mxu0 0
      %1111 = vmatprep.mubr.bf16.mxu0 0
      %1112 = vmatmul.mubr.bf16.gmra.mxu0 %v1077
      %v1113 = vpop.f32.mrf.mxu0
      %v1114 = vadd.f32 %v1074, %v1113
      %v1115 = vpop.f32.mrf.mxu0
      %v1116 = vpop.f32.mrf.mxu0
      %v1117 = vpop.f32.mrf.mxu0
      %1118 = vdwg.mxu0
      %v1119 = vadd.f32 %v427, %v1114
      %v1120 = vld [vmem:[%s10] sm:$0x1]
      %v1121 = vld [vmem:[%s11] sm:$0x1]
      %vm1122 = vcmask 258048
      %v1123 = vsel %vm1122, %v1119, 0.0
      %1124 = vadd.xlane.f32.xlu0 %v1123
      %v1125 = vpop.xlane.xlu0 %1124
      %v1126 = vrcp.pop 32.0
      %v1127 = vmul.f32 %v1125, %v1126
      %v1128 = vsub.f32 %v1119, %v1127
      %v1129 = vmul.f32 %v1128, %v1128
      %v1130 = vsel %vm1122, %v1129, 0.0
      %1131 = vadd.xlane.f32.xlu0 %v1130
      %v1132 = vpop.xlane.xlu0 %1131
      %v1133 = vmul.f32 %v1132, %v1126
      %v1134 = vadd.f32 %v1133, 1e-05
      %v1135 = vrsqrt.pop %v1134
      %v1136 = vmul.f32 %v1128, %v1135
      %v1138 = vlaneseq
      %v1139 = vshrl.u32 %v1138, 7
      %v1140 = vsub.s32 0, %v1139
      %v1141 = vrot.slane %v1120, %v1140
      %v1143 = vmul.f32 %v1136, %v1141
      %v1145 = vlaneseq
      %v1146 = vshrl.u32 %v1145, 7
      %v1147 = vsub.s32 0, %v1146
      %v1148 = vrot.slane %v1121, %v1147
      %v1150 = vadd.f32 %v1143, %v1148
      %1151 = vst.msk [vmem:[%s425] sm:$0x1f] %vm1122, %v1150
      %p1152 = scmp.lt.s32.totalorder %s23, 1
      %s1153 = scalar_select %p1152, %s23, 1
      %s1154 = smul.addr %s1153, 8
      %s1155 = scalar_lea.vmem %s12, %s1154
      // Predicated region
      $region69: #{deepgem_forward.39} parent=67 // pred_check
        %p1156 = pneg %p303
      $region70: #{deepgem_forward.39} parent=67 // pred_check_branch
        %1158 = sbr.rel (%p1156) target = $region72
      $region71: #{deepgem_forward.39} parent=67 // pred_region
        _
      $region72: #{deepgem_forward.39} parent=67 // pred_fallthru
        _
    $region68: #{deepgem_forward.39} parent=5 // pred_fallthru
      _
    %p1159 = scmp.le.s32.totalorder 2, %s18
    // Predicated region
    $region73: #{deepgem_forward.39} parent=5 // pred_check
      %p1160 = pneg %p1159
    $region74: #{deepgem_forward.39} parent=5 // pred_check_branch
      %1162 = sbr.rel (%p1160) target = $region76
    $region75: #{deepgem_forward.39} parent=5 // pred_region
      %s1163 = ssub.s32 %s18, 2
      // Predicated region
      $region77: #{deepgem_forward.39} parent=75 // pred_check
        %p1164 = pneg %p309
      $region78: #{deepgem_forward.39} parent=75 // pred_check_branch
        %1166 = sbr.rel (%p1164) target = $region80
      $region79: #{deepgem_forward.39} parent=75 // pred_region
        %p1167 = scmp.lt.s32.totalorder %s24, 1
        %s1168 = scalar_select %p1167, %s24, 1
        %s1169 = smul.addr %s1168, 8
        %s1170 = scalar_lea.vmem %s12, %s1169
      $region80: #{deepgem_forward.39} parent=75 // pred_fallthru
        _
    $region76: #{deepgem_forward.39} parent=5 // pred_fallthru
      _
  $region6: #{deepgem_forward.39} parent=0 // loop_footer
    %s22 = sadd.s32 1, %s18
  $region7: #{deepgem_forward.39} parent=0 // loop_footer_branch
    %17 = sbr.rel target = $region3
  $region8: #{deepgem_forward.39} parent=0 // loop_exit
    _

// kernel: deepgem_forward.41
$region0: #{deepgem_forward.41}
  #allocation0 [shape = 'u32[]', space=smem, size = 0x4, offset = 0x4, fixed_abs, tag = 'smem constant byte address 0x4 - core index']
  #allocation1 [shape = 'u32[144,128]{1,0:T(1,128)}', space=vmem, size = 0x12000, scoped, tag = 'internal scratch']
  %s0 = inlined_call_operand.vmem [shape: f32[10,32], index: 0, kind: input, shape index: {}]
  %s1 = inlined_call_operand.vmem [shape: f32[32,64], index: 1, kind: input, shape index: {}]
  %s2 = inlined_call_operand.vmem [shape: f32[1,64], index: 2, kind: input, shape index: {}]
  %s3 = inlined_call_operand.vmem [shape: f32[64,32], index: 3, kind: input, shape index: {}]
  %s4 = inlined_call_operand.vmem [shape: f32[1,32], index: 4, kind: input, shape index: {}]
  %s5 = inlined_call_operand.vmem [shape: f32[1,32], index: 5, kind: input, shape index: {}]
  %s6 = inlined_call_operand.vmem [shape: f32[1,32], index: 6, kind: input, shape index: {}]
  %s7 = inlined_call_operand.vmem [shape: f32[10,32], index: 7, kind: output, shape index: {}]
  %s8 = sld [smem:[#allocation0]]
  $region38: #{deepgem_forward.41} parent=0
    _
  %s10 = ssub.s32 1, %s8
  %s11 = scalar_select 0, %s10, %s8
  // Predicated region
  $region2: #{deepgem_forward.41} parent=0 // pred_check
    _
  $region3: #{deepgem_forward.41} parent=0 // pred_check_branch
    %13 = sbr.rel (0) target = $region5
  $region4: #{deepgem_forward.41} parent=0 // pred_region
    _
  $region5: #{deepgem_forward.41} parent=0 // pred_fallthru
    _
  // Predicated region
  $region6: #{deepgem_forward.41} parent=0 // pred_check
    _
  $region7: #{deepgem_forward.41} parent=0 // pred_check_branch
    %15 = sbr.rel (0) target = $region9
  $region8: #{deepgem_forward.41} parent=0 // pred_region
    _
  $region9: #{deepgem_forward.41} parent=0 // pred_fallthru
    _
  // Predicated region
  $region10: #{deepgem_forward.41} parent=0 // pred_check
    _
  $region11: #{deepgem_forward.41} parent=0 // pred_check_branch
    %17 = sbr.rel (0) target = $region13
  $region12: #{deepgem_forward.41} parent=0 // pred_region
    _
  $region13: #{deepgem_forward.41} parent=0 // pred_fallthru
    _
  // Predicated region
  $region14: #{deepgem_forward.41} parent=0 // pred_check
    _
  $region15: #{deepgem_forward.41} parent=0 // pred_check_branch
    %19 = sbr.rel (0) target = $region17
  $region16: #{deepgem_forward.41} parent=0 // pred_region
    _
  $region17: #{deepgem_forward.41} parent=0 // pred_fallthru
    _
  // Predicated region
  $region18: #{deepgem_forward.41} parent=0 // pred_check
    _
  $region19: #{deepgem_forward.41} parent=0 // pred_check_branch
    %21 = sbr.rel (0) target = $region21
  $region20: #{deepgem_forward.41} parent=0 // pred_region
    _
  $region21: #{deepgem_forward.41} parent=0 // pred_fallthru
    _
  // Predicated region
  $region22: #{deepgem_forward.41} parent=0 // pred_check
    _
  $region23: #{deepgem_forward.41} parent=0 // pred_check_branch
    %23 = sbr.rel (0) target = $region25
  $region24: #{deepgem_forward.41} parent=0 // pred_region
    _
  $region25: #{deepgem_forward.41} parent=0 // pred_fallthru
    _
  // Predicated region
  $region26: #{deepgem_forward.41} parent=0 // pred_check
    _
  $region27: #{deepgem_forward.41} parent=0 // pred_check_branch
    %25 = sbr.rel (0) target = $region29
  $region28: #{deepgem_forward.41} parent=0 // pred_region
    _
  $region29: #{deepgem_forward.41} parent=0 // pred_fallthru
    _
  %v27 = vld [vmem:[%s0] sm:$0xff]
  %v28 = vld [vmem:[%s0 + $0x8] sm:$0x3]
  %v29 = vld [vmem:[%s1] sm:$0xff]
  %v30 = vld [vmem:[%s1 + $0x8] sm:$0xff]
  %v31 = vld [vmem:[%s1 + $0x10] sm:$0xff]
  %v32 = vld [vmem:[%s1 + $0x18] sm:$0xff]
  %v33 = vpack.c.bf16 %v28, %v27
  %v34 = vpack.c.bf16 %v30, %v29
  %v35 = vpack.c.bf16 %v32, %v31
  %v36 = vld [vmem:[%s2] sm:$0x1]
  %v38 = vlaneseq
  %v39 = vshrl.u32 %v38, 7
  %v40 = vsub.s32 0, %v39
  %v41 = vrot.slane %v36, %v40
  %vm43 = vcmask 261120
  %v45 = vsel %vm43, %v33, 0
  %47 = vmatprep.subr.bf16.mxu0 0
  %48 = vmatpush1.bf16.msra.mxu0 0
  %49 = vmatprep.subr.bf16.mxu0 0
  %50 = vmatpush1.bf16.msra.mxu0 0
  %51 = vmatprep.subr.bf16.mxu0 0
  %52 = vmatpush1.bf16.msra.mxu0 0
  %53 = vmatprep.subr.bf16.mxu0 0
  %54 = vmatpush1.bf16.msra.mxu0 0
  %55 = vmatprep.subr.bf16.mxu0 0
  %56 = vmatpush1.bf16.msra.mxu0 0
  %57 = vmatprep.subr.bf16.mxu0 0
  %58 = vmatpush1.bf16.msra.mxu0 0
  %59 = vmatprep.subr.bf16.mxu0 0
  %60 = vmatpush1.bf16.msra.mxu0 %v35
  %61 = vmatprep.subr.bf16.mxu0 0
  %62 = vmatpush1.bf16.msra.mxu0 %v34
  %63 = vmatprep.subr.bf16.mxu0 0
  %64 = vmatpush2.bf16.msra.mxu0 0
  %65 = vmatprep.subr.bf16.mxu0 0
  %66 = vmatpush2.bf16.msra.mxu0 0
  %67 = vmatprep.subr.bf16.mxu0 0
  %68 = vmatpush2.bf16.msra.mxu0 0
  %69 = vmatprep.subr.bf16.mxu0 0
  %70 = vmatpush2.bf16.msra.mxu0 0
  %71 = vmatprep.subr.bf16.mxu0 0
  %72 = vmatpush2.bf16.msra.mxu0 0
  %73 = vmatprep.subr.bf16.mxu0 0
  %74 = vmatpush2.bf16.msra.mxu0 0
  %75 = vmatprep.subr.bf16.mxu0 0
  %76 = vmatpush2.bf16.msra.mxu0 0
  %77 = vmatprep.subr.bf16.mxu0 0
  %78 = vmatpush2.bf16.msra.mxu0 0
  %79 = vmatprep.mubr.bf16.mxu0 0
  %80 = vmatmul.mubr.bf16.gmra.mxu0 %v45
  %v81 = vpop.f32.mrf.mxu0
  %v82 = vadd.f32 %v41, %v81
  %v83 = vpop.f32.mrf.mxu0
  %v84 = vpop.f32.mrf.mxu0
  %v85 = vadd.f32 %v41, %v84
  %v86 = vpop.f32.mrf.mxu0
  %87 = vdwg.mxu0
  %v88 = vmax.f32 %v82, 0.0
  %v89 = vmax.f32 %v85, 0.0
  %v90 = vld [vmem:[%s3] sm:$0xff]
  %v91 = vld [vmem:[%s3 + $0x8] sm:$0xff]
  %v92 = vld [vmem:[%s3 + $0x10] sm:$0xff]
  %v93 = vld [vmem:[%s3 + $0x18] sm:$0xff]
  %v94 = vld [vmem:[%s3 + $0x20] sm:$0xff]
  %v95 = vld [vmem:[%s3 + $0x28] sm:$0xff]
  %v96 = vld [vmem:[%s3 + $0x30] sm:$0xff]
  %v97 = vld [vmem:[%s3 + $0x38] sm:$0xff]
  %v98 = vpack.c.bf16 %v89, %v88
  %v99 = vpack.c.bf16 %v91, %v90
  %v100 = vpack.c.bf16 %v93, %v92
  %v101 = vpack.c.bf16 %v95, %v94
  %v102 = vpack.c.bf16 %v97, %v96
  %v103 = vld [vmem:[%s4] sm:$0x1]
  %v105 = vlaneseq
  %v106 = vshrl.u32 %v105, 7
  %v107 = vsub.s32 0, %v106
  %v108 = vrot.slane %v103, %v107
  %vm110 = vcmask 523264
  %v112 = vsel %vm110, %v98, 0
  %114 = vmatprep.subr.bf16.mxu0 0
  %115 = vmatpush1.bf16.msra.mxu0 0
  %116 = vmatprep.subr.bf16.mxu0 0
  %117 = vmatpush1.bf16.msra.mxu0 0
  %118 = vmatprep.subr.bf16.mxu0 0
  %119 = vmatpush1.bf16.msra.mxu0 0
  %120 = vmatprep.subr.bf16.mxu0 0
  %121 = vmatpush1.bf16.msra.mxu0 0
  %122 = vmatprep.subr.bf16.mxu0 0
  %123 = vmatpush1.bf16.msra.mxu0 %v102
  %124 = vmatprep.subr.bf16.mxu0 0
  %125 = vmatpush1.bf16.msra.mxu0 %v101
  %126 = vmatprep.subr.bf16.mxu0 0
  %127 = vmatpush1.bf16.msra.mxu0 %v100
  %128 = vmatprep.subr.bf16.mxu0 0
  %129 = vmatpush1.bf16.msra.mxu0 %v99
  %130 = vmatprep.subr.bf16.mxu0 0
  %131 = vmatpush2.bf16.msra.mxu0 0
  %132 = vmatprep.subr.bf16.mxu0 0
  %133 = vmatpush2.bf16.msra.mxu0 0
  %134 = vmatprep.subr.bf16.mxu0 0
  %135 = vmatpush2.bf16.msra.mxu0 0
  %136 = vmatprep.subr.bf16.mxu0 0
  %137 = vmatpush2.bf16.msra.mxu0 0
  %138 = vmatprep.subr.bf16.mxu0 0
  %139 = vmatpush2.bf16.msra.mxu0 0
  %140 = vmatprep.subr.bf16.mxu0 0
  %141 = vmatpush2.bf16.msra.mxu0 0
  %142 = vmatprep.subr.bf16.mxu0 0
  %143 = vmatpush2.bf16.msra.mxu0 0
  %144 = vmatprep.subr.bf16.mxu0 0
  %145 = vmatpush2.bf16.msra.mxu0 0
  %146 = vmatprep.mubr.bf16.mxu0 0
  %147 = vmatmul.mubr.bf16.gmra.mxu0 %v112
  %v148 = vpop.f32.mrf.mxu0
  %v149 = vadd.f32 %v108, %v148
  %v150 = vpop.f32.mrf.mxu0
  %v151 = vpop.f32.mrf.mxu0
  %v152 = vadd.f32 %v108, %v151
  %v153 = vpop.f32.mrf.mxu0
  %154 = vdwg.mxu0
  %v155 = vadd.f32 %v27, %v149
  %v156 = vadd.f32 %v28, %v152
  %v157 = vld [vmem:[%s5] sm:$0x1]
  %v158 = vld [vmem:[%s6] sm:$0x1]
  %v159 = vsel %vm43, %v155, 0.0
  %160 = vadd.xlane.f32.xlu0 %v159
  %v161 = vpop.xlane.xlu0 %160
  %vm162 = vcmask 254976
  %v163 = vsel %vm162, %v156, 0.0
  %164 = vadd.xlane.f32.xlu0 %v163
  %v165 = vpop.xlane.xlu0 %164
  %v166 = vrcp.pop 32.0
  %v167 = vmul.f32 %v161, %v166
  %v168 = vmul.f32 %v165, %v166
  %v169 = vsub.f32 %v155, %v167
  %v170 = vsub.f32 %v156, %v168
  %v171 = vmul.f32 %v169, %v169
  %v172 = vmul.f32 %v170, %v170
  %v173 = vsel %vm43, %v171, 0.0
  %174 = vadd.xlane.f32.xlu0 %v173
  %v175 = vpop.xlane.xlu0 %174
  %v176 = vsel %vm162, %v172, 0.0
  %177 = vadd.xlane.f32.xlu0 %v176
  %v178 = vpop.xlane.xlu0 %177
  %v179 = vmul.f32 %v175, %v166
  %v180 = vmul.f32 %v178, %v166
  %v181 = vadd.f32 %v179, 1e-05
  %v182 = vadd.f32 %v180, 1e-05
  %v183 = vrsqrt.pop %v181
  %v184 = vrsqrt.pop %v182
  %v185 = vmul.f32 %v169, %v183
  %v186 = vmul.f32 %v170, %v184
  %v188 = vlaneseq
  %v189 = vshrl.u32 %v188, 7
  %v190 = vsub.s32 0, %v189
  %v191 = vrot.slane %v157, %v190
  %v193 = vmul.f32 %v185, %v191
  %v194 = vmul.f32 %v186, %v191
  %v196 = vlaneseq
  %v197 = vshrl.u32 %v196, 7
  %v198 = vsub.s32 0, %v197
  %v199 = vrot.slane %v158, %v198
  %v201 = vadd.f32 %v193, %v199
  %v202 = vadd.f32 %v194, %v199
  %203 = vst.msk [vmem:[%s7] sm:$0xff] %vm43, %v201
  %204 = vst.msk [vmem:[%s7 + $0x8] sm:$0x3] %vm162, %v202
  // Predicated region
  $region30: #{deepgem_forward.41} parent=0 // pred_check
    _
  $region31: #{deepgem_forward.41} parent=0 // pred_check_branch
    %206 = sbr.rel (0) target = $region33
  $region32: #{deepgem_forward.41} parent=0 // pred_region
    _
  $region33: #{deepgem_forward.41} parent=0 // pred_fallthru
    _
  // Predicated region
  $region34: #{deepgem_forward.41} parent=0 // pred_check
    _
  $region35: #{deepgem_forward.41} parent=0 // pred_check_branch
    %208 = sbr.rel (0) target = $region37
  $region36: #{deepgem_forward.41} parent=0 // pred_region
    _
  $region37: #{deepgem_forward.41} parent=0 // pred_fallthru
    _

// kernel: deepgem_forward.40
$region0: #{deepgem_forward.40}
  #allocation0 [shape = 'u32[]', space=smem, size = 0x4, offset = 0x4, fixed_abs, tag = 'smem constant byte address 0x4 - core index']
  #allocation1 [shape = 'u32[144,128]{1,0:T(1,128)}', space=vmem, size = 0x12000, scoped, tag = 'internal scratch']
  %s0 = inlined_call_operand.vmem [shape: f32[2,5,32], index: 0, kind: input, shape index: {}]
  %s1 = inlined_call_operand.vmem [shape: f32[2,8,32], index: 1, kind: input, shape index: {}]
  %s2 = inlined_call_operand.vmem [shape: f32[32,32], index: 2, kind: input, shape index: {}]
  %s3 = inlined_call_operand.vmem [shape: f32[1,32], index: 3, kind: input, shape index: {}]
  %s4 = inlined_call_operand.vmem [shape: f32[32,32], index: 4, kind: input, shape index: {}]
  %s5 = inlined_call_operand.vmem [shape: f32[1,32], index: 5, kind: input, shape index: {}]
  %s6 = inlined_call_operand.vmem [shape: f32[32,32], index: 6, kind: input, shape index: {}]
  %s7 = inlined_call_operand.vmem [shape: f32[1,32], index: 7, kind: input, shape index: {}]
  %s8 = inlined_call_operand.vmem [shape: f32[32,32], index: 8, kind: input, shape index: {}]
  %s9 = inlined_call_operand.vmem [shape: f32[1,32], index: 9, kind: input, shape index: {}]
  %s10 = inlined_call_operand.vmem [shape: f32[1,32], index: 10, kind: input, shape index: {}]
  %s11 = inlined_call_operand.vmem [shape: f32[1,32], index: 11, kind: input, shape index: {}]
  %s12 = inlined_call_operand.vmem [shape: f32[2,5,32], index: 12, kind: output, shape index: {}]
  %s13 = sld [smem:[#allocation0]]
  $region81: #{deepgem_forward.40} parent=0
    _
  %s15 = ssub.s32 1, %s13
  %s16 = scalar_select 0, %s15, %s13
  loop: start=0, step=1, limit=4
  $region2: #{deepgem_forward.40} parent=0 // loop_pre_header
    _
  $region3: #{deepgem_forward.40} parent=0 // loop_header
    %s18 = sphi 0, %s22
    %p19 = scmp.ge.s32.totalorder %s18, 4
    %s28 = sphi 0, %s30
    %s31 = sphi 0, %s28
    %s32 = sphi 0, %s31
    %s48 = sphi 0, %s32
    %s54 = sphi 0, %s56
    %s57 = sphi 0, %s54
    %s58 = sphi 0, %s57
    %s74 = sphi 0, %s58
    %s78 = sphi 0, %s78
    %s80 = sphi 0, %s78
    %s81 = sphi 0, %s80
    %s95 = sphi 0, %s81
    %s99 = sphi 0, %s99
    %s101 = sphi 0, %s99
    %s102 = sphi 0, %s101
    %s116 = sphi 0, %s102
    %s120 = sphi 0, %s120
    %s122 = sphi 0, %s120
    %s123 = sphi 0, %s122
    %s137 = sphi 0, %s123
    %s141 = sphi 0, %s141
    %s143 = sphi 0, %s141
    %s144 = sphi 0, %s143
    %s158 = sphi 0, %s144
    %s162 = sphi 0, %s162
    %s164 = sphi 0, %s162
    %s165 = sphi 0, %s164
    %s179 = sphi 0, %s165
    %s183 = sphi 0, %s183
    %s185 = sphi 0, %s183
    %s186 = sphi 0, %s185
    %s200 = sphi 0, %s186
    %s204 = sphi 0, %s204
    %s206 = sphi 0, %s204
    %s207 = sphi 0, %s206
    %s221 = sphi 0, %s207
    %s225 = sphi 0, %s225
    %s227 = sphi 0, %s225
    %s228 = sphi 0, %s227
    %s242 = sphi 0, %s228
    %s246 = sphi 0, %s246
    %s248 = sphi 0, %s246
    %s249 = sphi 0, %s248
    %s263 = sphi 0, %s249
    %s267 = sphi 0, %s267
    %s269 = sphi 0, %s267
    %s270 = sphi 0, %s269
    %s284 = sphi 0, %s270
    %s290 = sphi 0, %s292
    %s293 = sphi 0, %s290
    %s294 = sphi 0, %s293
    %s310 = sphi 0, %s294
  $region4: #{deepgem_forward.40} parent=0 // loop_header_branch
    %21 = sbr.rel (%p19) target = $region8
  $region5: #{deepgem_forward.40} parent=0 // loop_body
    %s23 = ssub.s32 %s18, 1
    %s24 = ssub.s32 %s18, 2
    %s25 = sadd.s32 %s18, 1
    %s26 = ssub.s32 %s18, %s25
    %p27 = scmp.eq.s32.totalorder %s26, 0
    %s29 = sadd.s32 %s28, 1
    %s30 = scalar_select %p27, %s28, %s29
    %p33 = pneg %p27
    %p34 = scmp.eq.s32.totalorder %s18, 1
    %p35 = por %p33, %p34
    %p36 = scmp.ne.s32.totalorder %s28, %s31
    %p37 = scmp.eq.s32.totalorder %s18, 0
    %p38 = por %p36, %p37
    %p39 = scmp.ne.s32.totalorder %s28, %s31
    %p40 = scmp.eq.s32.totalorder %s23, 1
    %p41 = por %p39, %p40
    %p42 = scmp.ne.s32.totalorder %s31, %s32
    %p43 = scmp.eq.s32.totalorder %s23, 0
    %p44 = por %p42, %p43
    %p45 = scmp.ne.s32.totalorder %s31, %s32
    %p46 = scmp.eq.s32.totalorder %s24, 1
    %p47 = por %p45, %p46
    %p49 = scmp.ne.s32.totalorder %s32, %s48
    %p50 = scmp.eq.s32.totalorder %s24, 0
    %p51 = por %p49, %p50
    %s52 = ssub.s32 %s18, %s25
    %p53 = scmp.eq.s32.totalorder %s52, 0
    %s55 = sadd.s32 %s54, 1
    %s56 = scalar_select %p53, %s54, %s55
    %p59 = pneg %p53
    %p60 = scmp.eq.s32.totalorder %s18, 1
    %p61 = por %p59, %p60
    %p62 = scmp.ne.s32.totalorder %s54, %s57
    %p63 = scmp.eq.s32.totalorder %s18, 0
    %p64 = por %p62, %p63
    %p65 = scmp.ne.s32.totalorder %s54, %s57
    %p66 = scmp.eq.s32.totalorder %s23, 1
    %p67 = por %p65, %p66
    %p68 = scmp.ne.s32.totalorder %s57, %s58
    %p69 = scmp.eq.s32.totalorder %s23, 0
    %p70 = por %p68, %p69
    %p71 = scmp.ne.s32.totalorder %s57, %s58
    %p72 = scmp.eq.s32.totalorder %s24, 1
    %p73 = por %p71, %p72
    %p75 = scmp.ne.s32.totalorder %s58, %s74
    %p76 = scmp.eq.s32.totalorder %s24, 0
    %p77 = por %p75, %p76
    %s79 = sadd.s32 %s78, 1
    %p82 = scmp.eq.s32.totalorder %s18, 1
    %p83 = scmp.ne.s32.totalorder %s78, %s80
    %p84 = scmp.eq.s32.totalorder %s18, 0
    %p85 = por %p83, %p84
    %p86 = scmp.ne.s32.totalorder %s78, %s80
    %p87 = scmp.eq.s32.totalorder %s23, 1
    %p88 = por %p86, %p87
    %p89 = scmp.ne.s32.totalorder %s80, %s81
    %p90 = scmp.eq.s32.totalorder %s23, 0
    %p91 = por %p89, %p90
    %p92 = scmp.ne.s32.totalorder %s80, %s81
    %p93 = scmp.eq.s32.totalorder %s24, 1
    %p94 = por %p92, %p93
    %p96 = scmp.ne.s32.totalorder %s81, %s95
    %p97 = scmp.eq.s32.totalorder %s24, 0
    %p98 = por %p96, %p97
    %s100 = sadd.s32 %s99, 1
    %p103 = scmp.eq.s32.totalorder %s18, 1
    %p104 = scmp.ne.s32.totalorder %s99, %s101
    %p105 = scmp.eq.s32.totalorder %s18, 0
    %p106 = por %p104, %p105
    %p107 = scmp.ne.s32.totalorder %s99, %s101
    %p108 = scmp.eq.s32.totalorder %s23, 1
    %p109 = por %p107, %p108
    %p110 = scmp.ne.s32.totalorder %s101, %s102
    %p111 = scmp.eq.s32.totalorder %s23, 0
    %p112 = por %p110, %p111
    %p113 = scmp.ne.s32.totalorder %s101, %s102
    %p114 = scmp.eq.s32.totalorder %s24, 1
    %p115 = por %p113, %p114
    %p117 = scmp.ne.s32.totalorder %s102, %s116
    %p118 = scmp.eq.s32.totalorder %s24, 0
    %p119 = por %p117, %p118
    %s121 = sadd.s32 %s120, 1
    %p124 = scmp.eq.s32.totalorder %s18, 1
    %p125 = scmp.ne.s32.totalorder %s120, %s122
    %p126 = scmp.eq.s32.totalorder %s18, 0
    %p127 = por %p125, %p126
    %p128 = scmp.ne.s32.totalorder %s120, %s122
    %p129 = scmp.eq.s32.totalorder %s23, 1
    %p130 = por %p128, %p129
    %p131 = scmp.ne.s32.totalorder %s122, %s123
    %p132 = scmp.eq.s32.totalorder %s23, 0
    %p133 = por %p131, %p132
    %p134 = scmp.ne.s32.totalorder %s122, %s123
    %p135 = scmp.eq.s32.totalorder %s24, 1
    %p136 = por %p134, %p135
    %p138 = scmp.ne.s32.totalorder %s123, %s137
    %p139 = scmp.eq.s32.totalorder %s24, 0
    %p140 = por %p138, %p139
    %s142 = sadd.s32 %s141, 1
    %p145 = scmp.eq.s32.totalorder %s18, 1
    %p146 = scmp.ne.s32.totalorder %s141, %s143
    %p147 = scmp.eq.s32.totalorder %s18, 0
    %p148 = por %p146, %p147
    %p149 = scmp.ne.s32.totalorder %s141, %s143
    %p150 = scmp.eq.s32.totalorder %s23, 1
    %p151 = por %p149, %p150
    %p152 = scmp.ne.s32.totalorder %s143, %s144
    %p153 = scmp.eq.s32.totalorder %s23, 0
    %p154 = por %p152, %p153
    %p155 = scmp.ne.s32.totalorder %s143, %s144
    %p156 = scmp.eq.s32.totalorder %s24, 1
    %p157 = por %p155, %p156
    %p159 = scmp.ne.s32.totalorder %s144, %s158
    %p160 = scmp.eq.s32.totalorder %s24, 0
    %p161 = por %p159, %p160
    %s163 = sadd.s32 %s162, 1
    %p166 = scmp.eq.s32.totalorder %s18, 1
    %p167 = scmp.ne.s32.totalorder %s162, %s164
    %p168 = scmp.eq.s32.totalorder %s18, 0
    %p169 = por %p167, %p168
    %p170 = scmp.ne.s32.totalorder %s162, %s164
    %p171 = scmp.eq.s32.totalorder %s23, 1
    %p172 = por %p170, %p171
    %p173 = scmp.ne.s32.totalorder %s164, %s165
    %p174 = scmp.eq.s32.totalorder %s23, 0
    %p175 = por %p173, %p174
    %p176 = scmp.ne.s32.totalorder %s164, %s165
    %p177 = scmp.eq.s32.totalorder %s24, 1
    %p178 = por %p176, %p177
    %p180 = scmp.ne.s32.totalorder %s165, %s179
    %p181 = scmp.eq.s32.totalorder %s24, 0
    %p182 = por %p180, %p181
    %s184 = sadd.s32 %s183, 1
    %p187 = scmp.eq.s32.totalorder %s18, 1
    %p188 = scmp.ne.s32.totalorder %s183, %s185
    %p189 = scmp.eq.s32.totalorder %s18, 0
    %p190 = por %p188, %p189
    %p191 = scmp.ne.s32.totalorder %s183, %s185
    %p192 = scmp.eq.s32.totalorder %s23, 1
    %p193 = por %p191, %p192
    %p194 = scmp.ne.s32.totalorder %s185, %s186
    %p195 = scmp.eq.s32.totalorder %s23, 0
    %p196 = por %p194, %p195
    %p197 = scmp.ne.s32.totalorder %s185, %s186
    %p198 = scmp.eq.s32.totalorder %s24, 1
    %p199 = por %p197, %p198
    %p201 = scmp.ne.s32.totalorder %s186, %s200
    %p202 = scmp.eq.s32.totalorder %s24, 0
    %p203 = por %p201, %p202
    %s205 = sadd.s32 %s204, 1
    %p208 = scmp.eq.s32.totalorder %s18, 1
    %p209 = scmp.ne.s32.totalorder %s204, %s206
    %p210 = scmp.eq.s32.totalorder %s18, 0
    %p211 = por %p209, %p210
    %p212 = scmp.ne.s32.totalorder %s204, %s206
    %p213 = scmp.eq.s32.totalorder %s23, 1
    %p214 = por %p212, %p213
    %p215 = scmp.ne.s32.totalorder %s206, %s207
    %p216 = scmp.eq.s32.totalorder %s23, 0
    %p217 = por %p215, %p216
    %p218 = scmp.ne.s32.totalorder %s206, %s207
    %p219 = scmp.eq.s32.totalorder %s24, 1
    %p220 = por %p218, %p219
    %p222 = scmp.ne.s32.totalorder %s207, %s221
    %p223 = scmp.eq.s32.totalorder %s24, 0
    %p224 = por %p222, %p223
    %s226 = sadd.s32 %s225, 1
    %p229 = scmp.eq.s32.totalorder %s18, 1
    %p230 = scmp.ne.s32.totalorder %s225, %s227
    %p231 = scmp.eq.s32.totalorder %s18, 0
    %p232 = por %p230, %p231
    %p233 = scmp.ne.s32.totalorder %s225, %s227
    %p234 = scmp.eq.s32.totalorder %s23, 1
    %p235 = por %p233, %p234
    %p236 = scmp.ne.s32.totalorder %s227, %s228
    %p237 = scmp.eq.s32.totalorder %s23, 0
    %p238 = por %p236, %p237
    %p239 = scmp.ne.s32.totalorder %s227, %s228
    %p240 = scmp.eq.s32.totalorder %s24, 1
    %p241 = por %p239, %p240
    %p243 = scmp.ne.s32.totalorder %s228, %s242
    %p244 = scmp.eq.s32.totalorder %s24, 0
    %p245 = por %p243, %p244
    %s247 = sadd.s32 %s246, 1
    %p250 = scmp.eq.s32.totalorder %s18, 1
    %p251 = scmp.ne.s32.totalorder %s246, %s248
    %p252 = scmp.eq.s32.totalorder %s18, 0
    %p253 = por %p251, %p252
    %p254 = scmp.ne.s32.totalorder %s246, %s248
    %p255 = scmp.eq.s32.totalorder %s23, 1
    %p256 = por %p254, %p255
    %p257 = scmp.ne.s32.totalorder %s248, %s249
    %p258 = scmp.eq.s32.totalorder %s23, 0
    %p259 = por %p257, %p258
    %p260 = scmp.ne.s32.totalorder %s248, %s249
    %p261 = scmp.eq.s32.totalorder %s24, 1
    %p262 = por %p260, %p261
    %p264 = scmp.ne.s32.totalorder %s249, %s263
    %p265 = scmp.eq.s32.totalorder %s24, 0
    %p266 = por %p264, %p265
    %s268 = sadd.s32 %s267, 1
    %p271 = scmp.eq.s32.totalorder %s18, 1
    %p272 = scmp.ne.s32.totalorder %s267, %s269
    %p273 = scmp.eq.s32.totalorder %s18, 0
    %p274 = por %p272, %p273
    %p275 = scmp.ne.s32.totalorder %s267, %s269
    %p276 = scmp.eq.s32.totalorder %s23, 1
    %p277 = por %p275, %p276
    %p278 = scmp.ne.s32.totalorder %s269, %s270
    %p279 = scmp.eq.s32.totalorder %s23, 0
    %p280 = por %p278, %p279
    %p281 = scmp.ne.s32.totalorder %s269, %s270
    %p282 = scmp.eq.s32.totalorder %s24, 1
    %p283 = por %p281, %p282
    %p285 = scmp.ne.s32.totalorder %s270, %s284
    %p286 = scmp.eq.s32.totalorder %s24, 0
    %p287 = por %p285, %p286
    %s288 = ssub.s32 %s18, %s25
    %p289 = scmp.eq.s32.totalorder %s288, 0
    %s291 = sadd.s32 %s290, 1
    %s292 = scalar_select %p289, %s290, %s291
    %p295 = pneg %p289
    %p296 = scmp.eq.s32.totalorder %s18, 1
    %p297 = por %p295, %p296
    %p298 = scmp.ne.s32.totalorder %s290, %s293
    %p299 = scmp.eq.s32.totalorder %s18, 0
    %p300 = por %p298, %p299
    %p301 = scmp.ne.s32.totalorder %s290, %s293
    %p302 = scmp.eq.s32.totalorder %s23, 1
    %p303 = por %p301, %p302
    %p304 = scmp.ne.s32.totalorder %s293, %s294
    %p305 = scmp.eq.s32.totalorder %s23, 0
    %p306 = por %p304, %p305
    %p307 = scmp.ne.s32.totalorder %s293, %s294
    %p308 = scmp.eq.s32.totalorder %s24, 1
    %p309 = por %p307, %p308
    %p311 = scmp.ne.s32.totalorder %s294, %s310
    %p312 = scmp.eq.s32.totalorder %s24, 0
    %p313 = por %p311, %p312
    %p314 = scmp.le.s32.totalorder 1, %s18
    %p315 = scmp.lt.s32.totalorder %s18, 3
    %p316 = pnand %p314, %p315
    %p317 = pneg %p316
    // Predicated region
    $region9: #{deepgem_forward.40} parent=5 // pred_check
      _
    $region10: #{deepgem_forward.40} parent=5 // pred_check_branch
      %319 = sbr.rel (%p316) target = $region12
    $region11: #{deepgem_forward.40} parent=5 // pred_region
      %s320 = ssub.s32 %s18, 1
      // Predicated region
      $region13: #{deepgem_forward.40} parent=11 // pred_check
        %p321 = pneg %p91
      $region14: #{deepgem_forward.40} parent=11 // pred_check_branch
        %323 = sbr.rel (%p321) target = $region16
      $region15: #{deepgem_forward.40} parent=11 // pred_region
        _
      $region16: #{deepgem_forward.40} parent=11 // pred_fallthru
        _
      // Predicated region
      $region17: #{deepgem_forward.40} parent=11 // pred_check
        %p324 = pneg %p112
      $region18: #{deepgem_forward.40} parent=11 // pred_check_branch
        %326 = sbr.rel (%p324) target = $region20
      $region19: #{deepgem_forward.40} parent=11 // pred_region
        _
      $region20: #{deepgem_forward.40} parent=11 // pred_fallthru
        _
      // Predicated region
      $region21: #{deepgem_forward.40} parent=11 // pred_check
        %p327 = pneg %p133
      $region22: #{deepgem_forward.40} parent=11 // pred_check_branch
        %329 = sbr.rel (%p327) target = $region24
      $region23: #{deepgem_forward.40} parent=11 // pred_region
        _
      $region24: #{deepgem_forward.40} parent=11 // pred_fallthru
        _
      // Predicated region
      $region25: #{deepgem_forward.40} parent=11 // pred_check
        %p330 = pneg %p154
      $region26: #{deepgem_forward.40} parent=11 // pred_check_branch
        %332 = sbr.rel (%p330) target = $region28
      $region27: #{deepgem_forward.40} parent=11 // pred_region
        _
      $region28: #{deepgem_forward.40} parent=11 // pred_fallthru
        _
      // Predicated region
      $region29: #{deepgem_forward.40} parent=11 // pred_check
        %p333 = pneg %p175
      $region30: #{deepgem_forward.40} parent=11 // pred_check_branch
        %335 = sbr.rel (%p333) target = $region32
      $region31: #{deepgem_forward.40} parent=11 // pred_region
        _
      $region32: #{deepgem_forward.40} parent=11 // pred_fallthru
        _
      // Predicated region
      $region33: #{deepgem_forward.40} parent=11 // pred_check
        %p336 = pneg %p196
      $region34: #{deepgem_forward.40} parent=11 // pred_check_branch
        %338 = sbr.rel (%p336) target = $region36
      $region35: #{deepgem_forward.40} parent=11 // pred_region
        _
      $region36: #{deepgem_forward.40} parent=11 // pred_fallthru
        _
      // Predicated region
      $region37: #{deepgem_forward.40} parent=11 // pred_check
        %p339 = pneg %p217
      $region38: #{deepgem_forward.40} parent=11 // pred_check_branch
        %341 = sbr.rel (%p339) target = $region40
      $region39: #{deepgem_forward.40} parent=11 // pred_region
        _
      $region40: #{deepgem_forward.40} parent=11 // pred_fallthru
        _
      // Predicated region
      $region41: #{deepgem_forward.40} parent=11 // pred_check
        %p342 = pneg %p238
      $region42: #{deepgem_forward.40} parent=11 // pred_check_branch
        %344 = sbr.rel (%p342) target = $region44
      $region43: #{deepgem_forward.40} parent=11 // pred_region
        _
      $region44: #{deepgem_forward.40} parent=11 // pred_fallthru
        _
      // Predicated region
      $region45: #{deepgem_forward.40} parent=11 // pred_check
        %p345 = pneg %p259
      $region46: #{deepgem_forward.40} parent=11 // pred_check_branch
        %347 = sbr.rel (%p345) target = $region48
      $region47: #{deepgem_forward.40} parent=11 // pred_region
        _
      $region48: #{deepgem_forward.40} parent=11 // pred_fallthru
        _
      // Predicated region
      $region49: #{deepgem_forward.40} parent=11 // pred_check
        %p348 = pneg %p280
      $region50: #{deepgem_forward.40} parent=11 // pred_check_branch
        %350 = sbr.rel (%p348) target = $region52
      $region51: #{deepgem_forward.40} parent=11 // pred_region
        _
      $region52: #{deepgem_forward.40} parent=11 // pred_fallthru
        _
    $region12: #{deepgem_forward.40} parent=5 // pred_fallthru
      _
    %p351 = scmp.lt.s32.totalorder %s18, 2
    // Predicated region
    $region53: #{deepgem_forward.40} parent=5 // pred_check
      %p352 = pneg %p351
    $region54: #{deepgem_forward.40} parent=5 // pred_check_branch
      %354 = sbr.rel (%p352) target = $region56
    $region55: #{deepgem_forward.40} parent=5 // pred_region
      // Predicated region
      $region57: #{deepgem_forward.40} parent=55 // pred_check
        %p355 = pneg %p38
      $region58: #{deepgem_forward.40} parent=55 // pred_check_branch
        %357 = sbr.rel (%p355) target = $region60
      $region59: #{deepgem_forward.40} parent=55 // pred_region
        %p358 = scmp.lt.s32.totalorder %s18, 1
        %s359 = scalar_select %p358, %s18, 1
        %s360 = smul.addr %s359, 8
        %s361 = scalar_lea.vmem %s0, %s360
      $region60: #{deepgem_forward.40} parent=55 // pred_fallthru
        _
      // Predicated region
      $region61: #{deepgem_forward.40} parent=55 // pred_check
        %p362 = pneg %p64
      $region62: #{deepgem_forward.40} parent=55 // pred_check_branch
        %364 = sbr.rel (%p362) target = $region64
      $region63: #{deepgem_forward.40} parent=55 // pred_region
        %p365 = scmp.lt.s32.totalorder %s18, 1
        %s366 = scalar_select %p365, %s18, 1
        %s367 = smul.addr %s366, 8
        %s368 = scalar_lea.vmem %s1, %s367
      $region64: #{deepgem_forward.40} parent=55 // pred_fallthru
        _
    $region56: #{deepgem_forward.40} parent=5 // pred_fallthru
      _
    %p369 = scmp.le.s32.totalorder 1, %s18
    %p370 = scmp.lt.s32.totalorder %s18, 3
    %p371 = pnand %p369, %p370
    %p372 = pneg %p371
    // Predicated region
    $region65: #{deepgem_forward.40} parent=5 // pred_check
      _
    $region66: #{deepgem_forward.40} parent=5 // pred_check_branch
      %374 = sbr.rel (%p371) target = $region68
    $region67: #{deepgem_forward.40} parent=5 // pred_region
      %s375 = ssub.s32 %s18, 1
      %p376 = scmp.lt.s32.totalorder %s23, 1
      %s377 = scalar_select %p376, %s23, 1
      %s378 = smul.addr %s377, 8
      %s379 = scalar_lea.vmem %s0, %s378
      %p380 = pneg %p44
      %p381 = pneg %p41
      %p382 = scmp.lt.s32.totalorder %s23, 1
      %s383 = scalar_select %p382, %s23, 1
      %s384 = smul.addr %s383, 8
      %s385 = scalar_lea.vmem %s1, %s384
      %p386 = pneg %p70
      %p387 = pneg %p67
      %p388 = pneg %p91
      %p389 = pneg %p88
      %p390 = pneg %p112
      %p391 = pneg %p109
      %p392 = pneg %p133
      %p393 = pneg %p130
      %p394 = pneg %p154
      %p395 = pneg %p151
      %p396 = pneg %p175
      %p397 = pneg %p172
      %p398 = pneg %p196
      %p399 = pneg %p193
      %p400 = pneg %p217
      %p401 = pneg %p214
      %p402 = pneg %p238
      %p403 = pneg %p235
      %p404 = pneg %p259
      %p405 = pneg %p256
      %p406 = pneg %p280
      %p407 = pneg %p277
      %p408 = pneg %p306
      %p409 = pneg %p303
      %p410 = scmp.lt.s32.totalorder %s23, 1
      %s411 = scalar_select %p410, %s23, 1
      %s412 = smul.addr %s411, 8
      %s413 = scalar_lea.vmem %s12, %s412
      %p414 = scmp.lt.s32.totalorder %s23, 1
      %s415 = scalar_select %p414, %s23, 1
      %s416 = smul.addr %s415, 8
      %s417 = scalar_lea.vmem %s0, %s416
      %p418 = scmp.lt.s32.totalorder %s23, 1
      %s419 = scalar_select %p418, %s23, 1
      %s420 = smul.addr %s419, 8
      %s421 = scalar_lea.vmem %s1, %s420
      %p422 = scmp.lt.s32.totalorder %s23, 1
      %s423 = scalar_select %p422, %s23, 1
      %s424 = smul.addr %s423, 8
      %s425 = scalar_lea.vmem %s12, %s424
      %v427 = vld [vmem:[%s417] sm:$0x1f]
      %v428 = vld [vmem:[%s421] sm:$0xff]
      %v429 = vld [vmem:[%s2] sm:$0xff]
      %v430 = vld [vmem:[%s2 + $0x8] sm:$0xff]
      %v431 = vld [vmem:[%s2 + $0x10] sm:$0xff]
      %v432 = vld [vmem:[%s2 + $0x18] sm:$0xff]
      %v433 = vpack.c.bf16 %v427, %v427
      %v434 = vpack.c.bf16 %v430, %v429
      %v435 = vpack.c.bf16 %v432, %v431
      %v436 = vld [vmem:[%s3] sm:$0x1]
      %v438 = vlaneseq
      %v439 = vshrl.u32 %v438, 7
      %v440 = vsub.s32 0, %v439
      %v441 = vrot.slane %v436, %v440
      %vm443 = vcmask 261120
      %v445 = vsel %vm443, %v433, 0
      %447 = vmatprep.subr.bf16.mxu0 0
      %448 = vmatpush1.bf16.msra.mxu0 0
      %449 = vmatprep.subr.bf16.mxu0 0
      %450 = vmatpush1.bf16.msra.mxu0 0
      %451 = vmatprep.subr.bf16.mxu0 0
      %452 = vmatpush1.bf16.msra.mxu0 0
      %453 = vmatprep.subr.bf16.mxu0 0
      %454 = vmatpush1.bf16.msra.mxu0 0
      %455 = vmatprep.subr.bf16.mxu0 0
      %456 = vmatpush1.bf16.msra.mxu0 0
      %457 = vmatprep.subr.bf16.mxu0 0
      %458 = vmatpush1.bf16.msra.mxu0 0
      %459 = vmatprep.subr.bf16.mxu0 0
      %460 = vmatpush1.bf16.msra.mxu0 %v435
      %461 = vmatprep.subr.bf16.mxu0 0
      %462 = vmatpush1.bf16.msra.mxu0 %v434
      %463 = vmatprep.subr.bf16.mxu0 0
      %464 = vmatpush2.bf16.msra.mxu0 0
      %465 = vmatprep.subr.bf16.mxu0 0
      %466 = vmatpush2.bf16.msra.mxu0 0
      %467 = vmatprep.subr.bf16.mxu0 0
      %468 = vmatpush2.bf16.msra.mxu0 0
      %469 = vmatprep.subr.bf16.mxu0 0
      %470 = vmatpush2.bf16.msra.mxu0 0
      %471 = vmatprep.subr.bf16.mxu0 0
      %472 = vmatpush2.bf16.msra.mxu0 0
      %473 = vmatprep.subr.bf16.mxu0 0
      %474 = vmatpush2.bf16.msra.mxu0 0
      %475 = vmatprep.subr.bf16.mxu0 0
      %476 = vmatpush2.bf16.msra.mxu0 0
      %477 = vmatprep.subr.bf16.mxu0 0
      %478 = vmatpush2.bf16.msra.mxu0 0
      %479 = vmatprep.mubr.bf16.mxu0 0
      %480 = vmatmul.mubr.bf16.gmra.mxu0 %v445
      %v481 = vpop.f32.mrf.mxu0
      %v482 = vadd.f32 %v441, %v481
      %v483 = vpop.f32.mrf.mxu0
      %v484 = vpop.f32.mrf.mxu0
      %v485 = vpop.f32.mrf.mxu0
      %486 = vdwg.mxu0
      %v487 = vmul.f32 %v482, 0.35355338
      %v488 = vld [vmem:[%s4] sm:$0xff]
      %v489 = vld [vmem:[%s4 + $0x8] sm:$0xff]
      %v490 = vld [vmem:[%s4 + $0x10] sm:$0xff]
      %v491 = vld [vmem:[%s4 + $0x18] sm:$0xff]
      %v492 = vpack.c.bf16 %v428, %v428
      %v493 = vpack.c.bf16 %v489, %v488
      %v494 = vpack.c.bf16 %v491, %v490
      %v495 = vld [vmem:[%s5] sm:$0x1]
      %v497 = vlaneseq
      %v498 = vshrl.u32 %v497, 7
      %v499 = vsub.s32 0, %v498
      %v500 = vrot.slane %v495, %v499
      %v503 = vsel %vm443, %v492, 0
      %505 = vmatprep.subr.bf16.mxu0 0
      %506 = vmatpush1.bf16.msra.mxu0 0
      %507 = vmatprep.subr.bf16.mxu0 0
      %508 = vmatpush1.bf16.msra.mxu0 0
      %509 = vmatprep.subr.bf16.mxu0 0
      %510 = vmatpush1.bf16.msra.mxu0 0
      %511 = vmatprep.subr.bf16.mxu0 0
      %512 = vmatpush1.bf16.msra.mxu0 0
      %513 = vmatprep.subr.bf16.mxu0 0
      %514 = vmatpush1.bf16.msra.mxu0 0
      %515 = vmatprep.subr.bf16.mxu0 0
      %516 = vmatpush1.bf16.msra.mxu0 0
      %517 = vmatprep.subr.bf16.mxu0 0
      %518 = vmatpush1.bf16.msra.mxu0 %v494
      %519 = vmatprep.subr.bf16.mxu0 0
      %520 = vmatpush1.bf16.msra.mxu0 %v493
      %521 = vmatprep.subr.bf16.mxu0 0
      %522 = vmatpush2.bf16.msra.mxu0 0
      %523 = vmatprep.subr.bf16.mxu0 0
      %524 = vmatpush2.bf16.msra.mxu0 0
      %525 = vmatprep.subr.bf16.mxu0 0
      %526 = vmatpush2.bf16.msra.mxu0 0
      %527 = vmatprep.subr.bf16.mxu0 0
      %528 = vmatpush2.bf16.msra.mxu0 0
      %529 = vmatprep.subr.bf16.mxu0 0
      %530 = vmatpush2.bf16.msra.mxu0 0
      %531 = vmatprep.subr.bf16.mxu0 0
      %532 = vmatpush2.bf16.msra.mxu0 0
      %533 = vmatprep.subr.bf16.mxu0 0
      %534 = vmatpush2.bf16.msra.mxu0 0
      %535 = vmatprep.subr.bf16.mxu0 0
      %536 = vmatpush2.bf16.msra.mxu0 0
      %537 = vmatprep.mubr.bf16.mxu0 0
      %538 = vmatmul.mubr.bf16.gmra.mxu0 %v503
      %v539 = vpop.f32.mrf.mxu0
      %v540 = vadd.f32 %v500, %v539
      %v541 = vpop.f32.mrf.mxu0
      %v542 = vpop.f32.mrf.mxu0
      %v543 = vpop.f32.mrf.mxu0
      %544 = vdwg.mxu0
      %v545 = vld [vmem:[%s6] sm:$0xff]
      %v546 = vld [vmem:[%s6 + $0x8] sm:$0xff]
      %v547 = vld [vmem:[%s6 + $0x10] sm:$0xff]
      %v548 = vld [vmem:[%s6 + $0x18] sm:$0xff]
      %v549 = vpack.c.bf16 %v546, %v545
      %v550 = vpack.c.bf16 %v548, %v547
      %v551 = vld [vmem:[%s7] sm:$0x1]
      %v553 = vlaneseq
      %v554 = vshrl.u32 %v553, 7
      %v555 = vsub.s32 0, %v554
      %v556 = vrot.slane %v551, %v555
      %558 = vmatprep.subr.bf16.mxu0 0
      %559 = vmatpush1.bf16.msra.mxu0 0
      %560 = vmatprep.subr.bf16.mxu0 0
      %561 = vmatpush1.bf16.msra.mxu0 0
      %562 = vmatprep.subr.bf16.mxu0 0
      %563 = vmatpush1.bf16.msra.mxu0 0
      %564 = vmatprep.subr.bf16.mxu0 0
      %565 = vmatpush1.bf16.msra.mxu0 0
      %566 = vmatprep.subr.bf16.mxu0 0
      %567 = vmatpush1.bf16.msra.mxu0 0
      %568 = vmatprep.subr.bf16.mxu0 0
      %569 = vmatpush1.bf16.msra.mxu0 0
      %570 = vmatprep.subr.bf16.mxu0 0
      %571 = vmatpush1.bf16.msra.mxu0 %v550
      %572 = vmatprep.subr.bf16.mxu0 0
      %573 = vmatpush1.bf16.msra.mxu0 %v549
      %574 = vmatprep.subr.bf16.mxu0 0
      %575 = vmatpush2.bf16.msra.mxu0 0
      %576 = vmatprep.subr.bf16.mxu0 0
      %577 = vmatpush2.bf16.msra.mxu0 0
      %578 = vmatprep.subr.bf16.mxu0 0
      %579 = vmatpush2.bf16.msra.mxu0 0
      %580 = vmatprep.subr.bf16.mxu0 0
      %581 = vmatpush2.bf16.msra.mxu0 0
      %582 = vmatprep.subr.bf16.mxu0 0
      %583 = vmatpush2.bf16.msra.mxu0 0
      %584 = vmatprep.subr.bf16.mxu0 0
      %585 = vmatpush2.bf16.msra.mxu0 0
      %586 = vmatprep.subr.bf16.mxu0 0
      %587 = vmatpush2.bf16.msra.mxu0 0
      %588 = vmatprep.subr.bf16.mxu0 0
      %589 = vmatpush2.bf16.msra.mxu0 0
      %590 = vmatprep.mubr.bf16.mxu0 0
      %591 = vmatmul.mubr.bf16.gmra.mxu0 %v503
      %v592 = vpop.f32.mrf.mxu0
      %v593 = vadd.f32 %v556, %v592
      %v594 = vpop.f32.mrf.mxu0
      %v595 = vpop.f32.mrf.mxu0
      %v596 = vpop.f32.mrf.mxu0
      %597 = vdwg.mxu0
      %v598 = vpack.c.bf16 %v487, %v487
      %v599 = vpack.c.bf16 %v540, %v540
      %vm600 = vcmask 64512
      %v602 = vsel %vm600, %v598, 0
      %v605 = vsel %vm600, %v599, 0
      %607 = vmatprep.subr.bf16.mxu0 0
      %608 = vmatpush1.bf16.xpose.msra.mxu0 0
      %609 = vmatprep.subr.bf16.mxu0 0
      %610 = vmatpush1.bf16.xpose.msra.mxu0 0
      %611 = vmatprep.subr.bf16.mxu0 0
      %612 = vmatpush1.bf16.xpose.msra.mxu0 0
      %613 = vmatprep.subr.bf16.mxu0 0
      %614 = vmatpush1.bf16.xpose.msra.mxu0 0
      %615 = vmatprep.subr.bf16.mxu0 0
      %616 = vmatpush1.bf16.xpose.msra.mxu0 0
      %617 = vmatprep.subr.bf16.mxu0 0
      %618 = vmatpush1.bf16.xpose.msra.mxu0 0
      %619 = vmatprep.subr.bf16.mxu0 0
      %620 = vmatpush1.bf16.xpose.msra.mxu0 0
      %621 = vmatprep.subr.bf16.mxu0 0
      %622 = vmatpush1.bf16.xpose.msra.mxu0 %v605
      %623 = vmatprep.subr.bf16.mxu0 0
      %624 = vmatpush2.bf16.xpose.msra.mxu0 0
      %625 = vmatprep.subr.bf16.mxu0 0
      %626 = vmatpush2.bf16.xpose.msra.mxu0 0
      %627 = vmatprep.subr.bf16.mxu0 0
      %628 = vmatpush2.bf16.xpose.msra.mxu0 0
      %629 = vmatprep.subr.bf16.mxu0 0
      %630 = vmatpush2.bf16.xpose.msra.mxu0 0
      %631 = vmatprep.subr.bf16.mxu0 0
      %632 = vmatpush2.bf16.xpose.msra.mxu0 0
      %633 = vmatprep.subr.bf16.mxu0 0
      %634 = vmatpush2.bf16.xpose.msra.mxu0 0
      %635 = vmatprep.subr.bf16.mxu0 0
      %636 = vmatpush2.bf16.xpose.msra.mxu0 0
      %637 = vmatprep.subr.bf16.mxu0 0
      %638 = vmatpush2.bf16.xpose.msra.mxu0 0
      %639 = vmatprep.mubr.bf16.mxu0 0
      %640 = vmatmul.mubr.bf16.gmra.mxu0 %v602
      %v641 = vpop.f32.mrf.mxu0
      %v642 = vadd.f32 0.0, %v641
      %v643 = vpop.f32.mrf.mxu0
      %v644 = vpop.f32.mrf.mxu0
      %v645 = vpop.f32.mrf.mxu0
      %646 = vdwg.mxu0
      %vm647 = vcmask 61440
      %v648 = vsel %vm647, %v642, -inf
      %649 = vmax.xlane.f32.xlu0 %v648
      %v650 = vpop.xlane.xlu0 %649
      %v651 = vsub.f32 %v642, %v650
      %v652 = vmul.f32 %v651, 1.442695
      %v653 = vpow.pop %v652
      %v654 = vsel %vm647, %v653, 0.0
      %655 = vadd.xlane.f32.xlu0 %v654
      %v656 = vpop.xlane.xlu0 %655
      %v657 = vrcp.pop %v656
      %v658 = vmul.f32 %v653, %v657
      %v659 = vpack.c.bf16 %v658, %v658
      %v660 = vpack.c.bf16 %v593, %v593
      %v662 = vsel %vm600, %v659, 0
      %vm664 = vcmask 1043456
      %v666 = vsel %vm664, %v660, 0
      %668 = vmatprep.subr.bf16.mxu0 0
      %669 = vmatpush1.bf16.msra.mxu0 0
      %670 = vmatprep.subr.bf16.mxu0 0
      %671 = vmatpush1.bf16.msra.mxu0 0
      %672 = vmatprep.subr.bf16.mxu0 0
      %673 = vmatpush1.bf16.msra.mxu0 0
      %674 = vmatprep.subr.bf16.mxu0 0
      %675 = vmatpush1.bf16.msra.mxu0 0
      %676 = vmatprep.subr.bf16.mxu0 0
      %677 = vmatpush1.bf16.msra.mxu0 0
      %678 = vmatprep.subr.bf16.mxu0 0
      %679 = vmatpush1.bf16.msra.mxu0 0
      %680 = vmatprep.subr.bf16.mxu0 0
      %681 = vmatpush1.bf16.msra.mxu0 0
      %682 = vmatprep.subr.bf16.mxu0 0
      %683 = vmatpush1.bf16.msra.mxu0 %v666
      %684 = vmatprep.subr.bf16.mxu0 0
      %685 = vmatpush2.bf16.msra.mxu0 0
      %686 = vmatprep.subr.bf16.mxu0 0
      %687 = vmatpush2.bf16.msra.mxu0 0
      %688 = vmatprep.subr.bf16.mxu0 0
      %689 = vmatpush2.bf16.msra.mxu0 0
      %690 = vmatprep.subr.bf16.mxu0 0
      %691 = vmatpush2.bf16.msra.mxu0 0
      %692 = vmatprep.subr.bf16.mxu0 0
      %693 = vmatpush2.bf16.msra.mxu0 0
      %694 = vmatprep.subr.bf16.mxu0 0
      %695 = vmatpush2.bf16.msra.mxu0 0
      %696 = vmatprep.subr.bf16.mxu0 0
      %697 = vmatpush2.bf16.msra.mxu0 0
      %698 = vmatprep.subr.bf16.mxu0 0
      %699 = vmatpush2.bf16.msra.mxu0 0
      %700 = vmatprep.mubr.bf16.mxu0 0
      %701 = vmatmul.mubr.bf16.gmra.mxu0 %v662
      %v702 = vpop.f32.mrf.mxu0
      %v703 = vadd.f32 0.0, %v702
      %v704 = vpop.f32.mrf.mxu0
      %v705 = vpop.f32.mrf.mxu0
      %v706 = vpop.f32.mrf.mxu0
      %707 = vdwg.mxu0
      %709 = vrot.lane.b32.xlu0 %v598, 120
      %v710 = vpop.permute.xlu0 %709
      %712 = vrot.lane.b32.xlu0 %v599, 120
      %v713 = vpop.permute.xlu0 %712
      %v715 = vsel %vm600, %v710, 0
      %v718 = vsel %vm600, %v713, 0
      %720 = vmatprep.subr.bf16.mxu0 0
      %721 = vmatpush1.bf16.xpose.msra.mxu0 0
      %722 = vmatprep.subr.bf16.mxu0 0
      %723 = vmatpush1.bf16.xpose.msra.mxu0 0
      %724 = vmatprep.subr.bf16.mxu0 0
      %725 = vmatpush1.bf16.xpose.msra.mxu0 0
      %726 = vmatprep.subr.bf16.mxu0 0
      %727 = vmatpush1.bf16.xpose.msra.mxu0 0
      %728 = vmatprep.subr.bf16.mxu0 0
      %729 = vmatpush1.bf16.xpose.msra.mxu0 0
      %730 = vmatprep.subr.bf16.mxu0 0
      %731 = vmatpush1.bf16.xpose.msra.mxu0 0
      %732 = vmatprep.subr.bf16.mxu0 0
      %733 = vmatpush1.bf16.xpose.msra.mxu0 0
      %734 = vmatprep.subr.bf16.mxu0 0
      %735 = vmatpush1.bf16.xpose.msra.mxu0 %v718
      %736 = vmatprep.subr.bf16.mxu0 0
      %737 = vmatpush2.bf16.xpose.msra.mxu0 0
      %738 = vmatprep.subr.bf16.mxu0 0
      %739 = vmatpush2.bf16.xpose.msra.mxu0 0
      %740 = vmatprep.subr.bf16.mxu0 0
      %741 = vmatpush2.bf16.xpose.msra.mxu0 0
      %742 = vmatprep.subr.bf16.mxu0 0
      %743 = vmatpush2.bf16.xpose.msra.mxu0 0
      %744 = vmatprep.subr.bf16.mxu0 0
      %745 = vmatpush2.bf16.xpose.msra.mxu0 0
      %746 = vmatprep.subr.bf16.mxu0 0
      %747 = vmatpush2.bf16.xpose.msra.mxu0 0
      %748 = vmatprep.subr.bf16.mxu0 0
      %749 = vmatpush2.bf16.xpose.msra.mxu0 0
      %750 = vmatprep.subr.bf16.mxu0 0
      %751 = vmatpush2.bf16.xpose.msra.mxu0 0
      %752 = vmatprep.mubr.bf16.mxu0 0
      %753 = vmatmul.mubr.bf16.gmra.mxu0 %v715
      %v754 = vpop.f32.mrf.mxu0
      %v755 = vadd.f32 0.0, %v754
      %v756 = vpop.f32.mrf.mxu0
      %v757 = vpop.f32.mrf.mxu0
      %v758 = vpop.f32.mrf.mxu0
      %759 = vdwg.mxu0
      %v760 = vsel %vm647, %v755, -inf
      %761 = vmax.xlane.f32.xlu0 %v760
      %v762 = vpop.xlane.xlu0 %761
      %v763 = vsub.f32 %v755, %v762
      %v764 = vmul.f32 %v763, 1.442695
      %v765 = vpow.pop %v764
      %v766 = vsel %vm647, %v765, 0.0
      %767 = vadd.xlane.f32.xlu0 %v766
      %v768 = vpop.xlane.xlu0 %767
      %v769 = vrcp.pop %v768
      %v770 = vmul.f32 %v765, %v769
      %v771 = vpack.c.bf16 %v770, %v770
      %773 = vrot.lane.b32.xlu0 %v660, 120
      %v774 = vpop.permute.xlu0 %773
      %v776 = vsel %vm600, %v771, 0
      %v779 = vsel %vm664, %v774, 0
      %781 = vmatprep.subr.bf16.mxu0 0
      %782 = vmatpush1.bf16.msra.mxu0 0
      %783 = vmatprep.subr.bf16.mxu0 0
      %784 = vmatpush1.bf16.msra.mxu0 0
      %785 = vmatprep.subr.bf16.mxu0 0
      %786 = vmatpush1.bf16.msra.mxu0 0
      %787 = vmatprep.subr.bf16.mxu0 0
      %788 = vmatpush1.bf16.msra.mxu0 0
      %789 = vmatprep.subr.bf16.mxu0 0
      %790 = vmatpush1.bf16.msra.mxu0 0
      %791 = vmatprep.subr.bf16.mxu0 0
      %792 = vmatpush1.bf16.msra.mxu0 0
      %793 = vmatprep.subr.bf16.mxu0 0
      %794 = vmatpush1.bf16.msra.mxu0 0
      %795 = vmatprep.subr.bf16.mxu0 0
      %796 = vmatpush1.bf16.msra.mxu0 %v779
      %797 = vmatprep.subr.bf16.mxu0 0
      %798 = vmatpush2.bf16.msra.mxu0 0
      %799 = vmatprep.subr.bf16.mxu0 0
      %800 = vmatpush2.bf16.msra.mxu0 0
      %801 = vmatprep.subr.bf16.mxu0 0
      %802 = vmatpush2.bf16.msra.mxu0 0
      %803 = vmatprep.subr.bf16.mxu0 0
      %804 = vmatpush2.bf16.msra.mxu0 0
      %805 = vmatprep.subr.bf16.mxu0 0
      %806 = vmatpush2.bf16.msra.mxu0 0
      %807 = vmatprep.subr.bf16.mxu0 0
      %808 = vmatpush2.bf16.msra.mxu0 0
      %809 = vmatprep.subr.bf16.mxu0 0
      %810 = vmatpush2.bf16.msra.mxu0 0
      %811 = vmatprep.subr.bf16.mxu0 0
      %812 = vmatpush2.bf16.msra.mxu0 0
      %813 = vmatprep.mubr.bf16.mxu0 0
      %814 = vmatmul.mubr.bf16.gmra.mxu0 %v776
      %v815 = vpop.f32.mrf.mxu0
      %v816 = vadd.f32 0.0, %v815
      %v817 = vpop.f32.mrf.mxu0
      %v818 = vpop.f32.mrf.mxu0
      %v819 = vpop.f32.mrf.mxu0
      %820 = vdwg.mxu0
      %821 = vrot.lane.b32.xlu0 %v598, 112
      %v822 = vpop.permute.xlu0 %821
      %823 = vrot.lane.b32.xlu0 %v599, 112
      %v824 = vpop.permute.xlu0 %823
      %v826 = vsel %vm600, %v822, 0
      %v829 = vsel %vm600, %v824, 0
      %831 = vmatprep.subr.bf16.mxu0 0
      %832 = vmatpush1.bf16.xpose.msra.mxu0 0
      %833 = vmatprep.subr.bf16.mxu0 0
      %834 = vmatpush1.bf16.xpose.msra.mxu0 0
      %835 = vmatprep.subr.bf16.mxu0 0
      %836 = vmatpush1.bf16.xpose.msra.mxu0 0
      %837 = vmatprep.subr.bf16.mxu0 0
      %838 = vmatpush1.bf16.xpose.msra.mxu0 0
      %839 = vmatprep.subr.bf16.mxu0 0
      %840 = vmatpush1.bf16.xpose.msra.mxu0 0
      %841 = vmatprep.subr.bf16.mxu0 0
      %842 = vmatpush1.bf16.xpose.msra.mxu0 0
      %843 = vmatprep.subr.bf16.mxu0 0
      %844 = vmatpush1.bf16.xpose.msra.mxu0 0
      %845 = vmatprep.subr.bf16.mxu0 0
      %846 = vmatpush1.bf16.xpose.msra.mxu0 %v829
      %847 = vmatprep.subr.bf16.mxu0 0
      %848 = vmatpush2.bf16.xpose.msra.mxu0 0
      %849 = vmatprep.subr.bf16.mxu0 0
      %850 = vmatpush2.bf16.xpose.msra.mxu0 0
      %851 = vmatprep.subr.bf16.mxu0 0
      %852 = vmatpush2.bf16.xpose.msra.mxu0 0
      %853 = vmatprep.subr.bf16.mxu0 0
      %854 = vmatpush2.bf16.xpose.msra.mxu0 0
      %855 = vmatprep.subr.bf16.mxu0 0
      %856 = vmatpush2.bf16.xpose.msra.mxu0 0
      %857 = vmatprep.subr.bf16.mxu0 0
      %858 = vmatpush2.bf16.xpose.msra.mxu0 0
      %859 = vmatprep.subr.bf16.mxu0 0
      %860 = vmatpush2.bf16.xpose.msra.mxu0 0
      %861 = vmatprep.subr.bf16.mxu0 0
      %862 = vmatpush2.bf16.xpose.msra.mxu0 0
      %863 = vmatprep.mubr.bf16.mxu0 0
      %864 = vmatmul.mubr.bf16.gmra.mxu0 %v826
      %v865 = vpop.f32.mrf.mxu0
      %v866 = vadd.f32 0.0, %v865
      %v867 = vpop.f32.mrf.mxu0
      %v868 = vpop.f32.mrf.mxu0
      %v869 = vpop.f32.mrf.mxu0
      %870 = vdwg.mxu0
      %v871 = vsel %vm647, %v866, -inf
      %872 = vmax.xlane.f32.xlu0 %v871
      %v873 = vpop.xlane.xlu0 %872
      %v874 = vsub.f32 %v866, %v873
      %v875 = vmul.f32 %v874, 1.442695
      %v876 = vpow.pop %v875
      %v877 = vsel %vm647, %v876, 0.0
      %878 = vadd.xlane.f32.xlu0 %v877
      %v879 = vpop.xlane.xlu0 %878
      %v880 = vrcp.pop %v879
      %v881 = vmul.f32 %v876, %v880
      %v882 = vpack.c.bf16 %v881, %v881
      %883 = vrot.lane.b32.xlu0 %v660, 112
      %v884 = vpop.permute.xlu0 %883
      %v886 = vsel %vm600, %v882, 0
      %v889 = vsel %vm664, %v884, 0
      %891 = vmatprep.subr.bf16.mxu0 0
      %892 = vmatpush1.bf16.msra.mxu0 0
      %893 = vmatprep.subr.bf16.mxu0 0
      %894 = vmatpush1.bf16.msra.mxu0 0
      %895 = vmatprep.subr.bf16.mxu0 0
      %896 = vmatpush1.bf16.msra.mxu0 0
      %897 = vmatprep.subr.bf16.mxu0 0
      %898 = vmatpush1.bf16.msra.mxu0 0
      %899 = vmatprep.subr.bf16.mxu0 0
      %900 = vmatpush1.bf16.msra.mxu0 0
      %901 = vmatprep.subr.bf16.mxu0 0
      %902 = vmatpush1.bf16.msra.mxu0 0
      %903 = vmatprep.subr.bf16.mxu0 0
      %904 = vmatpush1.bf16.msra.mxu0 0
      %905 = vmatprep.subr.bf16.mxu0 0
      %906 = vmatpush1.bf16.msra.mxu0 %v889
      %907 = vmatprep.subr.bf16.mxu0 0
      %908 = vmatpush2.bf16.msra.mxu0 0
      %909 = vmatprep.subr.bf16.mxu0 0
      %910 = vmatpush2.bf16.msra.mxu0 0
      %911 = vmatprep.subr.bf16.mxu0 0
      %912 = vmatpush2.bf16.msra.mxu0 0
      %913 = vmatprep.subr.bf16.mxu0 0
      %914 = vmatpush2.bf16.msra.mxu0 0
      %915 = vmatprep.subr.bf16.mxu0 0
      %916 = vmatpush2.bf16.msra.mxu0 0
      %917 = vmatprep.subr.bf16.mxu0 0
      %918 = vmatpush2.bf16.msra.mxu0 0
      %919 = vmatprep.subr.bf16.mxu0 0
      %920 = vmatpush2.bf16.msra.mxu0 0
      %921 = vmatprep.subr.bf16.mxu0 0
      %922 = vmatpush2.bf16.msra.mxu0 0
      %923 = vmatprep.mubr.bf16.mxu0 0
      %924 = vmatmul.mubr.bf16.gmra.mxu0 %v886
      %v925 = vpop.f32.mrf.mxu0
      %v926 = vadd.f32 0.0, %v925
      %v927 = vpop.f32.mrf.mxu0
      %v928 = vpop.f32.mrf.mxu0
      %v929 = vpop.f32.mrf.mxu0
      %930 = vdwg.mxu0
      %931 = vrot.lane.b32.xlu0 %v598, 104
      %v932 = vpop.permute.xlu0 %931
      %933 = vrot.lane.b32.xlu0 %v599, 104
      %v934 = vpop.permute.xlu0 %933
      %v936 = vsel %vm600, %v932, 0
      %v939 = vsel %vm600, %v934, 0
      %941 = vmatprep.subr.bf16.mxu0 0
      %942 = vmatpush1.bf16.xpose.msra.mxu0 0
      %943 = vmatprep.subr.bf16.mxu0 0
      %944 = vmatpush1.bf16.xpose.msra.mxu0 0
      %945 = vmatprep.subr.bf16.mxu0 0
      %946 = vmatpush1.bf16.xpose.msra.mxu0 0
      %947 = vmatprep.subr.bf16.mxu0 0
      %948 = vmatpush1.bf16.xpose.msra.mxu0 0
      %949 = vmatprep.subr.bf16.mxu0 0
      %950 = vmatpush1.bf16.xpose.msra.mxu0 0
      %951 = vmatprep.subr.bf16.mxu0 0
      %952 = vmatpush1.bf16.xpose.msra.mxu0 0
      %953 = vmatprep.subr.bf16.mxu0 0
      %954 = vmatpush1.bf16.xpose.msra.mxu0 0
      %955 = vmatprep.subr.bf16.mxu0 0
      %956 = vmatpush1.bf16.xpose.msra.mxu0 %v939
      %957 = vmatprep.subr.bf16.mxu0 0
      %958 = vmatpush2.bf16.xpose.msra.mxu0 0
      %959 = vmatprep.subr.bf16.mxu0 0
      %960 = vmatpush2.bf16.xpose.msra.mxu0 0
      %961 = vmatprep.subr.bf16.mxu0 0
      %962 = vmatpush2.bf16.xpose.msra.mxu0 0
      %963 = vmatprep.subr.bf16.mxu0 0
      %964 = vmatpush2.bf16.xpose.msra.mxu0 0
      %965 = vmatprep.subr.bf16.mxu0 0
      %966 = vmatpush2.bf16.xpose.msra.mxu0 0
      %967 = vmatprep.subr.bf16.mxu0 0
      %968 = vmatpush2.bf16.xpose.msra.mxu0 0
      %969 = vmatprep.subr.bf16.mxu0 0
      %970 = vmatpush2.bf16.xpose.msra.mxu0 0
      %971 = vmatprep.subr.bf16.mxu0 0
      %972 = vmatpush2.bf16.xpose.msra.mxu0 0
      %973 = vmatprep.mubr.bf16.mxu0 0
      %974 = vmatmul.mubr.bf16.gmra.mxu0 %v936
      %v975 = vpop.f32.mrf.mxu0
      %v976 = vadd.f32 0.0, %v975
      %v977 = vpop.f32.mrf.mxu0
      %v978 = vpop.f32.mrf.mxu0
      %v979 = vpop.f32.mrf.mxu0
      %980 = vdwg.mxu0
      %v981 = vsel %vm647, %v976, -inf
      %982 = vmax.xlane.f32.xlu0 %v981
      %v983 = vpop.xlane.xlu0 %982
      %v984 = vsub.f32 %v976, %v983
      %v985 = vmul.f32 %v984, 1.442695
      %v986 = vpow.pop %v985
      %v987 = vsel %vm647, %v986, 0.0
      %988 = vadd.xlane.f32.xlu0 %v987
      %v989 = vpop.xlane.xlu0 %988
      %v990 = vrcp.pop %v989
      %v991 = vmul.f32 %v986, %v990
      %v992 = vpack.c.bf16 %v991, %v991
      %993 = vrot.lane.b32.xlu0 %v660, 104
      %v994 = vpop.permute.xlu0 %993
      %v996 = vsel %vm600, %v992, 0
      %v999 = vsel %vm664, %v994, 0
      %1001 = vmatprep.subr.bf16.mxu0 0
      %1002 = vmatpush1.bf16.msra.mxu0 0
      %1003 = vmatprep.subr.bf16.mxu0 0
      %1004 = vmatpush1.bf16.msra.mxu0 0
      %1005 = vmatprep.subr.bf16.mxu0 0
      %1006 = vmatpush1.bf16.msra.mxu0 0
      %1007 = vmatprep.subr.bf16.mxu0 0
      %1008 = vmatpush1.bf16.msra.mxu0 0
      %1009 = vmatprep.subr.bf16.mxu0 0
      %1010 = vmatpush1.bf16.msra.mxu0 0
      %1011 = vmatprep.subr.bf16.mxu0 0
      %1012 = vmatpush1.bf16.msra.mxu0 0
      %1013 = vmatprep.subr.bf16.mxu0 0
      %1014 = vmatpush1.bf16.msra.mxu0 0
      %1015 = vmatprep.subr.bf16.mxu0 0
      %1016 = vmatpush1.bf16.msra.mxu0 %v999
      %1017 = vmatprep.subr.bf16.mxu0 0
      %1018 = vmatpush2.bf16.msra.mxu0 0
      %1019 = vmatprep.subr.bf16.mxu0 0
      %1020 = vmatpush2.bf16.msra.mxu0 0
      %1021 = vmatprep.subr.bf16.mxu0 0
      %1022 = vmatpush2.bf16.msra.mxu0 0
      %1023 = vmatprep.subr.bf16.mxu0 0
      %1024 = vmatpush2.bf16.msra.mxu0 0
      %1025 = vmatprep.subr.bf16.mxu0 0
      %1026 = vmatpush2.bf16.msra.mxu0 0
      %1027 = vmatprep.subr.bf16.mxu0 0
      %1028 = vmatpush2.bf16.msra.mxu0 0
      %1029 = vmatprep.subr.bf16.mxu0 0
      %1030 = vmatpush2.bf16.msra.mxu0 0
      %1031 = vmatprep.subr.bf16.mxu0 0
      %1032 = vmatpush2.bf16.msra.mxu0 0
      %1033 = vmatprep.mubr.bf16.mxu0 0
      %1034 = vmatmul.mubr.bf16.gmra.mxu0 %v996
      %v1035 = vpop.f32.mrf.mxu0
      %v1036 = vadd.f32 0.0, %v1035
      %v1037 = vpop.f32.mrf.mxu0
      %v1038 = vpop.f32.mrf.mxu0
      %v1039 = vpop.f32.mrf.mxu0
      %1040 = vdwg.mxu0
      %1042 = vrot.lane.b32.xlu0 %v816, 8
      %v1043 = vpop.permute.xlu0 %1042
      %1046 = vrot.lane.b32.xlu0 %v926, 16
      %v1047 = vpop.permute.xlu0 %1046
      %1050 = vrot.lane.b32.xlu0 %v1036, 24
      %v1051 = vpop.permute.xlu0 %1050
      %v1053 = vsel %vm600, %v703, %v1043
      %vm1054 = vcmask 130048
      %v1055 = vsel %vm1054, %v1053, %v1047
      %vm1056 = vcmask 195584
      %v1057 = vsel %vm1056, %v1055, %v1051
      %v1058 = vld [vmem:[%s8] sm:$0xff]
      %v1059 = vld [vmem:[%s8 + $0x8] sm:$0xff]
      %v1060 = vld [vmem:[%s8 + $0x10] sm:$0xff]
      %v1061 = vld [vmem:[%s8 + $0x18] sm:$0xff]
      %v1062 = vpack.c.bf16 %v1057, %v1057
      %v1063 = vpack.c.bf16 %v1059, %v1058
      %v1064 = vpack.c.bf16 %v1061, %v1060
      %v1065 = vld [vmem:[%s9] sm:$0x1]
      %v1067 = vlaneseq
      %v1068 = vshrl.u32 %v1067, 7
      %v1069 = vsub.s32 0, %v1068
      %v1070 = vrot.slane %v1065, %v1069
      %v1073 = vsel %vm443, %v1062, 0
      %1075 = vmatprep.subr.bf16.mxu0 0
      %1076 = vmatpush1.bf16.msra.mxu0 0
      %1077 = vmatprep.subr.bf16.mxu0 0
      %1078 = vmatpush1.bf16.msra.mxu0 0
      %1079 = vmatprep.subr.bf16.mxu0 0
      %1080 = vmatpush1.bf16.msra.mxu0 0
      %1081 = vmatprep.subr.bf16.mxu0 0
      %1082 = vmatpush1.bf16.msra.mxu0 0
      %1083 = vmatprep.subr.bf16.mxu0 0
      %1084 = vmatpush1.bf16.msra.mxu0 0
      %1085 = vmatprep.subr.bf16.mxu0 0
      %1086 = vmatpush1.bf16.msra.mxu0 0
      %1087 = vmatprep.subr.bf16.mxu0 0
      %1088 = vmatpush1.bf16.msra.mxu0 %v1064
      %1089 = vmatprep.subr.bf16.mxu0 0
      %1090 = vmatpush1.bf16.msra.mxu0 %v1063
      %1091 = vmatprep.subr.bf16.mxu0 0
      %1092 = vmatpush2.bf16.msra.mxu0 0
      %1093 = vmatprep.subr.bf16.mxu0 0
      %1094 = vmatpush2.bf16.msra.mxu0 0
      %1095 = vmatprep.subr.bf16.mxu0 0
      %1096 = vmatpush2.bf16.msra.mxu0 0
      %1097 = vmatprep.subr.bf16.mxu0 0
      %1098 = vmatpush2.bf16.msra.mxu0 0
      %1099 = vmatprep.subr.bf16.mxu0 0
      %1100 = vmatpush2.bf16.msra.mxu0 0
      %1101 = vmatprep.subr.bf16.mxu0 0
      %1102 = vmatpush2.bf16.msra.mxu0 0
      %1103 = vmatprep.subr.bf16.mxu0 0
      %1104 = vmatpush2.bf16.msra.mxu0 0
      %1105 = vmatprep.subr.bf16.mxu0 0
      %1106 = vmatpush2.bf16.msra.mxu0 0
      %1107 = vmatprep.mubr.bf16.mxu0 0
      %1108 = vmatmul.mubr.bf16.gmra.mxu0 %v1073
      %v1109 = vpop.f32.mrf.mxu0
      %v1110 = vadd.f32 %v1070, %v1109
      %v1111 = vpop.f32.mrf.mxu0
      %v1112 = vpop.f32.mrf.mxu0
      %v1113 = vpop.f32.mrf.mxu0
      %1114 = vdwg.mxu0
      %v1115 = vadd.f32 %v427, %v1110
      %v1116 = vld [vmem:[%s10] sm:$0x1]
      %v1117 = vld [vmem:[%s11] sm:$0x1]
      %vm1118 = vcmask 258048
      %v1119 = vsel %vm1118, %v1115, 0.0
      %1120 = vadd.xlane.f32.xlu0 %v1119
      %v1121 = vpop.xlane.xlu0 %1120
      %v1122 = vrcp.pop 32.0
      %v1123 = vmul.f32 %v1121, %v1122
      %v1124 = vsub.f32 %v1115, %v1123
      %v1125 = vmul.f32 %v1124, %v1124
      %v1126 = vsel %vm1118, %v1125, 0.0
      %1127 = vadd.xlane.f32.xlu0 %v1126
      %v1128 = vpop.xlane.xlu0 %1127
      %v1129 = vmul.f32 %v1128, %v1122
      %v1130 = vadd.f32 %v1129, 1e-05
      %v1131 = vrsqrt.pop %v1130
      %v1132 = vmul.f32 %v1124, %v1131
      %v1134 = vlaneseq
      %v1135 = vshrl.u32 %v1134, 7
      %v1136 = vsub.s32 0, %v1135
      %v1137 = vrot.slane %v1116, %v1136
      %v1139 = vmul.f32 %v1132, %v1137
      %v1141 = vlaneseq
      %v1142 = vshrl.u32 %v1141, 7
      %v1143 = vsub.s32 0, %v1142
      %v1144 = vrot.slane %v1117, %v1143
      %v1146 = vadd.f32 %v1139, %v1144
      %1147 = vst.msk [vmem:[%s425] sm:$0x1f] %vm1118, %v1146
      %p1148 = scmp.lt.s32.totalorder %s23, 1
      %s1149 = scalar_select %p1148, %s23, 1
      %s1150 = smul.addr %s1149, 8
      %s1151 = scalar_lea.vmem %s12, %s1150
      // Predicated region
      $region69: #{deepgem_forward.40} parent=67 // pred_check
        %p1152 = pneg %p303
      $region70: #{deepgem_forward.40} parent=67 // pred_check_branch
        %1154 = sbr.rel (%p1152) target = $region72
      $region71: #{deepgem_forward.40} parent=67 // pred_region
        _
      $region72: #{deepgem_forward.40} parent=67 // pred_fallthru
        _
    $region68: #{deepgem_forward.40} parent=5 // pred_fallthru
      _
    %p1155 = scmp.le.s32.totalorder 2, %s18
    // Predicated region
    $region73: #{deepgem_forward.40} parent=5 // pred_check
      %p1156 = pneg %p1155
    $region74: #{deepgem_forward.40} parent=5 // pred_check_branch
      %1158 = sbr.rel (%p1156) target = $region76
    $region75: #{deepgem_forward.40} parent=5 // pred_region
      %s1159 = ssub.s32 %s18, 2
      // Predicated region
      $region77: #{deepgem_forward.40} parent=75 // pred_check
        %p1160 = pneg %p309
      $region78: #{deepgem_forward.40} parent=75 // pred_check_branch
        %1162 = sbr.rel (%p1160) target = $region80
      $region79: #{deepgem_forward.40} parent=75 // pred_region
        %p1163 = scmp.lt.s32.totalorder %s24, 1
        %s1164 = scalar_select %p1163, %s24, 1
        %s1165 = smul.addr %s1164, 8
        %s1166 = scalar_lea.vmem %s12, %s1165
      $region80: #{deepgem_forward.40} parent=75 // pred_fallthru
        _
    $region76: #{deepgem_forward.40} parent=5 // pred_fallthru
      _
  $region6: #{deepgem_forward.40} parent=0 // loop_footer
    %s22 = sadd.s32 1, %s18
  $region7: #{deepgem_forward.40} parent=0 // loop_footer_branch
    %17 = sbr.rel target = $region3
  $region8: #{deepgem_forward.40} parent=0 // loop_exit
    _

// kernel: deepgem_forward.45
$region0: #{deepgem_forward.45}
  #allocation0 [shape = 'u32[]', space=smem, size = 0x4, offset = 0x4, fixed_abs, tag = 'smem constant byte address 0x4 - core index']
  #allocation1 [shape = 'u32[144,128]{1,0:T(1,128)}', space=vmem, size = 0x12000, scoped, tag = 'internal scratch']
  %s0 = inlined_call_operand.vmem [shape: f32[2,160], index: 0, kind: input, shape index: {}]
  %s1 = inlined_call_operand.vmem [shape: f32[160,2], index: 1, kind: input, shape index: {}]
  %s2 = inlined_call_operand.vmem [shape: f32[1,2], index: 2, kind: input, shape index: {}]
  %s3 = inlined_call_operand.hbm [shape: f32[2,2], index: 3, kind: output, shape index: {}]
  %s4 = sld [smem:[#allocation0]]
  $region22: #{deepgem_forward.45} parent=0
    _
  %s6 = ssub.s32 1, %s4
  %s7 = scalar_select 0, %s6, %s4
  $region1: #{deepgem_forward.45} parent=0
    #allocation2 [shape = 'u8[1024]{0}', space=vmem, size = 0x400, scoped, tag = 'output window, operand 0, single buffered']
    #allocation3 [shape = 's32[1]{0}', space=sflag, size = 0x4, scoped, tag = 'scoped memory for deepgem_forward.45']
    %8 = vsyncpa [#allocation3], 0
    // Predicated region
    $region2: #{deepgem_forward.45} parent=1 // pred_check
      _
    $region3: #{deepgem_forward.45} parent=1 // pred_check_branch
      %10 = sbr.rel (0) target = $region5
    $region4: #{deepgem_forward.45} parent=1 // pred_region
      _
    $region5: #{deepgem_forward.45} parent=1 // pred_fallthru
      _
    // Predicated region
    $region6: #{deepgem_forward.45} parent=1 // pred_check
      _
    $region7: #{deepgem_forward.45} parent=1 // pred_check_branch
      %12 = sbr.rel (0) target = $region9
    $region8: #{deepgem_forward.45} parent=1 // pred_region
      _
    $region9: #{deepgem_forward.45} parent=1 // pred_fallthru
      _
    // Predicated region
    $region10: #{deepgem_forward.45} parent=1 // pred_check
      _
    $region11: #{deepgem_forward.45} parent=1 // pred_check_branch
      %14 = sbr.rel (0) target = $region13
    $region12: #{deepgem_forward.45} parent=1 // pred_region
      _
    $region13: #{deepgem_forward.45} parent=1 // pred_fallthru
      _
    %v16 = vld [vmem:[%s0] sm:$0xf]
    %v17 = vld [vmem:[%s1] sm:$0xff]
    %v18 = vld [vmem:[%s1 + $0x8] sm:$0xff]
    %v19 = vld [vmem:[%s1 + $0x10] sm:$0xff]
    %v20 = vld [vmem:[%s1 + $0x18] sm:$0xff]
    %v21 = vld [vmem:[%s1 + $0x20] sm:$0xff]
    %v22 = vld [vmem:[%s1 + $0x28] sm:$0xff]
    %v23 = vld [vmem:[%s1 + $0x30] sm:$0xff]
    %v24 = vld [vmem:[%s1 + $0x38] sm:$0xff]
    %v25 = vld [vmem:[%s1 + $0x40] sm:$0xff]
    %v26 = vld [vmem:[%s1 + $0x48] sm:$0xff]
    %v27 = vld [vmem:[%s1 + $0x50] sm:$0xff]
    %v28 = vld [vmem:[%s1 + $0x58] sm:$0xff]
    %v29 = vld [vmem:[%s1 + $0x60] sm:$0xff]
    %v30 = vld [vmem:[%s1 + $0x68] sm:$0xff]
    %v31 = vld [vmem:[%s1 + $0x70] sm:$0xff]
    %v32 = vld [vmem:[%s1 + $0x78] sm:$0xff]
    %v33 = vld [vmem:[%s1 + $0x80] sm:$0xff]
    %v34 = vld [vmem:[%s1 + $0x88] sm:$0xff]
    %v35 = vld [vmem:[%s1 + $0x90] sm:$0xff]
    %v36 = vld [vmem:[%s1 + $0x98] sm:$0xff]
    %v39 = vunpack.c.l.s4 1983009808
    %v40 = vunpack.c.0.s8 %v39
    %v41 = vlaneseq
    %v42 = vshrl.u32 %v41, 7
    %v43 = vsub.s32 %v40, %v42
    %v44 = vrot.slane %v16, %v43
    %v45 = vcombine.high %v44, %v44
    %v48 = vpack.c.bf16 %v44, %v44
    %v49 = vpack.c.bf16 %v45, %v45
    %v50 = vpack.c.bf16 %v18, %v17
    %v51 = vpack.c.bf16 %v20, %v19
    %v52 = vpack.c.bf16 %v22, %v21
    %v53 = vpack.c.bf16 %v24, %v23
    %v54 = vpack.c.bf16 %v26, %v25
    %v55 = vpack.c.bf16 %v28, %v27
    %v56 = vpack.c.bf16 %v30, %v29
    %v57 = vpack.c.bf16 %v32, %v31
    %v58 = vpack.c.bf16 %v34, %v33
    %v59 = vpack.c.bf16 %v36, %v35
    %v60 = vld [vmem:[%s2] sm:$0x1]
    %v62 = vlaneseq
    %v63 = vshrl.u32 %v62, 7
    %v64 = vsub.s32 0, %v63
    %v65 = vrot.slane %v60, %v64
    %vm67 = vcmask 261120
    %v69 = vsel %vm67, %v49, 0
    %71 = vmatprep.subr.bf16.mxu0 0
    %72 = vmatpush1.bf16.msra.mxu0 %v57
    %73 = vmatprep.subr.bf16.mxu0 0
    %74 = vmatpush1.bf16.msra.mxu0 %v56
    %75 = vmatprep.subr.bf16.mxu0 0
    %76 = vmatpush1.bf16.msra.mxu0 %v55
    %77 = vmatprep.subr.bf16.mxu0 0
    %78 = vmatpush1.bf16.msra.mxu0 %v54
    %79 = vmatprep.subr.bf16.mxu0 0
    %80 = vmatpush1.bf16.msra.mxu0 %v53
    %81 = vmatprep.subr.bf16.mxu0 0
    %82 = vmatpush1.bf16.msra.mxu0 %v52
    %83 = vmatprep.subr.bf16.mxu0 0
    %84 = vmatpush1.bf16.msra.mxu0 %v51
    %85 = vmatprep.subr.bf16.mxu0 0
    %86 = vmatpush1.bf16.msra.mxu0 %v50
    %87 = vmatprep.subr.bf16.mxu0 0
    %88 = vmatpush2.bf16.msra.mxu0 0
    %89 = vmatprep.subr.bf16.mxu0 0
    %90 = vmatpush2.bf16.msra.mxu0 0
    %91 = vmatprep.subr.bf16.mxu0 0
    %92 = vmatpush2.bf16.msra.mxu0 0
    %93 = vmatprep.subr.bf16.mxu0 0
    %94 = vmatpush2.bf16.msra.mxu0 0
    %95 = vmatprep.subr.bf16.mxu0 0
    %96 = vmatpush2.bf16.msra.mxu0 0
    %97 = vmatprep.subr.bf16.mxu0 0
    %98 = vmatpush2.bf16.msra.mxu0 0
    %99 = vmatprep.subr.bf16.mxu0 0
    %100 = vmatpush2.bf16.msra.mxu0 %v59
    %101 = vmatprep.subr.bf16.mxu0 0
    %102 = vmatpush2.bf16.msra.mxu0 %v58
    %103 = vmatprep.mubr.bf16.mxu0 %v69
    %104 = vmatmul.mubr.bf16.gmra.mxu0 %v48
    %v105 = vpop.f32.mrf.mxu0
    %v106 = vadd.f32 %v65, %v105
    %v107 = vpop.f32.mrf.mxu0
    %v108 = vpop.f32.mrf.mxu0
    %v109 = vpop.f32.mrf.mxu0
    %110 = vdwg.mxu0
    %vm111 = vcmask 9216
    %112 = vst.msk [vmem:[#allocation2] sm:$0x3] %vm111, %v106
    // Predicated region
    $region14: #{deepgem_forward.45} parent=1 // pred_check
      _
    $region15: #{deepgem_forward.45} parent=1 // pred_check_branch
      %114 = sbr.rel (0) target = $region17
    $region16: #{deepgem_forward.45} parent=1 // pred_region
      %s116 = ssub.s32 32, 32
      %117 = vsyncadd [#allocation3], %s116
      %s119 = sshll.u32 [#allocation2], 4
      %s120 = int_to_ptr.vmem [resolvable:$true] %s119
      %122 = dma.vmem_to_hbm [thread:$0]  %s120, 32, %s3, [#allocation3]
    $region17: #{deepgem_forward.45} parent=1 // pred_fallthru
      _
    // Predicated region
    $region18: #{deepgem_forward.45} parent=1 // pred_check
      _
    $region19: #{deepgem_forward.45} parent=1 // pred_check_branch
      %124 = sbr.rel (0) target = $region21
    $region20: #{deepgem_forward.45} parent=1 // pred_region
      %125 = dma.done [#allocation3], 32
    $region21: #{deepgem_forward.45} parent=1 // pred_fallthru
      _
    %126 = vsyncpa [#allocation3], 1

</llo_original>
